<compile_context>
chip_gen: v7x
topology: tpu7x:2x2x1
jax: 0.10.0
libtpu: 0.0.40
codegen_flags: <defaults>
</compile_context>

<pallas_src>
import math

import jax
import jax.numpy as jnp
from jax.experimental import pallas as pl
from jax.experimental.pallas import tpu as pltpu


# ---------------------------- Pallas kernels ----------------------------

def features_kernel(p1_ref, w1_ref, b1_ref, w2_ref, b2_ref, w3_ref, b3_ref,
                    aw1_ref, aw2_ref, sel_ref, o_ref):
    """Per-sample fused: 3 Bottleneck levels (merged-branch matmuls, BN folded,
    ReLU, branch sum) + ChannelAttention + MaxPool1d(4,4). Everything in VMEM."""
    f32 = jnp.float32
    C3 = w1_ref.shape[0]          # 48 = 3 * med_channels
    Cm = C3 // 3                  # 16
    KW = p1_ref.shape[1]          # 64  (merged conv window)
    L = p1_ref.shape[2]           # 256
    P = o_ref.shape[2]            # 64  (pooled length)
    nwin = sel_ref.shape[1] // P  # 4   (MaxPool window / stride)
    pad_l = (KW - 1) // 2         # 31  (PyTorch 'same': extra pad on the right)
    pad_r = KW - 1 - pad_l        # 32

    def branches_sum(y, b_ref):
        # per-branch (folded-BN) bias + ReLU, then sum the three Cm-row slices
        y = jnp.maximum(y + b_ref[...], 0.0)
        return y[0:Cm] + y[Cm:2 * Cm] + y[2 * Cm:3 * Cm]

    # ---- level 1 (stride 4): merged patches precomputed in glue -> 1 matmul ----
    y1 = jnp.dot(w1_ref[...], p1_ref[0], preferred_element_type=f32)   # (48, L)
    x1 = branches_sum(y1, b1_ref)                                      # (16, L)

    # ---- level 2 / 3 (stride 1, 'same'): im2col built in VMEM ----
    def conv_same(x, w_ref, b_ref):
        zl = jnp.zeros((Cm, pad_l), f32)
        zr = jnp.zeros((Cm, pad_r), f32)
        xp = jnp.concatenate([zl, x, zr], axis=1)                      # (16, L+63)
        # patch row order = k * Cm + c  (matches host-side weight layout)
        patches = jnp.concatenate([xp[:, k:k + L] for k in range(KW)], axis=0)
        y = jnp.dot(w_ref[...], patches, preferred_element_type=f32)   # (48, L)
        return branches_sum(y, b_ref)                                  # (16, L)

    x2 = conv_same(x1, w2_ref, b2_ref)
    x3 = conv_same(x2, w3_ref, b3_ref)

    x_cat = jnp.concatenate([x1, x2, x3], axis=0)                      # (48, L)

    # ---- ChannelAttention: shared MLP applied once to [avg | max] columns ----
    avg = jnp.mean(x_cat, axis=1, keepdims=True)                       # (48, 1)
    mx = jnp.max(x_cat, axis=1, keepdims=True)                         # (48, 1)
    v = jnp.concatenate([avg, mx], axis=1)                             # (48, 2)
    h = jnp.maximum(jnp.dot(aw1_ref[...], v, preferred_element_type=f32), 0.0)
    a = jnp.dot(aw2_ref[...], h, preferred_element_type=f32)           # (48, 2)
    gate = jax.nn.sigmoid(jnp.sum(a, axis=1, keepdims=True))           # (48, 1)

    # ---- MaxPool1d(4,4) via one lane-dense selection matmul ----
    # sel[l, r*P + i] = 1 iff l == 4*i + r, so cand[:, r*P + i] = x_cat[:, 4*i+r].
    # gate > 0 (sigmoid) and constant along L, so MaxPool(gate*x) == gate*MaxPool(x).
    cand = jnp.dot(x_cat, sel_ref[...], preferred_element_type=f32)    # (48, 4*P)
    pooled = cand[:, 0:P]
    for r in range(1, nwin):
        pooled = jnp.maximum(pooled, cand[:, r * P:(r + 1) * P])       # (48, P)

    o_ref[0] = gate * pooled                                           # (48, P)


def head_kernel(x_ref, w1_ref, b1_ref, w2_ref, b2_ref, o_ref, acc_ref):
    """Linear(3072,1024)->ReLU->Linear(1024,5)->Softmax, K-tiled fc1 reduction."""
    k = pl.program_id(0)

    @pl.when(k == 0)
    def _init():
        acc_ref[...] = jnp.zeros_like(acc_ref)

    acc_ref[...] += jnp.dot(x_ref[...], w1_ref[...],
                            preferred_element_type=jnp.float32)

    @pl.when(k == pl.num_programs(0) - 1)
    def _finish():
        h = jnp.maximum(acc_ref[...] + b1_ref[...], 0.0)
        logits = jnp.dot(h, w2_ref[...], preferred_element_type=jnp.float32)
        logits = logits + b2_ref[...]
        z = logits - jnp.max(logits, axis=1, keepdims=True)
        e = jnp.exp(z)
        o_ref[...] = e / jnp.sum(e, axis=1, keepdims=True)


# ------------------------------- Wrappers -------------------------------

def features_forward(x, params):
    """x: (N, 1, 1024) -> (N, 48, 64) pooled/gated features."""
    N, _, L_in = x.shape
    KW, stride, pad = 64, 4, 31
    L = (L_in + 2 * pad - KW) // stride + 1                  # 256
    # level-1 merged im2col (C_in=1): tiny (64 KB/sample), done in XLA glue.
    xp = jnp.pad(x[:, 0, :], ((0, 0), (pad, pad)))           # (N, L_in + 62)
    p1 = jnp.stack([xp[:, k:k + stride * (L - 1) + 1:stride] for k in range(KW)],
                   axis=1)                                   # (N, 64, L)

    C3 = params["w1m"].shape[0]                              # 48
    P = L // 4                                               # 64
    # MaxPool selection matrix: sel[l, r*P + i] = 1 iff l == 4*i + r.  Built from
    # concrete arrays -> baked in as a constant, DMA'd once (constant index_map).
    l_idx = jnp.arange(L)[:, None]
    c_idx = jnp.arange(4 * P)[None, :]
    sel = (l_idx == 4 * (c_idx % P) + (c_idx // P)).astype(jnp.float32)  # (256,256)

    return pl.pallas_call(
        features_kernel,
        out_shape=jax.ShapeDtypeStruct((N, C3, P), jnp.float32),
        grid=(N,),
        in_specs=[
            pl.BlockSpec((1, KW, L), lambda n: (n, 0, 0)),
            pl.BlockSpec(params["w1m"].shape, lambda n: (0, 0)),
            pl.BlockSpec(params["b1m"].shape, lambda n: (0, 0)),
            pl.BlockSpec(params["w2m"].shape, lambda n: (0, 0)),
            pl.BlockSpec(params["b2m"].shape, lambda n: (0, 0)),
            pl.BlockSpec(params["w3m"].shape, lambda n: (0, 0)),
            pl.BlockSpec(params["b3m"].shape, lambda n: (0, 0)),
            pl.BlockSpec(params["att_w1"].shape, lambda n: (0, 0)),
            pl.BlockSpec(params["att_w2"].shape, lambda n: (0, 0)),
            pl.BlockSpec((L, 4 * P), lambda n: (0, 0)),
        ],
        out_specs=pl.BlockSpec((1, C3, P), lambda n: (n, 0, 0)),
        compiler_params=pltpu.CompilerParams(dimension_semantics=("parallel",)),
    )(p1, params["w1m"], params["b1m"], params["w2m"], params["b2m"],
      params["w3m"], params["b3m"], params["att_w1"], params["att_w2"], sel)


def head_forward(feat, w1t_bf16, b1, w2t, b2, *, tk=768):
    N = feat.shape[0]
    Kdim, H = w1t_bf16.shape                                 # 3072, 1024
    ncls = w2t.shape[1]
    # torch .flatten(1): index c*64 + j.  Pre-cast to bf16 (halves activation DMA,
    # no per-grid-step cast in-kernel); fc1 accumulates in f32.
    x_flat = feat.reshape(N, Kdim).astype(jnp.bfloat16)
    assert Kdim % tk == 0
    return pl.pallas_call(
        head_kernel,
        out_shape=jax.ShapeDtypeStruct((N, ncls), jnp.float32),
        grid=(Kdim // tk,),
        in_specs=[
            pl.BlockSpec((N, tk), lambda k: (0, k)),
            pl.BlockSpec((tk, H), lambda k: (k, 0)),
            pl.BlockSpec((1, H), lambda k: (0, 0)),
            pl.BlockSpec((H, ncls), lambda k: (0, 0)),
            pl.BlockSpec((1, ncls), lambda k: (0, 0)),
        ],
        out_specs=pl.BlockSpec((N, ncls), lambda k: (0, 0)),
        scratch_shapes=[pltpu.VMEM((N, H), jnp.float32)],
        compiler_params=pltpu.CompilerParams(dimension_semantics=("arbitrary",)),
    )(x_flat, w1t_bf16, b1.reshape(1, -1), w2t, b2.reshape(1, -1))


def mlfnet_forward(x, params):
    feat = features_forward(x, params)                       # (N, 48, 64)
    return head_forward(feat, params["fc1_wt"], params["fc1_b"],
                        params["fc2_wt"], params["fc2_b"])   # (N, 5)


# ------------------------------- Parameters -------------------------------

def _init_conv_branch(key, c_in, c_out, K):
    kw, kb = jax.random.split(key)
    bound = 1.0 / math.sqrt(c_in * K)
    W = jax.random.uniform(kw, (c_out, c_in, K), jnp.float32, -bound, bound)
    b = jax.random.uniform(kb, (c_out,), jnp.float32, -bound, bound)
    # Fold eval-mode BatchNorm1d at default init (gamma=1, beta=0, mean=0, var=1).
    # TODO(synk): training-mode BatchNorm (per-batch statistics) is not reproduced.
    s = 1.0 / math.sqrt(1.0 + 1e-5)
    return W * s, b * s


def _merged_level(key, c_in, c_out, KW=64):
    """Merge the K=4/16/64 branches into one (3*c_out, c_in*KW) weight: smaller
    kernels are zero-embedded into the KW window at the offset implied by their
    left padding; columns ordered k*c_in + c to match the in-kernel im2col."""
    Ws, bs = [], []
    for K, kk in zip((4, 16, 64), jax.random.split(key, 3)):
        W, b = _init_conv_branch(kk, c_in, c_out, K)
        off = (KW - 1) // 2 - (K - 1) // 2                   # 30 / 24 / 0
        We = jnp.zeros((c_out, c_in, KW), jnp.float32).at[:, :, off:off + K].set(W)
        Ws.append(We)
        bs.append(b)
    Wm = jnp.concatenate(Ws, axis=0)                         # (3*c_out, c_in, KW)
    Wm = jnp.transpose(Wm, (0, 2, 1)).reshape(3 * c_out, c_in * KW)
    bm = jnp.concatenate(bs).reshape(3 * c_out, 1)
    return Wm, bm


def init_params(key, med_channels=16, input_channels=1, num_classes=5):
    keys = jax.random.split(key, 10)
    p = {}
    p["w1m"], p["b1m"] = _merged_level(keys[0], input_channels, med_channels)
    p["w2m"], p["b2m"] = _merged_level(keys[1], med_channels, med_channels)
    p["w3m"], p["b3m"] = _merged_level(keys[2], med_channels, med_channels)

    C = med_channels * 3                                     # 48
    ba = 1.0 / math.sqrt(C)
    p["att_w1"] = jax.random.uniform(keys[3], (C, C), jnp.float32, -ba, ba)
    p["att_w2"] = jax.random.uniform(keys[4], (C, C), jnp.float32, -ba, ba)

    fc_in = C * 64                                           # 3072
    b1 = 1.0 / math.sqrt(fc_in)
    fc1_w = jax.random.uniform(keys[5], (1024, fc_in), jnp.float32, -b1, b1)
    p["fc1_b"] = jax.random.uniform(keys[6], (1024,), jnp.float32, -b1, b1)
    b2 = 1.0 / math.sqrt(1024)
    fc2_w = jax.random.uniform(keys[7], (num_classes, 1024), jnp.float32, -b2, b2)
    p["fc2_b"] = jax.random.uniform(keys[8], (num_classes,), jnp.float32, -b2, b2)
    # fc1 is the model's only large HBM transfer; carry it in bf16 (f32 accum).
    p["fc1_wt"] = fc1_w.T.astype(jnp.bfloat16)               # (3072, 1024)
    p["fc2_wt"] = fc2_w.T                                    # (1024, 5)
    return p


# ---------------------------------- Main ----------------------------------

if __name__ == "__main__":
    # L=1024 is implied by the module: stride-4 level1 -> 256, MaxPool(4,4) -> 64,
    # and the classifier expects med_channels*3*64 = 3072 features.
    N, C_in, L = 2, 1, 1024
    kx, kp = jax.random.split(jax.random.PRNGKey(0))
    x = jax.random.normal(kx, (N, C_in, L), jnp.float32)
    params = init_params(kp)

    fwd = jax.jit(mlfnet_forward)
    out = jax.block_until_ready(fwd(x, params))
    assert out.shape == (N, 5)
    assert bool(jnp.all(jnp.isfinite(out)))
    print("KERNEL_OK")
</pallas_src>

<mosaic_0001>
module attributes {stable_mosaic.version = 11 : i64} {
  func.func @features_kernel(%arg0: i32, %arg1: memref<1x64x256xf32, #tpu.memory_space<vmem>>, %arg2: memref<48x64xf32, #tpu.memory_space<vmem>>, %arg3: memref<48x1xf32, #tpu.memory_space<vmem>>, %arg4: memref<48x1024xf32, #tpu.memory_space<vmem>>, %arg5: memref<48x1xf32, #tpu.memory_space<vmem>>, %arg6: memref<48x1024xf32, #tpu.memory_space<vmem>>, %arg7: memref<48x1xf32, #tpu.memory_space<vmem>>, %arg8: memref<48x48xf32, #tpu.memory_space<vmem>>, %arg9: memref<48x48xf32, #tpu.memory_space<vmem>>, %arg10: memref<256x256xf32, #tpu.memory_space<vmem>>, %arg11: memref<1x48x64xf32, #tpu.memory_space<vmem>>) attributes {dimension_semantics = [#tpu.dimension_semantics<parallel>], iteration_bounds = array<i64: 2>, scalar_prefetch = 0 : i64, scratch_operands = 0 : i64, tpu.core_type = #tpu.core_type<tc>, window_params = [{transform_indices = @transform_0, window_bounds = array<i64: 1, 64, 256>}, {pipeline_mode = #tpu.pipeline_mode<synchronous>, transform_indices = @transform_1, window_bounds = array<i64: 48, 64>}, {pipeline_mode = #tpu.pipeline_mode<synchronous>, transform_indices = @transform_2, window_bounds = array<i64: 48, 1>}, {pipeline_mode = #tpu.pipeline_mode<synchronous>, transform_indices = @transform_3, window_bounds = array<i64: 48, 1024>}, {pipeline_mode = #tpu.pipeline_mode<synchronous>, transform_indices = @transform_4, window_bounds = array<i64: 48, 1>}, {pipeline_mode = #tpu.pipeline_mode<synchronous>, transform_indices = @transform_5, window_bounds = array<i64: 48, 1024>}, {pipeline_mode = #tpu.pipeline_mode<synchronous>, transform_indices = @transform_6, window_bounds = array<i64: 48, 1>}, {pipeline_mode = #tpu.pipeline_mode<synchronous>, transform_indices = @transform_7, window_bounds = array<i64: 48, 48>}, {pipeline_mode = #tpu.pipeline_mode<synchronous>, transform_indices = @transform_8, window_bounds = array<i64: 48, 48>}, {pipeline_mode = #tpu.pipeline_mode<synchronous>, transform_indices = @transform_9, window_bounds = array<i64: 256, 256>}, {transform_indices = @transform_10, window_bounds = array<i64: 1, 48, 64>}]} {
    %c0 = arith.constant 0 : index
    %c0_0 = arith.constant 0 : index
    %0 = vector.load %arg2[%c0, %c0_0] : memref<48x64xf32, #tpu.memory_space<vmem>>, vector<48x64xf32>
    %c0_1 = arith.constant 0 : index
    %c0_2 = arith.constant 0 : index
    %c0_3 = arith.constant 0 : index
    %1 = vector.load %arg1[%c0_1, %c0_2, %c0_3] : memref<1x64x256xf32, #tpu.memory_space<vmem>>, vector<1x64x256xf32>
    %2 = vector.shape_cast %1 : vector<1x64x256xf32> to vector<64x256xf32>
    %cst = arith.constant dense<0.000000e+00> : vector<48x256xf32>
    %3 = tpu.matmul %0, %2, %cst {dimension_numbers = #tpu.dot_dimension_numbers<[1], [0], [0], [1], [0, 0, 1, 1], [], []>} : vector<48x64xf32>, vector<64x256xf32>, vector<48x256xf32> -> vector<48x256xf32>
    %c0_4 = arith.constant 0 : index
    %c0_5 = arith.constant 0 : index
    %4 = vector.load %arg3[%c0_4, %c0_5] : memref<48x1xf32, #tpu.memory_space<vmem>>, vector<48x1xf32>
    %5 = vector.broadcast %4 : vector<48x1xf32> to vector<48x256xf32>
    %6 = arith.addf %3, %5 : vector<48x256xf32>
    %cst_6 = arith.constant 0.000000e+00 : f32
    %7 = vector.broadcast %cst_6 : f32 to vector<48x256xf32>
    %8 = arith.maximumf %6, %7 : vector<48x256xf32>
    %9 = vector.extract_strided_slice %8 {offsets = [0, 0], sizes = [16, 256], strides = [1, 1]} : vector<48x256xf32> to vector<16x256xf32>
    %10 = vector.extract_strided_slice %8 {offsets = [16, 0], sizes = [16, 256], strides = [1, 1]} : vector<48x256xf32> to vector<16x256xf32>
    %11 = arith.addf %9, %10 : vector<16x256xf32>
    %12 = vector.extract_strided_slice %8 {offsets = [32, 0], sizes = [16, 256], strides = [1, 1]} : vector<48x256xf32> to vector<16x256xf32>
    %13 = arith.addf %11, %12 : vector<16x256xf32>
    %cst_7 = arith.constant 0.000000e+00 : f32
    %14 = vector.broadcast %cst_7 : f32 to vector<16x31xf32>
    %cst_8 = arith.constant 0.000000e+00 : f32
    %15 = vector.broadcast %cst_8 : f32 to vector<16x32xf32>
    %16 = tpu.concatenate %14, %13, %15 in 1 : vector<16x31xf32>, vector<16x256xf32>, vector<16x32xf32> -> vector<16x319xf32>
    %17 = vector.extract_strided_slice %16 {offsets = [0, 0], sizes = [16, 256], strides = [1, 1]} : vector<16x319xf32> to vector<16x256xf32>
    %18 = vector.extract_strided_slice %16 {offsets = [0, 1], sizes = [16, 256], strides = [1, 1]} : vector<16x319xf32> to vector<16x256xf32>
    %19 = vector.extract_strided_slice %16 {offsets = [0, 2], sizes = [16, 256], strides = [1, 1]} : vector<16x319xf32> to vector<16x256xf32>
    %20 = vector.extract_strided_slice %16 {offsets = [0, 3], sizes = [16, 256], strides = [1, 1]} : vector<16x319xf32> to vector<16x256xf32>
    %21 = vector.extract_strided_slice %16 {offsets = [0, 4], sizes = [16, 256], strides = [1, 1]} : vector<16x319xf32> to vector<16x256xf32>
    %22 = vector.extract_strided_slice %16 {offsets = [0, 5], sizes = [16, 256], strides = [1, 1]} : vector<16x319xf32> to vector<16x256xf32>
    %23 = vector.extract_strided_slice %16 {offsets = [0, 6], sizes = [16, 256], strides = [1, 1]} : vector<16x319xf32> to vector<16x256xf32>
    %24 = vector.extract_strided_slice %16 {offsets = [0, 7], sizes = [16, 256], strides = [1, 1]} : vector<16x319xf32> to vector<16x256xf32>
    %25 = vector.extract_strided_slice %16 {offsets = [0, 8], sizes = [16, 256], strides = [1, 1]} : vector<16x319xf32> to vector<16x256xf32>
    %26 = vector.extract_strided_slice %16 {offsets = [0, 9], sizes = [16, 256], strides = [1, 1]} : vector<16x319xf32> to vector<16x256xf32>
    %27 = vector.extract_strided_slice %16 {offsets = [0, 10], sizes = [16, 256], strides = [1, 1]} : vector<16x319xf32> to vector<16x256xf32>
    %28 = vector.extract_strided_slice %16 {offsets = [0, 11], sizes = [16, 256], strides = [1, 1]} : vector<16x319xf32> to vector<16x256xf32>
    %29 = vector.extract_strided_slice %16 {offsets = [0, 12], sizes = [16, 256], strides = [1, 1]} : vector<16x319xf32> to vector<16x256xf32>
    %30 = vector.extract_strided_slice %16 {offsets = [0, 13], sizes = [16, 256], strides = [1, 1]} : vector<16x319xf32> to vector<16x256xf32>
    %31 = vector.extract_strided_slice %16 {offsets = [0, 14], sizes = [16, 256], strides = [1, 1]} : vector<16x319xf32> to vector<16x256xf32>
    %32 = vector.extract_strided_slice %16 {offsets = [0, 15], sizes = [16, 256], strides = [1, 1]} : vector<16x319xf32> to vector<16x256xf32>
    %33 = vector.extract_strided_slice %16 {offsets = [0, 16], sizes = [16, 256], strides = [1, 1]} : vector<16x319xf32> to vector<16x256xf32>
    %34 = vector.extract_strided_slice %16 {offsets = [0, 17], sizes = [16, 256], strides = [1, 1]} : vector<16x319xf32> to vector<16x256xf32>
    %35 = vector.extract_strided_slice %16 {offsets = [0, 18], sizes = [16, 256], strides = [1, 1]} : vector<16x319xf32> to vector<16x256xf32>
    %36 = vector.extract_strided_slice %16 {offsets = [0, 19], sizes = [16, 256], strides = [1, 1]} : vector<16x319xf32> to vector<16x256xf32>
    %37 = vector.extract_strided_slice %16 {offsets = [0, 20], sizes = [16, 256], strides = [1, 1]} : vector<16x319xf32> to vector<16x256xf32>
    %38 = vector.extract_strided_slice %16 {offsets = [0, 21], sizes = [16, 256], strides = [1, 1]} : vector<16x319xf32> to vector<16x256xf32>
    %39 = vector.extract_strided_slice %16 {offsets = [0, 22], sizes = [16, 256], strides = [1, 1]} : vector<16x319xf32> to vector<16x256xf32>
    %40 = vector.extract_strided_slice %16 {offsets = [0, 23], sizes = [16, 256], strides = [1, 1]} : vector<16x319xf32> to vector<16x256xf32>
    %41 = vector.extract_strided_slice %16 {offsets = [0, 24], sizes = [16, 256], strides = [1, 1]} : vector<16x319xf32> to vector<16x256xf32>
    %42 = vector.extract_strided_slice %16 {offsets = [0, 25], sizes = [16, 256], strides = [1, 1]} : vector<16x319xf32> to vector<16x256xf32>
    %43 = vector.extract_strided_slice %16 {offsets = [0, 26], sizes = [16, 256], strides = [1, 1]} : vector<16x319xf32> to vector<16x256xf32>
    %44 = vector.extract_strided_slice %16 {offsets = [0, 27], sizes = [16, 256], strides = [1, 1]} : vector<16x319xf32> to vector<16x256xf32>
    %45 = vector.extract_strided_slice %16 {offsets = [0, 28], sizes = [16, 256], strides = [1, 1]} : vector<16x319xf32> to vector<16x256xf32>
    %46 = vector.extract_strided_slice %16 {offsets = [0, 29], sizes = [16, 256], strides = [1, 1]} : vector<16x319xf32> to vector<16x256xf32>
    %47 = vector.extract_strided_slice %16 {offsets = [0, 30], sizes = [16, 256], strides = [1, 1]} : vector<16x319xf32> to vector<16x256xf32>
    %48 = vector.extract_strided_slice %16 {offsets = [0, 31], sizes = [16, 256], strides = [1, 1]} : vector<16x319xf32> to vector<16x256xf32>
    %49 = vector.extract_strided_slice %16 {offsets = [0, 32], sizes = [16, 256], strides = [1, 1]} : vector<16x319xf32> to vector<16x256xf32>
    %50 = vector.extract_strided_slice %16 {offsets = [0, 33], sizes = [16, 256], strides = [1, 1]} : vector<16x319xf32> to vector<16x256xf32>
    %51 = vector.extract_strided_slice %16 {offsets = [0, 34], sizes = [16, 256], strides = [1, 1]} : vector<16x319xf32> to vector<16x256xf32>
    %52 = vector.extract_strided_slice %16 {offsets = [0, 35], sizes = [16, 256], strides = [1, 1]} : vector<16x319xf32> to vector<16x256xf32>
    %53 = vector.extract_strided_slice %16 {offsets = [0, 36], sizes = [16, 256], strides = [1, 1]} : vector<16x319xf32> to vector<16x256xf32>
    %54 = vector.extract_strided_slice %16 {offsets = [0, 37], sizes = [16, 256], strides = [1, 1]} : vector<16x319xf32> to vector<16x256xf32>
    %55 = vector.extract_strided_slice %16 {offsets = [0, 38], sizes = [16, 256], strides = [1, 1]} : vector<16x319xf32> to vector<16x256xf32>
    %56 = vector.extract_strided_slice %16 {offsets = [0, 39], sizes = [16, 256], strides = [1, 1]} : vector<16x319xf32> to vector<16x256xf32>
    %57 = vector.extract_strided_slice %16 {offsets = [0, 40], sizes = [16, 256], strides = [1, 1]} : vector<16x319xf32> to vector<16x256xf32>
    %58 = vector.extract_strided_slice %16 {offsets = [0, 41], sizes = [16, 256], strides = [1, 1]} : vector<16x319xf32> to vector<16x256xf32>
    %59 = vector.extract_strided_slice %16 {offsets = [0, 42], sizes = [16, 256], strides = [1, 1]} : vector<16x319xf32> to vector<16x256xf32>
    %60 = vector.extract_strided_slice %16 {offsets = [0, 43], sizes = [16, 256], strides = [1, 1]} : vector<16x319xf32> to vector<16x256xf32>
    %61 = vector.extract_strided_slice %16 {offsets = [0, 44], sizes = [16, 256], strides = [1, 1]} : vector<16x319xf32> to vector<16x256xf32>
    %62 = vector.extract_strided_slice %16 {offsets = [0, 45], sizes = [16, 256], strides = [1, 1]} : vector<16x319xf32> to vector<16x256xf32>
    %63 = vector.extract_strided_slice %16 {offsets = [0, 46], sizes = [16, 256], strides = [1, 1]} : vector<16x319xf32> to vector<16x256xf32>
    %64 = vector.extract_strided_slice %16 {offsets = [0, 47], sizes = [16, 256], strides = [1, 1]} : vector<16x319xf32> to vector<16x256xf32>
    %65 = vector.extract_strided_slice %16 {offsets = [0, 48], sizes = [16, 256], strides = [1, 1]} : vector<16x319xf32> to vector<16x256xf32>
    %66 = vector.extract_strided_slice %16 {offsets = [0, 49], sizes = [16, 256], strides = [1, 1]} : vector<16x319xf32> to vector<16x256xf32>
    %67 = vector.extract_strided_slice %16 {offsets = [0, 50], sizes = [16, 256], strides = [1, 1]} : vector<16x319xf32> to vector<16x256xf32>
    %68 = vector.extract_strided_slice %16 {offsets = [0, 51], sizes = [16, 256], strides = [1, 1]} : vector<16x319xf32> to vector<16x256xf32>
    %69 = vector.extract_strided_slice %16 {offsets = [0, 52], sizes = [16, 256], strides = [1, 1]} : vector<16x319xf32> to vector<16x256xf32>
    %70 = vector.extract_strided_slice %16 {offsets = [0, 53], sizes = [16, 256], strides = [1, 1]} : vector<16x319xf32> to vector<16x256xf32>
    %71 = vector.extract_strided_slice %16 {offsets = [0, 54], sizes = [16, 256], strides = [1, 1]} : vector<16x319xf32> to vector<16x256xf32>
    %72 = vector.extract_strided_slice %16 {offsets = [0, 55], sizes = [16, 256], strides = [1, 1]} : vector<16x319xf32> to vector<16x256xf32>
    %73 = vector.extract_strided_slice %16 {offsets = [0, 56], sizes = [16, 256], strides = [1, 1]} : vector<16x319xf32> to vector<16x256xf32>
    %74 = vector.extract_strided_slice %16 {offsets = [0, 57], sizes = [16, 256], strides = [1, 1]} : vector<16x319xf32> to vector<16x256xf32>
    %75 = vector.extract_strided_slice %16 {offsets = [0, 58], sizes = [16, 256], strides = [1, 1]} : vector<16x319xf32> to vector<16x256xf32>
    %76 = vector.extract_strided_slice %16 {offsets = [0, 59], sizes = [16, 256], strides = [1, 1]} : vector<16x319xf32> to vector<16x256xf32>
    %77 = vector.extract_strided_slice %16 {offsets = [0, 60], sizes = [16, 256], strides = [1, 1]} : vector<16x319xf32> to vector<16x256xf32>
    %78 = vector.extract_strided_slice %16 {offsets = [0, 61], sizes = [16, 256], strides = [1, 1]} : vector<16x319xf32> to vector<16x256xf32>
    %79 = vector.extract_strided_slice %16 {offsets = [0, 62], sizes = [16, 256], strides = [1, 1]} : vector<16x319xf32> to vector<16x256xf32>
    %80 = vector.extract_strided_slice %16 {offsets = [0, 63], sizes = [16, 256], strides = [1, 1]} : vector<16x319xf32> to vector<16x256xf32>
    %81 = tpu.concatenate %17, %18, %19, %20, %21, %22, %23, %24, %25, %26, %27, %28, %29, %30, %31, %32 in 0 : vector<16x256xf32>, vector<16x256xf32>, vector<16x256xf32>, vector<16x256xf32>, vector<16x256xf32>, vector<16x256xf32>, vector<16x256xf32>, vector<16x256xf32>, vector<16x256xf32>, vector<16x256xf32>, vector<16x256xf32>, vector<16x256xf32>, vector<16x256xf32>, vector<16x256xf32>, vector<16x256xf32>, vector<16x256xf32> -> vector<256x256xf32>
    %82 = tpu.concatenate %33, %34, %35, %36, %37, %38, %39, %40, %41, %42, %43, %44, %45, %46, %47, %48 in 0 : vector<16x256xf32>, vector<16x256xf32>, vector<16x256xf32>, vector<16x256xf32>, vector<16x256xf32>, vector<16x256xf32>, vector<16x256xf32>, vector<16x256xf32>, vector<16x256xf32>, vector<16x256xf32>, vector<16x256xf32>, vector<16x256xf32>, vector<16x256xf32>, vector<16x256xf32>, vector<16x256xf32>, vector<16x256xf32> -> vector<256x256xf32>
    %83 = tpu.concatenate %49, %50, %51, %52, %53, %54, %55, %56, %57, %58, %59, %60, %61, %62, %63, %64 in 0 : vector<16x256xf32>, vector<16x256xf32>, vector<16x256xf32>, vector<16x256xf32>, vector<16x256xf32>, vector<16x256xf32>, vector<16x256xf32>, vector<16x256xf32>, vector<16x256xf32>, vector<16x256xf32>, vector<16x256xf32>, vector<16x256xf32>, vector<16x256xf32>, vector<16x256xf32>, vector<16x256xf32>, vector<16x256xf32> -> vector<256x256xf32>
    %84 = tpu.concatenate %65, %66, %67, %68, %69, %70, %71, %72, %73, %74, %75, %76, %77, %78, %79, %80 in 0 : vector<16x256xf32>, vector<16x256xf32>, vector<16x256xf32>, vector<16x256xf32>, vector<16x256xf32>, vector<16x256xf32>, vector<16x256xf32>, vector<16x256xf32>, vector<16x256xf32>, vector<16x256xf32>, vector<16x256xf32>, vector<16x256xf32>, vector<16x256xf32>, vector<16x256xf32>, vector<16x256xf32>, vector<16x256xf32> -> vector<256x256xf32>
    %85 = tpu.concatenate %81, %82, %83, %84 in 0 : vector<256x256xf32>, vector<256x256xf32>, vector<256x256xf32>, vector<256x256xf32> -> vector<1024x256xf32>
    %c0_9 = arith.constant 0 : index
    %c0_10 = arith.constant 0 : index
    %86 = vector.load %arg4[%c0_9, %c0_10] : memref<48x1024xf32, #tpu.memory_space<vmem>>, vector<48x1024xf32>
    %cst_11 = arith.constant dense<0.000000e+00> : vector<48x256xf32>
    %87 = tpu.matmul %86, %85, %cst_11 {dimension_numbers = #tpu.dot_dimension_numbers<[1], [0], [0], [1], [0, 0, 1, 1], [], []>} : vector<48x1024xf32>, vector<1024x256xf32>, vector<48x256xf32> -> vector<48x256xf32>
    %c0_12 = arith.constant 0 : index
    %c0_13 = arith.constant 0 : index
    %88 = vector.load %arg5[%c0_12, %c0_13] : memref<48x1xf32, #tpu.memory_space<vmem>>, vector<48x1xf32>
    %89 = vector.broadcast %88 : vector<48x1xf32> to vector<48x256xf32>
    %90 = arith.addf %87, %89 : vector<48x256xf32>
    %cst_14 = arith.constant 0.000000e+00 : f32
    %91 = vector.broadcast %cst_14 : f32 to vector<48x256xf32>
    %92 = arith.maximumf %90, %91 : vector<48x256xf32>
    %93 = vector.extract_strided_slice %92 {offsets = [0, 0], sizes = [16, 256], strides = [1, 1]} : vector<48x256xf32> to vector<16x256xf32>
    %94 = vector.extract_strided_slice %92 {offsets = [16, 0], sizes = [16, 256], strides = [1, 1]} : vector<48x256xf32> to vector<16x256xf32>
    %95 = arith.addf %93, %94 : vector<16x256xf32>
    %96 = vector.extract_strided_slice %92 {offsets = [32, 0], sizes = [16, 256], strides = [1, 1]} : vector<48x256xf32> to vector<16x256xf32>
    %97 = arith.addf %95, %96 : vector<16x256xf32>
    %cst_15 = arith.constant 0.000000e+00 : f32
    %98 = vector.broadcast %cst_15 : f32 to vector<16x31xf32>
    %cst_16 = arith.constant 0.000000e+00 : f32
    %99 = vector.broadcast %cst_16 : f32 to vector<16x32xf32>
    %100 = tpu.concatenate %98, %97, %99 in 1 : vector<16x31xf32>, vector<16x256xf32>, vector<16x32xf32> -> vector<16x319xf32>
    %101 = vector.extract_strided_slice %100 {offsets = [0, 0], sizes = [16, 256], strides = [1, 1]} : vector<16x319xf32> to vector<16x256xf32>
    %102 = vector.extract_strided_slice %100 {offsets = [0, 1], sizes = [16, 256], strides = [1, 1]} : vector<16x319xf32> to vector<16x256xf32>
    %103 = vector.extract_strided_slice %100 {offsets = [0, 2], sizes = [16, 256], strides = [1, 1]} : vector<16x319xf32> to vector<16x256xf32>
    %104 = vector.extract_strided_slice %100 {offsets = [0, 3], sizes = [16, 256], strides = [1, 1]} : vector<16x319xf32> to vector<16x256xf32>
    %105 = vector.extract_strided_slice %100 {offsets = [0, 4], sizes = [16, 256], strides = [1, 1]} : vector<16x319xf32> to vector<16x256xf32>
    %106 = vector.extract_strided_slice %100 {offsets = [0, 5], sizes = [16, 256], strides = [1, 1]} : vector<16x319xf32> to vector<16x256xf32>
    %107 = vector.extract_strided_slice %100 {offsets = [0, 6], sizes = [16, 256], strides = [1, 1]} : vector<16x319xf32> to vector<16x256xf32>
    %108 = vector.extract_strided_slice %100 {offsets = [0, 7], sizes = [16, 256], strides = [1, 1]} : vector<16x319xf32> to vector<16x256xf32>
    %109 = vector.extract_strided_slice %100 {offsets = [0, 8], sizes = [16, 256], strides = [1, 1]} : vector<16x319xf32> to vector<16x256xf32>
    %110 = vector.extract_strided_slice %100 {offsets = [0, 9], sizes = [16, 256], strides = [1, 1]} : vector<16x319xf32> to vector<16x256xf32>
    %111 = vector.extract_strided_slice %100 {offsets = [0, 10], sizes = [16, 256], strides = [1, 1]} : vector<16x319xf32> to vector<16x256xf32>
    %112 = vector.extract_strided_slice %100 {offsets = [0, 11], sizes = [16, 256], strides = [1, 1]} : vector<16x319xf32> to vector<16x256xf32>
    %113 = vector.extract_strided_slice %100 {offsets = [0, 12], sizes = [16, 256], strides = [1, 1]} : vector<16x319xf32> to vector<16x256xf32>
    %114 = vector.extract_strided_slice %100 {offsets = [0, 13], sizes = [16, 256], strides = [1, 1]} : vector<16x319xf32> to vector<16x256xf32>
    %115 = vector.extract_strided_slice %100 {offsets = [0, 14], sizes = [16, 256], strides = [1, 1]} : vector<16x319xf32> to vector<16x256xf32>
    %116 = vector.extract_strided_slice %100 {offsets = [0, 15], sizes = [16, 256], strides = [1, 1]} : vector<16x319xf32> to vector<16x256xf32>
    %117 = vector.extract_strided_slice %100 {offsets = [0, 16], sizes = [16, 256], strides = [1, 1]} : vector<16x319xf32> to vector<16x256xf32>
    %118 = vector.extract_strided_slice %100 {offsets = [0, 17], sizes = [16, 256], strides = [1, 1]} : vector<16x319xf32> to vector<16x256xf32>
    %119 = vector.extract_strided_slice %100 {offsets = [0, 18], sizes = [16, 256], strides = [1, 1]} : vector<16x319xf32> to vector<16x256xf32>
    %120 = vector.extract_strided_slice %100 {offsets = [0, 19], sizes = [16, 256], strides = [1, 1]} : vector<16x319xf32> to vector<16x256xf32>
    %121 = vector.extract_strided_slice %100 {offsets = [0, 20], sizes = [16, 256], strides = [1, 1]} : vector<16x319xf32> to vector<16x256xf32>
    %122 = vector.extract_strided_slice %100 {offsets = [0, 21], sizes = [16, 256], strides = [1, 1]} : vector<16x319xf32> to vector<16x256xf32>
    %123 = vector.extract_strided_slice %100 {offsets = [0, 22], sizes = [16, 256], strides = [1, 1]} : vector<16x319xf32> to vector<16x256xf32>
    %124 = vector.extract_strided_slice %100 {offsets = [0, 23], sizes = [16, 256], strides = [1, 1]} : vector<16x319xf32> to vector<16x256xf32>
    %125 = vector.extract_strided_slice %100 {offsets = [0, 24], sizes = [16, 256], strides = [1, 1]} : vector<16x319xf32> to vector<16x256xf32>
    %126 = vector.extract_strided_slice %100 {offsets = [0, 25], sizes = [16, 256], strides = [1, 1]} : vector<16x319xf32> to vector<16x256xf32>
    %127 = vector.extract_strided_slice %100 {offsets = [0, 26], sizes = [16, 256], strides = [1, 1]} : vector<16x319xf32> to vector<16x256xf32>
    %128 = vector.extract_strided_slice %100 {offsets = [0, 27], sizes = [16, 256], strides = [1, 1]} : vector<16x319xf32> to vector<16x256xf32>
    %129 = vector.extract_strided_slice %100 {offsets = [0, 28], sizes = [16, 256], strides = [1, 1]} : vector<16x319xf32> to vector<16x256xf32>
    %130 = vector.extract_strided_slice %100 {offsets = [0, 29], sizes = [16, 256], strides = [1, 1]} : vector<16x319xf32> to vector<16x256xf32>
    %131 = vector.extract_strided_slice %100 {offsets = [0, 30], sizes = [16, 256], strides = [1, 1]} : vector<16x319xf32> to vector<16x256xf32>
    %132 = vector.extract_strided_slice %100 {offsets = [0, 31], sizes = [16, 256], strides = [1, 1]} : vector<16x319xf32> to vector<16x256xf32>
    %133 = vector.extract_strided_slice %100 {offsets = [0, 32], sizes = [16, 256], strides = [1, 1]} : vector<16x319xf32> to vector<16x256xf32>
    %134 = vector.extract_strided_slice %100 {offsets = [0, 33], sizes = [16, 256], strides = [1, 1]} : vector<16x319xf32> to vector<16x256xf32>
    %135 = vector.extract_strided_slice %100 {offsets = [0, 34], sizes = [16, 256], strides = [1, 1]} : vector<16x319xf32> to vector<16x256xf32>
    %136 = vector.extract_strided_slice %100 {offsets = [0, 35], sizes = [16, 256], strides = [1, 1]} : vector<16x319xf32> to vector<16x256xf32>
    %137 = vector.extract_strided_slice %100 {offsets = [0, 36], sizes = [16, 256], strides = [1, 1]} : vector<16x319xf32> to vector<16x256xf32>
    %138 = vector.extract_strided_slice %100 {offsets = [0, 37], sizes = [16, 256], strides = [1, 1]} : vector<16x319xf32> to vector<16x256xf32>
    %139 = vector.extract_strided_slice %100 {offsets = [0, 38], sizes = [16, 256], strides = [1, 1]} : vector<16x319xf32> to vector<16x256xf32>
    %140 = vector.extract_strided_slice %100 {offsets = [0, 39], sizes = [16, 256], strides = [1, 1]} : vector<16x319xf32> to vector<16x256xf32>
    %141 = vector.extract_strided_slice %100 {offsets = [0, 40], sizes = [16, 256], strides = [1, 1]} : vector<16x319xf32> to vector<16x256xf32>
    %142 = vector.extract_strided_slice %100 {offsets = [0, 41], sizes = [16, 256], strides = [1, 1]} : vector<16x319xf32> to vector<16x256xf32>
    %143 = vector.extract_strided_slice %100 {offsets = [0, 42], sizes = [16, 256], strides = [1, 1]} : vector<16x319xf32> to vector<16x256xf32>
    %144 = vector.extract_strided_slice %100 {offsets = [0, 43], sizes = [16, 256], strides = [1, 1]} : vector<16x319xf32> to vector<16x256xf32>
    %145 = vector.extract_strided_slice %100 {offsets = [0, 44], sizes = [16, 256], strides = [1, 1]} : vector<16x319xf32> to vector<16x256xf32>
    %146 = vector.extract_strided_slice %100 {offsets = [0, 45], sizes = [16, 256], strides = [1, 1]} : vector<16x319xf32> to vector<16x256xf32>
    %147 = vector.extract_strided_slice %100 {offsets = [0, 46], sizes = [16, 256], strides = [1, 1]} : vector<16x319xf32> to vector<16x256xf32>
    %148 = vector.extract_strided_slice %100 {offsets = [0, 47], sizes = [16, 256], strides = [1, 1]} : vector<16x319xf32> to vector<16x256xf32>
    %149 = vector.extract_strided_slice %100 {offsets = [0, 48], sizes = [16, 256], strides = [1, 1]} : vector<16x319xf32> to vector<16x256xf32>
    %150 = vector.extract_strided_slice %100 {offsets = [0, 49], sizes = [16, 256], strides = [1, 1]} : vector<16x319xf32> to vector<16x256xf32>
    %151 = vector.extract_strided_slice %100 {offsets = [0, 50], sizes = [16, 256], strides = [1, 1]} : vector<16x319xf32> to vector<16x256xf32>
    %152 = vector.extract_strided_slice %100 {offsets = [0, 51], sizes = [16, 256], strides = [1, 1]} : vector<16x319xf32> to vector<16x256xf32>
    %153 = vector.extract_strided_slice %100 {offsets = [0, 52], sizes = [16, 256], strides = [1, 1]} : vector<16x319xf32> to vector<16x256xf32>
    %154 = vector.extract_strided_slice %100 {offsets = [0, 53], sizes = [16, 256], strides = [1, 1]} : vector<16x319xf32> to vector<16x256xf32>
    %155 = vector.extract_strided_slice %100 {offsets = [0, 54], sizes = [16, 256], strides = [1, 1]} : vector<16x319xf32> to vector<16x256xf32>
    %156 = vector.extract_strided_slice %100 {offsets = [0, 55], sizes = [16, 256], strides = [1, 1]} : vector<16x319xf32> to vector<16x256xf32>
    %157 = vector.extract_strided_slice %100 {offsets = [0, 56], sizes = [16, 256], strides = [1, 1]} : vector<16x319xf32> to vector<16x256xf32>
    %158 = vector.extract_strided_slice %100 {offsets = [0, 57], sizes = [16, 256], strides = [1, 1]} : vector<16x319xf32> to vector<16x256xf32>
    %159 = vector.extract_strided_slice %100 {offsets = [0, 58], sizes = [16, 256], strides = [1, 1]} : vector<16x319xf32> to vector<16x256xf32>
    %160 = vector.extract_strided_slice %100 {offsets = [0, 59], sizes = [16, 256], strides = [1, 1]} : vector<16x319xf32> to vector<16x256xf32>
    %161 = vector.extract_strided_slice %100 {offsets = [0, 60], sizes = [16, 256], strides = [1, 1]} : vector<16x319xf32> to vector<16x256xf32>
    %162 = vector.extract_strided_slice %100 {offsets = [0, 61], sizes = [16, 256], strides = [1, 1]} : vector<16x319xf32> to vector<16x256xf32>
    %163 = vector.extract_strided_slice %100 {offsets = [0, 62], sizes = [16, 256], strides = [1, 1]} : vector<16x319xf32> to vector<16x256xf32>
    %164 = vector.extract_strided_slice %100 {offsets = [0, 63], sizes = [16, 256], strides = [1, 1]} : vector<16x319xf32> to vector<16x256xf32>
    %165 = tpu.concatenate %101, %102, %103, %104, %105, %106, %107, %108, %109, %110, %111, %112, %113, %114, %115, %116 in 0 : vector<16x256xf32>, vector<16x256xf32>, vector<16x256xf32>, vector<16x256xf32>, vector<16x256xf32>, vector<16x256xf32>, vector<16x256xf32>, vector<16x256xf32>, vector<16x256xf32>, vector<16x256xf32>, vector<16x256xf32>, vector<16x256xf32>, vector<16x256xf32>, vector<16x256xf32>, vector<16x256xf32>, vector<16x256xf32> -> vector<256x256xf32>
    %166 = tpu.concatenate %117, %118, %119, %120, %121, %122, %123, %124, %125, %126, %127, %128, %129, %130, %131, %132 in 0 : vector<16x256xf32>, vector<16x256xf32>, vector<16x256xf32>, vector<16x256xf32>, vector<16x256xf32>, vector<16x256xf32>, vector<16x256xf32>, vector<16x256xf32>, vector<16x256xf32>, vector<16x256xf32>, vector<16x256xf32>, vector<16x256xf32>, vector<16x256xf32>, vector<16x256xf32>, vector<16x256xf32>, vector<16x256xf32> -> vector<256x256xf32>
    %167 = tpu.concatenate %133, %134, %135, %136, %137, %138, %139, %140, %141, %142, %143, %144, %145, %146, %147, %148 in 0 : vector<16x256xf32>, vector<16x256xf32>, vector<16x256xf32>, vector<16x256xf32>, vector<16x256xf32>, vector<16x256xf32>, vector<16x256xf32>, vector<16x256xf32>, vector<16x256xf32>, vector<16x256xf32>, vector<16x256xf32>, vector<16x256xf32>, vector<16x256xf32>, vector<16x256xf32>, vector<16x256xf32>, vector<16x256xf32> -> vector<256x256xf32>
    %168 = tpu.concatenate %149, %150, %151, %152, %153, %154, %155, %156, %157, %158, %159, %160, %161, %162, %163, %164 in 0 : vector<16x256xf32>, vector<16x256xf32>, vector<16x256xf32>, vector<16x256xf32>, vector<16x256xf32>, vector<16x256xf32>, vector<16x256xf32>, vector<16x256xf32>, vector<16x256xf32>, vector<16x256xf32>, vector<16x256xf32>, vector<16x256xf32>, vector<16x256xf32>, vector<16x256xf32>, vector<16x256xf32>, vector<16x256xf32> -> vector<256x256xf32>
    %169 = tpu.concatenate %165, %166, %167, %168 in 0 : vector<256x256xf32>, vector<256x256xf32>, vector<256x256xf32>, vector<256x256xf32> -> vector<1024x256xf32>
    %c0_17 = arith.constant 0 : index
    %c0_18 = arith.constant 0 : index
    %170 = vector.load %arg6[%c0_17, %c0_18] : memref<48x1024xf32, #tpu.memory_space<vmem>>, vector<48x1024xf32>
    %cst_19 = arith.constant dense<0.000000e+00> : vector<48x256xf32>
    %171 = tpu.matmul %170, %169, %cst_19 {dimension_numbers = #tpu.dot_dimension_numbers<[1], [0], [0], [1], [0, 0, 1, 1], [], []>} : vector<48x1024xf32>, vector<1024x256xf32>, vector<48x256xf32> -> vector<48x256xf32>
    %c0_20 = arith.constant 0 : index
    %c0_21 = arith.constant 0 : index
    %172 = vector.load %arg7[%c0_20, %c0_21] : memref<48x1xf32, #tpu.memory_space<vmem>>, vector<48x1xf32>
    %173 = vector.broadcast %172 : vector<48x1xf32> to vector<48x256xf32>
    %174 = arith.addf %171, %173 : vector<48x256xf32>
    %cst_22 = arith.constant 0.000000e+00 : f32
    %175 = vector.broadcast %cst_22 : f32 to vector<48x256xf32>
    %176 = arith.maximumf %174, %175 : vector<48x256xf32>
    %177 = vector.extract_strided_slice %176 {offsets = [0, 0], sizes = [16, 256], strides = [1, 1]} : vector<48x256xf32> to vector<16x256xf32>
    %178 = vector.extract_strided_slice %176 {offsets = [16, 0], sizes = [16, 256], strides = [1, 1]} : vector<48x256xf32> to vector<16x256xf32>
    %179 = arith.addf %177, %178 : vector<16x256xf32>
    %180 = vector.extract_strided_slice %176 {offsets = [32, 0], sizes = [16, 256], strides = [1, 1]} : vector<48x256xf32> to vector<16x256xf32>
    %181 = arith.addf %179, %180 : vector<16x256xf32>
    %182 = tpu.concatenate %13, %97, %181 in 0 : vector<16x256xf32>, vector<16x256xf32>, vector<16x256xf32> -> vector<48x256xf32>
    %cst_23 = arith.constant dense<0.000000e+00> : vector<48xf32>
    %183 = vector.multi_reduction <add>, %182, %cst_23 [1] : vector<48x256xf32> to vector<48xf32>
    %184 = vector.shape_cast %183 : vector<48xf32> to vector<48x1xf32>
    %cst_24 = arith.constant 2.560000e+02 : f32
    %185 = vector.broadcast %cst_24 : f32 to vector<48x1xf32>
    %186 = arith.divf %184, %185 : vector<48x1xf32>
    %cst_25 = arith.constant dense<0xFF800000> : vector<48xf32>
    %187 = vector.multi_reduction <maximumf>, %182, %cst_25 [1] : vector<48x256xf32> to vector<48xf32>
    %188 = vector.shape_cast %187 : vector<48xf32> to vector<48x1xf32>
    %189 = tpu.concatenate %186, %188 in 1 : vector<48x1xf32>, vector<48x1xf32> -> vector<48x2xf32>
    %c0_26 = arith.constant 0 : index
    %c0_27 = arith.constant 0 : index
    %190 = vector.load %arg8[%c0_26, %c0_27] : memref<48x48xf32, #tpu.memory_space<vmem>>, vector<48x48xf32>
    %cst_28 = arith.constant dense<0.000000e+00> : vector<48x2xf32>
    %191 = tpu.matmul %190, %189, %cst_28 {dimension_numbers = #tpu.dot_dimension_numbers<[1], [0], [0], [1], [0, 0, 1, 1], [], []>} : vector<48x48xf32>, vector<48x2xf32>, vector<48x2xf32> -> vector<48x2xf32>
    %cst_29 = arith.constant 0.000000e+00 : f32
    %192 = vector.broadcast %cst_29 : f32 to vector<48x2xf32>
    %193 = arith.maximumf %191, %192 : vector<48x2xf32>
    %c0_30 = arith.constant 0 : index
    %c0_31 = arith.constant 0 : index
    %194 = vector.load %arg9[%c0_30, %c0_31] : memref<48x48xf32, #tpu.memory_space<vmem>>, vector<48x48xf32>
    %cst_32 = arith.constant dense<0.000000e+00> : vector<48x2xf32>
    %195 = tpu.matmul %194, %193, %cst_32 {dimension_numbers = #tpu.dot_dimension_numbers<[1], [0], [0], [1], [0, 0, 1, 1], [], []>} : vector<48x48xf32>, vector<48x2xf32>, vector<48x2xf32> -> vector<48x2xf32>
    %cst_33 = arith.constant dense<0.000000e+00> : vector<48xf32>
    %196 = vector.multi_reduction <add>, %195, %cst_33 [1] : vector<48x2xf32> to vector<48xf32>
    %197 = vector.shape_cast %196 : vector<48xf32> to vector<48x1xf32>
    %198 = arith.negf %197 : vector<48x1xf32>
    %199 = math.exp %198 : vector<48x1xf32>
    %cst_34 = arith.constant 1.000000e+00 : f32
    %200 = vector.broadcast %cst_34 : f32 to vector<48x1xf32>
    %201 = arith.addf %200, %199 : vector<48x1xf32>
    %202 = arith.divf %200, %201 : vector<48x1xf32>
    %c0_35 = arith.constant 0 : index
    %c0_36 = arith.constant 0 : index
    %203 = vector.load %arg10[%c0_35, %c0_36] : memref<256x256xf32, #tpu.memory_space<vmem>>, vector<256x256xf32>
    %cst_37 = arith.constant dense<0.000000e+00> : vector<48x256xf32>
    %204 = tpu.matmul %182, %203, %cst_37 {dimension_numbers = #tpu.dot_dimension_numbers<[1], [0], [0], [1], [0, 0, 1, 1], [], []>} : vector<48x256xf32>, vector<256x256xf32>, vector<48x256xf32> -> vector<48x256xf32>
    %205 = vector.extract_strided_slice %204 {offsets = [0, 0], sizes = [48, 64], strides = [1, 1]} : vector<48x256xf32> to vector<48x64xf32>
    %206 = vector.extract_strided_slice %204 {offsets = [0, 64], sizes = [48, 64], strides = [1, 1]} : vector<48x256xf32> to vector<48x64xf32>
    %207 = arith.maximumf %205, %206 : vector<48x64xf32>
    %208 = vector.extract_strided_slice %204 {offsets = [0, 128], sizes = [48, 64], strides = [1, 1]} : vector<48x256xf32> to vector<48x64xf32>
    %209 = arith.maximumf %207, %208 : vector<48x64xf32>
    %210 = vector.extract_strided_slice %204 {offsets = [0, 192], sizes = [48, 64], strides = [1, 1]} : vector<48x256xf32> to vector<48x64xf32>
    %211 = arith.maximumf %209, %210 : vector<48x64xf32>
    %212 = vector.broadcast %202 : vector<48x1xf32> to vector<48x64xf32>
    %213 = arith.mulf %212, %211 : vector<48x64xf32>
    %c0_38 = arith.constant 0 : index
    %c0_39 = arith.constant 0 : index
    %c0_40 = arith.constant 0 : index
    %214 = vector.load %arg11[%c0_38, %c0_39, %c0_40] : memref<1x48x64xf32, #tpu.memory_space<vmem>>, vector<1x48x64xf32>
    %215 = vector.shape_cast %214 : vector<1x48x64xf32> to vector<48x64xf32>
    %216 = vector.shape_cast %213 : vector<48x64xf32> to vector<1x48x64xf32>
    tpu.vector_store %arg11[%c0_38, %c0_39, %c0_40], %216 {strides = array<i32>} : memref<1x48x64xf32, #tpu.memory_space<vmem>>, vector<1x48x64xf32>,
    return
  }
  func.func @transform_0(%arg0: i32) -> (i32, i32, i32) {
    %c0_i32 = arith.constant 0 : i32
    %c0_i32_0 = arith.constant 0 : i32
    %c0_i32_1 = arith.constant 0 : i32
    return %arg0, %c0_i32, %c0_i32_0 : i32, i32, i32
  }
  func.func @transform_1(%arg0: i32) -> (i32, i32) {
    %c0_i32 = arith.constant 0 : i32
    %c0_i32_0 = arith.constant 0 : i32
    %c0_i32_1 = arith.constant 0 : i32
    return %c0_i32, %c0_i32_0 : i32, i32
  }
  func.func @transform_2(%arg0: i32) -> (i32, i32) {
    %c0_i32 = arith.constant 0 : i32
    %c0_i32_0 = arith.constant 0 : i32
    %c0_i32_1 = arith.constant 0 : i32
    return %c0_i32, %c0_i32_0 : i32, i32
  }
  func.func @transform_3(%arg0: i32) -> (i32, i32) {
    %c0_i32 = arith.constant 0 : i32
    %c0_i32_0 = arith.constant 0 : i32
    %c0_i32_1 = arith.constant 0 : i32
    return %c0_i32, %c0_i32_0 : i32, i32
  }
  func.func @transform_4(%arg0: i32) -> (i32, i32) {
    %c0_i32 = arith.constant 0 : i32
    %c0_i32_0 = arith.constant 0 : i32
    %c0_i32_1 = arith.constant 0 : i32
    return %c0_i32, %c0_i32_0 : i32, i32
  }
  func.func @transform_5(%arg0: i32) -> (i32, i32) {
    %c0_i32 = arith.constant 0 : i32
    %c0_i32_0 = arith.constant 0 : i32
    %c0_i32_1 = arith.constant 0 : i32
    return %c0_i32, %c0_i32_0 : i32, i32
  }
  func.func @transform_6(%arg0: i32) -> (i32, i32) {
    %c0_i32 = arith.constant 0 : i32
    %c0_i32_0 = arith.constant 0 : i32
    %c0_i32_1 = arith.constant 0 : i32
    return %c0_i32, %c0_i32_0 : i32, i32
  }
  func.func @transform_7(%arg0: i32) -> (i32, i32) {
    %c0_i32 = arith.constant 0 : i32
    %c0_i32_0 = arith.constant 0 : i32
    %c0_i32_1 = arith.constant 0 : i32
    return %c0_i32, %c0_i32_0 : i32, i32
  }
  func.func @transform_8(%arg0: i32) -> (i32, i32) {
    %c0_i32 = arith.constant 0 : i32
    %c0_i32_0 = arith.constant 0 : i32
    %c0_i32_1 = arith.constant 0 : i32
    return %c0_i32, %c0_i32_0 : i32, i32
  }
  func.func @transform_9(%arg0: i32) -> (i32, i32) {
    %c0_i32 = arith.constant 0 : i32
    %c0_i32_0 = arith.constant 0 : i32
    %c0_i32_1 = arith.constant 0 : i32
    return %c0_i32, %c0_i32_0 : i32, i32
  }
  func.func @transform_10(%arg0: i32) -> (i32, i32, i32) {
    %c0_i32 = arith.constant 0 : i32
    %c0_i32_0 = arith.constant 0 : i32
    %c0_i32_1 = arith.constant 0 : i32
    return %arg0, %c0_i32, %c0_i32_0 : i32, i32, i32
  }
}

module attributes {stable_mosaic.version = 11 : i64} {
  func.func @head_kernel(%arg0: i32, %arg1: memref<2x768xbf16, #tpu.memory_space<vmem>>, %arg2: memref<768x1024xbf16, #tpu.memory_space<vmem>>, %arg3: memref<1x1024xf32, #tpu.memory_space<vmem>>, %arg4: memref<1024x5xf32, #tpu.memory_space<vmem>>, %arg5: memref<1x5xf32, #tpu.memory_space<vmem>>, %arg6: memref<2x5xf32, #tpu.memory_space<vmem>>, %arg7: memref<2x1024xf32, #tpu.memory_space<vmem>>) attributes {dimension_semantics = [#tpu.dimension_semantics<arbitrary>], iteration_bounds = array<i64: 4>, scalar_prefetch = 0 : i64, scratch_operands = 1 : i64, tpu.core_type = #tpu.core_type<tc>, window_params = [{transform_indices = @transform_0, window_bounds = array<i64: 2, 768>}, {transform_indices = @transform_1, window_bounds = array<i64: 768, 1024>}, {pipeline_mode = #tpu.pipeline_mode<synchronous>, transform_indices = @transform_2, window_bounds = array<i64: 1, 1024>}, {pipeline_mode = #tpu.pipeline_mode<synchronous>, transform_indices = @transform_3, window_bounds = array<i64: 1024, 5>}, {pipeline_mode = #tpu.pipeline_mode<synchronous>, transform_indices = @transform_4, window_bounds = array<i64: 1, 5>}, {pipeline_mode = #tpu.pipeline_mode<synchronous>, transform_indices = @transform_5, window_bounds = array<i64: 2, 5>}]} {
    %c0_i32 = arith.constant 0 : i32
    %0 = arith.cmpi eq, %arg0, %c0_i32 : i32
    %1 = arith.extui %0 : i1 to i32
    %c0_i32_0 = arith.constant 0 : i32
    %2 = arith.cmpi ne, %1, %c0_i32_0 : i32
    scf.if %2 {
      %cst_9 = arith.constant 0.000000e+00 : f32
      %12 = vector.broadcast %cst_9 : f32 to vector<2x1024xf32>
      %c0_10 = arith.constant 0 : index
      %c0_11 = arith.constant 0 : index
      %13 = vector.load %arg7[%c0_10, %c0_11] : memref<2x1024xf32, #tpu.memory_space<vmem>>, vector<2x1024xf32>
      tpu.vector_store %arg7[%c0_10, %c0_11], %12 {strides = array<i32>} : memref<2x1024xf32, #tpu.memory_space<vmem>>, vector<2x1024xf32>,
    } else {
    }
    %c0 = arith.constant 0 : index
    %c0_1 = arith.constant 0 : index
    %3 = vector.load %arg7[%c0, %c0_1] : memref<2x1024xf32, #tpu.memory_space<vmem>>, vector<2x1024xf32>
    %c0_2 = arith.constant 0 : index
    %c0_3 = arith.constant 0 : index
    %4 = vector.load %arg1[%c0_2, %c0_3] : memref<2x768xbf16, #tpu.memory_space<vmem>>, vector<2x768xbf16>
    %c0_4 = arith.constant 0 : index
    %c0_5 = arith.constant 0 : index
    %5 = vector.load %arg2[%c0_4, %c0_5] : memref<768x1024xbf16, #tpu.memory_space<vmem>>, vector<768x1024xbf16>
    %cst = arith.constant dense<0.000000e+00> : vector<2x1024xf32>
    %6 = tpu.matmul %4, %5, %cst {dimension_numbers = #tpu.dot_dimension_numbers<[1], [0], [0], [1], [0, 0, 1, 1], [], []>} : vector<2x768xbf16>, vector<768x1024xbf16>, vector<2x1024xf32> -> vector<2x1024xf32>
    %7 = arith.addf %3, %6 : vector<2x1024xf32>
    %c0_6 = arith.constant 0 : index
    %c0_7 = arith.constant 0 : index
    %8 = vector.load %arg7[%c0_6, %c0_7] : memref<2x1024xf32, #tpu.memory_space<vmem>>, vector<2x1024xf32>
    tpu.vector_store %arg7[%c0_6, %c0_7], %7 {strides = array<i32>} : memref<2x1024xf32, #tpu.memory_space<vmem>>, vector<2x1024xf32>,
    %c3_i32 = arith.constant 3 : i32
    %9 = arith.cmpi eq, %arg0, %c3_i32 : i32
    %10 = arith.extui %9 : i1 to i32
    %c0_i32_8 = arith.constant 0 : i32
    %11 = arith.cmpi ne, %10, %c0_i32_8 : i32
    scf.if %11 {
      %c0_9 = arith.constant 0 : index
      %c0_10 = arith.constant 0 : index
      %12 = vector.load %arg7[%c0_9, %c0_10] : memref<2x1024xf32, #tpu.memory_space<vmem>>, vector<2x1024xf32>
      %c0_11 = arith.constant 0 : index
      %c0_12 = arith.constant 0 : index
      %13 = vector.load %arg3[%c0_11, %c0_12] : memref<1x1024xf32, #tpu.memory_space<vmem>>, vector<1x1024xf32>
      %14 = vector.broadcast %13 : vector<1x1024xf32> to vector<2x1024xf32>
      %15 = arith.addf %12, %14 : vector<2x1024xf32>
      %cst_13 = arith.constant 0.000000e+00 : f32
      %16 = vector.broadcast %cst_13 : f32 to vector<2x1024xf32>
      %17 = arith.maximumf %15, %16 : vector<2x1024xf32>
      %c0_14 = arith.constant 0 : index
      %c0_15 = arith.constant 0 : index
      %18 = vector.load %arg4[%c0_14, %c0_15] : memref<1024x5xf32, #tpu.memory_space<vmem>>, vector<1024x5xf32>
      %cst_16 = arith.constant dense<0.000000e+00> : vector<2x5xf32>
      %19 = tpu.matmul %17, %18, %cst_16 {dimension_numbers = #tpu.dot_dimension_numbers<[1], [0], [0], [1], [0, 0, 1, 1], [], []>} : vector<2x1024xf32>, vector<1024x5xf32>, vector<2x5xf32> -> vector<2x5xf32>
      %c0_17 = arith.constant 0 : index
      %c0_18 = arith.constant 0 : index
      %20 = vector.load %arg5[%c0_17, %c0_18] : memref<1x5xf32, #tpu.memory_space<vmem>>, vector<1x5xf32>
      %21 = vector.broadcast %20 : vector<1x5xf32> to vector<2x5xf32>
      %22 = arith.addf %19, %21 : vector<2x5xf32>
      %cst_19 = arith.constant dense<0xFF800000> : vector<2xf32>
      %23 = vector.multi_reduction <maximumf>, %22, %cst_19 [1] : vector<2x5xf32> to vector<2xf32>
      %24 = vector.shape_cast %23 : vector<2xf32> to vector<2x1xf32>
      %25 = vector.broadcast %24 : vector<2x1xf32> to vector<2x5xf32>
      %26 = arith.subf %22, %25 : vector<2x5xf32>
      %27 = math.exp %26 : vector<2x5xf32>
      %cst_20 = arith.constant dense<0.000000e+00> : vector<2xf32>
      %28 = vector.multi_reduction <add>, %27, %cst_20 [1] : vector<2x5xf32> to vector<2xf32>
      %29 = vector.shape_cast %28 : vector<2xf32> to vector<2x1xf32>
      %30 = vector.broadcast %29 : vector<2x1xf32> to vector<2x5xf32>
      %31 = arith.divf %27, %30 : vector<2x5xf32>
      %c0_21 = arith.constant 0 : index
      %c0_22 = arith.constant 0 : index
      %32 = vector.load %arg6[%c0_21, %c0_22] : memref<2x5xf32, #tpu.memory_space<vmem>>, vector<2x5xf32>
      tpu.vector_store %arg6[%c0_21, %c0_22], %31 {strides = array<i32>} : memref<2x5xf32, #tpu.memory_space<vmem>>, vector<2x5xf32>,
    } else {
    }
    return
  }
  func.func @transform_0(%arg0: i32) -> (i32, i32) {
    %c0_i32 = arith.constant 0 : i32
    %c0_i32_0 = arith.constant 0 : i32
    return %c0_i32, %arg0 : i32, i32
  }
  func.func @transform_1(%arg0: i32) -> (i32, i32) {
    %c0_i32 = arith.constant 0 : i32
    %c0_i32_0 = arith.constant 0 : i32
    return %arg0, %c0_i32 : i32, i32
  }
  func.func @transform_2(%arg0: i32) -> (i32, i32) {
    %c0_i32 = arith.constant 0 : i32
    %c0_i32_0 = arith.constant 0 : i32
    %c0_i32_1 = arith.constant 0 : i32
    return %c0_i32, %c0_i32_0 : i32, i32
  }
  func.func @transform_3(%arg0: i32) -> (i32, i32) {
    %c0_i32 = arith.constant 0 : i32
    %c0_i32_0 = arith.constant 0 : i32
    %c0_i32_1 = arith.constant 0 : i32
    return %c0_i32, %c0_i32_0 : i32, i32
  }
  func.func @transform_4(%arg0: i32) -> (i32, i32) {
    %c0_i32 = arith.constant 0 : i32
    %c0_i32_0 = arith.constant 0 : i32
    %c0_i32_1 = arith.constant 0 : i32
    return %c0_i32, %c0_i32_0 : i32, i32
  }
  func.func @transform_5(%arg0: i32) -> (i32, i32) {
    %c0_i32 = arith.constant 0 : i32
    %c0_i32_0 = arith.constant 0 : i32
    %c0_i32_1 = arith.constant 0 : i32
    return %c0_i32, %c0_i32_0 : i32, i32
  }
}

</mosaic_0001>

<llo_original>
// kernel: mlfnet_forward.2
$region0: #{mlfnet_forward.2}
  #allocation0 [shape = 'u32[]', space=smem, size = 0x4, offset = 0x4, fixed_abs, tag = 'smem constant byte address 0x4 - core index']
  #allocation1 [shape = 'u32[144,128]{1,0:T(1,128)}', space=vmem, size = 0x12000, scoped, tag = 'internal scratch']
  %s0 = inlined_call_operand.vmem [shape: f32[2,64,256], index: 0, kind: input, shape index: {}]
  %s1 = inlined_call_operand.hbm [shape: f32[48,64], index: 1, kind: input, shape index: {}]
  %s2 = inlined_call_operand.vmem [shape: f32[48,1], index: 2, kind: input, shape index: {}]
  %s3 = inlined_call_operand.hbm [shape: f32[48,1024], index: 3, kind: input, shape index: {}]
  %s4 = inlined_call_operand.vmem [shape: f32[48,1], index: 4, kind: input, shape index: {}]
  %s5 = inlined_call_operand.hbm [shape: f32[48,1024], index: 5, kind: input, shape index: {}]
  %s6 = inlined_call_operand.vmem [shape: f32[48,1], index: 6, kind: input, shape index: {}]
  %s7 = inlined_call_operand.hbm [shape: f32[48,48], index: 7, kind: input, shape index: {}]
  %s8 = inlined_call_operand.hbm [shape: f32[48,48], index: 8, kind: input, shape index: {}]
  %s9 = inlined_call_operand.vmem [shape: f32[256,256], index: 9, kind: input, shape index: {}]
  %s10 = inlined_call_operand.vmem [shape: f32[2,48,64], index: 10, kind: output, shape index: {}]
  %s11 = sld [smem:[#allocation0]]
  $region93: #{mlfnet_forward.2} parent=0
    _
  %s13 = ssub.s32 1, %s11
  %s14 = scalar_select 0, %s13, %s11
  $region1: #{mlfnet_forward.2} parent=0
    #allocation2 [shape = 'u8[24576]{0}', space=vmem, size = 0x6000, scoped, tag = 'input window, operand 1, single buffered']
    #allocation3 [shape = 's32[2]{0}', space=sflag, size = 0x8, scoped, tag = 'scoped memory for mlfnet_forward.2']
    #allocation4 [shape = 'u8[196608]{0}', space=vmem, size = 0x30000, scoped, tag = 'input window, operand 3, single buffered']
    #allocation5 [shape = 's32[1]{0}', space=sflag, size = 0x4, scoped, tag = 'scoped memory for mlfnet_forward.2']
    #allocation6 [shape = 'u8[196608]{0}', space=vmem, size = 0x30000, scoped, tag = 'input window, operand 5, single buffered']
    #allocation7 [shape = 'u8[24576]{0}', space=vmem, size = 0x6000, scoped, tag = 'input window, operand 7, single buffered']
    #allocation8 [shape = 's32[1]{0}', space=sflag, size = 0x4, scoped, tag = 'scoped memory for mlfnet_forward.2']
    #allocation9 [shape = 'u8[24576]{0}', space=vmem, size = 0x6000, scoped, tag = 'input window, operand 8, single buffered']
    %15 = vsyncpa [#allocation3], 0
    %16 = vsyncpa [#allocation5], 0
    %17 = vsyncpa [#allocation8], 0
    loop: start=0, step=1, limit=4
    $region2: #{mlfnet_forward.2} parent=1 // loop_pre_header
      _
    $region3: #{mlfnet_forward.2} parent=1 // loop_header
      %s19 = sphi 0, %s23
      %p20 = scmp.ge.s32.totalorder %s19, 4
      %s29 = sphi 0, %s31
      %s32 = sphi 0, %s29
      %s33 = sphi 0, %s32
      %s49 = sphi 0, %s33
      %s53 = sphi 0, %s53
      %s55 = sphi 0, %s53
      %s56 = sphi 0, %s55
      %s70 = sphi 0, %s56
      %s74 = sphi 0, %s74
      %s76 = sphi 0, %s74
      %s77 = sphi 0, %s76
      %s91 = sphi 0, %s77
      %s95 = sphi 0, %s95
      %s97 = sphi 0, %s95
      %s98 = sphi 0, %s97
      %s112 = sphi 0, %s98
      %s116 = sphi 0, %s116
      %s118 = sphi 0, %s116
      %s119 = sphi 0, %s118
      %s133 = sphi 0, %s119
      %s137 = sphi 0, %s137
      %s139 = sphi 0, %s137
      %s140 = sphi 0, %s139
      %s154 = sphi 0, %s140
      %s158 = sphi 0, %s158
      %s160 = sphi 0, %s158
      %s161 = sphi 0, %s160
      %s175 = sphi 0, %s161
      %s179 = sphi 0, %s179
      %s181 = sphi 0, %s179
      %s182 = sphi 0, %s181
      %s196 = sphi 0, %s182
      %s200 = sphi 0, %s200
      %s202 = sphi 0, %s200
      %s203 = sphi 0, %s202
      %s217 = sphi 0, %s203
      %s221 = sphi 0, %s221
      %s223 = sphi 0, %s221
      %s224 = sphi 0, %s223
      %s238 = sphi 0, %s224
      %s244 = sphi 0, %s246
      %s247 = sphi 0, %s244
      %s248 = sphi 0, %s247
      %s264 = sphi 0, %s248
    $region4: #{mlfnet_forward.2} parent=1 // loop_header_branch
      %22 = sbr.rel (%p20) target = $region8
    $region5: #{mlfnet_forward.2} parent=1 // loop_body
      %s24 = ssub.s32 %s19, 1
      %s25 = ssub.s32 %s19, 2
      %s26 = sadd.s32 %s19, 1
      %s27 = ssub.s32 %s19, %s26
      %p28 = scmp.eq.s32.totalorder %s27, 0
      %s30 = sadd.s32 %s29, 1
      %s31 = scalar_select %p28, %s29, %s30
      %p34 = pneg %p28
      %p35 = scmp.eq.s32.totalorder %s19, 1
      %p36 = por %p34, %p35
      %p37 = scmp.ne.s32.totalorder %s29, %s32
      %p38 = scmp.eq.s32.totalorder %s19, 0
      %p39 = por %p37, %p38
      %p40 = scmp.ne.s32.totalorder %s29, %s32
      %p41 = scmp.eq.s32.totalorder %s24, 1
      %p42 = por %p40, %p41
      %p43 = scmp.ne.s32.totalorder %s32, %s33
      %p44 = scmp.eq.s32.totalorder %s24, 0
      %p45 = por %p43, %p44
      %p46 = scmp.ne.s32.totalorder %s32, %s33
      %p47 = scmp.eq.s32.totalorder %s25, 1
      %p48 = por %p46, %p47
      %p50 = scmp.ne.s32.totalorder %s33, %s49
      %p51 = scmp.eq.s32.totalorder %s25, 0
      %p52 = por %p50, %p51
      %s54 = sadd.s32 %s53, 1
      %p57 = scmp.eq.s32.totalorder %s19, 1
      %p58 = scmp.ne.s32.totalorder %s53, %s55
      %p59 = scmp.eq.s32.totalorder %s19, 0
      %p60 = por %p58, %p59
      %p61 = scmp.ne.s32.totalorder %s53, %s55
      %p62 = scmp.eq.s32.totalorder %s24, 1
      %p63 = por %p61, %p62
      %p64 = scmp.ne.s32.totalorder %s55, %s56
      %p65 = scmp.eq.s32.totalorder %s24, 0
      %p66 = por %p64, %p65
      %p67 = scmp.ne.s32.totalorder %s55, %s56
      %p68 = scmp.eq.s32.totalorder %s25, 1
      %p69 = por %p67, %p68
      %p71 = scmp.ne.s32.totalorder %s56, %s70
      %p72 = scmp.eq.s32.totalorder %s25, 0
      %p73 = por %p71, %p72
      %s75 = sadd.s32 %s74, 1
      %p78 = scmp.eq.s32.totalorder %s19, 1
      %p79 = scmp.ne.s32.totalorder %s74, %s76
      %p80 = scmp.eq.s32.totalorder %s19, 0
      %p81 = por %p79, %p80
      %p82 = scmp.ne.s32.totalorder %s74, %s76
      %p83 = scmp.eq.s32.totalorder %s24, 1
      %p84 = por %p82, %p83
      %p85 = scmp.ne.s32.totalorder %s76, %s77
      %p86 = scmp.eq.s32.totalorder %s24, 0
      %p87 = por %p85, %p86
      %p88 = scmp.ne.s32.totalorder %s76, %s77
      %p89 = scmp.eq.s32.totalorder %s25, 1
      %p90 = por %p88, %p89
      %p92 = scmp.ne.s32.totalorder %s77, %s91
      %p93 = scmp.eq.s32.totalorder %s25, 0
      %p94 = por %p92, %p93
      %s96 = sadd.s32 %s95, 1
      %p99 = scmp.eq.s32.totalorder %s19, 1
      %p100 = scmp.ne.s32.totalorder %s95, %s97
      %p101 = scmp.eq.s32.totalorder %s19, 0
      %p102 = por %p100, %p101
      %p103 = scmp.ne.s32.totalorder %s95, %s97
      %p104 = scmp.eq.s32.totalorder %s24, 1
      %p105 = por %p103, %p104
      %p106 = scmp.ne.s32.totalorder %s97, %s98
      %p107 = scmp.eq.s32.totalorder %s24, 0
      %p108 = por %p106, %p107
      %p109 = scmp.ne.s32.totalorder %s97, %s98
      %p110 = scmp.eq.s32.totalorder %s25, 1
      %p111 = por %p109, %p110
      %p113 = scmp.ne.s32.totalorder %s98, %s112
      %p114 = scmp.eq.s32.totalorder %s25, 0
      %p115 = por %p113, %p114
      %s117 = sadd.s32 %s116, 1
      %p120 = scmp.eq.s32.totalorder %s19, 1
      %p121 = scmp.ne.s32.totalorder %s116, %s118
      %p122 = scmp.eq.s32.totalorder %s19, 0
      %p123 = por %p121, %p122
      %p124 = scmp.ne.s32.totalorder %s116, %s118
      %p125 = scmp.eq.s32.totalorder %s24, 1
      %p126 = por %p124, %p125
      %p127 = scmp.ne.s32.totalorder %s118, %s119
      %p128 = scmp.eq.s32.totalorder %s24, 0
      %p129 = por %p127, %p128
      %p130 = scmp.ne.s32.totalorder %s118, %s119
      %p131 = scmp.eq.s32.totalorder %s25, 1
      %p132 = por %p130, %p131
      %p134 = scmp.ne.s32.totalorder %s119, %s133
      %p135 = scmp.eq.s32.totalorder %s25, 0
      %p136 = por %p134, %p135
      %s138 = sadd.s32 %s137, 1
      %p141 = scmp.eq.s32.totalorder %s19, 1
      %p142 = scmp.ne.s32.totalorder %s137, %s139
      %p143 = scmp.eq.s32.totalorder %s19, 0
      %p144 = por %p142, %p143
      %p145 = scmp.ne.s32.totalorder %s137, %s139
      %p146 = scmp.eq.s32.totalorder %s24, 1
      %p147 = por %p145, %p146
      %p148 = scmp.ne.s32.totalorder %s139, %s140
      %p149 = scmp.eq.s32.totalorder %s24, 0
      %p150 = por %p148, %p149
      %p151 = scmp.ne.s32.totalorder %s139, %s140
      %p152 = scmp.eq.s32.totalorder %s25, 1
      %p153 = por %p151, %p152
      %p155 = scmp.ne.s32.totalorder %s140, %s154
      %p156 = scmp.eq.s32.totalorder %s25, 0
      %p157 = por %p155, %p156
      %s159 = sadd.s32 %s158, 1
      %p162 = scmp.eq.s32.totalorder %s19, 1
      %p163 = scmp.ne.s32.totalorder %s158, %s160
      %p164 = scmp.eq.s32.totalorder %s19, 0
      %p165 = por %p163, %p164
      %p166 = scmp.ne.s32.totalorder %s158, %s160
      %p167 = scmp.eq.s32.totalorder %s24, 1
      %p168 = por %p166, %p167
      %p169 = scmp.ne.s32.totalorder %s160, %s161
      %p170 = scmp.eq.s32.totalorder %s24, 0
      %p171 = por %p169, %p170
      %p172 = scmp.ne.s32.totalorder %s160, %s161
      %p173 = scmp.eq.s32.totalorder %s25, 1
      %p174 = por %p172, %p173
      %p176 = scmp.ne.s32.totalorder %s161, %s175
      %p177 = scmp.eq.s32.totalorder %s25, 0
      %p178 = por %p176, %p177
      %s180 = sadd.s32 %s179, 1
      %p183 = scmp.eq.s32.totalorder %s19, 1
      %p184 = scmp.ne.s32.totalorder %s179, %s181
      %p185 = scmp.eq.s32.totalorder %s19, 0
      %p186 = por %p184, %p185
      %p187 = scmp.ne.s32.totalorder %s179, %s181
      %p188 = scmp.eq.s32.totalorder %s24, 1
      %p189 = por %p187, %p188
      %p190 = scmp.ne.s32.totalorder %s181, %s182
      %p191 = scmp.eq.s32.totalorder %s24, 0
      %p192 = por %p190, %p191
      %p193 = scmp.ne.s32.totalorder %s181, %s182
      %p194 = scmp.eq.s32.totalorder %s25, 1
      %p195 = por %p193, %p194
      %p197 = scmp.ne.s32.totalorder %s182, %s196
      %p198 = scmp.eq.s32.totalorder %s25, 0
      %p199 = por %p197, %p198
      %s201 = sadd.s32 %s200, 1
      %p204 = scmp.eq.s32.totalorder %s19, 1
      %p205 = scmp.ne.s32.totalorder %s200, %s202
      %p206 = scmp.eq.s32.totalorder %s19, 0
      %p207 = por %p205, %p206
      %p208 = scmp.ne.s32.totalorder %s200, %s202
      %p209 = scmp.eq.s32.totalorder %s24, 1
      %p210 = por %p208, %p209
      %p211 = scmp.ne.s32.totalorder %s202, %s203
      %p212 = scmp.eq.s32.totalorder %s24, 0
      %p213 = por %p211, %p212
      %p214 = scmp.ne.s32.totalorder %s202, %s203
      %p215 = scmp.eq.s32.totalorder %s25, 1
      %p216 = por %p214, %p215
      %p218 = scmp.ne.s32.totalorder %s203, %s217
      %p219 = scmp.eq.s32.totalorder %s25, 0
      %p220 = por %p218, %p219
      %s222 = sadd.s32 %s221, 1
      %p225 = scmp.eq.s32.totalorder %s19, 1
      %p226 = scmp.ne.s32.totalorder %s221, %s223
      %p227 = scmp.eq.s32.totalorder %s19, 0
      %p228 = por %p226, %p227
      %p229 = scmp.ne.s32.totalorder %s221, %s223
      %p230 = scmp.eq.s32.totalorder %s24, 1
      %p231 = por %p229, %p230
      %p232 = scmp.ne.s32.totalorder %s223, %s224
      %p233 = scmp.eq.s32.totalorder %s24, 0
      %p234 = por %p232, %p233
      %p235 = scmp.ne.s32.totalorder %s223, %s224
      %p236 = scmp.eq.s32.totalorder %s25, 1
      %p237 = por %p235, %p236
      %p239 = scmp.ne.s32.totalorder %s224, %s238
      %p240 = scmp.eq.s32.totalorder %s25, 0
      %p241 = por %p239, %p240
      %s242 = ssub.s32 %s19, %s26
      %p243 = scmp.eq.s32.totalorder %s242, 0
      %s245 = sadd.s32 %s244, 1
      %s246 = scalar_select %p243, %s244, %s245
      %p249 = pneg %p243
      %p250 = scmp.eq.s32.totalorder %s19, 1
      %p251 = por %p249, %p250
      %p252 = scmp.ne.s32.totalorder %s244, %s247
      %p253 = scmp.eq.s32.totalorder %s19, 0
      %p254 = por %p252, %p253
      %p255 = scmp.ne.s32.totalorder %s244, %s247
      %p256 = scmp.eq.s32.totalorder %s24, 1
      %p257 = por %p255, %p256
      %p258 = scmp.ne.s32.totalorder %s247, %s248
      %p259 = scmp.eq.s32.totalorder %s24, 0
      %p260 = por %p258, %p259
      %p261 = scmp.ne.s32.totalorder %s247, %s248
      %p262 = scmp.eq.s32.totalorder %s25, 1
      %p263 = por %p261, %p262
      %p265 = scmp.ne.s32.totalorder %s248, %s264
      %p266 = scmp.eq.s32.totalorder %s25, 0
      %p267 = por %p265, %p266
      %p268 = scmp.le.s32.totalorder 1, %s19
      %p269 = scmp.lt.s32.totalorder %s19, 3
      %p270 = pnand %p268, %p269
      %p271 = pneg %p270
      // Predicated region
      $region9: #{mlfnet_forward.2} parent=5 // pred_check
        _
      $region10: #{mlfnet_forward.2} parent=5 // pred_check_branch
        %273 = sbr.rel (%p270) target = $region12
      $region11: #{mlfnet_forward.2} parent=5 // pred_region
        %s274 = ssub.s32 %s19, 1
        // Predicated region
        $region13: #{mlfnet_forward.2} parent=11 // pred_check
          %p275 = pneg %p66
        $region14: #{mlfnet_forward.2} parent=11 // pred_check_branch
          %277 = sbr.rel (%p275) target = $region16
        $region15: #{mlfnet_forward.2} parent=11 // pred_region
          %s279 = ssub.s32 768, 768
          %280 = vsyncadd [#allocation3], %s279
          %s281 = sshll.u32 [#allocation2], 4
          %s282 = int_to_ptr.vmem [resolvable:$true] %s281
          %287 = dma.hbm_to_vmem [thread:$0]  %s1, 768, %s282, [#allocation3], 128, 128, 8
        $region16: #{mlfnet_forward.2} parent=11 // pred_fallthru
          _
        // Predicated region
        $region17: #{mlfnet_forward.2} parent=11 // pred_check
          %p288 = pneg %p87
        $region18: #{mlfnet_forward.2} parent=11 // pred_check_branch
          %290 = sbr.rel (%p288) target = $region20
        $region19: #{mlfnet_forward.2} parent=11 // pred_region
          _
        $region20: #{mlfnet_forward.2} parent=11 // pred_fallthru
          _
        // Predicated region
        $region21: #{mlfnet_forward.2} parent=11 // pred_check
          %p291 = pneg %p108
        $region22: #{mlfnet_forward.2} parent=11 // pred_check_branch
          %293 = sbr.rel (%p291) target = $region24
        $region23: #{mlfnet_forward.2} parent=11 // pred_region
          %s295 = ssub.s32 6144, 6144
          %296 = vsyncadd [#allocation5], %s295
          %s297 = sshll.u32 [#allocation4], 4
          %s298 = int_to_ptr.vmem [resolvable:$true] %s297
          %303 = dma.hbm_to_vmem [thread:$0]  %s3, 6144, %s298, [#allocation5], 1024, 1024, 64
        $region24: #{mlfnet_forward.2} parent=11 // pred_fallthru
          _
        // Predicated region
        $region25: #{mlfnet_forward.2} parent=11 // pred_check
          %p304 = pneg %p129
        $region26: #{mlfnet_forward.2} parent=11 // pred_check_branch
          %306 = sbr.rel (%p304) target = $region28
        $region27: #{mlfnet_forward.2} parent=11 // pred_region
          _
        $region28: #{mlfnet_forward.2} parent=11 // pred_fallthru
          _
        // Predicated region
        $region29: #{mlfnet_forward.2} parent=11 // pred_check
          %p307 = pneg %p150
        $region30: #{mlfnet_forward.2} parent=11 // pred_check_branch
          %309 = sbr.rel (%p307) target = $region32
        $region31: #{mlfnet_forward.2} parent=11 // pred_region
          %s311 = ssub.s32 6144, 6144
          %312 = vsyncadd [#allocation5], %s311
          %s313 = sshll.u32 [#allocation6], 4
          %s314 = int_to_ptr.vmem [resolvable:$true] %s313
          %319 = dma.hbm_to_vmem [thread:$0]  %s5, 6144, %s314, [#allocation5], 1024, 1024, 64
        $region32: #{mlfnet_forward.2} parent=11 // pred_fallthru
          _
        // Predicated region
        $region33: #{mlfnet_forward.2} parent=11 // pred_check
          %p320 = pneg %p171
        $region34: #{mlfnet_forward.2} parent=11 // pred_check_branch
          %322 = sbr.rel (%p320) target = $region36
        $region35: #{mlfnet_forward.2} parent=11 // pred_region
          _
        $region36: #{mlfnet_forward.2} parent=11 // pred_fallthru
          _
        // Predicated region
        $region37: #{mlfnet_forward.2} parent=11 // pred_check
          %p323 = pneg %p192
        $region38: #{mlfnet_forward.2} parent=11 // pred_check_branch
          %325 = sbr.rel (%p323) target = $region40
        $region39: #{mlfnet_forward.2} parent=11 // pred_region
          %s327 = ssub.s32 768, 768
          %328 = vsyncadd [#allocation8], %s327
          %s329 = sshll.u32 [#allocation7], 4
          %s330 = int_to_ptr.vmem [resolvable:$true] %s329
          %335 = dma.hbm_to_vmem [thread:$0]  %s7, 768, %s330, [#allocation8], 128, 128, 8
        $region40: #{mlfnet_forward.2} parent=11 // pred_fallthru
          _
        // Predicated region
        $region41: #{mlfnet_forward.2} parent=11 // pred_check
          %p336 = pneg %p213
        $region42: #{mlfnet_forward.2} parent=11 // pred_check_branch
          %338 = sbr.rel (%p336) target = $region44
        $region43: #{mlfnet_forward.2} parent=11 // pred_region
          %s340 = ssub.s32 768, 768
          %341 = vsyncadd [#allocation8], %s340
          %s342 = sshll.u32 [#allocation9], 4
          %s343 = int_to_ptr.vmem [resolvable:$true] %s342
          %348 = dma.hbm_to_vmem [thread:$0]  %s8, 768, %s343, [#allocation8], 128, 128, 8
        $region44: #{mlfnet_forward.2} parent=11 // pred_fallthru
          _
        // Predicated region
        $region45: #{mlfnet_forward.2} parent=11 // pred_check
          %p349 = pneg %p234
        $region46: #{mlfnet_forward.2} parent=11 // pred_check_branch
          %351 = sbr.rel (%p349) target = $region48
        $region47: #{mlfnet_forward.2} parent=11 // pred_region
          _
        $region48: #{mlfnet_forward.2} parent=11 // pred_fallthru
          _
      $region12: #{mlfnet_forward.2} parent=5 // pred_fallthru
        _
      %p352 = scmp.lt.s32.totalorder %s19, 2
      // Predicated region
      $region49: #{mlfnet_forward.2} parent=5 // pred_check
        %p353 = pneg %p352
      $region50: #{mlfnet_forward.2} parent=5 // pred_check_branch
        %355 = sbr.rel (%p353) target = $region52
      $region51: #{mlfnet_forward.2} parent=5 // pred_region
        // Predicated region
        $region53: #{mlfnet_forward.2} parent=51 // pred_check
          %p356 = pneg %p39
        $region54: #{mlfnet_forward.2} parent=51 // pred_check_branch
          %358 = sbr.rel (%p356) target = $region56
        $region55: #{mlfnet_forward.2} parent=51 // pred_region
          %p359 = scmp.lt.s32.totalorder %s19, 1
          %s360 = scalar_select %p359, %s19, 1
          %s361 = smul.addr %s360, 16
          %s362 = smul.addr %s361, 8
          %s363 = scalar_lea.vmem %s0, %s362
        $region56: #{mlfnet_forward.2} parent=51 // pred_fallthru
          _
      $region52: #{mlfnet_forward.2} parent=5 // pred_fallthru
        _
      %p364 = scmp.le.s32.totalorder 1, %s19
      %p365 = scmp.lt.s32.totalorder %s19, 3
      %p366 = pnand %p364, %p365
      %p367 = pneg %p366
      // Predicated region
      $region57: #{mlfnet_forward.2} parent=5 // pred_check
        _
      $region58: #{mlfnet_forward.2} parent=5 // pred_check_branch
        %369 = sbr.rel (%p366) target = $region60
      $region59: #{mlfnet_forward.2} parent=5 // pred_region
        %s370 = ssub.s32 %s19, 1
        // Predicated region
        $region61: #{mlfnet_forward.2} parent=59 // pred_check
          %p371 = pneg %p66
        $region62: #{mlfnet_forward.2} parent=59 // pred_check_branch
          %373 = sbr.rel (%p371) target = $region64
        $region63: #{mlfnet_forward.2} parent=59 // pred_region
          %374 = dma.done [#allocation3], 768
        $region64: #{mlfnet_forward.2} parent=59 // pred_fallthru
          _
        // Predicated region
        $region65: #{mlfnet_forward.2} parent=59 // pred_check
          %p375 = pneg %p108
        $region66: #{mlfnet_forward.2} parent=59 // pred_check_branch
          %377 = sbr.rel (%p375) target = $region68
        $region67: #{mlfnet_forward.2} parent=59 // pred_region
          %378 = dma.done [#allocation5], 6144
        $region68: #{mlfnet_forward.2} parent=59 // pred_fallthru
          _
        // Predicated region
        $region69: #{mlfnet_forward.2} parent=59 // pred_check
          %p379 = pneg %p150
        $region70: #{mlfnet_forward.2} parent=59 // pred_check_branch
          %381 = sbr.rel (%p379) target = $region72
        $region71: #{mlfnet_forward.2} parent=59 // pred_region
          %382 = dma.done [#allocation5], 6144
        $region72: #{mlfnet_forward.2} parent=59 // pred_fallthru
          _
        // Predicated region
        $region73: #{mlfnet_forward.2} parent=59 // pred_check
          %p383 = pneg %p192
        $region74: #{mlfnet_forward.2} parent=59 // pred_check_branch
          %385 = sbr.rel (%p383) target = $region76
        $region75: #{mlfnet_forward.2} parent=59 // pred_region
          %386 = dma.done [#allocation8], 768
        $region76: #{mlfnet_forward.2} parent=59 // pred_fallthru
          _
        // Predicated region
        $region77: #{mlfnet_forward.2} parent=59 // pred_check
          %p387 = pneg %p213
        $region78: #{mlfnet_forward.2} parent=59 // pred_check_branch
          %389 = sbr.rel (%p387) target = $region80
        $region79: #{mlfnet_forward.2} parent=59 // pred_region
          %390 = dma.done [#allocation8], 768
        $region80: #{mlfnet_forward.2} parent=59 // pred_fallthru
          _
        %p391 = scmp.lt.s32.totalorder %s24, 1
        %s392 = scalar_select %p391, %s24, 1
        %s393 = smul.addr %s392, 16
        %s394 = smul.addr %s393, 8
        %s395 = scalar_lea.vmem %s0, %s394
        %p396 = pneg %p45
        %p397 = pneg %p42
        %p398 = pneg %p66
        %p399 = pneg %p63
        %p400 = pneg %p87
        %p401 = pneg %p84
        %p402 = pneg %p108
        %p403 = pneg %p105
        %p404 = pneg %p129
        %p405 = pneg %p126
        %p406 = pneg %p150
        %p407 = pneg %p147
        %p408 = pneg %p171
        %p409 = pneg %p168
        %p410 = pneg %p192
        %p411 = pneg %p189
        %p412 = pneg %p213
        %p413 = pneg %p210
        %p414 = pneg %p234
        %p415 = pneg %p231
        %p416 = pneg %p260
        %p417 = pneg %p257
        %p418 = scmp.lt.s32.totalorder %s24, 1
        %s419 = scalar_select %p418, %s24, 1
        %s420 = smul.addr %s419, 6
        %s421 = smul.addr %s420, 8
        %s422 = scalar_lea.vmem %s10, %s421
        %p423 = scmp.lt.s32.totalorder %s24, 1
        %s424 = scalar_select %p423, %s24, 1
        %s425 = smul.addr %s424, 16
        %s426 = smul.addr %s425, 8
        %s427 = scalar_lea.vmem %s0, %s426
        %p428 = scmp.lt.s32.totalorder %s24, 1
        %s429 = scalar_select %p428, %s24, 1
        %s430 = smul.addr %s429, 6
        %s431 = smul.addr %s430, 8
        %s432 = scalar_lea.vmem %s10, %s431
        %v433 = vld [vmem:[#allocation2] sm:$0xff]
        %v434 = vld [vmem:[#allocation2 + $0x8] sm:$0xff]
        %v435 = vld [vmem:[#allocation2 + $0x10] sm:$0xff]
        %v436 = vld [vmem:[#allocation2 + $0x18] sm:$0xff]
        %v437 = vld [vmem:[#allocation2 + $0x20] sm:$0xff]
        %v438 = vld [vmem:[#allocation2 + $0x28] sm:$0xff]
        %v439 = vld [vmem:[%s427] sm:$0xff]
        %v440 = vld [vmem:[%s427 + $0x8] sm:$0xff]
        %v441 = vld [vmem:[%s427 + $0x10] sm:$0xff]
        %v442 = vld [vmem:[%s427 + $0x18] sm:$0xff]
        %v443 = vld [vmem:[%s427 + $0x20] sm:$0xff]
        %v444 = vld [vmem:[%s427 + $0x28] sm:$0xff]
        %v445 = vld [vmem:[%s427 + $0x30] sm:$0xff]
        %v446 = vld [vmem:[%s427 + $0x38] sm:$0xff]
        %v447 = vld [vmem:[%s427 + $0x40] sm:$0xff]
        %v448 = vld [vmem:[%s427 + $0x48] sm:$0xff]
        %v449 = vld [vmem:[%s427 + $0x50] sm:$0xff]
        %v450 = vld [vmem:[%s427 + $0x58] sm:$0xff]
        %v451 = vld [vmem:[%s427 + $0x60] sm:$0xff]
        %v452 = vld [vmem:[%s427 + $0x68] sm:$0xff]
        %v453 = vld [vmem:[%s427 + $0x70] sm:$0xff]
        %v454 = vld [vmem:[%s427 + $0x78] sm:$0xff]
        %v455 = vld [vmem:[%s2] sm:$0xff]
        %v456 = vld [vmem:[%s2 + $0x8] sm:$0xff]
        %v457 = vld [vmem:[%s2 + $0x10] sm:$0xff]
        %v458 = vld [vmem:[%s2 + $0x18] sm:$0xff]
        %v459 = vld [vmem:[%s2 + $0x20] sm:$0xff]
        %v460 = vld [vmem:[%s2 + $0x28] sm:$0xff]
        %462 = vset.pattern.permute.xlu0 0
        %463 = vperm.xlu0 %462, %v455
        %v464 = vpop.permute.xlu0 %463
        %467 = vset.pattern.permute.xlu0 0
        %468 = vperm.xlu0 %467, %v456
        %v469 = vpop.permute.xlu0 %468
        %472 = vset.pattern.permute.xlu0 0
        %473 = vperm.xlu0 %472, %v457
        %v474 = vpop.permute.xlu0 %473
        %477 = vset.pattern.permute.xlu0 0
        %478 = vperm.xlu0 %477, %v458
        %v479 = vpop.permute.xlu0 %478
        %482 = vset.pattern.permute.xlu0 0
        %483 = vperm.xlu0 %482, %v459
        %v484 = vpop.permute.xlu0 %483
        %487 = vset.pattern.permute.xlu0 0
        %488 = vperm.xlu0 %487, %v460
        %v489 = vpop.permute.xlu0 %488
        %vm491 = vcmask 523264
        %v493 = vsel %vm491, %v433, 0
        %v496 = vsel %vm491, %v434, 0
        %v499 = vsel %vm491, %v435, 0
        %v502 = vsel %vm491, %v436, 0
        %v505 = vsel %vm491, %v437, 0
        %v508 = vsel %vm491, %v438, 0
        %510 = vmatprep.subr.mxu0 %v440
        %511 = vmatpush1.msra.mxu0 %v439
        %512 = vmatprep.subr.mxu0 %v442
        %513 = vmatpush1.msra.mxu0 %v441
        %514 = vmatprep.subr.mxu0 %v444
        %515 = vmatpush1.msra.mxu0 %v443
        %516 = vmatprep.subr.mxu0 %v446
        %517 = vmatpush1.msra.mxu0 %v445
        %518 = vmatprep.subr.mxu0 %v448
        %519 = vmatpush1.msra.mxu0 %v447
        %520 = vmatprep.subr.mxu0 %v450
        %521 = vmatpush1.msra.mxu0 %v449
        %522 = vmatprep.subr.mxu0 %v452
        %523 = vmatpush1.msra.mxu0 %v451
        %524 = vmatprep.subr.mxu0 %v454
        %525 = vmatpush1.msra.mxu0 %v453
        %526 = vmatprep.subr.mxu0 0.0
        %527 = vmatpush1.msra.mxu0 0.0
        %528 = vmatprep.subr.mxu0 0.0
        %529 = vmatpush1.msra.mxu0 0.0
        %530 = vmatprep.subr.mxu0 0.0
        %531 = vmatpush1.msra.mxu0 0.0
        %532 = vmatprep.subr.mxu0 0.0
        %533 = vmatpush1.msra.mxu0 0.0
        %534 = vmatprep.subr.mxu0 0.0
        %535 = vmatpush1.msra.mxu0 0.0
        %536 = vmatprep.subr.mxu0 0.0
        %537 = vmatpush1.msra.mxu0 0.0
        %538 = vmatprep.subr.mxu0 0.0
        %539 = vmatpush1.msra.mxu0 0.0
        %540 = vmatprep.subr.mxu0 0.0
        %541 = vmatpush1.msra.mxu0 0.0
        %542 = vmatprep.subr.mxu0 0.0
        %543 = vmatpush1.msra.mxu0 0.0
        %544 = vmatprep.subr.mxu0 0.0
        %545 = vmatpush1.msra.mxu0 0.0
        %546 = vmatprep.subr.mxu0 0.0
        %547 = vmatpush1.msra.mxu0 0.0
        %548 = vmatprep.subr.mxu0 0.0
        %549 = vmatpush1.msra.mxu0 0.0
        %550 = vmatprep.subr.mxu0 0.0
        %551 = vmatpush1.msra.mxu0 0.0
        %552 = vmatprep.subr.mxu0 0.0
        %553 = vmatpush1.msra.mxu0 0.0
        %554 = vmatprep.subr.mxu0 0.0
        %555 = vmatpush1.msra.mxu0 0.0
        %556 = vmatprep.subr.mxu0 0.0
        %557 = vmatpush1.msra.mxu0 0.0
        %558 = vmatprep.subr.mxu0 0.0
        %559 = vmatpush1.msra.mxu0 0.0
        %560 = vmatprep.subr.mxu0 0.0
        %561 = vmatpush1.msra.mxu0 0.0
        %562 = vmatprep.subr.mxu0 0.0
        %563 = vmatpush1.msra.mxu0 0.0
        %564 = vmatprep.subr.mxu0 0.0
        %565 = vmatpush1.msra.mxu0 0.0
        %566 = vmatprep.subr.mxu0 0.0
        %567 = vmatpush1.msra.mxu0 0.0
        %568 = vmatprep.subr.mxu0 0.0
        %569 = vmatpush1.msra.mxu0 0.0
        %570 = vmatprep.subr.mxu0 0.0
        %571 = vmatpush1.msra.mxu0 0.0
        %572 = vmatprep.subr.mxu0 0.0
        %573 = vmatpush1.msra.mxu0 0.0
        %574 = vmatprep.mubr.f32.mxu0 0.0
        %575 = vmatmul.mubr.f32.gmra.mrb[0].mxu0 %v493
        %v576 = vpop.f32.mrb[0].mxu0
        %v577 = vadd.f32 %v464, %v576
        %v578 = vpop.f32.mrb[0].mxu0
        %v579 = vadd.f32 %v464, %v578
        %580 = vmatprep.mubr.f32.mxu0 0.0
        %581 = vmatmul.mubr.f32.gmra.mrb[0].mxu0 %v496
        %v582 = vpop.f32.mrb[0].mxu0
        %v583 = vadd.f32 %v469, %v582
        %v584 = vpop.f32.mrb[0].mxu0
        %v585 = vadd.f32 %v469, %v584
        %586 = vmatprep.mubr.f32.mxu0 0.0
        %587 = vmatmul.mubr.f32.gmra.mrb[0].mxu0 %v499
        %v588 = vpop.f32.mrb[0].mxu0
        %v589 = vadd.f32 %v474, %v588
        %v590 = vpop.f32.mrb[0].mxu0
        %v591 = vadd.f32 %v474, %v590
        %592 = vmatprep.mubr.f32.mxu0 0.0
        %593 = vmatmul.mubr.f32.gmra.mrb[0].mxu0 %v502
        %v594 = vpop.f32.mrb[0].mxu0
        %v595 = vadd.f32 %v479, %v594
        %v596 = vpop.f32.mrb[0].mxu0
        %v597 = vadd.f32 %v479, %v596
        %598 = vmatprep.mubr.f32.mxu0 0.0
        %599 = vmatmul.mubr.f32.gmra.mrb[0].mxu0 %v505
        %v600 = vpop.f32.mrb[0].mxu0
        %v601 = vadd.f32 %v484, %v600
        %v602 = vpop.f32.mrb[0].mxu0
        %v603 = vadd.f32 %v484, %v602
        %604 = vmatprep.mubr.f32.mxu0 0.0
        %605 = vmatmul.mubr.f32.gmra.mrb[0].mxu0 %v508
        %v606 = vpop.f32.mrb[0].mxu0
        %v607 = vadd.f32 %v489, %v606
        %v608 = vpop.f32.mrb[0].mxu0
        %v609 = vadd.f32 %v489, %v608
        %610 = vdwg.mxu0
        %v611 = vmax.f32 %v577, 0.0
        %v612 = vmax.f32 %v579, 0.0
        %v613 = vmax.f32 %v583, 0.0
        %v614 = vmax.f32 %v585, 0.0
        %v615 = vmax.f32 %v589, 0.0
        %v616 = vmax.f32 %v591, 0.0
        %v617 = vmax.f32 %v595, 0.0
        %v618 = vmax.f32 %v597, 0.0
        %v619 = vmax.f32 %v601, 0.0
        %v620 = vmax.f32 %v603, 0.0
        %v621 = vmax.f32 %v607, 0.0
        %v622 = vmax.f32 %v609, 0.0
        %v623 = vadd.f32 %v611, %v615
        %v624 = vadd.f32 %v612, %v616
        %v625 = vadd.f32 %v613, %v617
        %v626 = vadd.f32 %v614, %v618
        %v627 = vadd.f32 %v623, %v619
        %v628 = vadd.f32 %v624, %v620
        %v629 = vadd.f32 %v625, %v621
        %v630 = vadd.f32 %v626, %v622
        %635 = vrot.lane.b32.xlu0 %v627, 31
        %v636 = vpop.permute.xlu0 %635
        %637 = vrot.lane.b32.xlu0 %v628, 31
        %v638 = vpop.permute.xlu0 %637
        %639 = vrot.lane.b32.xlu0 %v629, 31
        %v640 = vpop.permute.xlu0 %639
        %641 = vrot.lane.b32.xlu0 %v630, 31
        %v642 = vpop.permute.xlu0 %641
        %vm643 = vcmask 252928
        %v644 = vsel %vm643, %v636, %v638
        %v645 = vsel %vm643, %v640, %v642
        %v652 = vsel %vm643, 0.0, %v636
        %v653 = vsel %vm643, 0.0, %v640
        %v654 = vsel %vm643, %v638, 0.0
        %v655 = vsel %vm643, %v642, 0.0
        %660 = vrot.lane.b32.xlu0 %v652, 127
        %v661 = vpop.permute.xlu0 %660
        %662 = vrot.lane.b32.xlu0 %v644, 127
        %v663 = vpop.permute.xlu0 %662
        %664 = vrot.lane.b32.xlu0 %v654, 127
        %v665 = vpop.permute.xlu0 %664
        %666 = vrot.lane.b32.xlu0 %v653, 127
        %v667 = vpop.permute.xlu0 %666
        %668 = vrot.lane.b32.xlu0 %v645, 127
        %v669 = vpop.permute.xlu0 %668
        %670 = vrot.lane.b32.xlu0 %v655, 127
        %v671 = vpop.permute.xlu0 %670
        %vm672 = vcmask 1039360
        %v673 = vsel %vm672, %v661, %v663
        %v674 = vsel %vm672, %v663, %v665
        %v675 = vsel %vm672, %v667, %v669
        %v676 = vsel %vm672, %v669, %v671
        %681 = vrot.lane.b32.xlu0 %v652, 126
        %v682 = vpop.permute.xlu0 %681
        %683 = vrot.lane.b32.xlu0 %v644, 126
        %v684 = vpop.permute.xlu0 %683
        %685 = vrot.lane.b32.xlu0 %v654, 126
        %v686 = vpop.permute.xlu0 %685
        %687 = vrot.lane.b32.xlu0 %v653, 126
        %v688 = vpop.permute.xlu0 %687
        %689 = vrot.lane.b32.xlu0 %v645, 126
        %v690 = vpop.permute.xlu0 %689
        %691 = vrot.lane.b32.xlu0 %v655, 126
        %v692 = vpop.permute.xlu0 %691
        %vm693 = vcmask 1031168
        %v694 = vsel %vm693, %v682, %v684
        %v695 = vsel %vm693, %v684, %v686
        %v696 = vsel %vm693, %v688, %v690
        %v697 = vsel %vm693, %v690, %v692
        %702 = vrot.lane.b32.xlu0 %v652, 125
        %v703 = vpop.permute.xlu0 %702
        %704 = vrot.lane.b32.xlu0 %v644, 125
        %v705 = vpop.permute.xlu0 %704
        %706 = vrot.lane.b32.xlu0 %v654, 125
        %v707 = vpop.permute.xlu0 %706
        %708 = vrot.lane.b32.xlu0 %v653, 125
        %v709 = vpop.permute.xlu0 %708
        %710 = vrot.lane.b32.xlu0 %v645, 125
        %v711 = vpop.permute.xlu0 %710
        %712 = vrot.lane.b32.xlu0 %v655, 125
        %v713 = vpop.permute.xlu0 %712
        %vm714 = vcmask 1022976
        %v715 = vsel %vm714, %v703, %v705
        %v716 = vsel %vm714, %v705, %v707
        %v717 = vsel %vm714, %v709, %v711
        %v718 = vsel %vm714, %v711, %v713
        %723 = vrot.lane.b32.xlu0 %v652, 124
        %v724 = vpop.permute.xlu0 %723
        %725 = vrot.lane.b32.xlu0 %v644, 124
        %v726 = vpop.permute.xlu0 %725
        %727 = vrot.lane.b32.xlu0 %v654, 124
        %v728 = vpop.permute.xlu0 %727
        %729 = vrot.lane.b32.xlu0 %v653, 124
        %v730 = vpop.permute.xlu0 %729
        %731 = vrot.lane.b32.xlu0 %v645, 124
        %v732 = vpop.permute.xlu0 %731
        %733 = vrot.lane.b32.xlu0 %v655, 124
        %v734 = vpop.permute.xlu0 %733
        %vm735 = vcmask 1014784
        %v736 = vsel %vm735, %v724, %v726
        %v737 = vsel %vm735, %v726, %v728
        %v738 = vsel %vm735, %v730, %v732
        %v739 = vsel %vm735, %v732, %v734
        %744 = vrot.lane.b32.xlu0 %v652, 123
        %v745 = vpop.permute.xlu0 %744
        %746 = vrot.lane.b32.xlu0 %v644, 123
        %v747 = vpop.permute.xlu0 %746
        %748 = vrot.lane.b32.xlu0 %v654, 123
        %v749 = vpop.permute.xlu0 %748
        %750 = vrot.lane.b32.xlu0 %v653, 123
        %v751 = vpop.permute.xlu0 %750
        %752 = vrot.lane.b32.xlu0 %v645, 123
        %v753 = vpop.permute.xlu0 %752
        %754 = vrot.lane.b32.xlu0 %v655, 123
        %v755 = vpop.permute.xlu0 %754
        %vm756 = vcmask 1006592
        %v757 = vsel %vm756, %v745, %v747
        %v758 = vsel %vm756, %v747, %v749
        %v759 = vsel %vm756, %v751, %v753
        %v760 = vsel %vm756, %v753, %v755
        %765 = vrot.lane.b32.xlu0 %v652, 122
        %v766 = vpop.permute.xlu0 %765
        %767 = vrot.lane.b32.xlu0 %v644, 122
        %v768 = vpop.permute.xlu0 %767
        %769 = vrot.lane.b32.xlu0 %v654, 122
        %v770 = vpop.permute.xlu0 %769
        %771 = vrot.lane.b32.xlu0 %v653, 122
        %v772 = vpop.permute.xlu0 %771
        %773 = vrot.lane.b32.xlu0 %v645, 122
        %v774 = vpop.permute.xlu0 %773
        %775 = vrot.lane.b32.xlu0 %v655, 122
        %v776 = vpop.permute.xlu0 %775
        %vm777 = vcmask 998400
        %v778 = vsel %vm777, %v766, %v768
        %v779 = vsel %vm777, %v768, %v770
        %v780 = vsel %vm777, %v772, %v774
        %v781 = vsel %vm777, %v774, %v776
        %786 = vrot.lane.b32.xlu0 %v652, 121
        %v787 = vpop.permute.xlu0 %786
        %788 = vrot.lane.b32.xlu0 %v644, 121
        %v789 = vpop.permute.xlu0 %788
        %790 = vrot.lane.b32.xlu0 %v654, 121
        %v791 = vpop.permute.xlu0 %790
        %792 = vrot.lane.b32.xlu0 %v653, 121
        %v793 = vpop.permute.xlu0 %792
        %794 = vrot.lane.b32.xlu0 %v645, 121
        %v795 = vpop.permute.xlu0 %794
        %796 = vrot.lane.b32.xlu0 %v655, 121
        %v797 = vpop.permute.xlu0 %796
        %vm798 = vcmask 990208
        %v799 = vsel %vm798, %v787, %v789
        %v800 = vsel %vm798, %v789, %v791
        %v801 = vsel %vm798, %v793, %v795
        %v802 = vsel %vm798, %v795, %v797
        %807 = vrot.lane.b32.xlu0 %v652, 120
        %v808 = vpop.permute.xlu0 %807
        %809 = vrot.lane.b32.xlu0 %v644, 120
        %v810 = vpop.permute.xlu0 %809
        %811 = vrot.lane.b32.xlu0 %v654, 120
        %v812 = vpop.permute.xlu0 %811
        %813 = vrot.lane.b32.xlu0 %v653, 120
        %v814 = vpop.permute.xlu0 %813
        %815 = vrot.lane.b32.xlu0 %v645, 120
        %v816 = vpop.permute.xlu0 %815
        %817 = vrot.lane.b32.xlu0 %v655, 120
        %v818 = vpop.permute.xlu0 %817
        %vm819 = vcmask 982016
        %v820 = vsel %vm819, %v808, %v810
        %v821 = vsel %vm819, %v810, %v812
        %v822 = vsel %vm819, %v814, %v816
        %v823 = vsel %vm819, %v816, %v818
        %828 = vrot.lane.b32.xlu0 %v652, 119
        %v829 = vpop.permute.xlu0 %828
        %830 = vrot.lane.b32.xlu0 %v644, 119
        %v831 = vpop.permute.xlu0 %830
        %832 = vrot.lane.b32.xlu0 %v654, 119
        %v833 = vpop.permute.xlu0 %832
        %834 = vrot.lane.b32.xlu0 %v653, 119
        %v835 = vpop.permute.xlu0 %834
        %836 = vrot.lane.b32.xlu0 %v645, 119
        %v837 = vpop.permute.xlu0 %836
        %838 = vrot.lane.b32.xlu0 %v655, 119
        %v839 = vpop.permute.xlu0 %838
        %vm840 = vcmask 973824
        %v841 = vsel %vm840, %v829, %v831
        %v842 = vsel %vm840, %v831, %v833
        %v843 = vsel %vm840, %v835, %v837
        %v844 = vsel %vm840, %v837, %v839
        %849 = vrot.lane.b32.xlu0 %v652, 118
        %v850 = vpop.permute.xlu0 %849
        %851 = vrot.lane.b32.xlu0 %v644, 118
        %v852 = vpop.permute.xlu0 %851
        %853 = vrot.lane.b32.xlu0 %v654, 118
        %v854 = vpop.permute.xlu0 %853
        %855 = vrot.lane.b32.xlu0 %v653, 118
        %v856 = vpop.permute.xlu0 %855
        %857 = vrot.lane.b32.xlu0 %v645, 118
        %v858 = vpop.permute.xlu0 %857
        %859 = vrot.lane.b32.xlu0 %v655, 118
        %v860 = vpop.permute.xlu0 %859
        %vm861 = vcmask 965632
        %v862 = vsel %vm861, %v850, %v852
        %v863 = vsel %vm861, %v852, %v854
        %v864 = vsel %vm861, %v856, %v858
        %v865 = vsel %vm861, %v858, %v860
        %870 = vrot.lane.b32.xlu0 %v652, 117
        %v871 = vpop.permute.xlu0 %870
        %872 = vrot.lane.b32.xlu0 %v644, 117
        %v873 = vpop.permute.xlu0 %872
        %874 = vrot.lane.b32.xlu0 %v654, 117
        %v875 = vpop.permute.xlu0 %874
        %876 = vrot.lane.b32.xlu0 %v653, 117
        %v877 = vpop.permute.xlu0 %876
        %878 = vrot.lane.b32.xlu0 %v645, 117
        %v879 = vpop.permute.xlu0 %878
        %880 = vrot.lane.b32.xlu0 %v655, 117
        %v881 = vpop.permute.xlu0 %880
        %vm882 = vcmask 957440
        %v883 = vsel %vm882, %v871, %v873
        %v884 = vsel %vm882, %v873, %v875
        %v885 = vsel %vm882, %v877, %v879
        %v886 = vsel %vm882, %v879, %v881
        %891 = vrot.lane.b32.xlu0 %v652, 116
        %v892 = vpop.permute.xlu0 %891
        %893 = vrot.lane.b32.xlu0 %v644, 116
        %v894 = vpop.permute.xlu0 %893
        %895 = vrot.lane.b32.xlu0 %v654, 116
        %v896 = vpop.permute.xlu0 %895
        %897 = vrot.lane.b32.xlu0 %v653, 116
        %v898 = vpop.permute.xlu0 %897
        %899 = vrot.lane.b32.xlu0 %v645, 116
        %v900 = vpop.permute.xlu0 %899
        %901 = vrot.lane.b32.xlu0 %v655, 116
        %v902 = vpop.permute.xlu0 %901
        %vm903 = vcmask 949248
        %v904 = vsel %vm903, %v892, %v894
        %v905 = vsel %vm903, %v894, %v896
        %v906 = vsel %vm903, %v898, %v900
        %v907 = vsel %vm903, %v900, %v902
        %912 = vrot.lane.b32.xlu0 %v652, 115
        %v913 = vpop.permute.xlu0 %912
        %914 = vrot.lane.b32.xlu0 %v644, 115
        %v915 = vpop.permute.xlu0 %914
        %916 = vrot.lane.b32.xlu0 %v654, 115
        %v917 = vpop.permute.xlu0 %916
        %918 = vrot.lane.b32.xlu0 %v653, 115
        %v919 = vpop.permute.xlu0 %918
        %920 = vrot.lane.b32.xlu0 %v645, 115
        %v921 = vpop.permute.xlu0 %920
        %922 = vrot.lane.b32.xlu0 %v655, 115
        %v923 = vpop.permute.xlu0 %922
        %vm924 = vcmask 941056
        %v925 = vsel %vm924, %v913, %v915
        %v926 = vsel %vm924, %v915, %v917
        %v927 = vsel %vm924, %v919, %v921
        %v928 = vsel %vm924, %v921, %v923
        %933 = vrot.lane.b32.xlu0 %v652, 114
        %v934 = vpop.permute.xlu0 %933
        %935 = vrot.lane.b32.xlu0 %v644, 114
        %v936 = vpop.permute.xlu0 %935
        %937 = vrot.lane.b32.xlu0 %v654, 114
        %v938 = vpop.permute.xlu0 %937
        %939 = vrot.lane.b32.xlu0 %v653, 114
        %v940 = vpop.permute.xlu0 %939
        %941 = vrot.lane.b32.xlu0 %v645, 114
        %v942 = vpop.permute.xlu0 %941
        %943 = vrot.lane.b32.xlu0 %v655, 114
        %v944 = vpop.permute.xlu0 %943
        %vm945 = vcmask 932864
        %v946 = vsel %vm945, %v934, %v936
        %v947 = vsel %vm945, %v936, %v938
        %v948 = vsel %vm945, %v940, %v942
        %v949 = vsel %vm945, %v942, %v944
        %954 = vrot.lane.b32.xlu0 %v652, 113
        %v955 = vpop.permute.xlu0 %954
        %956 = vrot.lane.b32.xlu0 %v644, 113
        %v957 = vpop.permute.xlu0 %956
        %958 = vrot.lane.b32.xlu0 %v654, 113
        %v959 = vpop.permute.xlu0 %958
        %960 = vrot.lane.b32.xlu0 %v653, 113
        %v961 = vpop.permute.xlu0 %960
        %962 = vrot.lane.b32.xlu0 %v645, 113
        %v963 = vpop.permute.xlu0 %962
        %964 = vrot.lane.b32.xlu0 %v655, 113
        %v965 = vpop.permute.xlu0 %964
        %vm966 = vcmask 924672
        %v967 = vsel %vm966, %v955, %v957
        %v968 = vsel %vm966, %v957, %v959
        %v969 = vsel %vm966, %v961, %v963
        %v970 = vsel %vm966, %v963, %v965
        %975 = vrot.lane.b32.xlu0 %v652, 112
        %v976 = vpop.permute.xlu0 %975
        %977 = vrot.lane.b32.xlu0 %v644, 112
        %v978 = vpop.permute.xlu0 %977
        %979 = vrot.lane.b32.xlu0 %v654, 112
        %v980 = vpop.permute.xlu0 %979
        %981 = vrot.lane.b32.xlu0 %v653, 112
        %v982 = vpop.permute.xlu0 %981
        %983 = vrot.lane.b32.xlu0 %v645, 112
        %v984 = vpop.permute.xlu0 %983
        %985 = vrot.lane.b32.xlu0 %v655, 112
        %v986 = vpop.permute.xlu0 %985
        %987 = vrot.lane.b32.xlu0 %v673, 112
        %v988 = vpop.permute.xlu0 %987
        %989 = vrot.lane.b32.xlu0 %v674, 112
        %v990 = vpop.permute.xlu0 %989
        %991 = vrot.lane.b32.xlu0 %v665, 112
        %v992 = vpop.permute.xlu0 %991
        %993 = vrot.lane.b32.xlu0 %v675, 112
        %v994 = vpop.permute.xlu0 %993
        %995 = vrot.lane.b32.xlu0 %v676, 112
        %v996 = vpop.permute.xlu0 %995
        %997 = vrot.lane.b32.xlu0 %v671, 112
        %v998 = vpop.permute.xlu0 %997
        %999 = vrot.lane.b32.xlu0 %v694, 112
        %v1000 = vpop.permute.xlu0 %999
        %1001 = vrot.lane.b32.xlu0 %v695, 112
        %v1002 = vpop.permute.xlu0 %1001
        %1003 = vrot.lane.b32.xlu0 %v686, 112
        %v1004 = vpop.permute.xlu0 %1003
        %1005 = vrot.lane.b32.xlu0 %v696, 112
        %v1006 = vpop.permute.xlu0 %1005
        %1007 = vrot.lane.b32.xlu0 %v697, 112
        %v1008 = vpop.permute.xlu0 %1007
        %1009 = vrot.lane.b32.xlu0 %v692, 112
        %v1010 = vpop.permute.xlu0 %1009
        %1011 = vrot.lane.b32.xlu0 %v715, 112
        %v1012 = vpop.permute.xlu0 %1011
        %1013 = vrot.lane.b32.xlu0 %v716, 112
        %v1014 = vpop.permute.xlu0 %1013
        %1015 = vrot.lane.b32.xlu0 %v707, 112
        %v1016 = vpop.permute.xlu0 %1015
        %1017 = vrot.lane.b32.xlu0 %v717, 112
        %v1018 = vpop.permute.xlu0 %1017
        %1019 = vrot.lane.b32.xlu0 %v718, 112
        %v1020 = vpop.permute.xlu0 %1019
        %1021 = vrot.lane.b32.xlu0 %v713, 112
        %v1022 = vpop.permute.xlu0 %1021
        %1023 = vrot.lane.b32.xlu0 %v736, 112
        %v1024 = vpop.permute.xlu0 %1023
        %1025 = vrot.lane.b32.xlu0 %v737, 112
        %v1026 = vpop.permute.xlu0 %1025
        %1027 = vrot.lane.b32.xlu0 %v728, 112
        %v1028 = vpop.permute.xlu0 %1027
        %1029 = vrot.lane.b32.xlu0 %v738, 112
        %v1030 = vpop.permute.xlu0 %1029
        %1031 = vrot.lane.b32.xlu0 %v739, 112
        %v1032 = vpop.permute.xlu0 %1031
        %1033 = vrot.lane.b32.xlu0 %v734, 112
        %v1034 = vpop.permute.xlu0 %1033
        %1035 = vrot.lane.b32.xlu0 %v757, 112
        %v1036 = vpop.permute.xlu0 %1035
        %1037 = vrot.lane.b32.xlu0 %v758, 112
        %v1038 = vpop.permute.xlu0 %1037
        %1039 = vrot.lane.b32.xlu0 %v749, 112
        %v1040 = vpop.permute.xlu0 %1039
        %1041 = vrot.lane.b32.xlu0 %v759, 112
        %v1042 = vpop.permute.xlu0 %1041
        %1043 = vrot.lane.b32.xlu0 %v760, 112
        %v1044 = vpop.permute.xlu0 %1043
        %1045 = vrot.lane.b32.xlu0 %v755, 112
        %v1046 = vpop.permute.xlu0 %1045
        %1047 = vrot.lane.b32.xlu0 %v778, 112
        %v1048 = vpop.permute.xlu0 %1047
        %1049 = vrot.lane.b32.xlu0 %v779, 112
        %v1050 = vpop.permute.xlu0 %1049
        %1051 = vrot.lane.b32.xlu0 %v770, 112
        %v1052 = vpop.permute.xlu0 %1051
        %1053 = vrot.lane.b32.xlu0 %v780, 112
        %v1054 = vpop.permute.xlu0 %1053
        %1055 = vrot.lane.b32.xlu0 %v781, 112
        %v1056 = vpop.permute.xlu0 %1055
        %1057 = vrot.lane.b32.xlu0 %v776, 112
        %v1058 = vpop.permute.xlu0 %1057
        %1059 = vrot.lane.b32.xlu0 %v799, 112
        %v1060 = vpop.permute.xlu0 %1059
        %1061 = vrot.lane.b32.xlu0 %v800, 112
        %v1062 = vpop.permute.xlu0 %1061
        %1063 = vrot.lane.b32.xlu0 %v791, 112
        %v1064 = vpop.permute.xlu0 %1063
        %1065 = vrot.lane.b32.xlu0 %v801, 112
        %v1066 = vpop.permute.xlu0 %1065
        %1067 = vrot.lane.b32.xlu0 %v802, 112
        %v1068 = vpop.permute.xlu0 %1067
        %1069 = vrot.lane.b32.xlu0 %v797, 112
        %v1070 = vpop.permute.xlu0 %1069
        %1071 = vrot.lane.b32.xlu0 %v820, 112
        %v1072 = vpop.permute.xlu0 %1071
        %1073 = vrot.lane.b32.xlu0 %v821, 112
        %v1074 = vpop.permute.xlu0 %1073
        %1075 = vrot.lane.b32.xlu0 %v812, 112
        %v1076 = vpop.permute.xlu0 %1075
        %1077 = vrot.lane.b32.xlu0 %v822, 112
        %v1078 = vpop.permute.xlu0 %1077
        %1079 = vrot.lane.b32.xlu0 %v823, 112
        %v1080 = vpop.permute.xlu0 %1079
        %1081 = vrot.lane.b32.xlu0 %v818, 112
        %v1082 = vpop.permute.xlu0 %1081
        %1083 = vrot.lane.b32.xlu0 %v841, 112
        %v1084 = vpop.permute.xlu0 %1083
        %1085 = vrot.lane.b32.xlu0 %v842, 112
        %v1086 = vpop.permute.xlu0 %1085
        %1087 = vrot.lane.b32.xlu0 %v833, 112
        %v1088 = vpop.permute.xlu0 %1087
        %1089 = vrot.lane.b32.xlu0 %v843, 112
        %v1090 = vpop.permute.xlu0 %1089
        %1091 = vrot.lane.b32.xlu0 %v844, 112
        %v1092 = vpop.permute.xlu0 %1091
        %1093 = vrot.lane.b32.xlu0 %v839, 112
        %v1094 = vpop.permute.xlu0 %1093
        %1095 = vrot.lane.b32.xlu0 %v862, 112
        %v1096 = vpop.permute.xlu0 %1095
        %1097 = vrot.lane.b32.xlu0 %v863, 112
        %v1098 = vpop.permute.xlu0 %1097
        %1099 = vrot.lane.b32.xlu0 %v854, 112
        %v1100 = vpop.permute.xlu0 %1099
        %1101 = vrot.lane.b32.xlu0 %v864, 112
        %v1102 = vpop.permute.xlu0 %1101
        %1103 = vrot.lane.b32.xlu0 %v865, 112
        %v1104 = vpop.permute.xlu0 %1103
        %1105 = vrot.lane.b32.xlu0 %v860, 112
        %v1106 = vpop.permute.xlu0 %1105
        %1107 = vrot.lane.b32.xlu0 %v883, 112
        %v1108 = vpop.permute.xlu0 %1107
        %1109 = vrot.lane.b32.xlu0 %v884, 112
        %v1110 = vpop.permute.xlu0 %1109
        %1111 = vrot.lane.b32.xlu0 %v875, 112
        %v1112 = vpop.permute.xlu0 %1111
        %1113 = vrot.lane.b32.xlu0 %v885, 112
        %v1114 = vpop.permute.xlu0 %1113
        %1115 = vrot.lane.b32.xlu0 %v886, 112
        %v1116 = vpop.permute.xlu0 %1115
        %1117 = vrot.lane.b32.xlu0 %v881, 112
        %v1118 = vpop.permute.xlu0 %1117
        %1119 = vrot.lane.b32.xlu0 %v904, 112
        %v1120 = vpop.permute.xlu0 %1119
        %1121 = vrot.lane.b32.xlu0 %v905, 112
        %v1122 = vpop.permute.xlu0 %1121
        %1123 = vrot.lane.b32.xlu0 %v896, 112
        %v1124 = vpop.permute.xlu0 %1123
        %1125 = vrot.lane.b32.xlu0 %v906, 112
        %v1126 = vpop.permute.xlu0 %1125
        %1127 = vrot.lane.b32.xlu0 %v907, 112
        %v1128 = vpop.permute.xlu0 %1127
        %1129 = vrot.lane.b32.xlu0 %v902, 112
        %v1130 = vpop.permute.xlu0 %1129
        %1131 = vrot.lane.b32.xlu0 %v925, 112
        %v1132 = vpop.permute.xlu0 %1131
        %1133 = vrot.lane.b32.xlu0 %v926, 112
        %v1134 = vpop.permute.xlu0 %1133
        %1135 = vrot.lane.b32.xlu0 %v917, 112
        %v1136 = vpop.permute.xlu0 %1135
        %1137 = vrot.lane.b32.xlu0 %v927, 112
        %v1138 = vpop.permute.xlu0 %1137
        %1139 = vrot.lane.b32.xlu0 %v928, 112
        %v1140 = vpop.permute.xlu0 %1139
        %1141 = vrot.lane.b32.xlu0 %v923, 112
        %v1142 = vpop.permute.xlu0 %1141
        %1143 = vrot.lane.b32.xlu0 %v946, 112
        %v1144 = vpop.permute.xlu0 %1143
        %1145 = vrot.lane.b32.xlu0 %v947, 112
        %v1146 = vpop.permute.xlu0 %1145
        %1147 = vrot.lane.b32.xlu0 %v938, 112
        %v1148 = vpop.permute.xlu0 %1147
        %1149 = vrot.lane.b32.xlu0 %v948, 112
        %v1150 = vpop.permute.xlu0 %1149
        %1151 = vrot.lane.b32.xlu0 %v949, 112
        %v1152 = vpop.permute.xlu0 %1151
        %1153 = vrot.lane.b32.xlu0 %v944, 112
        %v1154 = vpop.permute.xlu0 %1153
        %1155 = vrot.lane.b32.xlu0 %v967, 112
        %v1156 = vpop.permute.xlu0 %1155
        %1157 = vrot.lane.b32.xlu0 %v968, 112
        %v1158 = vpop.permute.xlu0 %1157
        %1159 = vrot.lane.b32.xlu0 %v959, 112
        %v1160 = vpop.permute.xlu0 %1159
        %1161 = vrot.lane.b32.xlu0 %v969, 112
        %v1162 = vpop.permute.xlu0 %1161
        %1163 = vrot.lane.b32.xlu0 %v970, 112
        %v1164 = vpop.permute.xlu0 %1163
        %1165 = vrot.lane.b32.xlu0 %v965, 112
        %v1166 = vpop.permute.xlu0 %1165
        %vm1167 = vcmask 916480
        %v1168 = vsel %vm1167, %v976, %v978
        %v1169 = vsel %vm1167, %v978, %v980
        %v1170 = vsel %vm1167, %v982, %v984
        %v1171 = vsel %vm1167, %v984, %v986
        %v1172 = vsel %vm1167, %v988, %v990
        %v1173 = vsel %vm1167, %v990, %v992
        %v1174 = vsel %vm1167, %v994, %v996
        %v1175 = vsel %vm1167, %v996, %v998
        %v1176 = vsel %vm1167, %v1000, %v1002
        %v1177 = vsel %vm1167, %v1002, %v1004
        %v1178 = vsel %vm1167, %v1006, %v1008
        %v1179 = vsel %vm1167, %v1008, %v1010
        %v1180 = vsel %vm1167, %v1012, %v1014
        %v1181 = vsel %vm1167, %v1014, %v1016
        %v1182 = vsel %vm1167, %v1018, %v1020
        %v1183 = vsel %vm1167, %v1020, %v1022
        %v1184 = vsel %vm1167, %v1024, %v1026
        %v1185 = vsel %vm1167, %v1026, %v1028
        %v1186 = vsel %vm1167, %v1030, %v1032
        %v1187 = vsel %vm1167, %v1032, %v1034
        %v1188 = vsel %vm1167, %v1036, %v1038
        %v1189 = vsel %vm1167, %v1038, %v1040
        %v1190 = vsel %vm1167, %v1042, %v1044
        %v1191 = vsel %vm1167, %v1044, %v1046
        %v1192 = vsel %vm1167, %v1048, %v1050
        %v1193 = vsel %vm1167, %v1050, %v1052
        %v1194 = vsel %vm1167, %v1054, %v1056
        %v1195 = vsel %vm1167, %v1056, %v1058
        %v1196 = vsel %vm1167, %v1060, %v1062
        %v1197 = vsel %vm1167, %v1062, %v1064
        %v1198 = vsel %vm1167, %v1066, %v1068
        %v1199 = vsel %vm1167, %v1068, %v1070
        %v1200 = vsel %vm1167, %v1072, %v1074
        %v1201 = vsel %vm1167, %v1074, %v1076
        %v1202 = vsel %vm1167, %v1078, %v1080
        %v1203 = vsel %vm1167, %v1080, %v1082
        %v1204 = vsel %vm1167, %v1084, %v1086
        %v1205 = vsel %vm1167, %v1086, %v1088
        %v1206 = vsel %vm1167, %v1090, %v1092
        %v1207 = vsel %vm1167, %v1092, %v1094
        %v1208 = vsel %vm1167, %v1096, %v1098
        %v1209 = vsel %vm1167, %v1098, %v1100
        %v1210 = vsel %vm1167, %v1102, %v1104
        %v1211 = vsel %vm1167, %v1104, %v1106
        %v1212 = vsel %vm1167, %v1108, %v1110
        %v1213 = vsel %vm1167, %v1110, %v1112
        %v1214 = vsel %vm1167, %v1114, %v1116
        %v1215 = vsel %vm1167, %v1116, %v1118
        %v1216 = vsel %vm1167, %v1120, %v1122
        %v1217 = vsel %vm1167, %v1122, %v1124
        %v1218 = vsel %vm1167, %v1126, %v1128
        %v1219 = vsel %vm1167, %v1128, %v1130
        %v1220 = vsel %vm1167, %v1132, %v1134
        %v1221 = vsel %vm1167, %v1134, %v1136
        %v1222 = vsel %vm1167, %v1138, %v1140
        %v1223 = vsel %vm1167, %v1140, %v1142
        %v1224 = vsel %vm1167, %v1144, %v1146
        %v1225 = vsel %vm1167, %v1146, %v1148
        %v1226 = vsel %vm1167, %v1150, %v1152
        %v1227 = vsel %vm1167, %v1152, %v1154
        %v1228 = vsel %vm1167, %v1156, %v1158
        %v1229 = vsel %vm1167, %v1158, %v1160
        %v1230 = vsel %vm1167, %v1162, %v1164
        %v1231 = vsel %vm1167, %v1164, %v1166
        %1296 = vrot.lane.b32.xlu0 %v652, 96
        %v1297 = vpop.permute.xlu0 %1296
        %1298 = vrot.lane.b32.xlu0 %v644, 96
        %v1299 = vpop.permute.xlu0 %1298
        %1300 = vrot.lane.b32.xlu0 %v654, 96
        %v1301 = vpop.permute.xlu0 %1300
        %1302 = vrot.lane.b32.xlu0 %v653, 96
        %v1303 = vpop.permute.xlu0 %1302
        %1304 = vrot.lane.b32.xlu0 %v645, 96
        %v1305 = vpop.permute.xlu0 %1304
        %1306 = vrot.lane.b32.xlu0 %v655, 96
        %v1307 = vpop.permute.xlu0 %1306
        %1308 = vrot.lane.b32.xlu0 %v673, 96
        %v1309 = vpop.permute.xlu0 %1308
        %1310 = vrot.lane.b32.xlu0 %v674, 96
        %v1311 = vpop.permute.xlu0 %1310
        %1312 = vrot.lane.b32.xlu0 %v665, 96
        %v1313 = vpop.permute.xlu0 %1312
        %1314 = vrot.lane.b32.xlu0 %v675, 96
        %v1315 = vpop.permute.xlu0 %1314
        %1316 = vrot.lane.b32.xlu0 %v676, 96
        %v1317 = vpop.permute.xlu0 %1316
        %1318 = vrot.lane.b32.xlu0 %v671, 96
        %v1319 = vpop.permute.xlu0 %1318
        %1320 = vrot.lane.b32.xlu0 %v694, 96
        %v1321 = vpop.permute.xlu0 %1320
        %1322 = vrot.lane.b32.xlu0 %v695, 96
        %v1323 = vpop.permute.xlu0 %1322
        %1324 = vrot.lane.b32.xlu0 %v686, 96
        %v1325 = vpop.permute.xlu0 %1324
        %1326 = vrot.lane.b32.xlu0 %v696, 96
        %v1327 = vpop.permute.xlu0 %1326
        %1328 = vrot.lane.b32.xlu0 %v697, 96
        %v1329 = vpop.permute.xlu0 %1328
        %1330 = vrot.lane.b32.xlu0 %v692, 96
        %v1331 = vpop.permute.xlu0 %1330
        %1332 = vrot.lane.b32.xlu0 %v715, 96
        %v1333 = vpop.permute.xlu0 %1332
        %1334 = vrot.lane.b32.xlu0 %v716, 96
        %v1335 = vpop.permute.xlu0 %1334
        %1336 = vrot.lane.b32.xlu0 %v707, 96
        %v1337 = vpop.permute.xlu0 %1336
        %1338 = vrot.lane.b32.xlu0 %v717, 96
        %v1339 = vpop.permute.xlu0 %1338
        %1340 = vrot.lane.b32.xlu0 %v718, 96
        %v1341 = vpop.permute.xlu0 %1340
        %1342 = vrot.lane.b32.xlu0 %v713, 96
        %v1343 = vpop.permute.xlu0 %1342
        %1344 = vrot.lane.b32.xlu0 %v736, 96
        %v1345 = vpop.permute.xlu0 %1344
        %1346 = vrot.lane.b32.xlu0 %v737, 96
        %v1347 = vpop.permute.xlu0 %1346
        %1348 = vrot.lane.b32.xlu0 %v728, 96
        %v1349 = vpop.permute.xlu0 %1348
        %1350 = vrot.lane.b32.xlu0 %v738, 96
        %v1351 = vpop.permute.xlu0 %1350
        %1352 = vrot.lane.b32.xlu0 %v739, 96
        %v1353 = vpop.permute.xlu0 %1352
        %1354 = vrot.lane.b32.xlu0 %v734, 96
        %v1355 = vpop.permute.xlu0 %1354
        %1356 = vrot.lane.b32.xlu0 %v757, 96
        %v1357 = vpop.permute.xlu0 %1356
        %1358 = vrot.lane.b32.xlu0 %v758, 96
        %v1359 = vpop.permute.xlu0 %1358
        %1360 = vrot.lane.b32.xlu0 %v749, 96
        %v1361 = vpop.permute.xlu0 %1360
        %1362 = vrot.lane.b32.xlu0 %v759, 96
        %v1363 = vpop.permute.xlu0 %1362
        %1364 = vrot.lane.b32.xlu0 %v760, 96
        %v1365 = vpop.permute.xlu0 %1364
        %1366 = vrot.lane.b32.xlu0 %v755, 96
        %v1367 = vpop.permute.xlu0 %1366
        %1368 = vrot.lane.b32.xlu0 %v778, 96
        %v1369 = vpop.permute.xlu0 %1368
        %1370 = vrot.lane.b32.xlu0 %v779, 96
        %v1371 = vpop.permute.xlu0 %1370
        %1372 = vrot.lane.b32.xlu0 %v770, 96
        %v1373 = vpop.permute.xlu0 %1372
        %1374 = vrot.lane.b32.xlu0 %v780, 96
        %v1375 = vpop.permute.xlu0 %1374
        %1376 = vrot.lane.b32.xlu0 %v781, 96
        %v1377 = vpop.permute.xlu0 %1376
        %1378 = vrot.lane.b32.xlu0 %v776, 96
        %v1379 = vpop.permute.xlu0 %1378
        %1380 = vrot.lane.b32.xlu0 %v799, 96
        %v1381 = vpop.permute.xlu0 %1380
        %1382 = vrot.lane.b32.xlu0 %v800, 96
        %v1383 = vpop.permute.xlu0 %1382
        %1384 = vrot.lane.b32.xlu0 %v791, 96
        %v1385 = vpop.permute.xlu0 %1384
        %1386 = vrot.lane.b32.xlu0 %v801, 96
        %v1387 = vpop.permute.xlu0 %1386
        %1388 = vrot.lane.b32.xlu0 %v802, 96
        %v1389 = vpop.permute.xlu0 %1388
        %1390 = vrot.lane.b32.xlu0 %v797, 96
        %v1391 = vpop.permute.xlu0 %1390
        %1392 = vrot.lane.b32.xlu0 %v820, 96
        %v1393 = vpop.permute.xlu0 %1392
        %1394 = vrot.lane.b32.xlu0 %v821, 96
        %v1395 = vpop.permute.xlu0 %1394
        %1396 = vrot.lane.b32.xlu0 %v812, 96
        %v1397 = vpop.permute.xlu0 %1396
        %1398 = vrot.lane.b32.xlu0 %v822, 96
        %v1399 = vpop.permute.xlu0 %1398
        %1400 = vrot.lane.b32.xlu0 %v823, 96
        %v1401 = vpop.permute.xlu0 %1400
        %1402 = vrot.lane.b32.xlu0 %v818, 96
        %v1403 = vpop.permute.xlu0 %1402
        %1404 = vrot.lane.b32.xlu0 %v841, 96
        %v1405 = vpop.permute.xlu0 %1404
        %1406 = vrot.lane.b32.xlu0 %v842, 96
        %v1407 = vpop.permute.xlu0 %1406
        %1408 = vrot.lane.b32.xlu0 %v833, 96
        %v1409 = vpop.permute.xlu0 %1408
        %1410 = vrot.lane.b32.xlu0 %v843, 96
        %v1411 = vpop.permute.xlu0 %1410
        %1412 = vrot.lane.b32.xlu0 %v844, 96
        %v1413 = vpop.permute.xlu0 %1412
        %1414 = vrot.lane.b32.xlu0 %v839, 96
        %v1415 = vpop.permute.xlu0 %1414
        %1416 = vrot.lane.b32.xlu0 %v862, 96
        %v1417 = vpop.permute.xlu0 %1416
        %1418 = vrot.lane.b32.xlu0 %v863, 96
        %v1419 = vpop.permute.xlu0 %1418
        %1420 = vrot.lane.b32.xlu0 %v854, 96
        %v1421 = vpop.permute.xlu0 %1420
        %1422 = vrot.lane.b32.xlu0 %v864, 96
        %v1423 = vpop.permute.xlu0 %1422
        %1424 = vrot.lane.b32.xlu0 %v865, 96
        %v1425 = vpop.permute.xlu0 %1424
        %1426 = vrot.lane.b32.xlu0 %v860, 96
        %v1427 = vpop.permute.xlu0 %1426
        %1428 = vrot.lane.b32.xlu0 %v883, 96
        %v1429 = vpop.permute.xlu0 %1428
        %1430 = vrot.lane.b32.xlu0 %v884, 96
        %v1431 = vpop.permute.xlu0 %1430
        %1432 = vrot.lane.b32.xlu0 %v875, 96
        %v1433 = vpop.permute.xlu0 %1432
        %1434 = vrot.lane.b32.xlu0 %v885, 96
        %v1435 = vpop.permute.xlu0 %1434
        %1436 = vrot.lane.b32.xlu0 %v886, 96
        %v1437 = vpop.permute.xlu0 %1436
        %1438 = vrot.lane.b32.xlu0 %v881, 96
        %v1439 = vpop.permute.xlu0 %1438
        %1440 = vrot.lane.b32.xlu0 %v904, 96
        %v1441 = vpop.permute.xlu0 %1440
        %1442 = vrot.lane.b32.xlu0 %v905, 96
        %v1443 = vpop.permute.xlu0 %1442
        %1444 = vrot.lane.b32.xlu0 %v896, 96
        %v1445 = vpop.permute.xlu0 %1444
        %1446 = vrot.lane.b32.xlu0 %v906, 96
        %v1447 = vpop.permute.xlu0 %1446
        %1448 = vrot.lane.b32.xlu0 %v907, 96
        %v1449 = vpop.permute.xlu0 %1448
        %1450 = vrot.lane.b32.xlu0 %v902, 96
        %v1451 = vpop.permute.xlu0 %1450
        %1452 = vrot.lane.b32.xlu0 %v925, 96
        %v1453 = vpop.permute.xlu0 %1452
        %1454 = vrot.lane.b32.xlu0 %v926, 96
        %v1455 = vpop.permute.xlu0 %1454
        %1456 = vrot.lane.b32.xlu0 %v917, 96
        %v1457 = vpop.permute.xlu0 %1456
        %1458 = vrot.lane.b32.xlu0 %v927, 96
        %v1459 = vpop.permute.xlu0 %1458
        %1460 = vrot.lane.b32.xlu0 %v928, 96
        %v1461 = vpop.permute.xlu0 %1460
        %1462 = vrot.lane.b32.xlu0 %v923, 96
        %v1463 = vpop.permute.xlu0 %1462
        %1464 = vrot.lane.b32.xlu0 %v946, 96
        %v1465 = vpop.permute.xlu0 %1464
        %1466 = vrot.lane.b32.xlu0 %v947, 96
        %v1467 = vpop.permute.xlu0 %1466
        %1468 = vrot.lane.b32.xlu0 %v938, 96
        %v1469 = vpop.permute.xlu0 %1468
        %1470 = vrot.lane.b32.xlu0 %v948, 96
        %v1471 = vpop.permute.xlu0 %1470
        %1472 = vrot.lane.b32.xlu0 %v949, 96
        %v1473 = vpop.permute.xlu0 %1472
        %1474 = vrot.lane.b32.xlu0 %v944, 96
        %v1475 = vpop.permute.xlu0 %1474
        %1476 = vrot.lane.b32.xlu0 %v967, 96
        %v1477 = vpop.permute.xlu0 %1476
        %1478 = vrot.lane.b32.xlu0 %v968, 96
        %v1479 = vpop.permute.xlu0 %1478
        %1480 = vrot.lane.b32.xlu0 %v959, 96
        %v1481 = vpop.permute.xlu0 %1480
        %1482 = vrot.lane.b32.xlu0 %v969, 96
        %v1483 = vpop.permute.xlu0 %1482
        %1484 = vrot.lane.b32.xlu0 %v970, 96
        %v1485 = vpop.permute.xlu0 %1484
        %1486 = vrot.lane.b32.xlu0 %v965, 96
        %v1487 = vpop.permute.xlu0 %1486
        %vm1488 = vcmask 785408
        %v1489 = vsel %vm1488, %v1297, %v1299
        %v1490 = vsel %vm1488, %v1299, %v1301
        %v1491 = vsel %vm1488, %v1303, %v1305
        %v1492 = vsel %vm1488, %v1305, %v1307
        %v1493 = vsel %vm1488, %v1309, %v1311
        %v1494 = vsel %vm1488, %v1311, %v1313
        %v1495 = vsel %vm1488, %v1315, %v1317
        %v1496 = vsel %vm1488, %v1317, %v1319
        %v1497 = vsel %vm1488, %v1321, %v1323
        %v1498 = vsel %vm1488, %v1323, %v1325
        %v1499 = vsel %vm1488, %v1327, %v1329
        %v1500 = vsel %vm1488, %v1329, %v1331
        %v1501 = vsel %vm1488, %v1333, %v1335
        %v1502 = vsel %vm1488, %v1335, %v1337
        %v1503 = vsel %vm1488, %v1339, %v1341
        %v1504 = vsel %vm1488, %v1341, %v1343
        %v1505 = vsel %vm1488, %v1345, %v1347
        %v1506 = vsel %vm1488, %v1347, %v1349
        %v1507 = vsel %vm1488, %v1351, %v1353
        %v1508 = vsel %vm1488, %v1353, %v1355
        %v1509 = vsel %vm1488, %v1357, %v1359
        %v1510 = vsel %vm1488, %v1359, %v1361
        %v1511 = vsel %vm1488, %v1363, %v1365
        %v1512 = vsel %vm1488, %v1365, %v1367
        %v1513 = vsel %vm1488, %v1369, %v1371
        %v1514 = vsel %vm1488, %v1371, %v1373
        %v1515 = vsel %vm1488, %v1375, %v1377
        %v1516 = vsel %vm1488, %v1377, %v1379
        %v1517 = vsel %vm1488, %v1381, %v1383
        %v1518 = vsel %vm1488, %v1383, %v1385
        %v1519 = vsel %vm1488, %v1387, %v1389
        %v1520 = vsel %vm1488, %v1389, %v1391
        %v1521 = vsel %vm1488, %v1393, %v1395
        %v1522 = vsel %vm1488, %v1395, %v1397
        %v1523 = vsel %vm1488, %v1399, %v1401
        %v1524 = vsel %vm1488, %v1401, %v1403
        %v1525 = vsel %vm1488, %v1405, %v1407
        %v1526 = vsel %vm1488, %v1407, %v1409
        %v1527 = vsel %vm1488, %v1411, %v1413
        %v1528 = vsel %vm1488, %v1413, %v1415
        %v1529 = vsel %vm1488, %v1417, %v1419
        %v1530 = vsel %vm1488, %v1419, %v1421
        %v1531 = vsel %vm1488, %v1423, %v1425
        %v1532 = vsel %vm1488, %v1425, %v1427
        %v1533 = vsel %vm1488, %v1429, %v1431
        %v1534 = vsel %vm1488, %v1431, %v1433
        %v1535 = vsel %vm1488, %v1435, %v1437
        %v1536 = vsel %vm1488, %v1437, %v1439
        %v1537 = vsel %vm1488, %v1441, %v1443
        %v1538 = vsel %vm1488, %v1443, %v1445
        %v1539 = vsel %vm1488, %v1447, %v1449
        %v1540 = vsel %vm1488, %v1449, %v1451
        %v1541 = vsel %vm1488, %v1453, %v1455
        %v1542 = vsel %vm1488, %v1455, %v1457
        %v1543 = vsel %vm1488, %v1459, %v1461
        %v1544 = vsel %vm1488, %v1461, %v1463
        %v1545 = vsel %vm1488, %v1465, %v1467
        %v1546 = vsel %vm1488, %v1467, %v1469
        %v1547 = vsel %vm1488, %v1471, %v1473
        %v1548 = vsel %vm1488, %v1473, %v1475
        %v1549 = vsel %vm1488, %v1477, %v1479
        %v1550 = vsel %vm1488, %v1479, %v1481
        %v1551 = vsel %vm1488, %v1483, %v1485
        %v1552 = vsel %vm1488, %v1485, %v1487
        %1617 = vrot.lane.b32.xlu0 %v652, 80
        %v1618 = vpop.permute.xlu0 %1617
        %1619 = vrot.lane.b32.xlu0 %v644, 80
        %v1620 = vpop.permute.xlu0 %1619
        %1621 = vrot.lane.b32.xlu0 %v654, 80
        %v1622 = vpop.permute.xlu0 %1621
        %1623 = vrot.lane.b32.xlu0 %v653, 80
        %v1624 = vpop.permute.xlu0 %1623
        %1625 = vrot.lane.b32.xlu0 %v645, 80
        %v1626 = vpop.permute.xlu0 %1625
        %1627 = vrot.lane.b32.xlu0 %v655, 80
        %v1628 = vpop.permute.xlu0 %1627
        %1629 = vrot.lane.b32.xlu0 %v673, 80
        %v1630 = vpop.permute.xlu0 %1629
        %1631 = vrot.lane.b32.xlu0 %v674, 80
        %v1632 = vpop.permute.xlu0 %1631
        %1633 = vrot.lane.b32.xlu0 %v665, 80
        %v1634 = vpop.permute.xlu0 %1633
        %1635 = vrot.lane.b32.xlu0 %v675, 80
        %v1636 = vpop.permute.xlu0 %1635
        %1637 = vrot.lane.b32.xlu0 %v676, 80
        %v1638 = vpop.permute.xlu0 %1637
        %1639 = vrot.lane.b32.xlu0 %v671, 80
        %v1640 = vpop.permute.xlu0 %1639
        %1641 = vrot.lane.b32.xlu0 %v694, 80
        %v1642 = vpop.permute.xlu0 %1641
        %1643 = vrot.lane.b32.xlu0 %v695, 80
        %v1644 = vpop.permute.xlu0 %1643
        %1645 = vrot.lane.b32.xlu0 %v686, 80
        %v1646 = vpop.permute.xlu0 %1645
        %1647 = vrot.lane.b32.xlu0 %v696, 80
        %v1648 = vpop.permute.xlu0 %1647
        %1649 = vrot.lane.b32.xlu0 %v697, 80
        %v1650 = vpop.permute.xlu0 %1649
        %1651 = vrot.lane.b32.xlu0 %v692, 80
        %v1652 = vpop.permute.xlu0 %1651
        %1653 = vrot.lane.b32.xlu0 %v715, 80
        %v1654 = vpop.permute.xlu0 %1653
        %1655 = vrot.lane.b32.xlu0 %v716, 80
        %v1656 = vpop.permute.xlu0 %1655
        %1657 = vrot.lane.b32.xlu0 %v707, 80
        %v1658 = vpop.permute.xlu0 %1657
        %1659 = vrot.lane.b32.xlu0 %v717, 80
        %v1660 = vpop.permute.xlu0 %1659
        %1661 = vrot.lane.b32.xlu0 %v718, 80
        %v1662 = vpop.permute.xlu0 %1661
        %1663 = vrot.lane.b32.xlu0 %v713, 80
        %v1664 = vpop.permute.xlu0 %1663
        %1665 = vrot.lane.b32.xlu0 %v736, 80
        %v1666 = vpop.permute.xlu0 %1665
        %1667 = vrot.lane.b32.xlu0 %v737, 80
        %v1668 = vpop.permute.xlu0 %1667
        %1669 = vrot.lane.b32.xlu0 %v728, 80
        %v1670 = vpop.permute.xlu0 %1669
        %1671 = vrot.lane.b32.xlu0 %v738, 80
        %v1672 = vpop.permute.xlu0 %1671
        %1673 = vrot.lane.b32.xlu0 %v739, 80
        %v1674 = vpop.permute.xlu0 %1673
        %1675 = vrot.lane.b32.xlu0 %v734, 80
        %v1676 = vpop.permute.xlu0 %1675
        %1677 = vrot.lane.b32.xlu0 %v757, 80
        %v1678 = vpop.permute.xlu0 %1677
        %1679 = vrot.lane.b32.xlu0 %v758, 80
        %v1680 = vpop.permute.xlu0 %1679
        %1681 = vrot.lane.b32.xlu0 %v749, 80
        %v1682 = vpop.permute.xlu0 %1681
        %1683 = vrot.lane.b32.xlu0 %v759, 80
        %v1684 = vpop.permute.xlu0 %1683
        %1685 = vrot.lane.b32.xlu0 %v760, 80
        %v1686 = vpop.permute.xlu0 %1685
        %1687 = vrot.lane.b32.xlu0 %v755, 80
        %v1688 = vpop.permute.xlu0 %1687
        %1689 = vrot.lane.b32.xlu0 %v778, 80
        %v1690 = vpop.permute.xlu0 %1689
        %1691 = vrot.lane.b32.xlu0 %v779, 80
        %v1692 = vpop.permute.xlu0 %1691
        %1693 = vrot.lane.b32.xlu0 %v770, 80
        %v1694 = vpop.permute.xlu0 %1693
        %1695 = vrot.lane.b32.xlu0 %v780, 80
        %v1696 = vpop.permute.xlu0 %1695
        %1697 = vrot.lane.b32.xlu0 %v781, 80
        %v1698 = vpop.permute.xlu0 %1697
        %1699 = vrot.lane.b32.xlu0 %v776, 80
        %v1700 = vpop.permute.xlu0 %1699
        %1701 = vrot.lane.b32.xlu0 %v799, 80
        %v1702 = vpop.permute.xlu0 %1701
        %1703 = vrot.lane.b32.xlu0 %v800, 80
        %v1704 = vpop.permute.xlu0 %1703
        %1705 = vrot.lane.b32.xlu0 %v791, 80
        %v1706 = vpop.permute.xlu0 %1705
        %1707 = vrot.lane.b32.xlu0 %v801, 80
        %v1708 = vpop.permute.xlu0 %1707
        %1709 = vrot.lane.b32.xlu0 %v802, 80
        %v1710 = vpop.permute.xlu0 %1709
        %1711 = vrot.lane.b32.xlu0 %v797, 80
        %v1712 = vpop.permute.xlu0 %1711
        %1713 = vrot.lane.b32.xlu0 %v820, 80
        %v1714 = vpop.permute.xlu0 %1713
        %1715 = vrot.lane.b32.xlu0 %v821, 80
        %v1716 = vpop.permute.xlu0 %1715
        %1717 = vrot.lane.b32.xlu0 %v812, 80
        %v1718 = vpop.permute.xlu0 %1717
        %1719 = vrot.lane.b32.xlu0 %v822, 80
        %v1720 = vpop.permute.xlu0 %1719
        %1721 = vrot.lane.b32.xlu0 %v823, 80
        %v1722 = vpop.permute.xlu0 %1721
        %1723 = vrot.lane.b32.xlu0 %v818, 80
        %v1724 = vpop.permute.xlu0 %1723
        %1725 = vrot.lane.b32.xlu0 %v841, 80
        %v1726 = vpop.permute.xlu0 %1725
        %1727 = vrot.lane.b32.xlu0 %v842, 80
        %v1728 = vpop.permute.xlu0 %1727
        %1729 = vrot.lane.b32.xlu0 %v833, 80
        %v1730 = vpop.permute.xlu0 %1729
        %1731 = vrot.lane.b32.xlu0 %v843, 80
        %v1732 = vpop.permute.xlu0 %1731
        %1733 = vrot.lane.b32.xlu0 %v844, 80
        %v1734 = vpop.permute.xlu0 %1733
        %1735 = vrot.lane.b32.xlu0 %v839, 80
        %v1736 = vpop.permute.xlu0 %1735
        %1737 = vrot.lane.b32.xlu0 %v862, 80
        %v1738 = vpop.permute.xlu0 %1737
        %1739 = vrot.lane.b32.xlu0 %v863, 80
        %v1740 = vpop.permute.xlu0 %1739
        %1741 = vrot.lane.b32.xlu0 %v854, 80
        %v1742 = vpop.permute.xlu0 %1741
        %1743 = vrot.lane.b32.xlu0 %v864, 80
        %v1744 = vpop.permute.xlu0 %1743
        %1745 = vrot.lane.b32.xlu0 %v865, 80
        %v1746 = vpop.permute.xlu0 %1745
        %1747 = vrot.lane.b32.xlu0 %v860, 80
        %v1748 = vpop.permute.xlu0 %1747
        %1749 = vrot.lane.b32.xlu0 %v883, 80
        %v1750 = vpop.permute.xlu0 %1749
        %1751 = vrot.lane.b32.xlu0 %v884, 80
        %v1752 = vpop.permute.xlu0 %1751
        %1753 = vrot.lane.b32.xlu0 %v875, 80
        %v1754 = vpop.permute.xlu0 %1753
        %1755 = vrot.lane.b32.xlu0 %v885, 80
        %v1756 = vpop.permute.xlu0 %1755
        %1757 = vrot.lane.b32.xlu0 %v886, 80
        %v1758 = vpop.permute.xlu0 %1757
        %1759 = vrot.lane.b32.xlu0 %v881, 80
        %v1760 = vpop.permute.xlu0 %1759
        %1761 = vrot.lane.b32.xlu0 %v904, 80
        %v1762 = vpop.permute.xlu0 %1761
        %1763 = vrot.lane.b32.xlu0 %v905, 80
        %v1764 = vpop.permute.xlu0 %1763
        %1765 = vrot.lane.b32.xlu0 %v896, 80
        %v1766 = vpop.permute.xlu0 %1765
        %1767 = vrot.lane.b32.xlu0 %v906, 80
        %v1768 = vpop.permute.xlu0 %1767
        %1769 = vrot.lane.b32.xlu0 %v907, 80
        %v1770 = vpop.permute.xlu0 %1769
        %1771 = vrot.lane.b32.xlu0 %v902, 80
        %v1772 = vpop.permute.xlu0 %1771
        %1773 = vrot.lane.b32.xlu0 %v925, 80
        %v1774 = vpop.permute.xlu0 %1773
        %1775 = vrot.lane.b32.xlu0 %v926, 80
        %v1776 = vpop.permute.xlu0 %1775
        %1777 = vrot.lane.b32.xlu0 %v917, 80
        %v1778 = vpop.permute.xlu0 %1777
        %1779 = vrot.lane.b32.xlu0 %v927, 80
        %v1780 = vpop.permute.xlu0 %1779
        %1781 = vrot.lane.b32.xlu0 %v928, 80
        %v1782 = vpop.permute.xlu0 %1781
        %1783 = vrot.lane.b32.xlu0 %v923, 80
        %v1784 = vpop.permute.xlu0 %1783
        %1785 = vrot.lane.b32.xlu0 %v946, 80
        %v1786 = vpop.permute.xlu0 %1785
        %1787 = vrot.lane.b32.xlu0 %v947, 80
        %v1788 = vpop.permute.xlu0 %1787
        %1789 = vrot.lane.b32.xlu0 %v938, 80
        %v1790 = vpop.permute.xlu0 %1789
        %1791 = vrot.lane.b32.xlu0 %v948, 80
        %v1792 = vpop.permute.xlu0 %1791
        %1793 = vrot.lane.b32.xlu0 %v949, 80
        %v1794 = vpop.permute.xlu0 %1793
        %1795 = vrot.lane.b32.xlu0 %v944, 80
        %v1796 = vpop.permute.xlu0 %1795
        %1797 = vrot.lane.b32.xlu0 %v967, 80
        %v1798 = vpop.permute.xlu0 %1797
        %1799 = vrot.lane.b32.xlu0 %v968, 80
        %v1800 = vpop.permute.xlu0 %1799
        %1801 = vrot.lane.b32.xlu0 %v959, 80
        %v1802 = vpop.permute.xlu0 %1801
        %1803 = vrot.lane.b32.xlu0 %v969, 80
        %v1804 = vpop.permute.xlu0 %1803
        %1805 = vrot.lane.b32.xlu0 %v970, 80
        %v1806 = vpop.permute.xlu0 %1805
        %1807 = vrot.lane.b32.xlu0 %v965, 80
        %v1808 = vpop.permute.xlu0 %1807
        %vm1809 = vcmask 654336
        %v1810 = vsel %vm1809, %v1618, %v1620
        %v1811 = vsel %vm1809, %v1620, %v1622
        %v1812 = vsel %vm1809, %v1624, %v1626
        %v1813 = vsel %vm1809, %v1626, %v1628
        %v1814 = vsel %vm1809, %v1630, %v1632
        %v1815 = vsel %vm1809, %v1632, %v1634
        %v1816 = vsel %vm1809, %v1636, %v1638
        %v1817 = vsel %vm1809, %v1638, %v1640
        %v1818 = vsel %vm1809, %v1642, %v1644
        %v1819 = vsel %vm1809, %v1644, %v1646
        %v1820 = vsel %vm1809, %v1648, %v1650
        %v1821 = vsel %vm1809, %v1650, %v1652
        %v1822 = vsel %vm1809, %v1654, %v1656
        %v1823 = vsel %vm1809, %v1656, %v1658
        %v1824 = vsel %vm1809, %v1660, %v1662
        %v1825 = vsel %vm1809, %v1662, %v1664
        %v1826 = vsel %vm1809, %v1666, %v1668
        %v1827 = vsel %vm1809, %v1668, %v1670
        %v1828 = vsel %vm1809, %v1672, %v1674
        %v1829 = vsel %vm1809, %v1674, %v1676
        %v1830 = vsel %vm1809, %v1678, %v1680
        %v1831 = vsel %vm1809, %v1680, %v1682
        %v1832 = vsel %vm1809, %v1684, %v1686
        %v1833 = vsel %vm1809, %v1686, %v1688
        %v1834 = vsel %vm1809, %v1690, %v1692
        %v1835 = vsel %vm1809, %v1692, %v1694
        %v1836 = vsel %vm1809, %v1696, %v1698
        %v1837 = vsel %vm1809, %v1698, %v1700
        %v1838 = vsel %vm1809, %v1702, %v1704
        %v1839 = vsel %vm1809, %v1704, %v1706
        %v1840 = vsel %vm1809, %v1708, %v1710
        %v1841 = vsel %vm1809, %v1710, %v1712
        %v1842 = vsel %vm1809, %v1714, %v1716
        %v1843 = vsel %vm1809, %v1716, %v1718
        %v1844 = vsel %vm1809, %v1720, %v1722
        %v1845 = vsel %vm1809, %v1722, %v1724
        %v1846 = vsel %vm1809, %v1726, %v1728
        %v1847 = vsel %vm1809, %v1728, %v1730
        %v1848 = vsel %vm1809, %v1732, %v1734
        %v1849 = vsel %vm1809, %v1734, %v1736
        %v1850 = vsel %vm1809, %v1738, %v1740
        %v1851 = vsel %vm1809, %v1740, %v1742
        %v1852 = vsel %vm1809, %v1744, %v1746
        %v1853 = vsel %vm1809, %v1746, %v1748
        %v1854 = vsel %vm1809, %v1750, %v1752
        %v1855 = vsel %vm1809, %v1752, %v1754
        %v1856 = vsel %vm1809, %v1756, %v1758
        %v1857 = vsel %vm1809, %v1758, %v1760
        %v1858 = vsel %vm1809, %v1762, %v1764
        %v1859 = vsel %vm1809, %v1764, %v1766
        %v1860 = vsel %vm1809, %v1768, %v1770
        %v1861 = vsel %vm1809, %v1770, %v1772
        %v1862 = vsel %vm1809, %v1774, %v1776
        %v1863 = vsel %vm1809, %v1776, %v1778
        %v1864 = vsel %vm1809, %v1780, %v1782
        %v1865 = vsel %vm1809, %v1782, %v1784
        %v1866 = vsel %vm1809, %v1786, %v1788
        %v1867 = vsel %vm1809, %v1788, %v1790
        %v1868 = vsel %vm1809, %v1792, %v1794
        %v1869 = vsel %vm1809, %v1794, %v1796
        %v1870 = vsel %vm1809, %v1798, %v1800
        %v1871 = vsel %vm1809, %v1800, %v1802
        %v1872 = vsel %vm1809, %v1804, %v1806
        %v1873 = vsel %vm1809, %v1806, %v1808
        %v1938 = vld [vmem:[#allocation4] sm:$0xff]
        %v1939 = vld [vmem:[#allocation4 + $0x8] sm:$0xff]
        %v1940 = vld [vmem:[#allocation4 + $0x10] sm:$0xff]
        %v1941 = vld [vmem:[#allocation4 + $0x18] sm:$0xff]
        %v1942 = vld [vmem:[#allocation4 + $0x20] sm:$0xff]
        %v1943 = vld [vmem:[#allocation4 + $0x28] sm:$0xff]
        %v1944 = vld [vmem:[#allocation4 + $0x30] sm:$0xff]
        %v1945 = vld [vmem:[#allocation4 + $0x38] sm:$0xff]
        %v1946 = vld [vmem:[#allocation4 + $0x40] sm:$0xff]
        %v1947 = vld [vmem:[#allocation4 + $0x48] sm:$0xff]
        %v1948 = vld [vmem:[#allocation4 + $0x50] sm:$0xff]
        %v1949 = vld [vmem:[#allocation4 + $0x58] sm:$0xff]
        %v1950 = vld [vmem:[#allocation4 + $0x60] sm:$0xff]
        %v1951 = vld [vmem:[#allocation4 + $0x68] sm:$0xff]
        %v1952 = vld [vmem:[#allocation4 + $0x70] sm:$0xff]
        %v1953 = vld [vmem:[#allocation4 + $0x78] sm:$0xff]
        %v1954 = vld [vmem:[#allocation4 + $0x80] sm:$0xff]
        %v1955 = vld [vmem:[#allocation4 + $0x88] sm:$0xff]
        %v1956 = vld [vmem:[#allocation4 + $0x90] sm:$0xff]
        %v1957 = vld [vmem:[#allocation4 + $0x98] sm:$0xff]
        %v1958 = vld [vmem:[#allocation4 + $0xa0] sm:$0xff]
        %v1959 = vld [vmem:[#allocation4 + $0xa8] sm:$0xff]
        %v1960 = vld [vmem:[#allocation4 + $0xb0] sm:$0xff]
        %v1961 = vld [vmem:[#allocation4 + $0xb8] sm:$0xff]
        %v1962 = vld [vmem:[#allocation4 + $0xc0] sm:$0xff]
        %v1963 = vld [vmem:[#allocation4 + $0xc8] sm:$0xff]
        %v1964 = vld [vmem:[#allocation4 + $0xd0] sm:$0xff]
        %v1965 = vld [vmem:[#allocation4 + $0xd8] sm:$0xff]
        %v1966 = vld [vmem:[#allocation4 + $0xe0] sm:$0xff]
        %v1967 = vld [vmem:[#allocation4 + $0xe8] sm:$0xff]
        %v1968 = vld [vmem:[#allocation4 + $0xf0] sm:$0xff]
        %v1969 = vld [vmem:[#allocation4 + $0xf8] sm:$0xff]
        %v1970 = vld [vmem:[#allocation4 + $0x100] sm:$0xff]
        %v1971 = vld [vmem:[#allocation4 + $0x108] sm:$0xff]
        %v1972 = vld [vmem:[#allocation4 + $0x110] sm:$0xff]
        %v1973 = vld [vmem:[#allocation4 + $0x118] sm:$0xff]
        %v1974 = vld [vmem:[#allocation4 + $0x120] sm:$0xff]
        %v1975 = vld [vmem:[#allocation4 + $0x128] sm:$0xff]
        %v1976 = vld [vmem:[#allocation4 + $0x130] sm:$0xff]
        %v1977 = vld [vmem:[#allocation4 + $0x138] sm:$0xff]
        %v1978 = vld [vmem:[#allocation4 + $0x140] sm:$0xff]
        %v1979 = vld [vmem:[#allocation4 + $0x148] sm:$0xff]
        %v1980 = vld [vmem:[#allocation4 + $0x150] sm:$0xff]
        %v1981 = vld [vmem:[#allocation4 + $0x158] sm:$0xff]
        %v1982 = vld [vmem:[#allocation4 + $0x160] sm:$0xff]
        %v1983 = vld [vmem:[#allocation4 + $0x168] sm:$0xff]
        %v1984 = vld [vmem:[#allocation4 + $0x170] sm:$0xff]
        %v1985 = vld [vmem:[#allocation4 + $0x178] sm:$0xff]
        %v1986 = vld [vmem:[%s4] sm:$0xff]
        %v1987 = vld [vmem:[%s4 + $0x8] sm:$0xff]
        %v1988 = vld [vmem:[%s4 + $0x10] sm:$0xff]
        %v1989 = vld [vmem:[%s4 + $0x18] sm:$0xff]
        %v1990 = vld [vmem:[%s4 + $0x20] sm:$0xff]
        %v1991 = vld [vmem:[%s4 + $0x28] sm:$0xff]
        %1993 = vset.pattern.permute.xlu0 0
        %1994 = vperm.xlu0 %1993, %v1986
        %v1995 = vpop.permute.xlu0 %1994
        %1998 = vset.pattern.permute.xlu0 0
        %1999 = vperm.xlu0 %1998, %v1987
        %v2000 = vpop.permute.xlu0 %1999
        %2003 = vset.pattern.permute.xlu0 0
        %2004 = vperm.xlu0 %2003, %v1988
        %v2005 = vpop.permute.xlu0 %2004
        %2008 = vset.pattern.permute.xlu0 0
        %2009 = vperm.xlu0 %2008, %v1989
        %v2010 = vpop.permute.xlu0 %2009
        %2013 = vset.pattern.permute.xlu0 0
        %2014 = vperm.xlu0 %2013, %v1990
        %v2015 = vpop.permute.xlu0 %2014
        %2018 = vset.pattern.permute.xlu0 0
        %2019 = vperm.xlu0 %2018, %v1991
        %v2020 = vpop.permute.xlu0 %2019
        %2022 = vmatprep.subr.mxu0 %v644
        %2023 = vmatpush1.msra.mxu0 %v652
        %2024 = vmatprep.subr.mxu0 %v645
        %2025 = vmatpush1.msra.mxu0 %v653
        %2026 = vmatprep.subr.mxu0 %v674
        %2027 = vmatpush1.msra.mxu0 %v673
        %2028 = vmatprep.subr.mxu0 %v676
        %2029 = vmatpush1.msra.mxu0 %v675
        %2030 = vmatprep.subr.mxu0 %v695
        %2031 = vmatpush1.msra.mxu0 %v694
        %2032 = vmatprep.subr.mxu0 %v697
        %2033 = vmatpush1.msra.mxu0 %v696
        %2034 = vmatprep.subr.mxu0 %v716
        %2035 = vmatpush1.msra.mxu0 %v715
        %2036 = vmatprep.subr.mxu0 %v718
        %2037 = vmatpush1.msra.mxu0 %v717
        %2038 = vmatprep.subr.mxu0 %v737
        %2039 = vmatpush1.msra.mxu0 %v736
        %2040 = vmatprep.subr.mxu0 %v739
        %2041 = vmatpush1.msra.mxu0 %v738
        %2042 = vmatprep.subr.mxu0 %v758
        %2043 = vmatpush1.msra.mxu0 %v757
        %2044 = vmatprep.subr.mxu0 %v760
        %2045 = vmatpush1.msra.mxu0 %v759
        %2046 = vmatprep.subr.mxu0 %v779
        %2047 = vmatpush1.msra.mxu0 %v778
        %2048 = vmatprep.subr.mxu0 %v781
        %2049 = vmatpush1.msra.mxu0 %v780
        %2050 = vmatprep.subr.mxu0 %v800
        %2051 = vmatpush1.msra.mxu0 %v799
        %2052 = vmatprep.subr.mxu0 %v802
        %2053 = vmatpush1.msra.mxu0 %v801
        %2054 = vmatprep.subr.mxu0 %v821
        %2055 = vmatpush1.msra.mxu0 %v820
        %2056 = vmatprep.subr.mxu0 %v823
        %2057 = vmatpush1.msra.mxu0 %v822
        %2058 = vmatprep.subr.mxu0 %v842
        %2059 = vmatpush1.msra.mxu0 %v841
        %2060 = vmatprep.subr.mxu0 %v844
        %2061 = vmatpush1.msra.mxu0 %v843
        %2062 = vmatprep.subr.mxu0 %v863
        %2063 = vmatpush1.msra.mxu0 %v862
        %2064 = vmatprep.subr.mxu0 %v865
        %2065 = vmatpush1.msra.mxu0 %v864
        %2066 = vmatprep.subr.mxu0 %v884
        %2067 = vmatpush1.msra.mxu0 %v883
        %2068 = vmatprep.subr.mxu0 %v886
        %2069 = vmatpush1.msra.mxu0 %v885
        %2070 = vmatprep.subr.mxu0 %v905
        %2071 = vmatpush1.msra.mxu0 %v904
        %2072 = vmatprep.subr.mxu0 %v907
        %2073 = vmatpush1.msra.mxu0 %v906
        %2074 = vmatprep.subr.mxu0 %v926
        %2075 = vmatpush1.msra.mxu0 %v925
        %2076 = vmatprep.subr.mxu0 %v928
        %2077 = vmatpush1.msra.mxu0 %v927
        %2078 = vmatprep.subr.mxu0 %v947
        %2079 = vmatpush1.msra.mxu0 %v946
        %2080 = vmatprep.subr.mxu0 %v949
        %2081 = vmatpush1.msra.mxu0 %v948
        %2082 = vmatprep.subr.mxu0 %v968
        %2083 = vmatpush1.msra.mxu0 %v967
        %2084 = vmatprep.subr.mxu0 %v970
        %2085 = vmatpush1.msra.mxu0 %v969
        %2086 = vmatprep.mubr.f32.mxu0 %v1939
        %2087 = vmatmul.mubr.f32.gmra.mrb[0].mxu0 %v1938
        %v2088 = vpop.f32.mrb[0].mxu0
        %v2089 = vadd.f32 %v1995, %v2088
        %v2090 = vpop.f32.mrb[0].mxu0
        %v2091 = vadd.f32 %v1995, %v2090
        %2092 = vmatprep.mubr.f32.mxu0 %v1947
        %2093 = vmatmul.mubr.f32.gmra.mrb[0].mxu0 %v1946
        %v2094 = vpop.f32.mrb[0].mxu0
        %v2095 = vadd.f32 %v2000, %v2094
        %v2096 = vpop.f32.mrb[0].mxu0
        %v2097 = vadd.f32 %v2000, %v2096
        %2098 = vmatprep.mubr.f32.mxu0 %v1955
        %2099 = vmatmul.mubr.f32.gmra.mrb[0].mxu0 %v1954
        %v2100 = vpop.f32.mrb[0].mxu0
        %v2101 = vadd.f32 %v2005, %v2100
        %v2102 = vpop.f32.mrb[0].mxu0
        %v2103 = vadd.f32 %v2005, %v2102
        %2104 = vmatprep.mubr.f32.mxu0 %v1963
        %2105 = vmatmul.mubr.f32.gmra.mrb[0].mxu0 %v1962
        %v2106 = vpop.f32.mrb[0].mxu0
        %v2107 = vadd.f32 %v2010, %v2106
        %v2108 = vpop.f32.mrb[0].mxu0
        %v2109 = vadd.f32 %v2010, %v2108
        %2110 = vmatprep.mubr.f32.mxu0 %v1971
        %2111 = vmatmul.mubr.f32.gmra.mrb[0].mxu0 %v1970
        %v2112 = vpop.f32.mrb[0].mxu0
        %v2113 = vadd.f32 %v2015, %v2112
        %v2114 = vpop.f32.mrb[0].mxu0
        %v2115 = vadd.f32 %v2015, %v2114
        %2116 = vmatprep.mubr.f32.mxu0 %v1979
        %2117 = vmatmul.mubr.f32.gmra.mrb[0].mxu0 %v1978
        %v2118 = vpop.f32.mrb[0].mxu0
        %v2119 = vadd.f32 %v2020, %v2118
        %v2120 = vpop.f32.mrb[0].mxu0
        %v2121 = vadd.f32 %v2020, %v2120
        %2122 = vdwg.mxu0
        %2123 = vmatprep.subr.mxu0 %v1169
        %2124 = vmatpush1.msra.mxu0 %v1168
        %2125 = vmatprep.subr.mxu0 %v1171
        %2126 = vmatpush1.msra.mxu0 %v1170
        %2127 = vmatprep.subr.mxu0 %v1173
        %2128 = vmatpush1.msra.mxu0 %v1172
        %2129 = vmatprep.subr.mxu0 %v1175
        %2130 = vmatpush1.msra.mxu0 %v1174
        %2131 = vmatprep.subr.mxu0 %v1177
        %2132 = vmatpush1.msra.mxu0 %v1176
        %2133 = vmatprep.subr.mxu0 %v1179
        %2134 = vmatpush1.msra.mxu0 %v1178
        %2135 = vmatprep.subr.mxu0 %v1181
        %2136 = vmatpush1.msra.mxu0 %v1180
        %2137 = vmatprep.subr.mxu0 %v1183
        %2138 = vmatpush1.msra.mxu0 %v1182
        %2139 = vmatprep.subr.mxu0 %v1185
        %2140 = vmatpush1.msra.mxu0 %v1184
        %2141 = vmatprep.subr.mxu0 %v1187
        %2142 = vmatpush1.msra.mxu0 %v1186
        %2143 = vmatprep.subr.mxu0 %v1189
        %2144 = vmatpush1.msra.mxu0 %v1188
        %2145 = vmatprep.subr.mxu0 %v1191
        %2146 = vmatpush1.msra.mxu0 %v1190
        %2147 = vmatprep.subr.mxu0 %v1193
        %2148 = vmatpush1.msra.mxu0 %v1192
        %2149 = vmatprep.subr.mxu0 %v1195
        %2150 = vmatpush1.msra.mxu0 %v1194
        %2151 = vmatprep.subr.mxu0 %v1197
        %2152 = vmatpush1.msra.mxu0 %v1196
        %2153 = vmatprep.subr.mxu0 %v1199
        %2154 = vmatpush1.msra.mxu0 %v1198
        %2155 = vmatprep.subr.mxu0 %v1201
        %2156 = vmatpush1.msra.mxu0 %v1200
        %2157 = vmatprep.subr.mxu0 %v1203
        %2158 = vmatpush1.msra.mxu0 %v1202
        %2159 = vmatprep.subr.mxu0 %v1205
        %2160 = vmatpush1.msra.mxu0 %v1204
        %2161 = vmatprep.subr.mxu0 %v1207
        %2162 = vmatpush1.msra.mxu0 %v1206
        %2163 = vmatprep.subr.mxu0 %v1209
        %2164 = vmatpush1.msra.mxu0 %v1208
        %2165 = vmatprep.subr.mxu0 %v1211
        %2166 = vmatpush1.msra.mxu0 %v1210
        %2167 = vmatprep.subr.mxu0 %v1213
        %2168 = vmatpush1.msra.mxu0 %v1212
        %2169 = vmatprep.subr.mxu0 %v1215
        %2170 = vmatpush1.msra.mxu0 %v1214
        %2171 = vmatprep.subr.mxu0 %v1217
        %2172 = vmatpush1.msra.mxu0 %v1216
        %2173 = vmatprep.subr.mxu0 %v1219
        %2174 = vmatpush1.msra.mxu0 %v1218
        %2175 = vmatprep.subr.mxu0 %v1221
        %2176 = vmatpush1.msra.mxu0 %v1220
        %2177 = vmatprep.subr.mxu0 %v1223
        %2178 = vmatpush1.msra.mxu0 %v1222
        %2179 = vmatprep.subr.mxu0 %v1225
        %2180 = vmatpush1.msra.mxu0 %v1224
        %2181 = vmatprep.subr.mxu0 %v1227
        %2182 = vmatpush1.msra.mxu0 %v1226
        %2183 = vmatprep.subr.mxu0 %v1229
        %2184 = vmatpush1.msra.mxu0 %v1228
        %2185 = vmatprep.subr.mxu0 %v1231
        %2186 = vmatpush1.msra.mxu0 %v1230
        %2187 = vmatprep.mubr.f32.mxu0 %v1941
        %2188 = vmatmul.mubr.f32.gmra.mrb[0].mxu0 %v1940
        %v2189 = vpop.f32.mrb[0].mxu0
        %v2190 = vadd.f32 %v2089, %v2189
        %v2191 = vpop.f32.mrb[0].mxu0
        %v2192 = vadd.f32 %v2091, %v2191
        %2193 = vmatprep.mubr.f32.mxu0 %v1949
        %2194 = vmatmul.mubr.f32.gmra.mrb[0].mxu0 %v1948
        %v2195 = vpop.f32.mrb[0].mxu0
        %v2196 = vadd.f32 %v2095, %v2195
        %v2197 = vpop.f32.mrb[0].mxu0
        %v2198 = vadd.f32 %v2097, %v2197
        %2199 = vmatprep.mubr.f32.mxu0 %v1957
        %2200 = vmatmul.mubr.f32.gmra.mrb[0].mxu0 %v1956
        %v2201 = vpop.f32.mrb[0].mxu0
        %v2202 = vadd.f32 %v2101, %v2201
        %v2203 = vpop.f32.mrb[0].mxu0
        %v2204 = vadd.f32 %v2103, %v2203
        %2205 = vmatprep.mubr.f32.mxu0 %v1965
        %2206 = vmatmul.mubr.f32.gmra.mrb[0].mxu0 %v1964
        %v2207 = vpop.f32.mrb[0].mxu0
        %v2208 = vadd.f32 %v2107, %v2207
        %v2209 = vpop.f32.mrb[0].mxu0
        %v2210 = vadd.f32 %v2109, %v2209
        %2211 = vmatprep.mubr.f32.mxu0 %v1973
        %2212 = vmatmul.mubr.f32.gmra.mrb[0].mxu0 %v1972
        %v2213 = vpop.f32.mrb[0].mxu0
        %v2214 = vadd.f32 %v2113, %v2213
        %v2215 = vpop.f32.mrb[0].mxu0
        %v2216 = vadd.f32 %v2115, %v2215
        %2217 = vmatprep.mubr.f32.mxu0 %v1981
        %2218 = vmatmul.mubr.f32.gmra.mrb[0].mxu0 %v1980
        %v2219 = vpop.f32.mrb[0].mxu0
        %v2220 = vadd.f32 %v2119, %v2219
        %v2221 = vpop.f32.mrb[0].mxu0
        %v2222 = vadd.f32 %v2121, %v2221
        %2223 = vdwg.mxu0
        %2224 = vmatprep.subr.mxu0 %v1490
        %2225 = vmatpush1.msra.mxu0 %v1489
        %2226 = vmatprep.subr.mxu0 %v1492
        %2227 = vmatpush1.msra.mxu0 %v1491
        %2228 = vmatprep.subr.mxu0 %v1494
        %2229 = vmatpush1.msra.mxu0 %v1493
        %2230 = vmatprep.subr.mxu0 %v1496
        %2231 = vmatpush1.msra.mxu0 %v1495
        %2232 = vmatprep.subr.mxu0 %v1498
        %2233 = vmatpush1.msra.mxu0 %v1497
        %2234 = vmatprep.subr.mxu0 %v1500
        %2235 = vmatpush1.msra.mxu0 %v1499
        %2236 = vmatprep.subr.mxu0 %v1502
        %2237 = vmatpush1.msra.mxu0 %v1501
        %2238 = vmatprep.subr.mxu0 %v1504
        %2239 = vmatpush1.msra.mxu0 %v1503
        %2240 = vmatprep.subr.mxu0 %v1506
        %2241 = vmatpush1.msra.mxu0 %v1505
        %2242 = vmatprep.subr.mxu0 %v1508
        %2243 = vmatpush1.msra.mxu0 %v1507
        %2244 = vmatprep.subr.mxu0 %v1510
        %2245 = vmatpush1.msra.mxu0 %v1509
        %2246 = vmatprep.subr.mxu0 %v1512
        %2247 = vmatpush1.msra.mxu0 %v1511
        %2248 = vmatprep.subr.mxu0 %v1514
        %2249 = vmatpush1.msra.mxu0 %v1513
        %2250 = vmatprep.subr.mxu0 %v1516
        %2251 = vmatpush1.msra.mxu0 %v1515
        %2252 = vmatprep.subr.mxu0 %v1518
        %2253 = vmatpush1.msra.mxu0 %v1517
        %2254 = vmatprep.subr.mxu0 %v1520
        %2255 = vmatpush1.msra.mxu0 %v1519
        %2256 = vmatprep.subr.mxu0 %v1522
        %2257 = vmatpush1.msra.mxu0 %v1521
        %2258 = vmatprep.subr.mxu0 %v1524
        %2259 = vmatpush1.msra.mxu0 %v1523
        %2260 = vmatprep.subr.mxu0 %v1526
        %2261 = vmatpush1.msra.mxu0 %v1525
        %2262 = vmatprep.subr.mxu0 %v1528
        %2263 = vmatpush1.msra.mxu0 %v1527
        %2264 = vmatprep.subr.mxu0 %v1530
        %2265 = vmatpush1.msra.mxu0 %v1529
        %2266 = vmatprep.subr.mxu0 %v1532
        %2267 = vmatpush1.msra.mxu0 %v1531
        %2268 = vmatprep.subr.mxu0 %v1534
        %2269 = vmatpush1.msra.mxu0 %v1533
        %2270 = vmatprep.subr.mxu0 %v1536
        %2271 = vmatpush1.msra.mxu0 %v1535
        %2272 = vmatprep.subr.mxu0 %v1538
        %2273 = vmatpush1.msra.mxu0 %v1537
        %2274 = vmatprep.subr.mxu0 %v1540
        %2275 = vmatpush1.msra.mxu0 %v1539
        %2276 = vmatprep.subr.mxu0 %v1542
        %2277 = vmatpush1.msra.mxu0 %v1541
        %2278 = vmatprep.subr.mxu0 %v1544
        %2279 = vmatpush1.msra.mxu0 %v1543
        %2280 = vmatprep.subr.mxu0 %v1546
        %2281 = vmatpush1.msra.mxu0 %v1545
        %2282 = vmatprep.subr.mxu0 %v1548
        %2283 = vmatpush1.msra.mxu0 %v1547
        %2284 = vmatprep.subr.mxu0 %v1550
        %2285 = vmatpush1.msra.mxu0 %v1549
        %2286 = vmatprep.subr.mxu0 %v1552
        %2287 = vmatpush1.msra.mxu0 %v1551
        %2288 = vmatprep.mubr.f32.mxu0 %v1943
        %2289 = vmatmul.mubr.f32.gmra.mrb[0].mxu0 %v1942
        %v2290 = vpop.f32.mrb[0].mxu0
        %v2291 = vadd.f32 %v2190, %v2290
        %v2292 = vpop.f32.mrb[0].mxu0
        %v2293 = vadd.f32 %v2192, %v2292
        %2294 = vmatprep.mubr.f32.mxu0 %v1951
        %2295 = vmatmul.mubr.f32.gmra.mrb[0].mxu0 %v1950
        %v2296 = vpop.f32.mrb[0].mxu0
        %v2297 = vadd.f32 %v2196, %v2296
        %v2298 = vpop.f32.mrb[0].mxu0
        %v2299 = vadd.f32 %v2198, %v2298
        %2300 = vmatprep.mubr.f32.mxu0 %v1959
        %2301 = vmatmul.mubr.f32.gmra.mrb[0].mxu0 %v1958
        %v2302 = vpop.f32.mrb[0].mxu0
        %v2303 = vadd.f32 %v2202, %v2302
        %v2304 = vpop.f32.mrb[0].mxu0
        %v2305 = vadd.f32 %v2204, %v2304
        %2306 = vmatprep.mubr.f32.mxu0 %v1967
        %2307 = vmatmul.mubr.f32.gmra.mrb[0].mxu0 %v1966
        %v2308 = vpop.f32.mrb[0].mxu0
        %v2309 = vadd.f32 %v2208, %v2308
        %v2310 = vpop.f32.mrb[0].mxu0
        %v2311 = vadd.f32 %v2210, %v2310
        %2312 = vmatprep.mubr.f32.mxu0 %v1975
        %2313 = vmatmul.mubr.f32.gmra.mrb[0].mxu0 %v1974
        %v2314 = vpop.f32.mrb[0].mxu0
        %v2315 = vadd.f32 %v2214, %v2314
        %v2316 = vpop.f32.mrb[0].mxu0
        %v2317 = vadd.f32 %v2216, %v2316
        %2318 = vmatprep.mubr.f32.mxu0 %v1983
        %2319 = vmatmul.mubr.f32.gmra.mrb[0].mxu0 %v1982
        %v2320 = vpop.f32.mrb[0].mxu0
        %v2321 = vadd.f32 %v2220, %v2320
        %v2322 = vpop.f32.mrb[0].mxu0
        %v2323 = vadd.f32 %v2222, %v2322
        %2324 = vdwg.mxu0
        %2325 = vmatprep.subr.mxu0 %v1811
        %2326 = vmatpush1.msra.mxu0 %v1810
        %2327 = vmatprep.subr.mxu0 %v1813
        %2328 = vmatpush1.msra.mxu0 %v1812
        %2329 = vmatprep.subr.mxu0 %v1815
        %2330 = vmatpush1.msra.mxu0 %v1814
        %2331 = vmatprep.subr.mxu0 %v1817
        %2332 = vmatpush1.msra.mxu0 %v1816
        %2333 = vmatprep.subr.mxu0 %v1819
        %2334 = vmatpush1.msra.mxu0 %v1818
        %2335 = vmatprep.subr.mxu0 %v1821
        %2336 = vmatpush1.msra.mxu0 %v1820
        %2337 = vmatprep.subr.mxu0 %v1823
        %2338 = vmatpush1.msra.mxu0 %v1822
        %2339 = vmatprep.subr.mxu0 %v1825
        %2340 = vmatpush1.msra.mxu0 %v1824
        %2341 = vmatprep.subr.mxu0 %v1827
        %2342 = vmatpush1.msra.mxu0 %v1826
        %2343 = vmatprep.subr.mxu0 %v1829
        %2344 = vmatpush1.msra.mxu0 %v1828
        %2345 = vmatprep.subr.mxu0 %v1831
        %2346 = vmatpush1.msra.mxu0 %v1830
        %2347 = vmatprep.subr.mxu0 %v1833
        %2348 = vmatpush1.msra.mxu0 %v1832
        %2349 = vmatprep.subr.mxu0 %v1835
        %2350 = vmatpush1.msra.mxu0 %v1834
        %2351 = vmatprep.subr.mxu0 %v1837
        %2352 = vmatpush1.msra.mxu0 %v1836
        %2353 = vmatprep.subr.mxu0 %v1839
        %2354 = vmatpush1.msra.mxu0 %v1838
        %2355 = vmatprep.subr.mxu0 %v1841
        %2356 = vmatpush1.msra.mxu0 %v1840
        %2357 = vmatprep.subr.mxu0 %v1843
        %2358 = vmatpush1.msra.mxu0 %v1842
        %2359 = vmatprep.subr.mxu0 %v1845
        %2360 = vmatpush1.msra.mxu0 %v1844
        %2361 = vmatprep.subr.mxu0 %v1847
        %2362 = vmatpush1.msra.mxu0 %v1846
        %2363 = vmatprep.subr.mxu0 %v1849
        %2364 = vmatpush1.msra.mxu0 %v1848
        %2365 = vmatprep.subr.mxu0 %v1851
        %2366 = vmatpush1.msra.mxu0 %v1850
        %2367 = vmatprep.subr.mxu0 %v1853
        %2368 = vmatpush1.msra.mxu0 %v1852
        %2369 = vmatprep.subr.mxu0 %v1855
        %2370 = vmatpush1.msra.mxu0 %v1854
        %2371 = vmatprep.subr.mxu0 %v1857
        %2372 = vmatpush1.msra.mxu0 %v1856
        %2373 = vmatprep.subr.mxu0 %v1859
        %2374 = vmatpush1.msra.mxu0 %v1858
        %2375 = vmatprep.subr.mxu0 %v1861
        %2376 = vmatpush1.msra.mxu0 %v1860
        %2377 = vmatprep.subr.mxu0 %v1863
        %2378 = vmatpush1.msra.mxu0 %v1862
        %2379 = vmatprep.subr.mxu0 %v1865
        %2380 = vmatpush1.msra.mxu0 %v1864
        %2381 = vmatprep.subr.mxu0 %v1867
        %2382 = vmatpush1.msra.mxu0 %v1866
        %2383 = vmatprep.subr.mxu0 %v1869
        %2384 = vmatpush1.msra.mxu0 %v1868
        %2385 = vmatprep.subr.mxu0 %v1871
        %2386 = vmatpush1.msra.mxu0 %v1870
        %2387 = vmatprep.subr.mxu0 %v1873
        %2388 = vmatpush1.msra.mxu0 %v1872
        %2389 = vmatprep.mubr.f32.mxu0 %v1945
        %2390 = vmatmul.mubr.f32.gmra.mrb[0].mxu0 %v1944
        %v2391 = vpop.f32.mrb[0].mxu0
        %v2392 = vadd.f32 %v2291, %v2391
        %v2393 = vpop.f32.mrb[0].mxu0
        %v2394 = vadd.f32 %v2293, %v2393
        %2395 = vmatprep.mubr.f32.mxu0 %v1953
        %2396 = vmatmul.mubr.f32.gmra.mrb[0].mxu0 %v1952
        %v2397 = vpop.f32.mrb[0].mxu0
        %v2398 = vadd.f32 %v2297, %v2397
        %v2399 = vpop.f32.mrb[0].mxu0
        %v2400 = vadd.f32 %v2299, %v2399
        %2401 = vmatprep.mubr.f32.mxu0 %v1961
        %2402 = vmatmul.mubr.f32.gmra.mrb[0].mxu0 %v1960
        %v2403 = vpop.f32.mrb[0].mxu0
        %v2404 = vadd.f32 %v2303, %v2403
        %v2405 = vpop.f32.mrb[0].mxu0
        %v2406 = vadd.f32 %v2305, %v2405
        %2407 = vmatprep.mubr.f32.mxu0 %v1969
        %2408 = vmatmul.mubr.f32.gmra.mrb[0].mxu0 %v1968
        %v2409 = vpop.f32.mrb[0].mxu0
        %v2410 = vadd.f32 %v2309, %v2409
        %v2411 = vpop.f32.mrb[0].mxu0
        %v2412 = vadd.f32 %v2311, %v2411
        %2413 = vmatprep.mubr.f32.mxu0 %v1977
        %2414 = vmatmul.mubr.f32.gmra.mrb[0].mxu0 %v1976
        %v2415 = vpop.f32.mrb[0].mxu0
        %v2416 = vadd.f32 %v2315, %v2415
        %v2417 = vpop.f32.mrb[0].mxu0
        %v2418 = vadd.f32 %v2317, %v2417
        %2419 = vmatprep.mubr.f32.mxu0 %v1985
        %2420 = vmatmul.mubr.f32.gmra.mrb[0].mxu0 %v1984
        %v2421 = vpop.f32.mrb[0].mxu0
        %v2422 = vadd.f32 %v2321, %v2421
        %v2423 = vpop.f32.mrb[0].mxu0
        %v2424 = vadd.f32 %v2323, %v2423
        %2425 = vdwg.mxu0
        %v2426 = vmax.f32 %v2392, 0.0
        %v2427 = vmax.f32 %v2394, 0.0
        %v2428 = vmax.f32 %v2398, 0.0
        %v2429 = vmax.f32 %v2400, 0.0
        %v2430 = vmax.f32 %v2404, 0.0
        %v2431 = vmax.f32 %v2406, 0.0
        %v2432 = vmax.f32 %v2410, 0.0
        %v2433 = vmax.f32 %v2412, 0.0
        %v2434 = vmax.f32 %v2416, 0.0
        %v2435 = vmax.f32 %v2418, 0.0
        %v2436 = vmax.f32 %v2422, 0.0
        %v2437 = vmax.f32 %v2424, 0.0
        %v2438 = vadd.f32 %v2426, %v2430
        %v2439 = vadd.f32 %v2427, %v2431
        %v2440 = vadd.f32 %v2428, %v2432
        %v2441 = vadd.f32 %v2429, %v2433
        %v2442 = vadd.f32 %v2438, %v2434
        %v2443 = vadd.f32 %v2439, %v2435
        %v2444 = vadd.f32 %v2440, %v2436
        %v2445 = vadd.f32 %v2441, %v2437
        %2450 = vrot.lane.b32.xlu0 %v2442, 31
        %v2451 = vpop.permute.xlu0 %2450
        %2452 = vrot.lane.b32.xlu0 %v2443, 31
        %v2453 = vpop.permute.xlu0 %2452
        %2454 = vrot.lane.b32.xlu0 %v2444, 31
        %v2455 = vpop.permute.xlu0 %2454
        %2456 = vrot.lane.b32.xlu0 %v2445, 31
        %v2457 = vpop.permute.xlu0 %2456
        %v2458 = vsel %vm643, %v2451, %v2453
        %v2459 = vsel %vm643, %v2455, %v2457
        %v2466 = vsel %vm643, 0.0, %v2451
        %v2467 = vsel %vm643, 0.0, %v2455
        %v2468 = vsel %vm643, %v2453, 0.0
        %v2469 = vsel %vm643, %v2457, 0.0
        %2474 = vrot.lane.b32.xlu0 %v2466, 127
        %v2475 = vpop.permute.xlu0 %2474
        %2476 = vrot.lane.b32.xlu0 %v2458, 127
        %v2477 = vpop.permute.xlu0 %2476
        %2478 = vrot.lane.b32.xlu0 %v2468, 127
        %v2479 = vpop.permute.xlu0 %2478
        %2480 = vrot.lane.b32.xlu0 %v2467, 127
        %v2481 = vpop.permute.xlu0 %2480
        %2482 = vrot.lane.b32.xlu0 %v2459, 127
        %v2483 = vpop.permute.xlu0 %2482
        %2484 = vrot.lane.b32.xlu0 %v2469, 127
        %v2485 = vpop.permute.xlu0 %2484
        %v2486 = vsel %vm672, %v2475, %v2477
        %v2487 = vsel %vm672, %v2477, %v2479
        %v2488 = vsel %vm672, %v2481, %v2483
        %v2489 = vsel %vm672, %v2483, %v2485
        %2494 = vrot.lane.b32.xlu0 %v2466, 126
        %v2495 = vpop.permute.xlu0 %2494
        %2496 = vrot.lane.b32.xlu0 %v2458, 126
        %v2497 = vpop.permute.xlu0 %2496
        %2498 = vrot.lane.b32.xlu0 %v2468, 126
        %v2499 = vpop.permute.xlu0 %2498
        %2500 = vrot.lane.b32.xlu0 %v2467, 126
        %v2501 = vpop.permute.xlu0 %2500
        %2502 = vrot.lane.b32.xlu0 %v2459, 126
        %v2503 = vpop.permute.xlu0 %2502
        %2504 = vrot.lane.b32.xlu0 %v2469, 126
        %v2505 = vpop.permute.xlu0 %2504
        %v2506 = vsel %vm693, %v2495, %v2497
        %v2507 = vsel %vm693, %v2497, %v2499
        %v2508 = vsel %vm693, %v2501, %v2503
        %v2509 = vsel %vm693, %v2503, %v2505
        %2514 = vrot.lane.b32.xlu0 %v2466, 125
        %v2515 = vpop.permute.xlu0 %2514
        %2516 = vrot.lane.b32.xlu0 %v2458, 125
        %v2517 = vpop.permute.xlu0 %2516
        %2518 = vrot.lane.b32.xlu0 %v2468, 125
        %v2519 = vpop.permute.xlu0 %2518
        %2520 = vrot.lane.b32.xlu0 %v2467, 125
        %v2521 = vpop.permute.xlu0 %2520
        %2522 = vrot.lane.b32.xlu0 %v2459, 125
        %v2523 = vpop.permute.xlu0 %2522
        %2524 = vrot.lane.b32.xlu0 %v2469, 125
        %v2525 = vpop.permute.xlu0 %2524
        %v2526 = vsel %vm714, %v2515, %v2517
        %v2527 = vsel %vm714, %v2517, %v2519
        %v2528 = vsel %vm714, %v2521, %v2523
        %v2529 = vsel %vm714, %v2523, %v2525
        %2534 = vrot.lane.b32.xlu0 %v2466, 124
        %v2535 = vpop.permute.xlu0 %2534
        %2536 = vrot.lane.b32.xlu0 %v2458, 124
        %v2537 = vpop.permute.xlu0 %2536
        %2538 = vrot.lane.b32.xlu0 %v2468, 124
        %v2539 = vpop.permute.xlu0 %2538
        %2540 = vrot.lane.b32.xlu0 %v2467, 124
        %v2541 = vpop.permute.xlu0 %2540
        %2542 = vrot.lane.b32.xlu0 %v2459, 124
        %v2543 = vpop.permute.xlu0 %2542
        %2544 = vrot.lane.b32.xlu0 %v2469, 124
        %v2545 = vpop.permute.xlu0 %2544
        %v2546 = vsel %vm735, %v2535, %v2537
        %v2547 = vsel %vm735, %v2537, %v2539
        %v2548 = vsel %vm735, %v2541, %v2543
        %v2549 = vsel %vm735, %v2543, %v2545
        %2554 = vrot.lane.b32.xlu0 %v2466, 123
        %v2555 = vpop.permute.xlu0 %2554
        %2556 = vrot.lane.b32.xlu0 %v2458, 123
        %v2557 = vpop.permute.xlu0 %2556
        %2558 = vrot.lane.b32.xlu0 %v2468, 123
        %v2559 = vpop.permute.xlu0 %2558
        %2560 = vrot.lane.b32.xlu0 %v2467, 123
        %v2561 = vpop.permute.xlu0 %2560
        %2562 = vrot.lane.b32.xlu0 %v2459, 123
        %v2563 = vpop.permute.xlu0 %2562
        %2564 = vrot.lane.b32.xlu0 %v2469, 123
        %v2565 = vpop.permute.xlu0 %2564
        %v2566 = vsel %vm756, %v2555, %v2557
        %v2567 = vsel %vm756, %v2557, %v2559
        %v2568 = vsel %vm756, %v2561, %v2563
        %v2569 = vsel %vm756, %v2563, %v2565
        %2574 = vrot.lane.b32.xlu0 %v2466, 122
        %v2575 = vpop.permute.xlu0 %2574
        %2576 = vrot.lane.b32.xlu0 %v2458, 122
        %v2577 = vpop.permute.xlu0 %2576
        %2578 = vrot.lane.b32.xlu0 %v2468, 122
        %v2579 = vpop.permute.xlu0 %2578
        %2580 = vrot.lane.b32.xlu0 %v2467, 122
        %v2581 = vpop.permute.xlu0 %2580
        %2582 = vrot.lane.b32.xlu0 %v2459, 122
        %v2583 = vpop.permute.xlu0 %2582
        %2584 = vrot.lane.b32.xlu0 %v2469, 122
        %v2585 = vpop.permute.xlu0 %2584
        %v2586 = vsel %vm777, %v2575, %v2577
        %v2587 = vsel %vm777, %v2577, %v2579
        %v2588 = vsel %vm777, %v2581, %v2583
        %v2589 = vsel %vm777, %v2583, %v2585
        %2594 = vrot.lane.b32.xlu0 %v2466, 121
        %v2595 = vpop.permute.xlu0 %2594
        %2596 = vrot.lane.b32.xlu0 %v2458, 121
        %v2597 = vpop.permute.xlu0 %2596
        %2598 = vrot.lane.b32.xlu0 %v2468, 121
        %v2599 = vpop.permute.xlu0 %2598
        %2600 = vrot.lane.b32.xlu0 %v2467, 121
        %v2601 = vpop.permute.xlu0 %2600
        %2602 = vrot.lane.b32.xlu0 %v2459, 121
        %v2603 = vpop.permute.xlu0 %2602
        %2604 = vrot.lane.b32.xlu0 %v2469, 121
        %v2605 = vpop.permute.xlu0 %2604
        %v2606 = vsel %vm798, %v2595, %v2597
        %v2607 = vsel %vm798, %v2597, %v2599
        %v2608 = vsel %vm798, %v2601, %v2603
        %v2609 = vsel %vm798, %v2603, %v2605
        %2614 = vrot.lane.b32.xlu0 %v2466, 120
        %v2615 = vpop.permute.xlu0 %2614
        %2616 = vrot.lane.b32.xlu0 %v2458, 120
        %v2617 = vpop.permute.xlu0 %2616
        %2618 = vrot.lane.b32.xlu0 %v2468, 120
        %v2619 = vpop.permute.xlu0 %2618
        %2620 = vrot.lane.b32.xlu0 %v2467, 120
        %v2621 = vpop.permute.xlu0 %2620
        %2622 = vrot.lane.b32.xlu0 %v2459, 120
        %v2623 = vpop.permute.xlu0 %2622
        %2624 = vrot.lane.b32.xlu0 %v2469, 120
        %v2625 = vpop.permute.xlu0 %2624
        %v2626 = vsel %vm819, %v2615, %v2617
        %v2627 = vsel %vm819, %v2617, %v2619
        %v2628 = vsel %vm819, %v2621, %v2623
        %v2629 = vsel %vm819, %v2623, %v2625
        %2634 = vrot.lane.b32.xlu0 %v2466, 119
        %v2635 = vpop.permute.xlu0 %2634
        %2636 = vrot.lane.b32.xlu0 %v2458, 119
        %v2637 = vpop.permute.xlu0 %2636
        %2638 = vrot.lane.b32.xlu0 %v2468, 119
        %v2639 = vpop.permute.xlu0 %2638
        %2640 = vrot.lane.b32.xlu0 %v2467, 119
        %v2641 = vpop.permute.xlu0 %2640
        %2642 = vrot.lane.b32.xlu0 %v2459, 119
        %v2643 = vpop.permute.xlu0 %2642
        %2644 = vrot.lane.b32.xlu0 %v2469, 119
        %v2645 = vpop.permute.xlu0 %2644
        %v2646 = vsel %vm840, %v2635, %v2637
        %v2647 = vsel %vm840, %v2637, %v2639
        %v2648 = vsel %vm840, %v2641, %v2643
        %v2649 = vsel %vm840, %v2643, %v2645
        %2654 = vrot.lane.b32.xlu0 %v2466, 118
        %v2655 = vpop.permute.xlu0 %2654
        %2656 = vrot.lane.b32.xlu0 %v2458, 118
        %v2657 = vpop.permute.xlu0 %2656
        %2658 = vrot.lane.b32.xlu0 %v2468, 118
        %v2659 = vpop.permute.xlu0 %2658
        %2660 = vrot.lane.b32.xlu0 %v2467, 118
        %v2661 = vpop.permute.xlu0 %2660
        %2662 = vrot.lane.b32.xlu0 %v2459, 118
        %v2663 = vpop.permute.xlu0 %2662
        %2664 = vrot.lane.b32.xlu0 %v2469, 118
        %v2665 = vpop.permute.xlu0 %2664
        %v2666 = vsel %vm861, %v2655, %v2657
        %v2667 = vsel %vm861, %v2657, %v2659
        %v2668 = vsel %vm861, %v2661, %v2663
        %v2669 = vsel %vm861, %v2663, %v2665
        %2674 = vrot.lane.b32.xlu0 %v2466, 117
        %v2675 = vpop.permute.xlu0 %2674
        %2676 = vrot.lane.b32.xlu0 %v2458, 117
        %v2677 = vpop.permute.xlu0 %2676
        %2678 = vrot.lane.b32.xlu0 %v2468, 117
        %v2679 = vpop.permute.xlu0 %2678
        %2680 = vrot.lane.b32.xlu0 %v2467, 117
        %v2681 = vpop.permute.xlu0 %2680
        %2682 = vrot.lane.b32.xlu0 %v2459, 117
        %v2683 = vpop.permute.xlu0 %2682
        %2684 = vrot.lane.b32.xlu0 %v2469, 117
        %v2685 = vpop.permute.xlu0 %2684
        %v2686 = vsel %vm882, %v2675, %v2677
        %v2687 = vsel %vm882, %v2677, %v2679
        %v2688 = vsel %vm882, %v2681, %v2683
        %v2689 = vsel %vm882, %v2683, %v2685
        %2694 = vrot.lane.b32.xlu0 %v2466, 116
        %v2695 = vpop.permute.xlu0 %2694
        %2696 = vrot.lane.b32.xlu0 %v2458, 116
        %v2697 = vpop.permute.xlu0 %2696
        %2698 = vrot.lane.b32.xlu0 %v2468, 116
        %v2699 = vpop.permute.xlu0 %2698
        %2700 = vrot.lane.b32.xlu0 %v2467, 116
        %v2701 = vpop.permute.xlu0 %2700
        %2702 = vrot.lane.b32.xlu0 %v2459, 116
        %v2703 = vpop.permute.xlu0 %2702
        %2704 = vrot.lane.b32.xlu0 %v2469, 116
        %v2705 = vpop.permute.xlu0 %2704
        %v2706 = vsel %vm903, %v2695, %v2697
        %v2707 = vsel %vm903, %v2697, %v2699
        %v2708 = vsel %vm903, %v2701, %v2703
        %v2709 = vsel %vm903, %v2703, %v2705
        %2714 = vrot.lane.b32.xlu0 %v2466, 115
        %v2715 = vpop.permute.xlu0 %2714
        %2716 = vrot.lane.b32.xlu0 %v2458, 115
        %v2717 = vpop.permute.xlu0 %2716
        %2718 = vrot.lane.b32.xlu0 %v2468, 115
        %v2719 = vpop.permute.xlu0 %2718
        %2720 = vrot.lane.b32.xlu0 %v2467, 115
        %v2721 = vpop.permute.xlu0 %2720
        %2722 = vrot.lane.b32.xlu0 %v2459, 115
        %v2723 = vpop.permute.xlu0 %2722
        %2724 = vrot.lane.b32.xlu0 %v2469, 115
        %v2725 = vpop.permute.xlu0 %2724
        %v2726 = vsel %vm924, %v2715, %v2717
        %v2727 = vsel %vm924, %v2717, %v2719
        %v2728 = vsel %vm924, %v2721, %v2723
        %v2729 = vsel %vm924, %v2723, %v2725
        %2734 = vrot.lane.b32.xlu0 %v2466, 114
        %v2735 = vpop.permute.xlu0 %2734
        %2736 = vrot.lane.b32.xlu0 %v2458, 114
        %v2737 = vpop.permute.xlu0 %2736
        %2738 = vrot.lane.b32.xlu0 %v2468, 114
        %v2739 = vpop.permute.xlu0 %2738
        %2740 = vrot.lane.b32.xlu0 %v2467, 114
        %v2741 = vpop.permute.xlu0 %2740
        %2742 = vrot.lane.b32.xlu0 %v2459, 114
        %v2743 = vpop.permute.xlu0 %2742
        %2744 = vrot.lane.b32.xlu0 %v2469, 114
        %v2745 = vpop.permute.xlu0 %2744
        %v2746 = vsel %vm945, %v2735, %v2737
        %v2747 = vsel %vm945, %v2737, %v2739
        %v2748 = vsel %vm945, %v2741, %v2743
        %v2749 = vsel %vm945, %v2743, %v2745
        %2754 = vrot.lane.b32.xlu0 %v2466, 113
        %v2755 = vpop.permute.xlu0 %2754
        %2756 = vrot.lane.b32.xlu0 %v2458, 113
        %v2757 = vpop.permute.xlu0 %2756
        %2758 = vrot.lane.b32.xlu0 %v2468, 113
        %v2759 = vpop.permute.xlu0 %2758
        %2760 = vrot.lane.b32.xlu0 %v2467, 113
        %v2761 = vpop.permute.xlu0 %2760
        %2762 = vrot.lane.b32.xlu0 %v2459, 113
        %v2763 = vpop.permute.xlu0 %2762
        %2764 = vrot.lane.b32.xlu0 %v2469, 113
        %v2765 = vpop.permute.xlu0 %2764
        %v2766 = vsel %vm966, %v2755, %v2757
        %v2767 = vsel %vm966, %v2757, %v2759
        %v2768 = vsel %vm966, %v2761, %v2763
        %v2769 = vsel %vm966, %v2763, %v2765
        %2774 = vrot.lane.b32.xlu0 %v2466, 112
        %v2775 = vpop.permute.xlu0 %2774
        %2776 = vrot.lane.b32.xlu0 %v2458, 112
        %v2777 = vpop.permute.xlu0 %2776
        %2778 = vrot.lane.b32.xlu0 %v2468, 112
        %v2779 = vpop.permute.xlu0 %2778
        %2780 = vrot.lane.b32.xlu0 %v2467, 112
        %v2781 = vpop.permute.xlu0 %2780
        %2782 = vrot.lane.b32.xlu0 %v2459, 112
        %v2783 = vpop.permute.xlu0 %2782
        %2784 = vrot.lane.b32.xlu0 %v2469, 112
        %v2785 = vpop.permute.xlu0 %2784
        %2786 = vrot.lane.b32.xlu0 %v2486, 112
        %v2787 = vpop.permute.xlu0 %2786
        %2788 = vrot.lane.b32.xlu0 %v2487, 112
        %v2789 = vpop.permute.xlu0 %2788
        %2790 = vrot.lane.b32.xlu0 %v2479, 112
        %v2791 = vpop.permute.xlu0 %2790
        %2792 = vrot.lane.b32.xlu0 %v2488, 112
        %v2793 = vpop.permute.xlu0 %2792
        %2794 = vrot.lane.b32.xlu0 %v2489, 112
        %v2795 = vpop.permute.xlu0 %2794
        %2796 = vrot.lane.b32.xlu0 %v2485, 112
        %v2797 = vpop.permute.xlu0 %2796
        %2798 = vrot.lane.b32.xlu0 %v2506, 112
        %v2799 = vpop.permute.xlu0 %2798
        %2800 = vrot.lane.b32.xlu0 %v2507, 112
        %v2801 = vpop.permute.xlu0 %2800
        %2802 = vrot.lane.b32.xlu0 %v2499, 112
        %v2803 = vpop.permute.xlu0 %2802
        %2804 = vrot.lane.b32.xlu0 %v2508, 112
        %v2805 = vpop.permute.xlu0 %2804
        %2806 = vrot.lane.b32.xlu0 %v2509, 112
        %v2807 = vpop.permute.xlu0 %2806
        %2808 = vrot.lane.b32.xlu0 %v2505, 112
        %v2809 = vpop.permute.xlu0 %2808
        %2810 = vrot.lane.b32.xlu0 %v2526, 112
        %v2811 = vpop.permute.xlu0 %2810
        %2812 = vrot.lane.b32.xlu0 %v2527, 112
        %v2813 = vpop.permute.xlu0 %2812
        %2814 = vrot.lane.b32.xlu0 %v2519, 112
        %v2815 = vpop.permute.xlu0 %2814
        %2816 = vrot.lane.b32.xlu0 %v2528, 112
        %v2817 = vpop.permute.xlu0 %2816
        %2818 = vrot.lane.b32.xlu0 %v2529, 112
        %v2819 = vpop.permute.xlu0 %2818
        %2820 = vrot.lane.b32.xlu0 %v2525, 112
        %v2821 = vpop.permute.xlu0 %2820
        %2822 = vrot.lane.b32.xlu0 %v2546, 112
        %v2823 = vpop.permute.xlu0 %2822
        %2824 = vrot.lane.b32.xlu0 %v2547, 112
        %v2825 = vpop.permute.xlu0 %2824
        %2826 = vrot.lane.b32.xlu0 %v2539, 112
        %v2827 = vpop.permute.xlu0 %2826
        %2828 = vrot.lane.b32.xlu0 %v2548, 112
        %v2829 = vpop.permute.xlu0 %2828
        %2830 = vrot.lane.b32.xlu0 %v2549, 112
        %v2831 = vpop.permute.xlu0 %2830
        %2832 = vrot.lane.b32.xlu0 %v2545, 112
        %v2833 = vpop.permute.xlu0 %2832
        %2834 = vrot.lane.b32.xlu0 %v2566, 112
        %v2835 = vpop.permute.xlu0 %2834
        %2836 = vrot.lane.b32.xlu0 %v2567, 112
        %v2837 = vpop.permute.xlu0 %2836
        %2838 = vrot.lane.b32.xlu0 %v2559, 112
        %v2839 = vpop.permute.xlu0 %2838
        %2840 = vrot.lane.b32.xlu0 %v2568, 112
        %v2841 = vpop.permute.xlu0 %2840
        %2842 = vrot.lane.b32.xlu0 %v2569, 112
        %v2843 = vpop.permute.xlu0 %2842
        %2844 = vrot.lane.b32.xlu0 %v2565, 112
        %v2845 = vpop.permute.xlu0 %2844
        %2846 = vrot.lane.b32.xlu0 %v2586, 112
        %v2847 = vpop.permute.xlu0 %2846
        %2848 = vrot.lane.b32.xlu0 %v2587, 112
        %v2849 = vpop.permute.xlu0 %2848
        %2850 = vrot.lane.b32.xlu0 %v2579, 112
        %v2851 = vpop.permute.xlu0 %2850
        %2852 = vrot.lane.b32.xlu0 %v2588, 112
        %v2853 = vpop.permute.xlu0 %2852
        %2854 = vrot.lane.b32.xlu0 %v2589, 112
        %v2855 = vpop.permute.xlu0 %2854
        %2856 = vrot.lane.b32.xlu0 %v2585, 112
        %v2857 = vpop.permute.xlu0 %2856
        %2858 = vrot.lane.b32.xlu0 %v2606, 112
        %v2859 = vpop.permute.xlu0 %2858
        %2860 = vrot.lane.b32.xlu0 %v2607, 112
        %v2861 = vpop.permute.xlu0 %2860
        %2862 = vrot.lane.b32.xlu0 %v2599, 112
        %v2863 = vpop.permute.xlu0 %2862
        %2864 = vrot.lane.b32.xlu0 %v2608, 112
        %v2865 = vpop.permute.xlu0 %2864
        %2866 = vrot.lane.b32.xlu0 %v2609, 112
        %v2867 = vpop.permute.xlu0 %2866
        %2868 = vrot.lane.b32.xlu0 %v2605, 112
        %v2869 = vpop.permute.xlu0 %2868
        %2870 = vrot.lane.b32.xlu0 %v2626, 112
        %v2871 = vpop.permute.xlu0 %2870
        %2872 = vrot.lane.b32.xlu0 %v2627, 112
        %v2873 = vpop.permute.xlu0 %2872
        %2874 = vrot.lane.b32.xlu0 %v2619, 112
        %v2875 = vpop.permute.xlu0 %2874
        %2876 = vrot.lane.b32.xlu0 %v2628, 112
        %v2877 = vpop.permute.xlu0 %2876
        %2878 = vrot.lane.b32.xlu0 %v2629, 112
        %v2879 = vpop.permute.xlu0 %2878
        %2880 = vrot.lane.b32.xlu0 %v2625, 112
        %v2881 = vpop.permute.xlu0 %2880
        %2882 = vrot.lane.b32.xlu0 %v2646, 112
        %v2883 = vpop.permute.xlu0 %2882
        %2884 = vrot.lane.b32.xlu0 %v2647, 112
        %v2885 = vpop.permute.xlu0 %2884
        %2886 = vrot.lane.b32.xlu0 %v2639, 112
        %v2887 = vpop.permute.xlu0 %2886
        %2888 = vrot.lane.b32.xlu0 %v2648, 112
        %v2889 = vpop.permute.xlu0 %2888
        %2890 = vrot.lane.b32.xlu0 %v2649, 112
        %v2891 = vpop.permute.xlu0 %2890
        %2892 = vrot.lane.b32.xlu0 %v2645, 112
        %v2893 = vpop.permute.xlu0 %2892
        %2894 = vrot.lane.b32.xlu0 %v2666, 112
        %v2895 = vpop.permute.xlu0 %2894
        %2896 = vrot.lane.b32.xlu0 %v2667, 112
        %v2897 = vpop.permute.xlu0 %2896
        %2898 = vrot.lane.b32.xlu0 %v2659, 112
        %v2899 = vpop.permute.xlu0 %2898
        %2900 = vrot.lane.b32.xlu0 %v2668, 112
        %v2901 = vpop.permute.xlu0 %2900
        %2902 = vrot.lane.b32.xlu0 %v2669, 112
        %v2903 = vpop.permute.xlu0 %2902
        %2904 = vrot.lane.b32.xlu0 %v2665, 112
        %v2905 = vpop.permute.xlu0 %2904
        %2906 = vrot.lane.b32.xlu0 %v2686, 112
        %v2907 = vpop.permute.xlu0 %2906
        %2908 = vrot.lane.b32.xlu0 %v2687, 112
        %v2909 = vpop.permute.xlu0 %2908
        %2910 = vrot.lane.b32.xlu0 %v2679, 112
        %v2911 = vpop.permute.xlu0 %2910
        %2912 = vrot.lane.b32.xlu0 %v2688, 112
        %v2913 = vpop.permute.xlu0 %2912
        %2914 = vrot.lane.b32.xlu0 %v2689, 112
        %v2915 = vpop.permute.xlu0 %2914
        %2916 = vrot.lane.b32.xlu0 %v2685, 112
        %v2917 = vpop.permute.xlu0 %2916
        %2918 = vrot.lane.b32.xlu0 %v2706, 112
        %v2919 = vpop.permute.xlu0 %2918
        %2920 = vrot.lane.b32.xlu0 %v2707, 112
        %v2921 = vpop.permute.xlu0 %2920
        %2922 = vrot.lane.b32.xlu0 %v2699, 112
        %v2923 = vpop.permute.xlu0 %2922
        %2924 = vrot.lane.b32.xlu0 %v2708, 112
        %v2925 = vpop.permute.xlu0 %2924
        %2926 = vrot.lane.b32.xlu0 %v2709, 112
        %v2927 = vpop.permute.xlu0 %2926
        %2928 = vrot.lane.b32.xlu0 %v2705, 112
        %v2929 = vpop.permute.xlu0 %2928
        %2930 = vrot.lane.b32.xlu0 %v2726, 112
        %v2931 = vpop.permute.xlu0 %2930
        %2932 = vrot.lane.b32.xlu0 %v2727, 112
        %v2933 = vpop.permute.xlu0 %2932
        %2934 = vrot.lane.b32.xlu0 %v2719, 112
        %v2935 = vpop.permute.xlu0 %2934
        %2936 = vrot.lane.b32.xlu0 %v2728, 112
        %v2937 = vpop.permute.xlu0 %2936
        %2938 = vrot.lane.b32.xlu0 %v2729, 112
        %v2939 = vpop.permute.xlu0 %2938
        %2940 = vrot.lane.b32.xlu0 %v2725, 112
        %v2941 = vpop.permute.xlu0 %2940
        %2942 = vrot.lane.b32.xlu0 %v2746, 112
        %v2943 = vpop.permute.xlu0 %2942
        %2944 = vrot.lane.b32.xlu0 %v2747, 112
        %v2945 = vpop.permute.xlu0 %2944
        %2946 = vrot.lane.b32.xlu0 %v2739, 112
        %v2947 = vpop.permute.xlu0 %2946
        %2948 = vrot.lane.b32.xlu0 %v2748, 112
        %v2949 = vpop.permute.xlu0 %2948
        %2950 = vrot.lane.b32.xlu0 %v2749, 112
        %v2951 = vpop.permute.xlu0 %2950
        %2952 = vrot.lane.b32.xlu0 %v2745, 112
        %v2953 = vpop.permute.xlu0 %2952
        %2954 = vrot.lane.b32.xlu0 %v2766, 112
        %v2955 = vpop.permute.xlu0 %2954
        %2956 = vrot.lane.b32.xlu0 %v2767, 112
        %v2957 = vpop.permute.xlu0 %2956
        %2958 = vrot.lane.b32.xlu0 %v2759, 112
        %v2959 = vpop.permute.xlu0 %2958
        %2960 = vrot.lane.b32.xlu0 %v2768, 112
        %v2961 = vpop.permute.xlu0 %2960
        %2962 = vrot.lane.b32.xlu0 %v2769, 112
        %v2963 = vpop.permute.xlu0 %2962
        %2964 = vrot.lane.b32.xlu0 %v2765, 112
        %v2965 = vpop.permute.xlu0 %2964
        %v2966 = vsel %vm1167, %v2775, %v2777
        %v2967 = vsel %vm1167, %v2777, %v2779
        %v2968 = vsel %vm1167, %v2781, %v2783
        %v2969 = vsel %vm1167, %v2783, %v2785
        %v2970 = vsel %vm1167, %v2787, %v2789
        %v2971 = vsel %vm1167, %v2789, %v2791
        %v2972 = vsel %vm1167, %v2793, %v2795
        %v2973 = vsel %vm1167, %v2795, %v2797
        %v2974 = vsel %vm1167, %v2799, %v2801
        %v2975 = vsel %vm1167, %v2801, %v2803
        %v2976 = vsel %vm1167, %v2805, %v2807
        %v2977 = vsel %vm1167, %v2807, %v2809
        %v2978 = vsel %vm1167, %v2811, %v2813
        %v2979 = vsel %vm1167, %v2813, %v2815
        %v2980 = vsel %vm1167, %v2817, %v2819
        %v2981 = vsel %vm1167, %v2819, %v2821
        %v2982 = vsel %vm1167, %v2823, %v2825
        %v2983 = vsel %vm1167, %v2825, %v2827
        %v2984 = vsel %vm1167, %v2829, %v2831
        %v2985 = vsel %vm1167, %v2831, %v2833
        %v2986 = vsel %vm1167, %v2835, %v2837
        %v2987 = vsel %vm1167, %v2837, %v2839
        %v2988 = vsel %vm1167, %v2841, %v2843
        %v2989 = vsel %vm1167, %v2843, %v2845
        %v2990 = vsel %vm1167, %v2847, %v2849
        %v2991 = vsel %vm1167, %v2849, %v2851
        %v2992 = vsel %vm1167, %v2853, %v2855
        %v2993 = vsel %vm1167, %v2855, %v2857
        %v2994 = vsel %vm1167, %v2859, %v2861
        %v2995 = vsel %vm1167, %v2861, %v2863
        %v2996 = vsel %vm1167, %v2865, %v2867
        %v2997 = vsel %vm1167, %v2867, %v2869
        %v2998 = vsel %vm1167, %v2871, %v2873
        %v2999 = vsel %vm1167, %v2873, %v2875
        %v3000 = vsel %vm1167, %v2877, %v2879
        %v3001 = vsel %vm1167, %v2879, %v2881
        %v3002 = vsel %vm1167, %v2883, %v2885
        %v3003 = vsel %vm1167, %v2885, %v2887
        %v3004 = vsel %vm1167, %v2889, %v2891
        %v3005 = vsel %vm1167, %v2891, %v2893
        %v3006 = vsel %vm1167, %v2895, %v2897
        %v3007 = vsel %vm1167, %v2897, %v2899
        %v3008 = vsel %vm1167, %v2901, %v2903
        %v3009 = vsel %vm1167, %v2903, %v2905
        %v3010 = vsel %vm1167, %v2907, %v2909
        %v3011 = vsel %vm1167, %v2909, %v2911
        %v3012 = vsel %vm1167, %v2913, %v2915
        %v3013 = vsel %vm1167, %v2915, %v2917
        %v3014 = vsel %vm1167, %v2919, %v2921
        %v3015 = vsel %vm1167, %v2921, %v2923
        %v3016 = vsel %vm1167, %v2925, %v2927
        %v3017 = vsel %vm1167, %v2927, %v2929
        %v3018 = vsel %vm1167, %v2931, %v2933
        %v3019 = vsel %vm1167, %v2933, %v2935
        %v3020 = vsel %vm1167, %v2937, %v2939
        %v3021 = vsel %vm1167, %v2939, %v2941
        %v3022 = vsel %vm1167, %v2943, %v2945
        %v3023 = vsel %vm1167, %v2945, %v2947
        %v3024 = vsel %vm1167, %v2949, %v2951
        %v3025 = vsel %vm1167, %v2951, %v2953
        %v3026 = vsel %vm1167, %v2955, %v2957
        %v3027 = vsel %vm1167, %v2957, %v2959
        %v3028 = vsel %vm1167, %v2961, %v2963
        %v3029 = vsel %vm1167, %v2963, %v2965
        %3094 = vrot.lane.b32.xlu0 %v2466, 96
        %v3095 = vpop.permute.xlu0 %3094
        %3096 = vrot.lane.b32.xlu0 %v2458, 96
        %v3097 = vpop.permute.xlu0 %3096
        %3098 = vrot.lane.b32.xlu0 %v2468, 96
        %v3099 = vpop.permute.xlu0 %3098
        %3100 = vrot.lane.b32.xlu0 %v2467, 96
        %v3101 = vpop.permute.xlu0 %3100
        %3102 = vrot.lane.b32.xlu0 %v2459, 96
        %v3103 = vpop.permute.xlu0 %3102
        %3104 = vrot.lane.b32.xlu0 %v2469, 96
        %v3105 = vpop.permute.xlu0 %3104
        %3106 = vrot.lane.b32.xlu0 %v2486, 96
        %v3107 = vpop.permute.xlu0 %3106
        %3108 = vrot.lane.b32.xlu0 %v2487, 96
        %v3109 = vpop.permute.xlu0 %3108
        %3110 = vrot.lane.b32.xlu0 %v2479, 96
        %v3111 = vpop.permute.xlu0 %3110
        %3112 = vrot.lane.b32.xlu0 %v2488, 96
        %v3113 = vpop.permute.xlu0 %3112
        %3114 = vrot.lane.b32.xlu0 %v2489, 96
        %v3115 = vpop.permute.xlu0 %3114
        %3116 = vrot.lane.b32.xlu0 %v2485, 96
        %v3117 = vpop.permute.xlu0 %3116
        %3118 = vrot.lane.b32.xlu0 %v2506, 96
        %v3119 = vpop.permute.xlu0 %3118
        %3120 = vrot.lane.b32.xlu0 %v2507, 96
        %v3121 = vpop.permute.xlu0 %3120
        %3122 = vrot.lane.b32.xlu0 %v2499, 96
        %v3123 = vpop.permute.xlu0 %3122
        %3124 = vrot.lane.b32.xlu0 %v2508, 96
        %v3125 = vpop.permute.xlu0 %3124
        %3126 = vrot.lane.b32.xlu0 %v2509, 96
        %v3127 = vpop.permute.xlu0 %3126
        %3128 = vrot.lane.b32.xlu0 %v2505, 96
        %v3129 = vpop.permute.xlu0 %3128
        %3130 = vrot.lane.b32.xlu0 %v2526, 96
        %v3131 = vpop.permute.xlu0 %3130
        %3132 = vrot.lane.b32.xlu0 %v2527, 96
        %v3133 = vpop.permute.xlu0 %3132
        %3134 = vrot.lane.b32.xlu0 %v2519, 96
        %v3135 = vpop.permute.xlu0 %3134
        %3136 = vrot.lane.b32.xlu0 %v2528, 96
        %v3137 = vpop.permute.xlu0 %3136
        %3138 = vrot.lane.b32.xlu0 %v2529, 96
        %v3139 = vpop.permute.xlu0 %3138
        %3140 = vrot.lane.b32.xlu0 %v2525, 96
        %v3141 = vpop.permute.xlu0 %3140
        %3142 = vrot.lane.b32.xlu0 %v2546, 96
        %v3143 = vpop.permute.xlu0 %3142
        %3144 = vrot.lane.b32.xlu0 %v2547, 96
        %v3145 = vpop.permute.xlu0 %3144
        %3146 = vrot.lane.b32.xlu0 %v2539, 96
        %v3147 = vpop.permute.xlu0 %3146
        %3148 = vrot.lane.b32.xlu0 %v2548, 96
        %v3149 = vpop.permute.xlu0 %3148
        %3150 = vrot.lane.b32.xlu0 %v2549, 96
        %v3151 = vpop.permute.xlu0 %3150
        %3152 = vrot.lane.b32.xlu0 %v2545, 96
        %v3153 = vpop.permute.xlu0 %3152
        %3154 = vrot.lane.b32.xlu0 %v2566, 96
        %v3155 = vpop.permute.xlu0 %3154
        %3156 = vrot.lane.b32.xlu0 %v2567, 96
        %v3157 = vpop.permute.xlu0 %3156
        %3158 = vrot.lane.b32.xlu0 %v2559, 96
        %v3159 = vpop.permute.xlu0 %3158
        %3160 = vrot.lane.b32.xlu0 %v2568, 96
        %v3161 = vpop.permute.xlu0 %3160
        %3162 = vrot.lane.b32.xlu0 %v2569, 96
        %v3163 = vpop.permute.xlu0 %3162
        %3164 = vrot.lane.b32.xlu0 %v2565, 96
        %v3165 = vpop.permute.xlu0 %3164
        %3166 = vrot.lane.b32.xlu0 %v2586, 96
        %v3167 = vpop.permute.xlu0 %3166
        %3168 = vrot.lane.b32.xlu0 %v2587, 96
        %v3169 = vpop.permute.xlu0 %3168
        %3170 = vrot.lane.b32.xlu0 %v2579, 96
        %v3171 = vpop.permute.xlu0 %3170
        %3172 = vrot.lane.b32.xlu0 %v2588, 96
        %v3173 = vpop.permute.xlu0 %3172
        %3174 = vrot.lane.b32.xlu0 %v2589, 96
        %v3175 = vpop.permute.xlu0 %3174
        %3176 = vrot.lane.b32.xlu0 %v2585, 96
        %v3177 = vpop.permute.xlu0 %3176
        %3178 = vrot.lane.b32.xlu0 %v2606, 96
        %v3179 = vpop.permute.xlu0 %3178
        %3180 = vrot.lane.b32.xlu0 %v2607, 96
        %v3181 = vpop.permute.xlu0 %3180
        %3182 = vrot.lane.b32.xlu0 %v2599, 96
        %v3183 = vpop.permute.xlu0 %3182
        %3184 = vrot.lane.b32.xlu0 %v2608, 96
        %v3185 = vpop.permute.xlu0 %3184
        %3186 = vrot.lane.b32.xlu0 %v2609, 96
        %v3187 = vpop.permute.xlu0 %3186
        %3188 = vrot.lane.b32.xlu0 %v2605, 96
        %v3189 = vpop.permute.xlu0 %3188
        %3190 = vrot.lane.b32.xlu0 %v2626, 96
        %v3191 = vpop.permute.xlu0 %3190
        %3192 = vrot.lane.b32.xlu0 %v2627, 96
        %v3193 = vpop.permute.xlu0 %3192
        %3194 = vrot.lane.b32.xlu0 %v2619, 96
        %v3195 = vpop.permute.xlu0 %3194
        %3196 = vrot.lane.b32.xlu0 %v2628, 96
        %v3197 = vpop.permute.xlu0 %3196
        %3198 = vrot.lane.b32.xlu0 %v2629, 96
        %v3199 = vpop.permute.xlu0 %3198
        %3200 = vrot.lane.b32.xlu0 %v2625, 96
        %v3201 = vpop.permute.xlu0 %3200
        %3202 = vrot.lane.b32.xlu0 %v2646, 96
        %v3203 = vpop.permute.xlu0 %3202
        %3204 = vrot.lane.b32.xlu0 %v2647, 96
        %v3205 = vpop.permute.xlu0 %3204
        %3206 = vrot.lane.b32.xlu0 %v2639, 96
        %v3207 = vpop.permute.xlu0 %3206
        %3208 = vrot.lane.b32.xlu0 %v2648, 96
        %v3209 = vpop.permute.xlu0 %3208
        %3210 = vrot.lane.b32.xlu0 %v2649, 96
        %v3211 = vpop.permute.xlu0 %3210
        %3212 = vrot.lane.b32.xlu0 %v2645, 96
        %v3213 = vpop.permute.xlu0 %3212
        %3214 = vrot.lane.b32.xlu0 %v2666, 96
        %v3215 = vpop.permute.xlu0 %3214
        %3216 = vrot.lane.b32.xlu0 %v2667, 96
        %v3217 = vpop.permute.xlu0 %3216
        %3218 = vrot.lane.b32.xlu0 %v2659, 96
        %v3219 = vpop.permute.xlu0 %3218
        %3220 = vrot.lane.b32.xlu0 %v2668, 96
        %v3221 = vpop.permute.xlu0 %3220
        %3222 = vrot.lane.b32.xlu0 %v2669, 96
        %v3223 = vpop.permute.xlu0 %3222
        %3224 = vrot.lane.b32.xlu0 %v2665, 96
        %v3225 = vpop.permute.xlu0 %3224
        %3226 = vrot.lane.b32.xlu0 %v2686, 96
        %v3227 = vpop.permute.xlu0 %3226
        %3228 = vrot.lane.b32.xlu0 %v2687, 96
        %v3229 = vpop.permute.xlu0 %3228
        %3230 = vrot.lane.b32.xlu0 %v2679, 96
        %v3231 = vpop.permute.xlu0 %3230
        %3232 = vrot.lane.b32.xlu0 %v2688, 96
        %v3233 = vpop.permute.xlu0 %3232
        %3234 = vrot.lane.b32.xlu0 %v2689, 96
        %v3235 = vpop.permute.xlu0 %3234
        %3236 = vrot.lane.b32.xlu0 %v2685, 96
        %v3237 = vpop.permute.xlu0 %3236
        %3238 = vrot.lane.b32.xlu0 %v2706, 96
        %v3239 = vpop.permute.xlu0 %3238
        %3240 = vrot.lane.b32.xlu0 %v2707, 96
        %v3241 = vpop.permute.xlu0 %3240
        %3242 = vrot.lane.b32.xlu0 %v2699, 96
        %v3243 = vpop.permute.xlu0 %3242
        %3244 = vrot.lane.b32.xlu0 %v2708, 96
        %v3245 = vpop.permute.xlu0 %3244
        %3246 = vrot.lane.b32.xlu0 %v2709, 96
        %v3247 = vpop.permute.xlu0 %3246
        %3248 = vrot.lane.b32.xlu0 %v2705, 96
        %v3249 = vpop.permute.xlu0 %3248
        %3250 = vrot.lane.b32.xlu0 %v2726, 96
        %v3251 = vpop.permute.xlu0 %3250
        %3252 = vrot.lane.b32.xlu0 %v2727, 96
        %v3253 = vpop.permute.xlu0 %3252
        %3254 = vrot.lane.b32.xlu0 %v2719, 96
        %v3255 = vpop.permute.xlu0 %3254
        %3256 = vrot.lane.b32.xlu0 %v2728, 96
        %v3257 = vpop.permute.xlu0 %3256
        %3258 = vrot.lane.b32.xlu0 %v2729, 96
        %v3259 = vpop.permute.xlu0 %3258
        %3260 = vrot.lane.b32.xlu0 %v2725, 96
        %v3261 = vpop.permute.xlu0 %3260
        %3262 = vrot.lane.b32.xlu0 %v2746, 96
        %v3263 = vpop.permute.xlu0 %3262
        %3264 = vrot.lane.b32.xlu0 %v2747, 96
        %v3265 = vpop.permute.xlu0 %3264
        %3266 = vrot.lane.b32.xlu0 %v2739, 96
        %v3267 = vpop.permute.xlu0 %3266
        %3268 = vrot.lane.b32.xlu0 %v2748, 96
        %v3269 = vpop.permute.xlu0 %3268
        %3270 = vrot.lane.b32.xlu0 %v2749, 96
        %v3271 = vpop.permute.xlu0 %3270
        %3272 = vrot.lane.b32.xlu0 %v2745, 96
        %v3273 = vpop.permute.xlu0 %3272
        %3274 = vrot.lane.b32.xlu0 %v2766, 96
        %v3275 = vpop.permute.xlu0 %3274
        %3276 = vrot.lane.b32.xlu0 %v2767, 96
        %v3277 = vpop.permute.xlu0 %3276
        %3278 = vrot.lane.b32.xlu0 %v2759, 96
        %v3279 = vpop.permute.xlu0 %3278
        %3280 = vrot.lane.b32.xlu0 %v2768, 96
        %v3281 = vpop.permute.xlu0 %3280
        %3282 = vrot.lane.b32.xlu0 %v2769, 96
        %v3283 = vpop.permute.xlu0 %3282
        %3284 = vrot.lane.b32.xlu0 %v2765, 96
        %v3285 = vpop.permute.xlu0 %3284
        %v3286 = vsel %vm1488, %v3095, %v3097
        %v3287 = vsel %vm1488, %v3097, %v3099
        %v3288 = vsel %vm1488, %v3101, %v3103
        %v3289 = vsel %vm1488, %v3103, %v3105
        %v3290 = vsel %vm1488, %v3107, %v3109
        %v3291 = vsel %vm1488, %v3109, %v3111
        %v3292 = vsel %vm1488, %v3113, %v3115
        %v3293 = vsel %vm1488, %v3115, %v3117
        %v3294 = vsel %vm1488, %v3119, %v3121
        %v3295 = vsel %vm1488, %v3121, %v3123
        %v3296 = vsel %vm1488, %v3125, %v3127
        %v3297 = vsel %vm1488, %v3127, %v3129
        %v3298 = vsel %vm1488, %v3131, %v3133
        %v3299 = vsel %vm1488, %v3133, %v3135
        %v3300 = vsel %vm1488, %v3137, %v3139
        %v3301 = vsel %vm1488, %v3139, %v3141
        %v3302 = vsel %vm1488, %v3143, %v3145
        %v3303 = vsel %vm1488, %v3145, %v3147
        %v3304 = vsel %vm1488, %v3149, %v3151
        %v3305 = vsel %vm1488, %v3151, %v3153
        %v3306 = vsel %vm1488, %v3155, %v3157
        %v3307 = vsel %vm1488, %v3157, %v3159
        %v3308 = vsel %vm1488, %v3161, %v3163
        %v3309 = vsel %vm1488, %v3163, %v3165
        %v3310 = vsel %vm1488, %v3167, %v3169
        %v3311 = vsel %vm1488, %v3169, %v3171
        %v3312 = vsel %vm1488, %v3173, %v3175
        %v3313 = vsel %vm1488, %v3175, %v3177
        %v3314 = vsel %vm1488, %v3179, %v3181
        %v3315 = vsel %vm1488, %v3181, %v3183
        %v3316 = vsel %vm1488, %v3185, %v3187
        %v3317 = vsel %vm1488, %v3187, %v3189
        %v3318 = vsel %vm1488, %v3191, %v3193
        %v3319 = vsel %vm1488, %v3193, %v3195
        %v3320 = vsel %vm1488, %v3197, %v3199
        %v3321 = vsel %vm1488, %v3199, %v3201
        %v3322 = vsel %vm1488, %v3203, %v3205
        %v3323 = vsel %vm1488, %v3205, %v3207
        %v3324 = vsel %vm1488, %v3209, %v3211
        %v3325 = vsel %vm1488, %v3211, %v3213
        %v3326 = vsel %vm1488, %v3215, %v3217
        %v3327 = vsel %vm1488, %v3217, %v3219
        %v3328 = vsel %vm1488, %v3221, %v3223
        %v3329 = vsel %vm1488, %v3223, %v3225
        %v3330 = vsel %vm1488, %v3227, %v3229
        %v3331 = vsel %vm1488, %v3229, %v3231
        %v3332 = vsel %vm1488, %v3233, %v3235
        %v3333 = vsel %vm1488, %v3235, %v3237
        %v3334 = vsel %vm1488, %v3239, %v3241
        %v3335 = vsel %vm1488, %v3241, %v3243
        %v3336 = vsel %vm1488, %v3245, %v3247
        %v3337 = vsel %vm1488, %v3247, %v3249
        %v3338 = vsel %vm1488, %v3251, %v3253
        %v3339 = vsel %vm1488, %v3253, %v3255
        %v3340 = vsel %vm1488, %v3257, %v3259
        %v3341 = vsel %vm1488, %v3259, %v3261
        %v3342 = vsel %vm1488, %v3263, %v3265
        %v3343 = vsel %vm1488, %v3265, %v3267
        %v3344 = vsel %vm1488, %v3269, %v3271
        %v3345 = vsel %vm1488, %v3271, %v3273
        %v3346 = vsel %vm1488, %v3275, %v3277
        %v3347 = vsel %vm1488, %v3277, %v3279
        %v3348 = vsel %vm1488, %v3281, %v3283
        %v3349 = vsel %vm1488, %v3283, %v3285
        %3414 = vrot.lane.b32.xlu0 %v2466, 80
        %v3415 = vpop.permute.xlu0 %3414
        %3416 = vrot.lane.b32.xlu0 %v2458, 80
        %v3417 = vpop.permute.xlu0 %3416
        %3418 = vrot.lane.b32.xlu0 %v2468, 80
        %v3419 = vpop.permute.xlu0 %3418
        %3420 = vrot.lane.b32.xlu0 %v2467, 80
        %v3421 = vpop.permute.xlu0 %3420
        %3422 = vrot.lane.b32.xlu0 %v2459, 80
        %v3423 = vpop.permute.xlu0 %3422
        %3424 = vrot.lane.b32.xlu0 %v2469, 80
        %v3425 = vpop.permute.xlu0 %3424
        %3426 = vrot.lane.b32.xlu0 %v2486, 80
        %v3427 = vpop.permute.xlu0 %3426
        %3428 = vrot.lane.b32.xlu0 %v2487, 80
        %v3429 = vpop.permute.xlu0 %3428
        %3430 = vrot.lane.b32.xlu0 %v2479, 80
        %v3431 = vpop.permute.xlu0 %3430
        %3432 = vrot.lane.b32.xlu0 %v2488, 80
        %v3433 = vpop.permute.xlu0 %3432
        %3434 = vrot.lane.b32.xlu0 %v2489, 80
        %v3435 = vpop.permute.xlu0 %3434
        %3436 = vrot.lane.b32.xlu0 %v2485, 80
        %v3437 = vpop.permute.xlu0 %3436
        %3438 = vrot.lane.b32.xlu0 %v2506, 80
        %v3439 = vpop.permute.xlu0 %3438
        %3440 = vrot.lane.b32.xlu0 %v2507, 80
        %v3441 = vpop.permute.xlu0 %3440
        %3442 = vrot.lane.b32.xlu0 %v2499, 80
        %v3443 = vpop.permute.xlu0 %3442
        %3444 = vrot.lane.b32.xlu0 %v2508, 80
        %v3445 = vpop.permute.xlu0 %3444
        %3446 = vrot.lane.b32.xlu0 %v2509, 80
        %v3447 = vpop.permute.xlu0 %3446
        %3448 = vrot.lane.b32.xlu0 %v2505, 80
        %v3449 = vpop.permute.xlu0 %3448
        %3450 = vrot.lane.b32.xlu0 %v2526, 80
        %v3451 = vpop.permute.xlu0 %3450
        %3452 = vrot.lane.b32.xlu0 %v2527, 80
        %v3453 = vpop.permute.xlu0 %3452
        %3454 = vrot.lane.b32.xlu0 %v2519, 80
        %v3455 = vpop.permute.xlu0 %3454
        %3456 = vrot.lane.b32.xlu0 %v2528, 80
        %v3457 = vpop.permute.xlu0 %3456
        %3458 = vrot.lane.b32.xlu0 %v2529, 80
        %v3459 = vpop.permute.xlu0 %3458
        %3460 = vrot.lane.b32.xlu0 %v2525, 80
        %v3461 = vpop.permute.xlu0 %3460
        %3462 = vrot.lane.b32.xlu0 %v2546, 80
        %v3463 = vpop.permute.xlu0 %3462
        %3464 = vrot.lane.b32.xlu0 %v2547, 80
        %v3465 = vpop.permute.xlu0 %3464
        %3466 = vrot.lane.b32.xlu0 %v2539, 80
        %v3467 = vpop.permute.xlu0 %3466
        %3468 = vrot.lane.b32.xlu0 %v2548, 80
        %v3469 = vpop.permute.xlu0 %3468
        %3470 = vrot.lane.b32.xlu0 %v2549, 80
        %v3471 = vpop.permute.xlu0 %3470
        %3472 = vrot.lane.b32.xlu0 %v2545, 80
        %v3473 = vpop.permute.xlu0 %3472
        %3474 = vrot.lane.b32.xlu0 %v2566, 80
        %v3475 = vpop.permute.xlu0 %3474
        %3476 = vrot.lane.b32.xlu0 %v2567, 80
        %v3477 = vpop.permute.xlu0 %3476
        %3478 = vrot.lane.b32.xlu0 %v2559, 80
        %v3479 = vpop.permute.xlu0 %3478
        %3480 = vrot.lane.b32.xlu0 %v2568, 80
        %v3481 = vpop.permute.xlu0 %3480
        %3482 = vrot.lane.b32.xlu0 %v2569, 80
        %v3483 = vpop.permute.xlu0 %3482
        %3484 = vrot.lane.b32.xlu0 %v2565, 80
        %v3485 = vpop.permute.xlu0 %3484
        %3486 = vrot.lane.b32.xlu0 %v2586, 80
        %v3487 = vpop.permute.xlu0 %3486
        %3488 = vrot.lane.b32.xlu0 %v2587, 80
        %v3489 = vpop.permute.xlu0 %3488
        %3490 = vrot.lane.b32.xlu0 %v2579, 80
        %v3491 = vpop.permute.xlu0 %3490
        %3492 = vrot.lane.b32.xlu0 %v2588, 80
        %v3493 = vpop.permute.xlu0 %3492
        %3494 = vrot.lane.b32.xlu0 %v2589, 80
        %v3495 = vpop.permute.xlu0 %3494
        %3496 = vrot.lane.b32.xlu0 %v2585, 80
        %v3497 = vpop.permute.xlu0 %3496
        %3498 = vrot.lane.b32.xlu0 %v2606, 80
        %v3499 = vpop.permute.xlu0 %3498
        %3500 = vrot.lane.b32.xlu0 %v2607, 80
        %v3501 = vpop.permute.xlu0 %3500
        %3502 = vrot.lane.b32.xlu0 %v2599, 80
        %v3503 = vpop.permute.xlu0 %3502
        %3504 = vrot.lane.b32.xlu0 %v2608, 80
        %v3505 = vpop.permute.xlu0 %3504
        %3506 = vrot.lane.b32.xlu0 %v2609, 80
        %v3507 = vpop.permute.xlu0 %3506
        %3508 = vrot.lane.b32.xlu0 %v2605, 80
        %v3509 = vpop.permute.xlu0 %3508
        %3510 = vrot.lane.b32.xlu0 %v2626, 80
        %v3511 = vpop.permute.xlu0 %3510
        %3512 = vrot.lane.b32.xlu0 %v2627, 80
        %v3513 = vpop.permute.xlu0 %3512
        %3514 = vrot.lane.b32.xlu0 %v2619, 80
        %v3515 = vpop.permute.xlu0 %3514
        %3516 = vrot.lane.b32.xlu0 %v2628, 80
        %v3517 = vpop.permute.xlu0 %3516
        %3518 = vrot.lane.b32.xlu0 %v2629, 80
        %v3519 = vpop.permute.xlu0 %3518
        %3520 = vrot.lane.b32.xlu0 %v2625, 80
        %v3521 = vpop.permute.xlu0 %3520
        %3522 = vrot.lane.b32.xlu0 %v2646, 80
        %v3523 = vpop.permute.xlu0 %3522
        %3524 = vrot.lane.b32.xlu0 %v2647, 80
        %v3525 = vpop.permute.xlu0 %3524
        %3526 = vrot.lane.b32.xlu0 %v2639, 80
        %v3527 = vpop.permute.xlu0 %3526
        %3528 = vrot.lane.b32.xlu0 %v2648, 80
        %v3529 = vpop.permute.xlu0 %3528
        %3530 = vrot.lane.b32.xlu0 %v2649, 80
        %v3531 = vpop.permute.xlu0 %3530
        %3532 = vrot.lane.b32.xlu0 %v2645, 80
        %v3533 = vpop.permute.xlu0 %3532
        %3534 = vrot.lane.b32.xlu0 %v2666, 80
        %v3535 = vpop.permute.xlu0 %3534
        %3536 = vrot.lane.b32.xlu0 %v2667, 80
        %v3537 = vpop.permute.xlu0 %3536
        %3538 = vrot.lane.b32.xlu0 %v2659, 80
        %v3539 = vpop.permute.xlu0 %3538
        %3540 = vrot.lane.b32.xlu0 %v2668, 80
        %v3541 = vpop.permute.xlu0 %3540
        %3542 = vrot.lane.b32.xlu0 %v2669, 80
        %v3543 = vpop.permute.xlu0 %3542
        %3544 = vrot.lane.b32.xlu0 %v2665, 80
        %v3545 = vpop.permute.xlu0 %3544
        %3546 = vrot.lane.b32.xlu0 %v2686, 80
        %v3547 = vpop.permute.xlu0 %3546
        %3548 = vrot.lane.b32.xlu0 %v2687, 80
        %v3549 = vpop.permute.xlu0 %3548
        %3550 = vrot.lane.b32.xlu0 %v2679, 80
        %v3551 = vpop.permute.xlu0 %3550
        %3552 = vrot.lane.b32.xlu0 %v2688, 80
        %v3553 = vpop.permute.xlu0 %3552
        %3554 = vrot.lane.b32.xlu0 %v2689, 80
        %v3555 = vpop.permute.xlu0 %3554
        %3556 = vrot.lane.b32.xlu0 %v2685, 80
        %v3557 = vpop.permute.xlu0 %3556
        %3558 = vrot.lane.b32.xlu0 %v2706, 80
        %v3559 = vpop.permute.xlu0 %3558
        %3560 = vrot.lane.b32.xlu0 %v2707, 80
        %v3561 = vpop.permute.xlu0 %3560
        %3562 = vrot.lane.b32.xlu0 %v2699, 80
        %v3563 = vpop.permute.xlu0 %3562
        %3564 = vrot.lane.b32.xlu0 %v2708, 80
        %v3565 = vpop.permute.xlu0 %3564
        %3566 = vrot.lane.b32.xlu0 %v2709, 80
        %v3567 = vpop.permute.xlu0 %3566
        %3568 = vrot.lane.b32.xlu0 %v2705, 80
        %v3569 = vpop.permute.xlu0 %3568
        %3570 = vrot.lane.b32.xlu0 %v2726, 80
        %v3571 = vpop.permute.xlu0 %3570
        %3572 = vrot.lane.b32.xlu0 %v2727, 80
        %v3573 = vpop.permute.xlu0 %3572
        %3574 = vrot.lane.b32.xlu0 %v2719, 80
        %v3575 = vpop.permute.xlu0 %3574
        %3576 = vrot.lane.b32.xlu0 %v2728, 80
        %v3577 = vpop.permute.xlu0 %3576
        %3578 = vrot.lane.b32.xlu0 %v2729, 80
        %v3579 = vpop.permute.xlu0 %3578
        %3580 = vrot.lane.b32.xlu0 %v2725, 80
        %v3581 = vpop.permute.xlu0 %3580
        %3582 = vrot.lane.b32.xlu0 %v2746, 80
        %v3583 = vpop.permute.xlu0 %3582
        %3584 = vrot.lane.b32.xlu0 %v2747, 80
        %v3585 = vpop.permute.xlu0 %3584
        %3586 = vrot.lane.b32.xlu0 %v2739, 80
        %v3587 = vpop.permute.xlu0 %3586
        %3588 = vrot.lane.b32.xlu0 %v2748, 80
        %v3589 = vpop.permute.xlu0 %3588
        %3590 = vrot.lane.b32.xlu0 %v2749, 80
        %v3591 = vpop.permute.xlu0 %3590
        %3592 = vrot.lane.b32.xlu0 %v2745, 80
        %v3593 = vpop.permute.xlu0 %3592
        %3594 = vrot.lane.b32.xlu0 %v2766, 80
        %v3595 = vpop.permute.xlu0 %3594
        %3596 = vrot.lane.b32.xlu0 %v2767, 80
        %v3597 = vpop.permute.xlu0 %3596
        %3598 = vrot.lane.b32.xlu0 %v2759, 80
        %v3599 = vpop.permute.xlu0 %3598
        %3600 = vrot.lane.b32.xlu0 %v2768, 80
        %v3601 = vpop.permute.xlu0 %3600
        %3602 = vrot.lane.b32.xlu0 %v2769, 80
        %v3603 = vpop.permute.xlu0 %3602
        %3604 = vrot.lane.b32.xlu0 %v2765, 80
        %v3605 = vpop.permute.xlu0 %3604
        %v3606 = vsel %vm1809, %v3415, %v3417
        %v3607 = vsel %vm1809, %v3417, %v3419
        %v3608 = vsel %vm1809, %v3421, %v3423
        %v3609 = vsel %vm1809, %v3423, %v3425
        %v3610 = vsel %vm1809, %v3427, %v3429
        %v3611 = vsel %vm1809, %v3429, %v3431
        %v3612 = vsel %vm1809, %v3433, %v3435
        %v3613 = vsel %vm1809, %v3435, %v3437
        %v3614 = vsel %vm1809, %v3439, %v3441
        %v3615 = vsel %vm1809, %v3441, %v3443
        %v3616 = vsel %vm1809, %v3445, %v3447
        %v3617 = vsel %vm1809, %v3447, %v3449
        %v3618 = vsel %vm1809, %v3451, %v3453
        %v3619 = vsel %vm1809, %v3453, %v3455
        %v3620 = vsel %vm1809, %v3457, %v3459
        %v3621 = vsel %vm1809, %v3459, %v3461
        %v3622 = vsel %vm1809, %v3463, %v3465
        %v3623 = vsel %vm1809, %v3465, %v3467
        %v3624 = vsel %vm1809, %v3469, %v3471
        %v3625 = vsel %vm1809, %v3471, %v3473
        %v3626 = vsel %vm1809, %v3475, %v3477
        %v3627 = vsel %vm1809, %v3477, %v3479
        %v3628 = vsel %vm1809, %v3481, %v3483
        %v3629 = vsel %vm1809, %v3483, %v3485
        %v3630 = vsel %vm1809, %v3487, %v3489
        %v3631 = vsel %vm1809, %v3489, %v3491
        %v3632 = vsel %vm1809, %v3493, %v3495
        %v3633 = vsel %vm1809, %v3495, %v3497
        %v3634 = vsel %vm1809, %v3499, %v3501
        %v3635 = vsel %vm1809, %v3501, %v3503
        %v3636 = vsel %vm1809, %v3505, %v3507
        %v3637 = vsel %vm1809, %v3507, %v3509
        %v3638 = vsel %vm1809, %v3511, %v3513
        %v3639 = vsel %vm1809, %v3513, %v3515
        %v3640 = vsel %vm1809, %v3517, %v3519
        %v3641 = vsel %vm1809, %v3519, %v3521
        %v3642 = vsel %vm1809, %v3523, %v3525
        %v3643 = vsel %vm1809, %v3525, %v3527
        %v3644 = vsel %vm1809, %v3529, %v3531
        %v3645 = vsel %vm1809, %v3531, %v3533
        %v3646 = vsel %vm1809, %v3535, %v3537
        %v3647 = vsel %vm1809, %v3537, %v3539
        %v3648 = vsel %vm1809, %v3541, %v3543
        %v3649 = vsel %vm1809, %v3543, %v3545
        %v3650 = vsel %vm1809, %v3547, %v3549
        %v3651 = vsel %vm1809, %v3549, %v3551
        %v3652 = vsel %vm1809, %v3553, %v3555
        %v3653 = vsel %vm1809, %v3555, %v3557
        %v3654 = vsel %vm1809, %v3559, %v3561
        %v3655 = vsel %vm1809, %v3561, %v3563
        %v3656 = vsel %vm1809, %v3565, %v3567
        %v3657 = vsel %vm1809, %v3567, %v3569
        %v3658 = vsel %vm1809, %v3571, %v3573
        %v3659 = vsel %vm1809, %v3573, %v3575
        %v3660 = vsel %vm1809, %v3577, %v3579
        %v3661 = vsel %vm1809, %v3579, %v3581
        %v3662 = vsel %vm1809, %v3583, %v3585
        %v3663 = vsel %vm1809, %v3585, %v3587
        %v3664 = vsel %vm1809, %v3589, %v3591
        %v3665 = vsel %vm1809, %v3591, %v3593
        %v3666 = vsel %vm1809, %v3595, %v3597
        %v3667 = vsel %vm1809, %v3597, %v3599
        %v3668 = vsel %vm1809, %v3601, %v3603
        %v3669 = vsel %vm1809, %v3603, %v3605
        %v3734 = vld [vmem:[#allocation6] sm:$0xff]
        %v3735 = vld [vmem:[#allocation6 + $0x8] sm:$0xff]
        %v3736 = vld [vmem:[#allocation6 + $0x10] sm:$0xff]
        %v3737 = vld [vmem:[#allocation6 + $0x18] sm:$0xff]
        %v3738 = vld [vmem:[#allocation6 + $0x20] sm:$0xff]
        %v3739 = vld [vmem:[#allocation6 + $0x28] sm:$0xff]
        %v3740 = vld [vmem:[#allocation6 + $0x30] sm:$0xff]
        %v3741 = vld [vmem:[#allocation6 + $0x38] sm:$0xff]
        %v3742 = vld [vmem:[#allocation6 + $0x40] sm:$0xff]
        %v3743 = vld [vmem:[#allocation6 + $0x48] sm:$0xff]
        %v3744 = vld [vmem:[#allocation6 + $0x50] sm:$0xff]
        %v3745 = vld [vmem:[#allocation6 + $0x58] sm:$0xff]
        %v3746 = vld [vmem:[#allocation6 + $0x60] sm:$0xff]
        %v3747 = vld [vmem:[#allocation6 + $0x68] sm:$0xff]
        %v3748 = vld [vmem:[#allocation6 + $0x70] sm:$0xff]
        %v3749 = vld [vmem:[#allocation6 + $0x78] sm:$0xff]
        %v3750 = vld [vmem:[#allocation6 + $0x80] sm:$0xff]
        %v3751 = vld [vmem:[#allocation6 + $0x88] sm:$0xff]
        %v3752 = vld [vmem:[#allocation6 + $0x90] sm:$0xff]
        %v3753 = vld [vmem:[#allocation6 + $0x98] sm:$0xff]
        %v3754 = vld [vmem:[#allocation6 + $0xa0] sm:$0xff]
        %v3755 = vld [vmem:[#allocation6 + $0xa8] sm:$0xff]
        %v3756 = vld [vmem:[#allocation6 + $0xb0] sm:$0xff]
        %v3757 = vld [vmem:[#allocation6 + $0xb8] sm:$0xff]
        %v3758 = vld [vmem:[#allocation6 + $0xc0] sm:$0xff]
        %v3759 = vld [vmem:[#allocation6 + $0xc8] sm:$0xff]
        %v3760 = vld [vmem:[#allocation6 + $0xd0] sm:$0xff]
        %v3761 = vld [vmem:[#allocation6 + $0xd8] sm:$0xff]
        %v3762 = vld [vmem:[#allocation6 + $0xe0] sm:$0xff]
        %v3763 = vld [vmem:[#allocation6 + $0xe8] sm:$0xff]
        %v3764 = vld [vmem:[#allocation6 + $0xf0] sm:$0xff]
        %v3765 = vld [vmem:[#allocation6 + $0xf8] sm:$0xff]
        %v3766 = vld [vmem:[#allocation6 + $0x100] sm:$0xff]
        %v3767 = vld [vmem:[#allocation6 + $0x108] sm:$0xff]
        %v3768 = vld [vmem:[#allocation6 + $0x110] sm:$0xff]
        %v3769 = vld [vmem:[#allocation6 + $0x118] sm:$0xff]
        %v3770 = vld [vmem:[#allocation6 + $0x120] sm:$0xff]
        %v3771 = vld [vmem:[#allocation6 + $0x128] sm:$0xff]
        %v3772 = vld [vmem:[#allocation6 + $0x130] sm:$0xff]
        %v3773 = vld [vmem:[#allocation6 + $0x138] sm:$0xff]
        %v3774 = vld [vmem:[#allocation6 + $0x140] sm:$0xff]
        %v3775 = vld [vmem:[#allocation6 + $0x148] sm:$0xff]
        %v3776 = vld [vmem:[#allocation6 + $0x150] sm:$0xff]
        %v3777 = vld [vmem:[#allocation6 + $0x158] sm:$0xff]
        %v3778 = vld [vmem:[#allocation6 + $0x160] sm:$0xff]
        %v3779 = vld [vmem:[#allocation6 + $0x168] sm:$0xff]
        %v3780 = vld [vmem:[#allocation6 + $0x170] sm:$0xff]
        %v3781 = vld [vmem:[#allocation6 + $0x178] sm:$0xff]
        %v3782 = vld [vmem:[%s6] sm:$0xff]
        %v3783 = vld [vmem:[%s6 + $0x8] sm:$0xff]
        %v3784 = vld [vmem:[%s6 + $0x10] sm:$0xff]
        %v3785 = vld [vmem:[%s6 + $0x18] sm:$0xff]
        %v3786 = vld [vmem:[%s6 + $0x20] sm:$0xff]
        %v3787 = vld [vmem:[%s6 + $0x28] sm:$0xff]
        %3789 = vset.pattern.permute.xlu0 0
        %3790 = vperm.xlu0 %3789, %v3782
        %v3791 = vpop.permute.xlu0 %3790
        %3794 = vset.pattern.permute.xlu0 0
        %3795 = vperm.xlu0 %3794, %v3783
        %v3796 = vpop.permute.xlu0 %3795
        %3799 = vset.pattern.permute.xlu0 0
        %3800 = vperm.xlu0 %3799, %v3784
        %v3801 = vpop.permute.xlu0 %3800
        %3804 = vset.pattern.permute.xlu0 0
        %3805 = vperm.xlu0 %3804, %v3785
        %v3806 = vpop.permute.xlu0 %3805
        %3809 = vset.pattern.permute.xlu0 0
        %3810 = vperm.xlu0 %3809, %v3786
        %v3811 = vpop.permute.xlu0 %3810
        %3814 = vset.pattern.permute.xlu0 0
        %3815 = vperm.xlu0 %3814, %v3787
        %v3816 = vpop.permute.xlu0 %3815
        %3818 = vmatprep.subr.mxu0 %v2458
        %3819 = vmatpush1.msra.mxu0 %v2466
        %3820 = vmatprep.subr.mxu0 %v2459
        %3821 = vmatpush1.msra.mxu0 %v2467
        %3822 = vmatprep.subr.mxu0 %v2487
        %3823 = vmatpush1.msra.mxu0 %v2486
        %3824 = vmatprep.subr.mxu0 %v2489
        %3825 = vmatpush1.msra.mxu0 %v2488
        %3826 = vmatprep.subr.mxu0 %v2507
        %3827 = vmatpush1.msra.mxu0 %v2506
        %3828 = vmatprep.subr.mxu0 %v2509
        %3829 = vmatpush1.msra.mxu0 %v2508
        %3830 = vmatprep.subr.mxu0 %v2527
        %3831 = vmatpush1.msra.mxu0 %v2526
        %3832 = vmatprep.subr.mxu0 %v2529
        %3833 = vmatpush1.msra.mxu0 %v2528
        %3834 = vmatprep.subr.mxu0 %v2547
        %3835 = vmatpush1.msra.mxu0 %v2546
        %3836 = vmatprep.subr.mxu0 %v2549
        %3837 = vmatpush1.msra.mxu0 %v2548
        %3838 = vmatprep.subr.mxu0 %v2567
        %3839 = vmatpush1.msra.mxu0 %v2566
        %3840 = vmatprep.subr.mxu0 %v2569
        %3841 = vmatpush1.msra.mxu0 %v2568
        %3842 = vmatprep.subr.mxu0 %v2587
        %3843 = vmatpush1.msra.mxu0 %v2586
        %3844 = vmatprep.subr.mxu0 %v2589
        %3845 = vmatpush1.msra.mxu0 %v2588
        %3846 = vmatprep.subr.mxu0 %v2607
        %3847 = vmatpush1.msra.mxu0 %v2606
        %3848 = vmatprep.subr.mxu0 %v2609
        %3849 = vmatpush1.msra.mxu0 %v2608
        %3850 = vmatprep.subr.mxu0 %v2627
        %3851 = vmatpush1.msra.mxu0 %v2626
        %3852 = vmatprep.subr.mxu0 %v2629
        %3853 = vmatpush1.msra.mxu0 %v2628
        %3854 = vmatprep.subr.mxu0 %v2647
        %3855 = vmatpush1.msra.mxu0 %v2646
        %3856 = vmatprep.subr.mxu0 %v2649
        %3857 = vmatpush1.msra.mxu0 %v2648
        %3858 = vmatprep.subr.mxu0 %v2667
        %3859 = vmatpush1.msra.mxu0 %v2666
        %3860 = vmatprep.subr.mxu0 %v2669
        %3861 = vmatpush1.msra.mxu0 %v2668
        %3862 = vmatprep.subr.mxu0 %v2687
        %3863 = vmatpush1.msra.mxu0 %v2686
        %3864 = vmatprep.subr.mxu0 %v2689
        %3865 = vmatpush1.msra.mxu0 %v2688
        %3866 = vmatprep.subr.mxu0 %v2707
        %3867 = vmatpush1.msra.mxu0 %v2706
        %3868 = vmatprep.subr.mxu0 %v2709
        %3869 = vmatpush1.msra.mxu0 %v2708
        %3870 = vmatprep.subr.mxu0 %v2727
        %3871 = vmatpush1.msra.mxu0 %v2726
        %3872 = vmatprep.subr.mxu0 %v2729
        %3873 = vmatpush1.msra.mxu0 %v2728
        %3874 = vmatprep.subr.mxu0 %v2747
        %3875 = vmatpush1.msra.mxu0 %v2746
        %3876 = vmatprep.subr.mxu0 %v2749
        %3877 = vmatpush1.msra.mxu0 %v2748
        %3878 = vmatprep.subr.mxu0 %v2767
        %3879 = vmatpush1.msra.mxu0 %v2766
        %3880 = vmatprep.subr.mxu0 %v2769
        %3881 = vmatpush1.msra.mxu0 %v2768
        %3882 = vmatprep.mubr.f32.mxu0 %v3735
        %3883 = vmatmul.mubr.f32.gmra.mrb[0].mxu0 %v3734
        %v3884 = vpop.f32.mrb[0].mxu0
        %v3885 = vadd.f32 %v3791, %v3884
        %v3886 = vpop.f32.mrb[0].mxu0
        %v3887 = vadd.f32 %v3791, %v3886
        %3888 = vmatprep.mubr.f32.mxu0 %v3743
        %3889 = vmatmul.mubr.f32.gmra.mrb[0].mxu0 %v3742
        %v3890 = vpop.f32.mrb[0].mxu0
        %v3891 = vadd.f32 %v3796, %v3890
        %v3892 = vpop.f32.mrb[0].mxu0
        %v3893 = vadd.f32 %v3796, %v3892
        %3894 = vmatprep.mubr.f32.mxu0 %v3751
        %3895 = vmatmul.mubr.f32.gmra.mrb[0].mxu0 %v3750
        %v3896 = vpop.f32.mrb[0].mxu0
        %v3897 = vadd.f32 %v3801, %v3896
        %v3898 = vpop.f32.mrb[0].mxu0
        %v3899 = vadd.f32 %v3801, %v3898
        %3900 = vmatprep.mubr.f32.mxu0 %v3759
        %3901 = vmatmul.mubr.f32.gmra.mrb[0].mxu0 %v3758
        %v3902 = vpop.f32.mrb[0].mxu0
        %v3903 = vadd.f32 %v3806, %v3902
        %v3904 = vpop.f32.mrb[0].mxu0
        %v3905 = vadd.f32 %v3806, %v3904
        %3906 = vmatprep.mubr.f32.mxu0 %v3767
        %3907 = vmatmul.mubr.f32.gmra.mrb[0].mxu0 %v3766
        %v3908 = vpop.f32.mrb[0].mxu0
        %v3909 = vadd.f32 %v3811, %v3908
        %v3910 = vpop.f32.mrb[0].mxu0
        %v3911 = vadd.f32 %v3811, %v3910
        %3912 = vmatprep.mubr.f32.mxu0 %v3775
        %3913 = vmatmul.mubr.f32.gmra.mrb[0].mxu0 %v3774
        %v3914 = vpop.f32.mrb[0].mxu0
        %v3915 = vadd.f32 %v3816, %v3914
        %v3916 = vpop.f32.mrb[0].mxu0
        %v3917 = vadd.f32 %v3816, %v3916
        %3918 = vdwg.mxu0
        %3919 = vmatprep.subr.mxu0 %v2967
        %3920 = vmatpush1.msra.mxu0 %v2966
        %3921 = vmatprep.subr.mxu0 %v2969
        %3922 = vmatpush1.msra.mxu0 %v2968
        %3923 = vmatprep.subr.mxu0 %v2971
        %3924 = vmatpush1.msra.mxu0 %v2970
        %3925 = vmatprep.subr.mxu0 %v2973
        %3926 = vmatpush1.msra.mxu0 %v2972
        %3927 = vmatprep.subr.mxu0 %v2975
        %3928 = vmatpush1.msra.mxu0 %v2974
        %3929 = vmatprep.subr.mxu0 %v2977
        %3930 = vmatpush1.msra.mxu0 %v2976
        %3931 = vmatprep.subr.mxu0 %v2979
        %3932 = vmatpush1.msra.mxu0 %v2978
        %3933 = vmatprep.subr.mxu0 %v2981
        %3934 = vmatpush1.msra.mxu0 %v2980
        %3935 = vmatprep.subr.mxu0 %v2983
        %3936 = vmatpush1.msra.mxu0 %v2982
        %3937 = vmatprep.subr.mxu0 %v2985
        %3938 = vmatpush1.msra.mxu0 %v2984
        %3939 = vmatprep.subr.mxu0 %v2987
        %3940 = vmatpush1.msra.mxu0 %v2986
        %3941 = vmatprep.subr.mxu0 %v2989
        %3942 = vmatpush1.msra.mxu0 %v2988
        %3943 = vmatprep.subr.mxu0 %v2991
        %3944 = vmatpush1.msra.mxu0 %v2990
        %3945 = vmatprep.subr.mxu0 %v2993
        %3946 = vmatpush1.msra.mxu0 %v2992
        %3947 = vmatprep.subr.mxu0 %v2995
        %3948 = vmatpush1.msra.mxu0 %v2994
        %3949 = vmatprep.subr.mxu0 %v2997
        %3950 = vmatpush1.msra.mxu0 %v2996
        %3951 = vmatprep.subr.mxu0 %v2999
        %3952 = vmatpush1.msra.mxu0 %v2998
        %3953 = vmatprep.subr.mxu0 %v3001
        %3954 = vmatpush1.msra.mxu0 %v3000
        %3955 = vmatprep.subr.mxu0 %v3003
        %3956 = vmatpush1.msra.mxu0 %v3002
        %3957 = vmatprep.subr.mxu0 %v3005
        %3958 = vmatpush1.msra.mxu0 %v3004
        %3959 = vmatprep.subr.mxu0 %v3007
        %3960 = vmatpush1.msra.mxu0 %v3006
        %3961 = vmatprep.subr.mxu0 %v3009
        %3962 = vmatpush1.msra.mxu0 %v3008
        %3963 = vmatprep.subr.mxu0 %v3011
        %3964 = vmatpush1.msra.mxu0 %v3010
        %3965 = vmatprep.subr.mxu0 %v3013
        %3966 = vmatpush1.msra.mxu0 %v3012
        %3967 = vmatprep.subr.mxu0 %v3015
        %3968 = vmatpush1.msra.mxu0 %v3014
        %3969 = vmatprep.subr.mxu0 %v3017
        %3970 = vmatpush1.msra.mxu0 %v3016
        %3971 = vmatprep.subr.mxu0 %v3019
        %3972 = vmatpush1.msra.mxu0 %v3018
        %3973 = vmatprep.subr.mxu0 %v3021
        %3974 = vmatpush1.msra.mxu0 %v3020
        %3975 = vmatprep.subr.mxu0 %v3023
        %3976 = vmatpush1.msra.mxu0 %v3022
        %3977 = vmatprep.subr.mxu0 %v3025
        %3978 = vmatpush1.msra.mxu0 %v3024
        %3979 = vmatprep.subr.mxu0 %v3027
        %3980 = vmatpush1.msra.mxu0 %v3026
        %3981 = vmatprep.subr.mxu0 %v3029
        %3982 = vmatpush1.msra.mxu0 %v3028
        %3983 = vmatprep.mubr.f32.mxu0 %v3737
        %3984 = vmatmul.mubr.f32.gmra.mrb[0].mxu0 %v3736
        %v3985 = vpop.f32.mrb[0].mxu0
        %v3986 = vadd.f32 %v3885, %v3985
        %v3987 = vpop.f32.mrb[0].mxu0
        %v3988 = vadd.f32 %v3887, %v3987
        %3989 = vmatprep.mubr.f32.mxu0 %v3745
        %3990 = vmatmul.mubr.f32.gmra.mrb[0].mxu0 %v3744
        %v3991 = vpop.f32.mrb[0].mxu0
        %v3992 = vadd.f32 %v3891, %v3991
        %v3993 = vpop.f32.mrb[0].mxu0
        %v3994 = vadd.f32 %v3893, %v3993
        %3995 = vmatprep.mubr.f32.mxu0 %v3753
        %3996 = vmatmul.mubr.f32.gmra.mrb[0].mxu0 %v3752
        %v3997 = vpop.f32.mrb[0].mxu0
        %v3998 = vadd.f32 %v3897, %v3997
        %v3999 = vpop.f32.mrb[0].mxu0
        %v4000 = vadd.f32 %v3899, %v3999
        %4001 = vmatprep.mubr.f32.mxu0 %v3761
        %4002 = vmatmul.mubr.f32.gmra.mrb[0].mxu0 %v3760
        %v4003 = vpop.f32.mrb[0].mxu0
        %v4004 = vadd.f32 %v3903, %v4003
        %v4005 = vpop.f32.mrb[0].mxu0
        %v4006 = vadd.f32 %v3905, %v4005
        %4007 = vmatprep.mubr.f32.mxu0 %v3769
        %4008 = vmatmul.mubr.f32.gmra.mrb[0].mxu0 %v3768
        %v4009 = vpop.f32.mrb[0].mxu0
        %v4010 = vadd.f32 %v3909, %v4009
        %v4011 = vpop.f32.mrb[0].mxu0
        %v4012 = vadd.f32 %v3911, %v4011
        %4013 = vmatprep.mubr.f32.mxu0 %v3777
        %4014 = vmatmul.mubr.f32.gmra.mrb[0].mxu0 %v3776
        %v4015 = vpop.f32.mrb[0].mxu0
        %v4016 = vadd.f32 %v3915, %v4015
        %v4017 = vpop.f32.mrb[0].mxu0
        %v4018 = vadd.f32 %v3917, %v4017
        %4019 = vdwg.mxu0
        %4020 = vmatprep.subr.mxu0 %v3287
        %4021 = vmatpush1.msra.mxu0 %v3286
        %4022 = vmatprep.subr.mxu0 %v3289
        %4023 = vmatpush1.msra.mxu0 %v3288
        %4024 = vmatprep.subr.mxu0 %v3291
        %4025 = vmatpush1.msra.mxu0 %v3290
        %4026 = vmatprep.subr.mxu0 %v3293
        %4027 = vmatpush1.msra.mxu0 %v3292
        %4028 = vmatprep.subr.mxu0 %v3295
        %4029 = vmatpush1.msra.mxu0 %v3294
        %4030 = vmatprep.subr.mxu0 %v3297
        %4031 = vmatpush1.msra.mxu0 %v3296
        %4032 = vmatprep.subr.mxu0 %v3299
        %4033 = vmatpush1.msra.mxu0 %v3298
        %4034 = vmatprep.subr.mxu0 %v3301
        %4035 = vmatpush1.msra.mxu0 %v3300
        %4036 = vmatprep.subr.mxu0 %v3303
        %4037 = vmatpush1.msra.mxu0 %v3302
        %4038 = vmatprep.subr.mxu0 %v3305
        %4039 = vmatpush1.msra.mxu0 %v3304
        %4040 = vmatprep.subr.mxu0 %v3307
        %4041 = vmatpush1.msra.mxu0 %v3306
        %4042 = vmatprep.subr.mxu0 %v3309
        %4043 = vmatpush1.msra.mxu0 %v3308
        %4044 = vmatprep.subr.mxu0 %v3311
        %4045 = vmatpush1.msra.mxu0 %v3310
        %4046 = vmatprep.subr.mxu0 %v3313
        %4047 = vmatpush1.msra.mxu0 %v3312
        %4048 = vmatprep.subr.mxu0 %v3315
        %4049 = vmatpush1.msra.mxu0 %v3314
        %4050 = vmatprep.subr.mxu0 %v3317
        %4051 = vmatpush1.msra.mxu0 %v3316
        %4052 = vmatprep.subr.mxu0 %v3319
        %4053 = vmatpush1.msra.mxu0 %v3318
        %4054 = vmatprep.subr.mxu0 %v3321
        %4055 = vmatpush1.msra.mxu0 %v3320
        %4056 = vmatprep.subr.mxu0 %v3323
        %4057 = vmatpush1.msra.mxu0 %v3322
        %4058 = vmatprep.subr.mxu0 %v3325
        %4059 = vmatpush1.msra.mxu0 %v3324
        %4060 = vmatprep.subr.mxu0 %v3327
        %4061 = vmatpush1.msra.mxu0 %v3326
        %4062 = vmatprep.subr.mxu0 %v3329
        %4063 = vmatpush1.msra.mxu0 %v3328
        %4064 = vmatprep.subr.mxu0 %v3331
        %4065 = vmatpush1.msra.mxu0 %v3330
        %4066 = vmatprep.subr.mxu0 %v3333
        %4067 = vmatpush1.msra.mxu0 %v3332
        %4068 = vmatprep.subr.mxu0 %v3335
        %4069 = vmatpush1.msra.mxu0 %v3334
        %4070 = vmatprep.subr.mxu0 %v3337
        %4071 = vmatpush1.msra.mxu0 %v3336
        %4072 = vmatprep.subr.mxu0 %v3339
        %4073 = vmatpush1.msra.mxu0 %v3338
        %4074 = vmatprep.subr.mxu0 %v3341
        %4075 = vmatpush1.msra.mxu0 %v3340
        %4076 = vmatprep.subr.mxu0 %v3343
        %4077 = vmatpush1.msra.mxu0 %v3342
        %4078 = vmatprep.subr.mxu0 %v3345
        %4079 = vmatpush1.msra.mxu0 %v3344
        %4080 = vmatprep.subr.mxu0 %v3347
        %4081 = vmatpush1.msra.mxu0 %v3346
        %4082 = vmatprep.subr.mxu0 %v3349
        %4083 = vmatpush1.msra.mxu0 %v3348
        %4084 = vmatprep.mubr.f32.mxu0 %v3739
        %4085 = vmatmul.mubr.f32.gmra.mrb[0].mxu0 %v3738
        %v4086 = vpop.f32.mrb[0].mxu0
        %v4087 = vadd.f32 %v3986, %v4086
        %v4088 = vpop.f32.mrb[0].mxu0
        %v4089 = vadd.f32 %v3988, %v4088
        %4090 = vmatprep.mubr.f32.mxu0 %v3747
        %4091 = vmatmul.mubr.f32.gmra.mrb[0].mxu0 %v3746
        %v4092 = vpop.f32.mrb[0].mxu0
        %v4093 = vadd.f32 %v3992, %v4092
        %v4094 = vpop.f32.mrb[0].mxu0
        %v4095 = vadd.f32 %v3994, %v4094
        %4096 = vmatprep.mubr.f32.mxu0 %v3755
        %4097 = vmatmul.mubr.f32.gmra.mrb[0].mxu0 %v3754
        %v4098 = vpop.f32.mrb[0].mxu0
        %v4099 = vadd.f32 %v3998, %v4098
        %v4100 = vpop.f32.mrb[0].mxu0
        %v4101 = vadd.f32 %v4000, %v4100
        %4102 = vmatprep.mubr.f32.mxu0 %v3763
        %4103 = vmatmul.mubr.f32.gmra.mrb[0].mxu0 %v3762
        %v4104 = vpop.f32.mrb[0].mxu0
        %v4105 = vadd.f32 %v4004, %v4104
        %v4106 = vpop.f32.mrb[0].mxu0
        %v4107 = vadd.f32 %v4006, %v4106
        %4108 = vmatprep.mubr.f32.mxu0 %v3771
        %4109 = vmatmul.mubr.f32.gmra.mrb[0].mxu0 %v3770
        %v4110 = vpop.f32.mrb[0].mxu0
        %v4111 = vadd.f32 %v4010, %v4110
        %v4112 = vpop.f32.mrb[0].mxu0
        %v4113 = vadd.f32 %v4012, %v4112
        %4114 = vmatprep.mubr.f32.mxu0 %v3779
        %4115 = vmatmul.mubr.f32.gmra.mrb[0].mxu0 %v3778
        %v4116 = vpop.f32.mrb[0].mxu0
        %v4117 = vadd.f32 %v4016, %v4116
        %v4118 = vpop.f32.mrb[0].mxu0
        %v4119 = vadd.f32 %v4018, %v4118
        %4120 = vdwg.mxu0
        %4121 = vmatprep.subr.mxu0 %v3607
        %4122 = vmatpush1.msra.mxu0 %v3606
        %4123 = vmatprep.subr.mxu0 %v3609
        %4124 = vmatpush1.msra.mxu0 %v3608
        %4125 = vmatprep.subr.mxu0 %v3611
        %4126 = vmatpush1.msra.mxu0 %v3610
        %4127 = vmatprep.subr.mxu0 %v3613
        %4128 = vmatpush1.msra.mxu0 %v3612
        %4129 = vmatprep.subr.mxu0 %v3615
        %4130 = vmatpush1.msra.mxu0 %v3614
        %4131 = vmatprep.subr.mxu0 %v3617
        %4132 = vmatpush1.msra.mxu0 %v3616
        %4133 = vmatprep.subr.mxu0 %v3619
        %4134 = vmatpush1.msra.mxu0 %v3618
        %4135 = vmatprep.subr.mxu0 %v3621
        %4136 = vmatpush1.msra.mxu0 %v3620
        %4137 = vmatprep.subr.mxu0 %v3623
        %4138 = vmatpush1.msra.mxu0 %v3622
        %4139 = vmatprep.subr.mxu0 %v3625
        %4140 = vmatpush1.msra.mxu0 %v3624
        %4141 = vmatprep.subr.mxu0 %v3627
        %4142 = vmatpush1.msra.mxu0 %v3626
        %4143 = vmatprep.subr.mxu0 %v3629
        %4144 = vmatpush1.msra.mxu0 %v3628
        %4145 = vmatprep.subr.mxu0 %v3631
        %4146 = vmatpush1.msra.mxu0 %v3630
        %4147 = vmatprep.subr.mxu0 %v3633
        %4148 = vmatpush1.msra.mxu0 %v3632
        %4149 = vmatprep.subr.mxu0 %v3635
        %4150 = vmatpush1.msra.mxu0 %v3634
        %4151 = vmatprep.subr.mxu0 %v3637
        %4152 = vmatpush1.msra.mxu0 %v3636
        %4153 = vmatprep.subr.mxu0 %v3639
        %4154 = vmatpush1.msra.mxu0 %v3638
        %4155 = vmatprep.subr.mxu0 %v3641
        %4156 = vmatpush1.msra.mxu0 %v3640
        %4157 = vmatprep.subr.mxu0 %v3643
        %4158 = vmatpush1.msra.mxu0 %v3642
        %4159 = vmatprep.subr.mxu0 %v3645
        %4160 = vmatpush1.msra.mxu0 %v3644
        %4161 = vmatprep.subr.mxu0 %v3647
        %4162 = vmatpush1.msra.mxu0 %v3646
        %4163 = vmatprep.subr.mxu0 %v3649
        %4164 = vmatpush1.msra.mxu0 %v3648
        %4165 = vmatprep.subr.mxu0 %v3651
        %4166 = vmatpush1.msra.mxu0 %v3650
        %4167 = vmatprep.subr.mxu0 %v3653
        %4168 = vmatpush1.msra.mxu0 %v3652
        %4169 = vmatprep.subr.mxu0 %v3655
        %4170 = vmatpush1.msra.mxu0 %v3654
        %4171 = vmatprep.subr.mxu0 %v3657
        %4172 = vmatpush1.msra.mxu0 %v3656
        %4173 = vmatprep.subr.mxu0 %v3659
        %4174 = vmatpush1.msra.mxu0 %v3658
        %4175 = vmatprep.subr.mxu0 %v3661
        %4176 = vmatpush1.msra.mxu0 %v3660
        %4177 = vmatprep.subr.mxu0 %v3663
        %4178 = vmatpush1.msra.mxu0 %v3662
        %4179 = vmatprep.subr.mxu0 %v3665
        %4180 = vmatpush1.msra.mxu0 %v3664
        %4181 = vmatprep.subr.mxu0 %v3667
        %4182 = vmatpush1.msra.mxu0 %v3666
        %4183 = vmatprep.subr.mxu0 %v3669
        %4184 = vmatpush1.msra.mxu0 %v3668
        %4185 = vmatprep.mubr.f32.mxu0 %v3741
        %4186 = vmatmul.mubr.f32.gmra.mrb[0].mxu0 %v3740
        %v4187 = vpop.f32.mrb[0].mxu0
        %v4188 = vadd.f32 %v4087, %v4187
        %v4189 = vpop.f32.mrb[0].mxu0
        %v4190 = vadd.f32 %v4089, %v4189
        %4191 = vmatprep.mubr.f32.mxu0 %v3749
        %4192 = vmatmul.mubr.f32.gmra.mrb[0].mxu0 %v3748
        %v4193 = vpop.f32.mrb[0].mxu0
        %v4194 = vadd.f32 %v4093, %v4193
        %v4195 = vpop.f32.mrb[0].mxu0
        %v4196 = vadd.f32 %v4095, %v4195
        %4197 = vmatprep.mubr.f32.mxu0 %v3757
        %4198 = vmatmul.mubr.f32.gmra.mrb[0].mxu0 %v3756
        %v4199 = vpop.f32.mrb[0].mxu0
        %v4200 = vadd.f32 %v4099, %v4199
        %v4201 = vpop.f32.mrb[0].mxu0
        %v4202 = vadd.f32 %v4101, %v4201
        %4203 = vmatprep.mubr.f32.mxu0 %v3765
        %4204 = vmatmul.mubr.f32.gmra.mrb[0].mxu0 %v3764
        %v4205 = vpop.f32.mrb[0].mxu0
        %v4206 = vadd.f32 %v4105, %v4205
        %v4207 = vpop.f32.mrb[0].mxu0
        %v4208 = vadd.f32 %v4107, %v4207
        %4209 = vmatprep.mubr.f32.mxu0 %v3773
        %4210 = vmatmul.mubr.f32.gmra.mrb[0].mxu0 %v3772
        %v4211 = vpop.f32.mrb[0].mxu0
        %v4212 = vadd.f32 %v4111, %v4211
        %v4213 = vpop.f32.mrb[0].mxu0
        %v4214 = vadd.f32 %v4113, %v4213
        %4215 = vmatprep.mubr.f32.mxu0 %v3781
        %4216 = vmatmul.mubr.f32.gmra.mrb[0].mxu0 %v3780
        %v4217 = vpop.f32.mrb[0].mxu0
        %v4218 = vadd.f32 %v4117, %v4217
        %v4219 = vpop.f32.mrb[0].mxu0
        %v4220 = vadd.f32 %v4119, %v4219
        %4221 = vdwg.mxu0
        %v4222 = vmax.f32 %v4188, 0.0
        %v4223 = vmax.f32 %v4190, 0.0
        %v4224 = vmax.f32 %v4194, 0.0
        %v4225 = vmax.f32 %v4196, 0.0
        %v4226 = vmax.f32 %v4200, 0.0
        %v4227 = vmax.f32 %v4202, 0.0
        %v4228 = vmax.f32 %v4206, 0.0
        %v4229 = vmax.f32 %v4208, 0.0
        %v4230 = vmax.f32 %v4212, 0.0
        %v4231 = vmax.f32 %v4214, 0.0
        %v4232 = vmax.f32 %v4218, 0.0
        %v4233 = vmax.f32 %v4220, 0.0
        %v4234 = vadd.f32 %v4222, %v4226
        %v4235 = vadd.f32 %v4223, %v4227
        %v4236 = vadd.f32 %v4224, %v4228
        %v4237 = vadd.f32 %v4225, %v4229
        %v4238 = vadd.f32 %v4234, %v4230
        %v4239 = vadd.f32 %v4235, %v4231
        %v4240 = vadd.f32 %v4236, %v4232
        %v4241 = vadd.f32 %v4237, %v4233
        %v4242 = vadd.f32 %v627, %v628
        %4243 = vadd.xlane.f32.xlu0 %v4242
        %v4244 = vpop.xlane.xlu0 %4243
        %v4245 = vadd.f32 %v629, %v630
        %4246 = vadd.xlane.f32.xlu0 %v4245
        %v4247 = vpop.xlane.xlu0 %4246
        %v4248 = vadd.f32 %v2442, %v2443
        %4249 = vadd.xlane.f32.xlu0 %v4248
        %v4250 = vpop.xlane.xlu0 %4249
        %v4251 = vadd.f32 %v2444, %v2445
        %4252 = vadd.xlane.f32.xlu0 %v4251
        %v4253 = vpop.xlane.xlu0 %4252
        %v4254 = vadd.f32 %v4238, %v4239
        %4255 = vadd.xlane.f32.xlu0 %v4254
        %v4256 = vpop.xlane.xlu0 %4255
        %v4257 = vadd.f32 %v4240, %v4241
        %4258 = vadd.xlane.f32.xlu0 %v4257
        %v4259 = vpop.xlane.xlu0 %4258
        %v4260 = vrcp.pop 256.0
        %v4261 = vmul.f32 %v4244, %v4260
        %v4262 = vmul.f32 %v4247, %v4260
        %v4263 = vmul.f32 %v4250, %v4260
        %v4264 = vmul.f32 %v4253, %v4260
        %v4265 = vmul.f32 %v4256, %v4260
        %v4266 = vmul.f32 %v4259, %v4260
        %v4267 = vmax.f32 %v627, %v628
        %4268 = vmax.xlane.f32.xlu0 %v4267
        %v4269 = vpop.xlane.xlu0 %4268
        %v4270 = vmax.f32 %v629, %v630
        %4271 = vmax.xlane.f32.xlu0 %v4270
        %v4272 = vpop.xlane.xlu0 %4271
        %v4273 = vmax.f32 %v2442, %v2443
        %4274 = vmax.xlane.f32.xlu0 %v4273
        %v4275 = vpop.xlane.xlu0 %4274
        %v4276 = vmax.f32 %v2444, %v2445
        %4277 = vmax.xlane.f32.xlu0 %v4276
        %v4278 = vpop.xlane.xlu0 %4277
        %v4279 = vmax.f32 %v4238, %v4239
        %4280 = vmax.xlane.f32.xlu0 %v4279
        %v4281 = vpop.xlane.xlu0 %4280
        %v4282 = vmax.f32 %v4240, %v4241
        %4283 = vmax.xlane.f32.xlu0 %v4282
        %v4284 = vpop.xlane.xlu0 %4283
        %vm4285 = vcmask 7168
        %v4286 = vsel %vm4285, %v4261, %v4269
        %v4287 = vsel %vm4285, %v4262, %v4272
        %v4288 = vsel %vm4285, %v4263, %v4275
        %v4289 = vsel %vm4285, %v4264, %v4278
        %v4290 = vsel %vm4285, %v4265, %v4281
        %v4291 = vsel %vm4285, %v4266, %v4284
        %v4292 = vld [vmem:[#allocation7] sm:$0xff]
        %v4293 = vld [vmem:[#allocation7 + $0x8] sm:$0xff]
        %v4294 = vld [vmem:[#allocation7 + $0x10] sm:$0xff]
        %v4295 = vld [vmem:[#allocation7 + $0x18] sm:$0xff]
        %v4296 = vld [vmem:[#allocation7 + $0x20] sm:$0xff]
        %v4297 = vld [vmem:[#allocation7 + $0x28] sm:$0xff]
        %vm4298 = vcmask 392192
        %v4300 = vsel %vm4298, %v4292, 0
        %v4303 = vsel %vm4298, %v4293, 0
        %v4306 = vsel %vm4298, %v4294, 0
        %v4309 = vsel %vm4298, %v4295, 0
        %v4312 = vsel %vm4298, %v4296, 0
        %v4315 = vsel %vm4298, %v4297, 0
        %4317 = vmatprep.subr.mxu0 0.0
        %4318 = vmatpush1.msra.mxu0 %v4286
        %4319 = vmatprep.subr.mxu0 0.0
        %4320 = vmatpush1.msra.mxu0 %v4287
        %4321 = vmatprep.subr.mxu0 0.0
        %4322 = vmatpush1.msra.mxu0 %v4288
        %4323 = vmatprep.subr.mxu0 0.0
        %4324 = vmatpush1.msra.mxu0 %v4289
        %4325 = vmatprep.subr.mxu0 0.0
        %4326 = vmatpush1.msra.mxu0 %v4290
        %4327 = vmatprep.subr.mxu0 0.0
        %4328 = vmatpush1.msra.mxu0 %v4291
        %4329 = vmatprep.subr.mxu0 0.0
        %4330 = vmatpush1.msra.mxu0 0.0
        %4331 = vmatprep.subr.mxu0 0.0
        %4332 = vmatpush1.msra.mxu0 0.0
        %4333 = vmatprep.subr.mxu0 0.0
        %4334 = vmatpush1.msra.mxu0 0.0
        %4335 = vmatprep.subr.mxu0 0.0
        %4336 = vmatpush1.msra.mxu0 0.0
        %4337 = vmatprep.subr.mxu0 0.0
        %4338 = vmatpush1.msra.mxu0 0.0
        %4339 = vmatprep.subr.mxu0 0.0
        %4340 = vmatpush1.msra.mxu0 0.0
        %4341 = vmatprep.subr.mxu0 0.0
        %4342 = vmatpush1.msra.mxu0 0.0
        %4343 = vmatprep.subr.mxu0 0.0
        %4344 = vmatpush1.msra.mxu0 0.0
        %4345 = vmatprep.subr.mxu0 0.0
        %4346 = vmatpush1.msra.mxu0 0.0
        %4347 = vmatprep.subr.mxu0 0.0
        %4348 = vmatpush1.msra.mxu0 0.0
        %4349 = vmatprep.subr.mxu0 0.0
        %4350 = vmatpush1.msra.mxu0 0.0
        %4351 = vmatprep.subr.mxu0 0.0
        %4352 = vmatpush1.msra.mxu0 0.0
        %4353 = vmatprep.subr.mxu0 0.0
        %4354 = vmatpush1.msra.mxu0 0.0
        %4355 = vmatprep.subr.mxu0 0.0
        %4356 = vmatpush1.msra.mxu0 0.0
        %4357 = vmatprep.subr.mxu0 0.0
        %4358 = vmatpush1.msra.mxu0 0.0
        %4359 = vmatprep.subr.mxu0 0.0
        %4360 = vmatpush1.msra.mxu0 0.0
        %4361 = vmatprep.subr.mxu0 0.0
        %4362 = vmatpush1.msra.mxu0 0.0
        %4363 = vmatprep.subr.mxu0 0.0
        %4364 = vmatpush1.msra.mxu0 0.0
        %4365 = vmatprep.subr.mxu0 0.0
        %4366 = vmatpush1.msra.mxu0 0.0
        %4367 = vmatprep.subr.mxu0 0.0
        %4368 = vmatpush1.msra.mxu0 0.0
        %4369 = vmatprep.subr.mxu0 0.0
        %4370 = vmatpush1.msra.mxu0 0.0
        %4371 = vmatprep.subr.mxu0 0.0
        %4372 = vmatpush1.msra.mxu0 0.0
        %4373 = vmatprep.subr.mxu0 0.0
        %4374 = vmatpush1.msra.mxu0 0.0
        %4375 = vmatprep.subr.mxu0 0.0
        %4376 = vmatpush1.msra.mxu0 0.0
        %4377 = vmatprep.subr.mxu0 0.0
        %4378 = vmatpush1.msra.mxu0 0.0
        %4379 = vmatprep.subr.mxu0 0.0
        %4380 = vmatpush1.msra.mxu0 0.0
        %4381 = vmatprep.mubr.f32.mxu0 0.0
        %4382 = vmatmul.mubr.f32.gmra.mrb[0].mxu0 %v4300
        %v4383 = vpop.f32.mrb[0].mxu0
        %v4384 = vadd.f32 0.0, %v4383
        %v4385 = vpop.f32.mrb[0].mxu0
        %4386 = vmatprep.mubr.f32.mxu0 0.0
        %4387 = vmatmul.mubr.f32.gmra.mrb[0].mxu0 %v4303
        %v4388 = vpop.f32.mrb[0].mxu0
        %v4389 = vadd.f32 0.0, %v4388
        %v4390 = vpop.f32.mrb[0].mxu0
        %4391 = vmatprep.mubr.f32.mxu0 0.0
        %4392 = vmatmul.mubr.f32.gmra.mrb[0].mxu0 %v4306
        %v4393 = vpop.f32.mrb[0].mxu0
        %v4394 = vadd.f32 0.0, %v4393
        %v4395 = vpop.f32.mrb[0].mxu0
        %4396 = vmatprep.mubr.f32.mxu0 0.0
        %4397 = vmatmul.mubr.f32.gmra.mrb[0].mxu0 %v4309
        %v4398 = vpop.f32.mrb[0].mxu0
        %v4399 = vadd.f32 0.0, %v4398
        %v4400 = vpop.f32.mrb[0].mxu0
        %4401 = vmatprep.mubr.f32.mxu0 0.0
        %4402 = vmatmul.mubr.f32.gmra.mrb[0].mxu0 %v4312
        %v4403 = vpop.f32.mrb[0].mxu0
        %v4404 = vadd.f32 0.0, %v4403
        %v4405 = vpop.f32.mrb[0].mxu0
        %4406 = vmatprep.mubr.f32.mxu0 0.0
        %4407 = vmatmul.mubr.f32.gmra.mrb[0].mxu0 %v4315
        %v4408 = vpop.f32.mrb[0].mxu0
        %v4409 = vadd.f32 0.0, %v4408
        %v4410 = vpop.f32.mrb[0].mxu0
        %4411 = vdwg.mxu0
        %v4412 = vmax.f32 %v4384, 0.0
        %v4413 = vmax.f32 %v4389, 0.0
        %v4414 = vmax.f32 %v4394, 0.0
        %v4415 = vmax.f32 %v4399, 0.0
        %v4416 = vmax.f32 %v4404, 0.0
        %v4417 = vmax.f32 %v4409, 0.0
        %v4418 = vld [vmem:[#allocation9] sm:$0xff]
        %v4419 = vld [vmem:[#allocation9 + $0x8] sm:$0xff]
        %v4420 = vld [vmem:[#allocation9 + $0x10] sm:$0xff]
        %v4421 = vld [vmem:[#allocation9 + $0x18] sm:$0xff]
        %v4422 = vld [vmem:[#allocation9 + $0x20] sm:$0xff]
        %v4423 = vld [vmem:[#allocation9 + $0x28] sm:$0xff]
        %v4425 = vsel %vm4298, %v4418, 0
        %v4428 = vsel %vm4298, %v4419, 0
        %v4431 = vsel %vm4298, %v4420, 0
        %v4434 = vsel %vm4298, %v4421, 0
        %v4437 = vsel %vm4298, %v4422, 0
        %v4440 = vsel %vm4298, %v4423, 0
        %4442 = vmatprep.subr.mxu0 0.0
        %4443 = vmatpush1.msra.mxu0 %v4412
        %4444 = vmatprep.subr.mxu0 0.0
        %4445 = vmatpush1.msra.mxu0 %v4413
        %4446 = vmatprep.subr.mxu0 0.0
        %4447 = vmatpush1.msra.mxu0 %v4414
        %4448 = vmatprep.subr.mxu0 0.0
        %4449 = vmatpush1.msra.mxu0 %v4415
        %4450 = vmatprep.subr.mxu0 0.0
        %4451 = vmatpush1.msra.mxu0 %v4416
        %4452 = vmatprep.subr.mxu0 0.0
        %4453 = vmatpush1.msra.mxu0 %v4417
        %4454 = vmatprep.subr.mxu0 0.0
        %4455 = vmatpush1.msra.mxu0 0.0
        %4456 = vmatprep.subr.mxu0 0.0
        %4457 = vmatpush1.msra.mxu0 0.0
        %4458 = vmatprep.subr.mxu0 0.0
        %4459 = vmatpush1.msra.mxu0 0.0
        %4460 = vmatprep.subr.mxu0 0.0
        %4461 = vmatpush1.msra.mxu0 0.0
        %4462 = vmatprep.subr.mxu0 0.0
        %4463 = vmatpush1.msra.mxu0 0.0
        %4464 = vmatprep.subr.mxu0 0.0
        %4465 = vmatpush1.msra.mxu0 0.0
        %4466 = vmatprep.subr.mxu0 0.0
        %4467 = vmatpush1.msra.mxu0 0.0
        %4468 = vmatprep.subr.mxu0 0.0
        %4469 = vmatpush1.msra.mxu0 0.0
        %4470 = vmatprep.subr.mxu0 0.0
        %4471 = vmatpush1.msra.mxu0 0.0
        %4472 = vmatprep.subr.mxu0 0.0
        %4473 = vmatpush1.msra.mxu0 0.0
        %4474 = vmatprep.subr.mxu0 0.0
        %4475 = vmatpush1.msra.mxu0 0.0
        %4476 = vmatprep.subr.mxu0 0.0
        %4477 = vmatpush1.msra.mxu0 0.0
        %4478 = vmatprep.subr.mxu0 0.0
        %4479 = vmatpush1.msra.mxu0 0.0
        %4480 = vmatprep.subr.mxu0 0.0
        %4481 = vmatpush1.msra.mxu0 0.0
        %4482 = vmatprep.subr.mxu0 0.0
        %4483 = vmatpush1.msra.mxu0 0.0
        %4484 = vmatprep.subr.mxu0 0.0
        %4485 = vmatpush1.msra.mxu0 0.0
        %4486 = vmatprep.subr.mxu0 0.0
        %4487 = vmatpush1.msra.mxu0 0.0
        %4488 = vmatprep.subr.mxu0 0.0
        %4489 = vmatpush1.msra.mxu0 0.0
        %4490 = vmatprep.subr.mxu0 0.0
        %4491 = vmatpush1.msra.mxu0 0.0
        %4492 = vmatprep.subr.mxu0 0.0
        %4493 = vmatpush1.msra.mxu0 0.0
        %4494 = vmatprep.subr.mxu0 0.0
        %4495 = vmatpush1.msra.mxu0 0.0
        %4496 = vmatprep.subr.mxu0 0.0
        %4497 = vmatpush1.msra.mxu0 0.0
        %4498 = vmatprep.subr.mxu0 0.0
        %4499 = vmatpush1.msra.mxu0 0.0
        %4500 = vmatprep.subr.mxu0 0.0
        %4501 = vmatpush1.msra.mxu0 0.0
        %4502 = vmatprep.subr.mxu0 0.0
        %4503 = vmatpush1.msra.mxu0 0.0
        %4504 = vmatprep.subr.mxu0 0.0
        %4505 = vmatpush1.msra.mxu0 0.0
        %4506 = vmatprep.mubr.f32.mxu0 0.0
        %4507 = vmatmul.mubr.f32.gmra.mrb[0].mxu0 %v4425
        %v4508 = vpop.f32.mrb[0].mxu0
        %v4509 = vadd.f32 0.0, %v4508
        %v4510 = vpop.f32.mrb[0].mxu0
        %4511 = vmatprep.mubr.f32.mxu0 0.0
        %4512 = vmatmul.mubr.f32.gmra.mrb[0].mxu0 %v4428
        %v4513 = vpop.f32.mrb[0].mxu0
        %v4514 = vadd.f32 0.0, %v4513
        %v4515 = vpop.f32.mrb[0].mxu0
        %4516 = vmatprep.mubr.f32.mxu0 0.0
        %4517 = vmatmul.mubr.f32.gmra.mrb[0].mxu0 %v4431
        %v4518 = vpop.f32.mrb[0].mxu0
        %v4519 = vadd.f32 0.0, %v4518
        %v4520 = vpop.f32.mrb[0].mxu0
        %4521 = vmatprep.mubr.f32.mxu0 0.0
        %4522 = vmatmul.mubr.f32.gmra.mrb[0].mxu0 %v4434
        %v4523 = vpop.f32.mrb[0].mxu0
        %v4524 = vadd.f32 0.0, %v4523
        %v4525 = vpop.f32.mrb[0].mxu0
        %4526 = vmatprep.mubr.f32.mxu0 0.0
        %4527 = vmatmul.mubr.f32.gmra.mrb[0].mxu0 %v4437
        %v4528 = vpop.f32.mrb[0].mxu0
        %v4529 = vadd.f32 0.0, %v4528
        %v4530 = vpop.f32.mrb[0].mxu0
        %4531 = vmatprep.mubr.f32.mxu0 0.0
        %4532 = vmatmul.mubr.f32.gmra.mrb[0].mxu0 %v4440
        %v4533 = vpop.f32.mrb[0].mxu0
        %v4534 = vadd.f32 0.0, %v4533
        %v4535 = vpop.f32.mrb[0].mxu0
        %4536 = vdwg.mxu0
        %vm4537 = vcmask 15360
        %v4538 = vsel %vm4537, %v4509, 0.0
        %4539 = vadd.xlane.f32.xlu0 %v4538
        %v4540 = vpop.xlane.xlu0 %4539
        %v4541 = vsel %vm4537, %v4514, 0.0
        %4542 = vadd.xlane.f32.xlu0 %v4541
        %v4543 = vpop.xlane.xlu0 %4542
        %v4544 = vsel %vm4537, %v4519, 0.0
        %4545 = vadd.xlane.f32.xlu0 %v4544
        %v4546 = vpop.xlane.xlu0 %4545
        %v4547 = vsel %vm4537, %v4524, 0.0
        %4548 = vadd.xlane.f32.xlu0 %v4547
        %v4549 = vpop.xlane.xlu0 %4548
        %v4550 = vsel %vm4537, %v4529, 0.0
        %4551 = vadd.xlane.f32.xlu0 %v4550
        %v4552 = vpop.xlane.xlu0 %4551
        %v4553 = vsel %vm4537, %v4534, 0.0
        %4554 = vadd.xlane.f32.xlu0 %v4553
        %v4555 = vpop.xlane.xlu0 %4554
        %v4556 = vxor.u32 %v4540, 2147483648
        %v4557 = vxor.u32 %v4543, 2147483648
        %v4558 = vxor.u32 %v4546, 2147483648
        %v4559 = vxor.u32 %v4549, 2147483648
        %v4560 = vxor.u32 %v4552, 2147483648
        %v4561 = vxor.u32 %v4555, 2147483648
        %v4562 = vmul.f32 %v4556, 1.442695
        %v4563 = vpow.pop %v4562
        %v4564 = vmul.f32 %v4557, 1.442695
        %v4565 = vpow.pop %v4564
        %v4566 = vmul.f32 %v4558, 1.442695
        %v4567 = vpow.pop %v4566
        %v4568 = vmul.f32 %v4559, 1.442695
        %v4569 = vpow.pop %v4568
        %v4570 = vmul.f32 %v4560, 1.442695
        %v4571 = vpow.pop %v4570
        %v4572 = vmul.f32 %v4561, 1.442695
        %v4573 = vpow.pop %v4572
        %v4574 = vadd.f32 %v4563, 1.0
        %v4575 = vadd.f32 %v4565, 1.0
        %v4576 = vadd.f32 %v4567, 1.0
        %v4577 = vadd.f32 %v4569, 1.0
        %v4578 = vadd.f32 %v4571, 1.0
        %v4579 = vadd.f32 %v4573, 1.0
        %v4580 = vrcp.pop %v4574
        %v4581 = vmul.f32 1.0, %v4580
        %v4582 = vrcp.pop %v4575
        %v4583 = vmul.f32 1.0, %v4582
        %v4584 = vrcp.pop %v4576
        %v4585 = vmul.f32 1.0, %v4584
        %v4586 = vrcp.pop %v4577
        %v4587 = vmul.f32 1.0, %v4586
        %v4588 = vrcp.pop %v4578
        %v4589 = vmul.f32 1.0, %v4588
        %v4590 = vrcp.pop %v4579
        %v4591 = vmul.f32 1.0, %v4590
        %v4592 = vld [vmem:[%s9] sm:$0xff]
        %v4593 = vld [vmem:[%s9 + $0x8] sm:$0xff]
        %v4594 = vld [vmem:[%s9 + $0x10] sm:$0xff]
        %v4595 = vld [vmem:[%s9 + $0x18] sm:$0xff]
        %v4596 = vld [vmem:[%s9 + $0x20] sm:$0xff]
        %v4597 = vld [vmem:[%s9 + $0x28] sm:$0xff]
        %v4598 = vld [vmem:[%s9 + $0x30] sm:$0xff]
        %v4599 = vld [vmem:[%s9 + $0x38] sm:$0xff]
        %v4600 = vld [vmem:[%s9 + $0x40] sm:$0xff]
        %v4601 = vld [vmem:[%s9 + $0x48] sm:$0xff]
        %v4602 = vld [vmem:[%s9 + $0x50] sm:$0xff]
        %v4603 = vld [vmem:[%s9 + $0x58] sm:$0xff]
        %v4604 = vld [vmem:[%s9 + $0x60] sm:$0xff]
        %v4605 = vld [vmem:[%s9 + $0x68] sm:$0xff]
        %v4606 = vld [vmem:[%s9 + $0x70] sm:$0xff]
        %v4607 = vld [vmem:[%s9 + $0x78] sm:$0xff]
        %v4608 = vld [vmem:[%s9 + $0x80] sm:$0xff]
        %v4609 = vld [vmem:[%s9 + $0x88] sm:$0xff]
        %v4610 = vld [vmem:[%s9 + $0x90] sm:$0xff]
        %v4611 = vld [vmem:[%s9 + $0x98] sm:$0xff]
        %v4612 = vld [vmem:[%s9 + $0xa0] sm:$0xff]
        %v4613 = vld [vmem:[%s9 + $0xa8] sm:$0xff]
        %v4614 = vld [vmem:[%s9 + $0xb0] sm:$0xff]
        %v4615 = vld [vmem:[%s9 + $0xb8] sm:$0xff]
        %v4616 = vld [vmem:[%s9 + $0xc0] sm:$0xff]
        %v4617 = vld [vmem:[%s9 + $0xc8] sm:$0xff]
        %v4618 = vld [vmem:[%s9 + $0xd0] sm:$0xff]
        %v4619 = vld [vmem:[%s9 + $0xd8] sm:$0xff]
        %v4620 = vld [vmem:[%s9 + $0xe0] sm:$0xff]
        %v4621 = vld [vmem:[%s9 + $0xe8] sm:$0xff]
        %v4622 = vld [vmem:[%s9 + $0xf0] sm:$0xff]
        %v4623 = vld [vmem:[%s9 + $0xf8] sm:$0xff]
        %v4624 = vld [vmem:[%s9 + $0x100] sm:$0xff]
        %v4625 = vld [vmem:[%s9 + $0x108] sm:$0xff]
        %v4626 = vld [vmem:[%s9 + $0x110] sm:$0xff]
        %v4627 = vld [vmem:[%s9 + $0x118] sm:$0xff]
        %v4628 = vld [vmem:[%s9 + $0x120] sm:$0xff]
        %v4629 = vld [vmem:[%s9 + $0x128] sm:$0xff]
        %v4630 = vld [vmem:[%s9 + $0x130] sm:$0xff]
        %v4631 = vld [vmem:[%s9 + $0x138] sm:$0xff]
        %v4632 = vld [vmem:[%s9 + $0x140] sm:$0xff]
        %v4633 = vld [vmem:[%s9 + $0x148] sm:$0xff]
        %v4634 = vld [vmem:[%s9 + $0x150] sm:$0xff]
        %v4635 = vld [vmem:[%s9 + $0x158] sm:$0xff]
        %v4636 = vld [vmem:[%s9 + $0x160] sm:$0xff]
        %v4637 = vld [vmem:[%s9 + $0x168] sm:$0xff]
        %v4638 = vld [vmem:[%s9 + $0x170] sm:$0xff]
        %v4639 = vld [vmem:[%s9 + $0x178] sm:$0xff]
        %v4640 = vld [vmem:[%s9 + $0x180] sm:$0xff]
        %v4641 = vld [vmem:[%s9 + $0x188] sm:$0xff]
        %v4642 = vld [vmem:[%s9 + $0x190] sm:$0xff]
        %v4643 = vld [vmem:[%s9 + $0x198] sm:$0xff]
        %v4644 = vld [vmem:[%s9 + $0x1a0] sm:$0xff]
        %v4645 = vld [vmem:[%s9 + $0x1a8] sm:$0xff]
        %v4646 = vld [vmem:[%s9 + $0x1b0] sm:$0xff]
        %v4647 = vld [vmem:[%s9 + $0x1b8] sm:$0xff]
        %v4648 = vld [vmem:[%s9 + $0x1c0] sm:$0xff]
        %v4649 = vld [vmem:[%s9 + $0x1c8] sm:$0xff]
        %v4650 = vld [vmem:[%s9 + $0x1d0] sm:$0xff]
        %v4651 = vld [vmem:[%s9 + $0x1d8] sm:$0xff]
        %v4652 = vld [vmem:[%s9 + $0x1e0] sm:$0xff]
        %v4653 = vld [vmem:[%s9 + $0x1e8] sm:$0xff]
        %v4654 = vld [vmem:[%s9 + $0x1f0] sm:$0xff]
        %v4655 = vld [vmem:[%s9 + $0x1f8] sm:$0xff]
        %4656 = vmatprep.subr.mxu0 %v4593
        %4657 = vmatpush1.msra.mxu0 %v4592
        %4658 = vmatprep.subr.mxu0 %v4595
        %4659 = vmatpush1.msra.mxu0 %v4594
        %4660 = vmatprep.subr.mxu0 %v4597
        %4661 = vmatpush1.msra.mxu0 %v4596
        %4662 = vmatprep.subr.mxu0 %v4599
        %4663 = vmatpush1.msra.mxu0 %v4598
        %4664 = vmatprep.subr.mxu0 %v4601
        %4665 = vmatpush1.msra.mxu0 %v4600
        %4666 = vmatprep.subr.mxu0 %v4603
        %4667 = vmatpush1.msra.mxu0 %v4602
        %4668 = vmatprep.subr.mxu0 %v4605
        %4669 = vmatpush1.msra.mxu0 %v4604
        %4670 = vmatprep.subr.mxu0 %v4607
        %4671 = vmatpush1.msra.mxu0 %v4606
        %4672 = vmatprep.subr.mxu0 %v4609
        %4673 = vmatpush1.msra.mxu0 %v4608
        %4674 = vmatprep.subr.mxu0 %v4611
        %4675 = vmatpush1.msra.mxu0 %v4610
        %4676 = vmatprep.subr.mxu0 %v4613
        %4677 = vmatpush1.msra.mxu0 %v4612
        %4678 = vmatprep.subr.mxu0 %v4615
        %4679 = vmatpush1.msra.mxu0 %v4614
        %4680 = vmatprep.subr.mxu0 %v4617
        %4681 = vmatpush1.msra.mxu0 %v4616
        %4682 = vmatprep.subr.mxu0 %v4619
        %4683 = vmatpush1.msra.mxu0 %v4618
        %4684 = vmatprep.subr.mxu0 %v4621
        %4685 = vmatpush1.msra.mxu0 %v4620
        %4686 = vmatprep.subr.mxu0 %v4623
        %4687 = vmatpush1.msra.mxu0 %v4622
        %4688 = vmatprep.subr.mxu0 %v4625
        %4689 = vmatpush1.msra.mxu0 %v4624
        %4690 = vmatprep.subr.mxu0 %v4627
        %4691 = vmatpush1.msra.mxu0 %v4626
        %4692 = vmatprep.subr.mxu0 %v4629
        %4693 = vmatpush1.msra.mxu0 %v4628
        %4694 = vmatprep.subr.mxu0 %v4631
        %4695 = vmatpush1.msra.mxu0 %v4630
        %4696 = vmatprep.subr.mxu0 %v4633
        %4697 = vmatpush1.msra.mxu0 %v4632
        %4698 = vmatprep.subr.mxu0 %v4635
        %4699 = vmatpush1.msra.mxu0 %v4634
        %4700 = vmatprep.subr.mxu0 %v4637
        %4701 = vmatpush1.msra.mxu0 %v4636
        %4702 = vmatprep.subr.mxu0 %v4639
        %4703 = vmatpush1.msra.mxu0 %v4638
        %4704 = vmatprep.subr.mxu0 %v4641
        %4705 = vmatpush1.msra.mxu0 %v4640
        %4706 = vmatprep.subr.mxu0 %v4643
        %4707 = vmatpush1.msra.mxu0 %v4642
        %4708 = vmatprep.subr.mxu0 %v4645
        %4709 = vmatpush1.msra.mxu0 %v4644
        %4710 = vmatprep.subr.mxu0 %v4647
        %4711 = vmatpush1.msra.mxu0 %v4646
        %4712 = vmatprep.subr.mxu0 %v4649
        %4713 = vmatpush1.msra.mxu0 %v4648
        %4714 = vmatprep.subr.mxu0 %v4651
        %4715 = vmatpush1.msra.mxu0 %v4650
        %4716 = vmatprep.subr.mxu0 %v4653
        %4717 = vmatpush1.msra.mxu0 %v4652
        %4718 = vmatprep.subr.mxu0 %v4655
        %4719 = vmatpush1.msra.mxu0 %v4654
        %4720 = vmatprep.mubr.f32.mxu0 %v628
        %4721 = vmatmul.mubr.f32.gmra.mrb[0].mxu0 %v627
        %v4722 = vpop.f32.mrb[0].mxu0
        %v4723 = vadd.f32 0.0, %v4722
        %v4724 = vpop.f32.mrb[0].mxu0
        %v4725 = vadd.f32 0.0, %v4724
        %4726 = vmatprep.mubr.f32.mxu0 %v630
        %4727 = vmatmul.mubr.f32.gmra.mrb[0].mxu0 %v629
        %v4728 = vpop.f32.mrb[0].mxu0
        %v4729 = vadd.f32 0.0, %v4728
        %v4730 = vpop.f32.mrb[0].mxu0
        %v4731 = vadd.f32 0.0, %v4730
        %4732 = vmatprep.mubr.f32.mxu0 %v2443
        %4733 = vmatmul.mubr.f32.gmra.mrb[0].mxu0 %v2442
        %v4734 = vpop.f32.mrb[0].mxu0
        %v4735 = vadd.f32 0.0, %v4734
        %v4736 = vpop.f32.mrb[0].mxu0
        %v4737 = vadd.f32 0.0, %v4736
        %4738 = vmatprep.mubr.f32.mxu0 %v2445
        %4739 = vmatmul.mubr.f32.gmra.mrb[0].mxu0 %v2444
        %v4740 = vpop.f32.mrb[0].mxu0
        %v4741 = vadd.f32 0.0, %v4740
        %v4742 = vpop.f32.mrb[0].mxu0
        %v4743 = vadd.f32 0.0, %v4742
        %4744 = vmatprep.mubr.f32.mxu0 %v4239
        %4745 = vmatmul.mubr.f32.gmra.mrb[0].mxu0 %v4238
        %v4746 = vpop.f32.mrb[0].mxu0
        %v4747 = vadd.f32 0.0, %v4746
        %v4748 = vpop.f32.mrb[0].mxu0
        %v4749 = vadd.f32 0.0, %v4748
        %4750 = vmatprep.mubr.f32.mxu0 %v4241
        %4751 = vmatmul.mubr.f32.gmra.mrb[0].mxu0 %v4240
        %v4752 = vpop.f32.mrb[0].mxu0
        %v4753 = vadd.f32 0.0, %v4752
        %v4754 = vpop.f32.mrb[0].mxu0
        %v4755 = vadd.f32 0.0, %v4754
        %4756 = vdwg.mxu0
        %4763 = vrot.lane.b32.xlu0 %v4723, 64
        %v4764 = vpop.permute.xlu0 %4763
        %4765 = vrot.lane.b32.xlu0 %v4729, 64
        %v4766 = vpop.permute.xlu0 %4765
        %4767 = vrot.lane.b32.xlu0 %v4735, 64
        %v4768 = vpop.permute.xlu0 %4767
        %4769 = vrot.lane.b32.xlu0 %v4741, 64
        %v4770 = vpop.permute.xlu0 %4769
        %4771 = vrot.lane.b32.xlu0 %v4747, 64
        %v4772 = vpop.permute.xlu0 %4771
        %4773 = vrot.lane.b32.xlu0 %v4753, 64
        %v4774 = vpop.permute.xlu0 %4773
        %v4781 = vmax.f32 %v4723, %v4764
        %v4782 = vmax.f32 %v4729, %v4766
        %v4783 = vmax.f32 %v4735, %v4768
        %v4784 = vmax.f32 %v4741, %v4770
        %v4785 = vmax.f32 %v4747, %v4772
        %v4786 = vmax.f32 %v4753, %v4774
        %v4787 = vmax.f32 %v4781, %v4725
        %v4788 = vmax.f32 %v4782, %v4731
        %v4789 = vmax.f32 %v4783, %v4737
        %v4790 = vmax.f32 %v4784, %v4743
        %v4791 = vmax.f32 %v4785, %v4749
        %v4792 = vmax.f32 %v4786, %v4755
        %4799 = vrot.lane.b32.xlu0 %v4725, 64
        %v4800 = vpop.permute.xlu0 %4799
        %4801 = vrot.lane.b32.xlu0 %v4731, 64
        %v4802 = vpop.permute.xlu0 %4801
        %4803 = vrot.lane.b32.xlu0 %v4737, 64
        %v4804 = vpop.permute.xlu0 %4803
        %4805 = vrot.lane.b32.xlu0 %v4743, 64
        %v4806 = vpop.permute.xlu0 %4805
        %4807 = vrot.lane.b32.xlu0 %v4749, 64
        %v4808 = vpop.permute.xlu0 %4807
        %4809 = vrot.lane.b32.xlu0 %v4755, 64
        %v4810 = vpop.permute.xlu0 %4809
        %v4817 = vmax.f32 %v4787, %v4800
        %v4818 = vmax.f32 %v4788, %v4802
        %v4819 = vmax.f32 %v4789, %v4804
        %v4820 = vmax.f32 %v4790, %v4806
        %v4821 = vmax.f32 %v4791, %v4808
        %v4822 = vmax.f32 %v4792, %v4810
        %v4823 = vmul.f32 %v4581, %v4817
        %v4824 = vmul.f32 %v4583, %v4818
        %v4825 = vmul.f32 %v4585, %v4819
        %v4826 = vmul.f32 %v4587, %v4820
        %v4827 = vmul.f32 %v4589, %v4821
        %v4828 = vmul.f32 %v4591, %v4822
        %4829 = vst.msk [vmem:[%s432] sm:$0xff] %vm491, %v4823
        %4830 = vst.msk [vmem:[%s432 + $0x8] sm:$0xff] %vm491, %v4824
        %4831 = vst.msk [vmem:[%s432 + $0x10] sm:$0xff] %vm491, %v4825
        %4832 = vst.msk [vmem:[%s432 + $0x18] sm:$0xff] %vm491, %v4826
        %4833 = vst.msk [vmem:[%s432 + $0x20] sm:$0xff] %vm491, %v4827
        %4834 = vst.msk [vmem:[%s432 + $0x28] sm:$0xff] %vm491, %v4828
        %p4835 = scmp.lt.s32.totalorder %s24, 1
        %s4836 = scalar_select %p4835, %s24, 1
        %s4837 = smul.addr %s4836, 6
        %s4838 = smul.addr %s4837, 8
        %s4839 = scalar_lea.vmem %s10, %s4838
        // Predicated region
        $region81: #{mlfnet_forward.2} parent=59 // pred_check
          %p4840 = pneg %p257
        $region82: #{mlfnet_forward.2} parent=59 // pred_check_branch
          %4842 = sbr.rel (%p4840) target = $region84
        $region83: #{mlfnet_forward.2} parent=59 // pred_region
          _
        $region84: #{mlfnet_forward.2} parent=59 // pred_fallthru
          _
      $region60: #{mlfnet_forward.2} parent=5 // pred_fallthru
        _
      %p4843 = scmp.le.s32.totalorder 2, %s19
      // Predicated region
      $region85: #{mlfnet_forward.2} parent=5 // pred_check
        %p4844 = pneg %p4843
      $region86: #{mlfnet_forward.2} parent=5 // pred_check_branch
        %4846 = sbr.rel (%p4844) target = $region88
      $region87: #{mlfnet_forward.2} parent=5 // pred_region
        %s4847 = ssub.s32 %s19, 2
        // Predicated region
        $region89: #{mlfnet_forward.2} parent=87 // pred_check
          %p4848 = pneg %p263
        $region90: #{mlfnet_forward.2} parent=87 // pred_check_branch
          %4850 = sbr.rel (%p4848) target = $region92
        $region91: #{mlfnet_forward.2} parent=87 // pred_region
          %p4851 = scmp.lt.s32.totalorder %s25, 1
          %s4852 = scalar_select %p4851, %s25, 1
          %s4853 = smul.addr %s4852, 6
          %s4854 = smul.addr %s4853, 8
          %s4855 = scalar_lea.vmem %s10, %s4854
        $region92: #{mlfnet_forward.2} parent=87 // pred_fallthru
          _
      $region88: #{mlfnet_forward.2} parent=5 // pred_fallthru
        _
    $region6: #{mlfnet_forward.2} parent=1 // loop_footer
      %s23 = sadd.s32 1, %s19
    $region7: #{mlfnet_forward.2} parent=1 // loop_footer_branch
      %18 = sbr.rel target = $region3
    $region8: #{mlfnet_forward.2} parent=1 // loop_exit
      _
    %4856 = vsyncpa [#allocation3], 1
    %s4857 = scalar_lea.sflag [#allocation3], 1
    %4858 = vsyncpa %s4857, 1
    %4859 = vsyncpa [#allocation5], 1
    %4860 = vsyncpa [#allocation8], 1

// kernel: mlfnet_forward.3
$region0: #{mlfnet_forward.3}
  #allocation0 [shape = 'u32[]', space=smem, size = 0x4, offset = 0x4, fixed_abs, tag = 'smem constant byte address 0x4 - core index']
  #allocation1 [shape = 'u32[144,128]{1,0:T(1,128)}', space=vmem, size = 0x12000, scoped, tag = 'internal scratch']
  #allocation2 [shape = 'f32[2,1024]{1,0:T(2,128)}', space=vmem, size = 0x2000, scoped, tag = 'scratch operand']
  %s0 = inlined_call_operand.vmem [shape: bf16[2,3072], index: 0, kind: input, shape index: {}]
  %s1 = inlined_call_operand.hbm [shape: bf16[3072,1024], index: 1, kind: input, shape index: {}]
  %s2 = inlined_call_operand.hbm [shape: f32[1,1024], index: 2, kind: input, shape index: {}]
  %s3 = inlined_call_operand.vmem [shape: f32[1024,5], index: 3, kind: input, shape index: {}]
  %s4 = inlined_call_operand.hbm [shape: f32[1,5], index: 4, kind: input, shape index: {}]
  %s5 = inlined_call_operand.hbm [shape: f32[2,5], index: 5, kind: output, shape index: {}]
  %s6 = sld [smem:[#allocation0]]
  $region73: #{mlfnet_forward.3} parent=0
    _
  %s8 = ssub.s32 1, %s6
  %s9 = scalar_select 0, %s8, %s6
  $region1: #{mlfnet_forward.3} parent=0
    #allocation3 [shape = 'u8[3145728]{0}', space=vmem, size = 0x300000, scoped, tag = 'input window, operand 1']
    #allocation4 [shape = 's32[2]{0}', space=sflag, size = 0x8, scoped, tag = 'scoped memory for mlfnet_forward.3']
    #allocation5 [shape = 's32[2]{0}', space=sflag, size = 0x8, scoped, tag = 'scoped memory for mlfnet_forward.3']
    #allocation6 [shape = 'u8[4096]{0}', space=vmem, size = 0x1000, scoped, tag = 'input window, operand 2, single buffered']
    #allocation7 [shape = 's32[1]{0}', space=sflag, size = 0x4, scoped, tag = 'scoped memory for mlfnet_forward.3']
    #allocation8 [shape = 'u8[512]{0}', space=vmem, size = 0x400, scoped, tag = 'input window, operand 4, single buffered']
    #allocation9 [shape = 'u8[1024]{0}', space=vmem, size = 0x400, scoped, tag = 'output window, operand 0, single buffered']
    %10 = vsyncpa [#allocation4], 0
    %s11 = scalar_lea.sflag [#allocation4], 1
    %12 = vsyncpa %s11, 0
    %13 = vsyncpa [#allocation7], 0
    %14 = vsyncpa [#allocation5], 0
    loop: start=0, step=1, limit=6
    $region2: #{mlfnet_forward.3} parent=1 // loop_pre_header
      _
    $region3: #{mlfnet_forward.3} parent=1 // loop_header
      %s16 = sphi 0, %s20
      %p17 = scmp.ge.s32.totalorder %s16, 6
      %s26 = sphi 0, %s28
      %s29 = sphi 0, %s26
      %s30 = sphi 0, %s29
      %s46 = sphi 0, %s30
      %s52 = sphi 0, %s54
      %s55 = sphi 0, %s52
      %s56 = sphi 0, %s55
      %s72 = sphi 0, %s56
      %s76 = sphi 0, %s76
      %s78 = sphi 0, %s76
      %s79 = sphi 0, %s78
      %s93 = sphi 0, %s79
      %s97 = sphi 0, %s97
      %s99 = sphi 0, %s97
      %s100 = sphi 0, %s99
      %s114 = sphi 0, %s100
      %s118 = sphi 0, %s118
      %s120 = sphi 0, %s118
      %s121 = sphi 0, %s120
      %s135 = sphi 0, %s121
      %s139 = sphi 0, %s139
      %s141 = sphi 0, %s139
      %s142 = sphi 0, %s141
      %s156 = sphi 0, %s142
    $region4: #{mlfnet_forward.3} parent=1 // loop_header_branch
      %19 = sbr.rel (%p17) target = $region8
    $region5: #{mlfnet_forward.3} parent=1 // loop_body
      %s21 = ssub.s32 %s16, 1
      %s22 = ssub.s32 %s16, 2
      %s23 = sadd.s32 %s16, 1
      %s24 = ssub.s32 %s16, %s23
      %p25 = scmp.eq.s32.totalorder %s24, 0
      %s27 = sadd.s32 %s26, 1
      %s28 = scalar_select %p25, %s26, %s27
      %p31 = pneg %p25
      %p32 = scmp.eq.s32.totalorder %s16, 3
      %p33 = por %p31, %p32
      %p34 = scmp.ne.s32.totalorder %s26, %s29
      %p35 = scmp.eq.s32.totalorder %s16, 0
      %p36 = por %p34, %p35
      %p37 = scmp.ne.s32.totalorder %s26, %s29
      %p38 = scmp.eq.s32.totalorder %s21, 3
      %p39 = por %p37, %p38
      %p40 = scmp.ne.s32.totalorder %s29, %s30
      %p41 = scmp.eq.s32.totalorder %s21, 0
      %p42 = por %p40, %p41
      %p43 = scmp.ne.s32.totalorder %s29, %s30
      %p44 = scmp.eq.s32.totalorder %s22, 3
      %p45 = por %p43, %p44
      %p47 = scmp.ne.s32.totalorder %s30, %s46
      %p48 = scmp.eq.s32.totalorder %s22, 0
      %p49 = por %p47, %p48
      %s50 = ssub.s32 %s16, %s23
      %p51 = scmp.eq.s32.totalorder %s50, 0
      %s53 = sadd.s32 %s52, 1
      %s54 = scalar_select %p51, %s52, %s53
      %p57 = pneg %p51
      %p58 = scmp.eq.s32.totalorder %s16, 3
      %p59 = por %p57, %p58
      %p60 = scmp.ne.s32.totalorder %s52, %s55
      %p61 = scmp.eq.s32.totalorder %s16, 0
      %p62 = por %p60, %p61
      %p63 = scmp.ne.s32.totalorder %s52, %s55
      %p64 = scmp.eq.s32.totalorder %s21, 3
      %p65 = por %p63, %p64
      %p66 = scmp.ne.s32.totalorder %s55, %s56
      %p67 = scmp.eq.s32.totalorder %s21, 0
      %p68 = por %p66, %p67
      %p69 = scmp.ne.s32.totalorder %s55, %s56
      %p70 = scmp.eq.s32.totalorder %s22, 3
      %p71 = por %p69, %p70
      %p73 = scmp.ne.s32.totalorder %s56, %s72
      %p74 = scmp.eq.s32.totalorder %s22, 0
      %p75 = por %p73, %p74
      %s77 = sadd.s32 %s76, 1
      %p80 = scmp.eq.s32.totalorder %s16, 3
      %p81 = scmp.ne.s32.totalorder %s76, %s78
      %p82 = scmp.eq.s32.totalorder %s16, 0
      %p83 = por %p81, %p82
      %p84 = scmp.ne.s32.totalorder %s76, %s78
      %p85 = scmp.eq.s32.totalorder %s21, 3
      %p86 = por %p84, %p85
      %p87 = scmp.ne.s32.totalorder %s78, %s79
      %p88 = scmp.eq.s32.totalorder %s21, 0
      %p89 = por %p87, %p88
      %p90 = scmp.ne.s32.totalorder %s78, %s79
      %p91 = scmp.eq.s32.totalorder %s22, 3
      %p92 = por %p90, %p91
      %p94 = scmp.ne.s32.totalorder %s79, %s93
      %p95 = scmp.eq.s32.totalorder %s22, 0
      %p96 = por %p94, %p95
      %s98 = sadd.s32 %s97, 1
      %p101 = scmp.eq.s32.totalorder %s16, 3
      %p102 = scmp.ne.s32.totalorder %s97, %s99
      %p103 = scmp.eq.s32.totalorder %s16, 0
      %p104 = por %p102, %p103
      %p105 = scmp.ne.s32.totalorder %s97, %s99
      %p106 = scmp.eq.s32.totalorder %s21, 3
      %p107 = por %p105, %p106
      %p108 = scmp.ne.s32.totalorder %s99, %s100
      %p109 = scmp.eq.s32.totalorder %s21, 0
      %p110 = por %p108, %p109
      %p111 = scmp.ne.s32.totalorder %s99, %s100
      %p112 = scmp.eq.s32.totalorder %s22, 3
      %p113 = por %p111, %p112
      %p115 = scmp.ne.s32.totalorder %s100, %s114
      %p116 = scmp.eq.s32.totalorder %s22, 0
      %p117 = por %p115, %p116
      %s119 = sadd.s32 %s118, 1
      %p122 = scmp.eq.s32.totalorder %s16, 3
      %p123 = scmp.ne.s32.totalorder %s118, %s120
      %p124 = scmp.eq.s32.totalorder %s16, 0
      %p125 = por %p123, %p124
      %p126 = scmp.ne.s32.totalorder %s118, %s120
      %p127 = scmp.eq.s32.totalorder %s21, 3
      %p128 = por %p126, %p127
      %p129 = scmp.ne.s32.totalorder %s120, %s121
      %p130 = scmp.eq.s32.totalorder %s21, 0
      %p131 = por %p129, %p130
      %p132 = scmp.ne.s32.totalorder %s120, %s121
      %p133 = scmp.eq.s32.totalorder %s22, 3
      %p134 = por %p132, %p133
      %p136 = scmp.ne.s32.totalorder %s121, %s135
      %p137 = scmp.eq.s32.totalorder %s22, 0
      %p138 = por %p136, %p137
      %s140 = sadd.s32 %s139, 1
      %p143 = scmp.eq.s32.totalorder %s16, 3
      %p144 = scmp.ne.s32.totalorder %s139, %s141
      %p145 = scmp.eq.s32.totalorder %s16, 0
      %p146 = por %p144, %p145
      %p147 = scmp.ne.s32.totalorder %s139, %s141
      %p148 = scmp.eq.s32.totalorder %s21, 3
      %p149 = por %p147, %p148
      %p150 = scmp.ne.s32.totalorder %s141, %s142
      %p151 = scmp.eq.s32.totalorder %s21, 0
      %p152 = por %p150, %p151
      %p153 = scmp.ne.s32.totalorder %s141, %s142
      %p154 = scmp.eq.s32.totalorder %s22, 3
      %p155 = por %p153, %p154
      %p157 = scmp.ne.s32.totalorder %s142, %s156
      %p158 = scmp.eq.s32.totalorder %s22, 0
      %p159 = por %p157, %p158
      %p160 = scmp.le.s32.totalorder 1, %s16
      %p161 = scmp.lt.s32.totalorder %s16, 5
      %p162 = pnand %p160, %p161
      %p163 = pneg %p162
      // Predicated region
      $region9: #{mlfnet_forward.3} parent=5 // pred_check
        _
      $region10: #{mlfnet_forward.3} parent=5 // pred_check_branch
        %165 = sbr.rel (%p162) target = $region12
      $region11: #{mlfnet_forward.3} parent=5 // pred_region
        %s166 = ssub.s32 %s16, 1
        // Predicated region
        $region13: #{mlfnet_forward.3} parent=11 // pred_check
          %p167 = pneg %p89
        $region14: #{mlfnet_forward.3} parent=11 // pred_check_branch
          %169 = sbr.rel (%p167) target = $region16
        $region15: #{mlfnet_forward.3} parent=11 // pred_region
          %s171 = ssub.s32 128, 128
          %172 = vsyncadd [#allocation7], %s171
          %s174 = sshll.u32 [#allocation6], 4
          %s175 = int_to_ptr.vmem [resolvable:$true] %s174
          %177 = dma.hbm_to_vmem [thread:$0]  %s2, 128, %s175, [#allocation7]
        $region16: #{mlfnet_forward.3} parent=11 // pred_fallthru
          _
        // Predicated region
        $region17: #{mlfnet_forward.3} parent=11 // pred_check
          %p178 = pneg %p110
        $region18: #{mlfnet_forward.3} parent=11 // pred_check_branch
          %180 = sbr.rel (%p178) target = $region20
        $region19: #{mlfnet_forward.3} parent=11 // pred_region
          _
        $region20: #{mlfnet_forward.3} parent=11 // pred_fallthru
          _
        // Predicated region
        $region21: #{mlfnet_forward.3} parent=11 // pred_check
          %p181 = pneg %p131
        $region22: #{mlfnet_forward.3} parent=11 // pred_check_branch
          %183 = sbr.rel (%p181) target = $region24
        $region23: #{mlfnet_forward.3} parent=11 // pred_region
          %s185 = ssub.s32 16, 16
          %186 = vsyncadd [#allocation7], %s185
          %s188 = sshll.u32 [#allocation8], 4
          %s189 = int_to_ptr.vmem [resolvable:$true] %s188
          %191 = dma.hbm_to_vmem [thread:$0]  %s4, 16, %s189, [#allocation7]
        $region24: #{mlfnet_forward.3} parent=11 // pred_fallthru
          _
      $region12: #{mlfnet_forward.3} parent=5 // pred_fallthru
        _
      %p192 = scmp.lt.s32.totalorder %s16, 4
      // Predicated region
      $region25: #{mlfnet_forward.3} parent=5 // pred_check
        %p193 = pneg %p192
      $region26: #{mlfnet_forward.3} parent=5 // pred_check_branch
        %195 = sbr.rel (%p193) target = $region28
      $region27: #{mlfnet_forward.3} parent=5 // pred_region
        // Predicated region
        $region29: #{mlfnet_forward.3} parent=27 // pred_check
          %p196 = pneg %p36
        $region30: #{mlfnet_forward.3} parent=27 // pred_check_branch
          %198 = sbr.rel (%p196) target = $region32
        $region31: #{mlfnet_forward.3} parent=27 // pred_region
          %s199 = smul.u32 6, %s16
          %p200 = scmp.lt.s32.totalorder %s199, 23
          %s201 = scalar_select %p200, %s199, 23
          %s202 = scalar_lea.vmem %s0, %s201
          %s203 = smul.u32 6, %s16
        $region32: #{mlfnet_forward.3} parent=27 // pred_fallthru
          _
        // Predicated region
        $region33: #{mlfnet_forward.3} parent=27 // pred_check
          %p204 = pneg %p62
        $region34: #{mlfnet_forward.3} parent=27 // pred_check_branch
          %206 = sbr.rel (%p204) target = $region36
        $region35: #{mlfnet_forward.3} parent=27 // pred_region
          %s207 = sand.u32 %s52, 1
          %s208 = scalar_lea.sflag [#allocation4], %s207
          %s209 = sand.u32 %s52, 1
          %s210 = smul.addr %s209, 3072
          %s211 = scalar_lea.vmem [#allocation3], %s210
          %s212 = smul.u32 96, %s16
          %s214 = ssub.s32 49152, 49152
          %215 = vsyncadd %s208, %s214
          %s216 = smul.addr %s212, 8
          %s217 = smul.addr %s216, 64
          %s218 = scalar_lea.hbm %s1, %s217
          %s219 = sshll.u32 %s211, 4
          %s220 = int_to_ptr.vmem [resolvable:$true] %s219
          %225 = dma.hbm_to_vmem [thread:$0]  %s218, 49152, %s220, %s208, 512, 512, 32
        $region36: #{mlfnet_forward.3} parent=27 // pred_fallthru
          _
      $region28: #{mlfnet_forward.3} parent=5 // pred_fallthru
        _
      %p226 = scmp.le.s32.totalorder 1, %s16
      %p227 = scmp.lt.s32.totalorder %s16, 5
      %p228 = pnand %p226, %p227
      %p229 = pneg %p228
      // Predicated region
      $region37: #{mlfnet_forward.3} parent=5 // pred_check
        _
      $region38: #{mlfnet_forward.3} parent=5 // pred_check_branch
        %231 = sbr.rel (%p228) target = $region40
      $region39: #{mlfnet_forward.3} parent=5 // pred_region
        %s232 = ssub.s32 %s16, 1
        %s233 = sand.u32 %s55, 1
        %s234 = scalar_lea.sflag [#allocation4], %s233
        %s235 = sand.u32 %s55, 1
        %s236 = smul.addr %s235, 3072
        %s237 = scalar_lea.vmem [#allocation3], %s236
        // Predicated region
        $region41: #{mlfnet_forward.3} parent=39 // pred_check
          %p238 = pneg %p68
        $region42: #{mlfnet_forward.3} parent=39 // pred_check_branch
          %240 = sbr.rel (%p238) target = $region44
        $region43: #{mlfnet_forward.3} parent=39 // pred_region
          %241 = dma.done %s234, 49152
        $region44: #{mlfnet_forward.3} parent=39 // pred_fallthru
          _
        // Predicated region
        $region45: #{mlfnet_forward.3} parent=39 // pred_check
          %p242 = pneg %p89
        $region46: #{mlfnet_forward.3} parent=39 // pred_check_branch
          %244 = sbr.rel (%p242) target = $region48
        $region47: #{mlfnet_forward.3} parent=39 // pred_region
          %245 = dma.done [#allocation7], 128
        $region48: #{mlfnet_forward.3} parent=39 // pred_fallthru
          _
        // Predicated region
        $region49: #{mlfnet_forward.3} parent=39 // pred_check
          %p246 = pneg %p131
        $region50: #{mlfnet_forward.3} parent=39 // pred_check_branch
          %248 = sbr.rel (%p246) target = $region52
        $region51: #{mlfnet_forward.3} parent=39 // pred_region
          %249 = dma.done [#allocation7], 16
        $region52: #{mlfnet_forward.3} parent=39 // pred_fallthru
          _
        %s250 = smul.u32 6, %s21
        %p251 = scmp.lt.s32.totalorder %s250, 23
        %s252 = scalar_select %p251, %s250, 23
        %s253 = scalar_lea.vmem %s0, %s252
        %p254 = pneg %p42
        %p255 = pneg %p39
        %s256 = sand.u32 %s55, 1
        %s257 = scalar_lea.sflag [#allocation4], %s256
        %s258 = sand.u32 %s55, 1
        %s259 = smul.addr %s258, 3072
        %s260 = scalar_lea.vmem [#allocation3], %s259
        %p261 = pneg %p68
        %p262 = pneg %p65
        %p263 = pneg %p89
        %p264 = pneg %p86
        %p265 = pneg %p110
        %p266 = pneg %p107
        %p267 = pneg %p131
        %p268 = pneg %p128
        %p269 = pneg %p152
        %p270 = pneg %p149
        %s271 = smul.u32 6, %s21
        %p272 = scmp.lt.s32.totalorder %s271, 23
        %s273 = scalar_select %p272, %s271, 23
        %s274 = scalar_lea.vmem %s0, %s273
        %s275 = smul.u32 6, %s21
        %s276 = smul.u32 96, %s21
        %p277 = scmp.eq.s32.totalorder %s21, 0
        // Predicated region
        $region53: #{mlfnet_forward.3} parent=39 // pred_check
          %p278 = pneg %p277
        $region54: #{mlfnet_forward.3} parent=39 // pred_check_branch
          %280 = sbr.rel (%p278) target = $region56
        $region55: #{mlfnet_forward.3} parent=39 // pred_region
          %281 = vst [vmem:[#allocation2] sm:$0xff] 0.0
          %282 = vst [vmem:[#allocation2 + $0x8] sm:$0xff] 0.0
        $region56: #{mlfnet_forward.3} parent=39 // pred_fallthru
          _
        %v283 = vld [vmem:[#allocation2] sm:$0xff]
        %v284 = vld [vmem:[#allocation2 + $0x8] sm:$0xff]
        %v285 = vld [vmem:[%s274] sm:$0x3f]
        %v286 = vld [vmem:[%s237] sm:$0xff]
        %v287 = vld [vmem:[%s237 + $0x8] sm:$0xff]
        %v288 = vld [vmem:[%s237 + $0x10] sm:$0xff]
        %v289 = vld [vmem:[%s237 + $0x18] sm:$0xff]
        %v290 = vld [vmem:[%s237 + $0x20] sm:$0xff]
        %v291 = vld [vmem:[%s237 + $0x28] sm:$0xff]
        %v292 = vld [vmem:[%s237 + $0x30] sm:$0xff]
        %v293 = vld [vmem:[%s237 + $0x38] sm:$0xff]
        %v294 = vld [vmem:[%s237 + $0x40] sm:$0xff]
        %v295 = vld [vmem:[%s237 + $0x48] sm:$0xff]
        %v296 = vld [vmem:[%s237 + $0x50] sm:$0xff]
        %v297 = vld [vmem:[%s237 + $0x58] sm:$0xff]
        %v298 = vld [vmem:[%s237 + $0x60] sm:$0xff]
        %v299 = vld [vmem:[%s237 + $0x68] sm:$0xff]
        %v300 = vld [vmem:[%s237 + $0x70] sm:$0xff]
        %v301 = vld [vmem:[%s237 + $0x78] sm:$0xff]
        %v302 = vld [vmem:[%s237 + $0x80] sm:$0xff]
        %v303 = vld [vmem:[%s237 + $0x88] sm:$0xff]
        %v304 = vld [vmem:[%s237 + $0x90] sm:$0xff]
        %v305 = vld [vmem:[%s237 + $0x98] sm:$0xff]
        %v306 = vld [vmem:[%s237 + $0xa0] sm:$0xff]
        %v307 = vld [vmem:[%s237 + $0xa8] sm:$0xff]
        %v308 = vld [vmem:[%s237 + $0xb0] sm:$0xff]
        %v309 = vld [vmem:[%s237 + $0xb8] sm:$0xff]
        %v310 = vld [vmem:[%s237 + $0xc0] sm:$0xff]
        %v311 = vld [vmem:[%s237 + $0xc8] sm:$0xff]
        %v312 = vld [vmem:[%s237 + $0xd0] sm:$0xff]
        %v313 = vld [vmem:[%s237 + $0xd8] sm:$0xff]
        %v314 = vld [vmem:[%s237 + $0xe0] sm:$0xff]
        %v315 = vld [vmem:[%s237 + $0xe8] sm:$0xff]
        %v316 = vld [vmem:[%s237 + $0xf0] sm:$0xff]
        %v317 = vld [vmem:[%s237 + $0xf8] sm:$0xff]
        %v318 = vld [vmem:[%s237 + $0x100] sm:$0xff]
        %v319 = vld [vmem:[%s237 + $0x108] sm:$0xff]
        %v320 = vld [vmem:[%s237 + $0x110] sm:$0xff]
        %v321 = vld [vmem:[%s237 + $0x118] sm:$0xff]
        %v322 = vld [vmem:[%s237 + $0x120] sm:$0xff]
        %v323 = vld [vmem:[%s237 + $0x128] sm:$0xff]
        %v324 = vld [vmem:[%s237 + $0x130] sm:$0xff]
        %v325 = vld [vmem:[%s237 + $0x138] sm:$0xff]
        %v326 = vld [vmem:[%s237 + $0x140] sm:$0xff]
        %v327 = vld [vmem:[%s237 + $0x148] sm:$0xff]
        %v328 = vld [vmem:[%s237 + $0x150] sm:$0xff]
        %v329 = vld [vmem:[%s237 + $0x158] sm:$0xff]
        %v330 = vld [vmem:[%s237 + $0x160] sm:$0xff]
        %v331 = vld [vmem:[%s237 + $0x168] sm:$0xff]
        %v332 = vld [vmem:[%s237 + $0x170] sm:$0xff]
        %v333 = vld [vmem:[%s237 + $0x178] sm:$0xff]
        %v334 = vld [vmem:[%s237 + $0x180] sm:$0xff]
        %v335 = vld [vmem:[%s237 + $0x188] sm:$0xff]
        %v336 = vld [vmem:[%s237 + $0x190] sm:$0xff]
        %v337 = vld [vmem:[%s237 + $0x198] sm:$0xff]
        %v338 = vld [vmem:[%s237 + $0x1a0] sm:$0xff]
        %v339 = vld [vmem:[%s237 + $0x1a8] sm:$0xff]
        %v340 = vld [vmem:[%s237 + $0x1b0] sm:$0xff]
        %v341 = vld [vmem:[%s237 + $0x1b8] sm:$0xff]
        %v342 = vld [vmem:[%s237 + $0x1c0] sm:$0xff]
        %v343 = vld [vmem:[%s237 + $0x1c8] sm:$0xff]
        %v344 = vld [vmem:[%s237 + $0x1d0] sm:$0xff]
        %v345 = vld [vmem:[%s237 + $0x1d8] sm:$0xff]
        %v346 = vld [vmem:[%s237 + $0x1e0] sm:$0xff]
        %v347 = vld [vmem:[%s237 + $0x1e8] sm:$0xff]
        %v348 = vld [vmem:[%s237 + $0x1f0] sm:$0xff]
        %v349 = vld [vmem:[%s237 + $0x1f8] sm:$0xff]
        %v350 = vld [vmem:[%s237 + $0x200] sm:$0xff]
        %v351 = vld [vmem:[%s237 + $0x208] sm:$0xff]
        %v352 = vld [vmem:[%s237 + $0x210] sm:$0xff]
        %v353 = vld [vmem:[%s237 + $0x218] sm:$0xff]
        %v354 = vld [vmem:[%s237 + $0x220] sm:$0xff]
        %v355 = vld [vmem:[%s237 + $0x228] sm:$0xff]
        %v356 = vld [vmem:[%s237 + $0x230] sm:$0xff]
        %v357 = vld [vmem:[%s237 + $0x238] sm:$0xff]
        %v358 = vld [vmem:[%s237 + $0x240] sm:$0xff]
        %v359 = vld [vmem:[%s237 + $0x248] sm:$0xff]
        %v360 = vld [vmem:[%s237 + $0x250] sm:$0xff]
        %v361 = vld [vmem:[%s237 + $0x258] sm:$0xff]
        %v362 = vld [vmem:[%s237 + $0x260] sm:$0xff]
        %v363 = vld [vmem:[%s237 + $0x268] sm:$0xff]
        %v364 = vld [vmem:[%s237 + $0x270] sm:$0xff]
        %v365 = vld [vmem:[%s237 + $0x278] sm:$0xff]
        %v366 = vld [vmem:[%s237 + $0x280] sm:$0xff]
        %v367 = vld [vmem:[%s237 + $0x288] sm:$0xff]
        %v368 = vld [vmem:[%s237 + $0x290] sm:$0xff]
        %v369 = vld [vmem:[%s237 + $0x298] sm:$0xff]
        %v370 = vld [vmem:[%s237 + $0x2a0] sm:$0xff]
        %v371 = vld [vmem:[%s237 + $0x2a8] sm:$0xff]
        %v372 = vld [vmem:[%s237 + $0x2b0] sm:$0xff]
        %v373 = vld [vmem:[%s237 + $0x2b8] sm:$0xff]
        %v374 = vld [vmem:[%s237 + $0x2c0] sm:$0xff]
        %v375 = vld [vmem:[%s237 + $0x2c8] sm:$0xff]
        %v376 = vld [vmem:[%s237 + $0x2d0] sm:$0xff]
        %v377 = vld [vmem:[%s237 + $0x2d8] sm:$0xff]
        %v378 = vld [vmem:[%s237 + $0x2e0] sm:$0xff]
        %v379 = vld [vmem:[%s237 + $0x2e8] sm:$0xff]
        %v380 = vld [vmem:[%s237 + $0x2f0] sm:$0xff]
        %v381 = vld [vmem:[%s237 + $0x2f8] sm:$0xff]
        %v382 = vld [vmem:[%s237 + $0x300] sm:$0xff]
        %v383 = vld [vmem:[%s237 + $0x308] sm:$0xff]
        %v384 = vld [vmem:[%s237 + $0x310] sm:$0xff]
        %v385 = vld [vmem:[%s237 + $0x318] sm:$0xff]
        %v386 = vld [vmem:[%s237 + $0x320] sm:$0xff]
        %v387 = vld [vmem:[%s237 + $0x328] sm:$0xff]
        %v388 = vld [vmem:[%s237 + $0x330] sm:$0xff]
        %v389 = vld [vmem:[%s237 + $0x338] sm:$0xff]
        %v390 = vld [vmem:[%s237 + $0x340] sm:$0xff]
        %v391 = vld [vmem:[%s237 + $0x348] sm:$0xff]
        %v392 = vld [vmem:[%s237 + $0x350] sm:$0xff]
        %v393 = vld [vmem:[%s237 + $0x358] sm:$0xff]
        %v394 = vld [vmem:[%s237 + $0x360] sm:$0xff]
        %v395 = vld [vmem:[%s237 + $0x368] sm:$0xff]
        %v396 = vld [vmem:[%s237 + $0x370] sm:$0xff]
        %v397 = vld [vmem:[%s237 + $0x378] sm:$0xff]
        %v398 = vld [vmem:[%s237 + $0x380] sm:$0xff]
        %v399 = vld [vmem:[%s237 + $0x388] sm:$0xff]
        %v400 = vld [vmem:[%s237 + $0x390] sm:$0xff]
        %v401 = vld [vmem:[%s237 + $0x398] sm:$0xff]
        %v402 = vld [vmem:[%s237 + $0x3a0] sm:$0xff]
        %v403 = vld [vmem:[%s237 + $0x3a8] sm:$0xff]
        %v404 = vld [vmem:[%s237 + $0x3b0] sm:$0xff]
        %v405 = vld [vmem:[%s237 + $0x3b8] sm:$0xff]
        %v406 = vld [vmem:[%s237 + $0x3c0] sm:$0xff]
        %v407 = vld [vmem:[%s237 + $0x3c8] sm:$0xff]
        %v408 = vld [vmem:[%s237 + $0x3d0] sm:$0xff]
        %v409 = vld [vmem:[%s237 + $0x3d8] sm:$0xff]
        %v410 = vld [vmem:[%s237 + $0x3e0] sm:$0xff]
        %v411 = vld [vmem:[%s237 + $0x3e8] sm:$0xff]
        %v412 = vld [vmem:[%s237 + $0x3f0] sm:$0xff]
        %v413 = vld [vmem:[%s237 + $0x3f8] sm:$0xff]
        %v414 = vld [vmem:[%s237 + $0x400] sm:$0xff]
        %v415 = vld [vmem:[%s237 + $0x408] sm:$0xff]
        %v416 = vld [vmem:[%s237 + $0x410] sm:$0xff]
        %v417 = vld [vmem:[%s237 + $0x418] sm:$0xff]
        %v418 = vld [vmem:[%s237 + $0x420] sm:$0xff]
        %v419 = vld [vmem:[%s237 + $0x428] sm:$0xff]
        %v420 = vld [vmem:[%s237 + $0x430] sm:$0xff]
        %v421 = vld [vmem:[%s237 + $0x438] sm:$0xff]
        %v422 = vld [vmem:[%s237 + $0x440] sm:$0xff]
        %v423 = vld [vmem:[%s237 + $0x448] sm:$0xff]
        %v424 = vld [vmem:[%s237 + $0x450] sm:$0xff]
        %v425 = vld [vmem:[%s237 + $0x458] sm:$0xff]
        %v426 = vld [vmem:[%s237 + $0x460] sm:$0xff]
        %v427 = vld [vmem:[%s237 + $0x468] sm:$0xff]
        %v428 = vld [vmem:[%s237 + $0x470] sm:$0xff]
        %v429 = vld [vmem:[%s237 + $0x478] sm:$0xff]
        %v430 = vld [vmem:[%s237 + $0x480] sm:$0xff]
        %v431 = vld [vmem:[%s237 + $0x488] sm:$0xff]
        %v432 = vld [vmem:[%s237 + $0x490] sm:$0xff]
        %v433 = vld [vmem:[%s237 + $0x498] sm:$0xff]
        %v434 = vld [vmem:[%s237 + $0x4a0] sm:$0xff]
        %v435 = vld [vmem:[%s237 + $0x4a8] sm:$0xff]
        %v436 = vld [vmem:[%s237 + $0x4b0] sm:$0xff]
        %v437 = vld [vmem:[%s237 + $0x4b8] sm:$0xff]
        %v438 = vld [vmem:[%s237 + $0x4c0] sm:$0xff]
        %v439 = vld [vmem:[%s237 + $0x4c8] sm:$0xff]
        %v440 = vld [vmem:[%s237 + $0x4d0] sm:$0xff]
        %v441 = vld [vmem:[%s237 + $0x4d8] sm:$0xff]
        %v442 = vld [vmem:[%s237 + $0x4e0] sm:$0xff]
        %v443 = vld [vmem:[%s237 + $0x4e8] sm:$0xff]
        %v444 = vld [vmem:[%s237 + $0x4f0] sm:$0xff]
        %v445 = vld [vmem:[%s237 + $0x4f8] sm:$0xff]
        %v446 = vld [vmem:[%s237 + $0x500] sm:$0xff]
        %v447 = vld [vmem:[%s237 + $0x508] sm:$0xff]
        %v448 = vld [vmem:[%s237 + $0x510] sm:$0xff]
        %v449 = vld [vmem:[%s237 + $0x518] sm:$0xff]
        %v450 = vld [vmem:[%s237 + $0x520] sm:$0xff]
        %v451 = vld [vmem:[%s237 + $0x528] sm:$0xff]
        %v452 = vld [vmem:[%s237 + $0x530] sm:$0xff]
        %v453 = vld [vmem:[%s237 + $0x538] sm:$0xff]
        %v454 = vld [vmem:[%s237 + $0x540] sm:$0xff]
        %v455 = vld [vmem:[%s237 + $0x548] sm:$0xff]
        %v456 = vld [vmem:[%s237 + $0x550] sm:$0xff]
        %v457 = vld [vmem:[%s237 + $0x558] sm:$0xff]
        %v458 = vld [vmem:[%s237 + $0x560] sm:$0xff]
        %v459 = vld [vmem:[%s237 + $0x568] sm:$0xff]
        %v460 = vld [vmem:[%s237 + $0x570] sm:$0xff]
        %v461 = vld [vmem:[%s237 + $0x578] sm:$0xff]
        %v462 = vld [vmem:[%s237 + $0x580] sm:$0xff]
        %v463 = vld [vmem:[%s237 + $0x588] sm:$0xff]
        %v464 = vld [vmem:[%s237 + $0x590] sm:$0xff]
        %v465 = vld [vmem:[%s237 + $0x598] sm:$0xff]
        %v466 = vld [vmem:[%s237 + $0x5a0] sm:$0xff]
        %v467 = vld [vmem:[%s237 + $0x5a8] sm:$0xff]
        %v468 = vld [vmem:[%s237 + $0x5b0] sm:$0xff]
        %v469 = vld [vmem:[%s237 + $0x5b8] sm:$0xff]
        %v470 = vld [vmem:[%s237 + $0x5c0] sm:$0xff]
        %v471 = vld [vmem:[%s237 + $0x5c8] sm:$0xff]
        %v472 = vld [vmem:[%s237 + $0x5d0] sm:$0xff]
        %v473 = vld [vmem:[%s237 + $0x5d8] sm:$0xff]
        %v474 = vld [vmem:[%s237 + $0x5e0] sm:$0xff]
        %v475 = vld [vmem:[%s237 + $0x5e8] sm:$0xff]
        %v476 = vld [vmem:[%s237 + $0x5f0] sm:$0xff]
        %v477 = vld [vmem:[%s237 + $0x5f8] sm:$0xff]
        %v478 = vld [vmem:[%s237 + $0x600] sm:$0xff]
        %v479 = vld [vmem:[%s237 + $0x608] sm:$0xff]
        %v480 = vld [vmem:[%s237 + $0x610] sm:$0xff]
        %v481 = vld [vmem:[%s237 + $0x618] sm:$0xff]
        %v482 = vld [vmem:[%s237 + $0x620] sm:$0xff]
        %v483 = vld [vmem:[%s237 + $0x628] sm:$0xff]
        %v484 = vld [vmem:[%s237 + $0x630] sm:$0xff]
        %v485 = vld [vmem:[%s237 + $0x638] sm:$0xff]
        %v486 = vld [vmem:[%s237 + $0x640] sm:$0xff]
        %v487 = vld [vmem:[%s237 + $0x648] sm:$0xff]
        %v488 = vld [vmem:[%s237 + $0x650] sm:$0xff]
        %v489 = vld [vmem:[%s237 + $0x658] sm:$0xff]
        %v490 = vld [vmem:[%s237 + $0x660] sm:$0xff]
        %v491 = vld [vmem:[%s237 + $0x668] sm:$0xff]
        %v492 = vld [vmem:[%s237 + $0x670] sm:$0xff]
        %v493 = vld [vmem:[%s237 + $0x678] sm:$0xff]
        %v494 = vld [vmem:[%s237 + $0x680] sm:$0xff]
        %v495 = vld [vmem:[%s237 + $0x688] sm:$0xff]
        %v496 = vld [vmem:[%s237 + $0x690] sm:$0xff]
        %v497 = vld [vmem:[%s237 + $0x698] sm:$0xff]
        %v498 = vld [vmem:[%s237 + $0x6a0] sm:$0xff]
        %v499 = vld [vmem:[%s237 + $0x6a8] sm:$0xff]
        %v500 = vld [vmem:[%s237 + $0x6b0] sm:$0xff]
        %v501 = vld [vmem:[%s237 + $0x6b8] sm:$0xff]
        %v502 = vld [vmem:[%s237 + $0x6c0] sm:$0xff]
        %v503 = vld [vmem:[%s237 + $0x6c8] sm:$0xff]
        %v504 = vld [vmem:[%s237 + $0x6d0] sm:$0xff]
        %v505 = vld [vmem:[%s237 + $0x6d8] sm:$0xff]
        %v506 = vld [vmem:[%s237 + $0x6e0] sm:$0xff]
        %v507 = vld [vmem:[%s237 + $0x6e8] sm:$0xff]
        %v508 = vld [vmem:[%s237 + $0x6f0] sm:$0xff]
        %v509 = vld [vmem:[%s237 + $0x6f8] sm:$0xff]
        %v510 = vld [vmem:[%s237 + $0x700] sm:$0xff]
        %v511 = vld [vmem:[%s237 + $0x708] sm:$0xff]
        %v512 = vld [vmem:[%s237 + $0x710] sm:$0xff]
        %v513 = vld [vmem:[%s237 + $0x718] sm:$0xff]
        %v514 = vld [vmem:[%s237 + $0x720] sm:$0xff]
        %v515 = vld [vmem:[%s237 + $0x728] sm:$0xff]
        %v516 = vld [vmem:[%s237 + $0x730] sm:$0xff]
        %v517 = vld [vmem:[%s237 + $0x738] sm:$0xff]
        %v518 = vld [vmem:[%s237 + $0x740] sm:$0xff]
        %v519 = vld [vmem:[%s237 + $0x748] sm:$0xff]
        %v520 = vld [vmem:[%s237 + $0x750] sm:$0xff]
        %v521 = vld [vmem:[%s237 + $0x758] sm:$0xff]
        %v522 = vld [vmem:[%s237 + $0x760] sm:$0xff]
        %v523 = vld [vmem:[%s237 + $0x768] sm:$0xff]
        %v524 = vld [vmem:[%s237 + $0x770] sm:$0xff]
        %v525 = vld [vmem:[%s237 + $0x778] sm:$0xff]
        %v526 = vld [vmem:[%s237 + $0x780] sm:$0xff]
        %v527 = vld [vmem:[%s237 + $0x788] sm:$0xff]
        %v528 = vld [vmem:[%s237 + $0x790] sm:$0xff]
        %v529 = vld [vmem:[%s237 + $0x798] sm:$0xff]
        %v530 = vld [vmem:[%s237 + $0x7a0] sm:$0xff]
        %v531 = vld [vmem:[%s237 + $0x7a8] sm:$0xff]
        %v532 = vld [vmem:[%s237 + $0x7b0] sm:$0xff]
        %v533 = vld [vmem:[%s237 + $0x7b8] sm:$0xff]
        %v534 = vld [vmem:[%s237 + $0x7c0] sm:$0xff]
        %v535 = vld [vmem:[%s237 + $0x7c8] sm:$0xff]
        %v536 = vld [vmem:[%s237 + $0x7d0] sm:$0xff]
        %v537 = vld [vmem:[%s237 + $0x7d8] sm:$0xff]
        %v538 = vld [vmem:[%s237 + $0x7e0] sm:$0xff]
        %v539 = vld [vmem:[%s237 + $0x7e8] sm:$0xff]
        %v540 = vld [vmem:[%s237 + $0x7f0] sm:$0xff]
        %v541 = vld [vmem:[%s237 + $0x7f8] sm:$0xff]
        %v542 = vld [vmem:[%s237 + $0x800] sm:$0xff]
        %v543 = vld [vmem:[%s237 + $0x808] sm:$0xff]
        %v544 = vld [vmem:[%s237 + $0x810] sm:$0xff]
        %v545 = vld [vmem:[%s237 + $0x818] sm:$0xff]
        %v546 = vld [vmem:[%s237 + $0x820] sm:$0xff]
        %v547 = vld [vmem:[%s237 + $0x828] sm:$0xff]
        %v548 = vld [vmem:[%s237 + $0x830] sm:$0xff]
        %v549 = vld [vmem:[%s237 + $0x838] sm:$0xff]
        %v550 = vld [vmem:[%s237 + $0x840] sm:$0xff]
        %v551 = vld [vmem:[%s237 + $0x848] sm:$0xff]
        %v552 = vld [vmem:[%s237 + $0x850] sm:$0xff]
        %v553 = vld [vmem:[%s237 + $0x858] sm:$0xff]
        %v554 = vld [vmem:[%s237 + $0x860] sm:$0xff]
        %v555 = vld [vmem:[%s237 + $0x868] sm:$0xff]
        %v556 = vld [vmem:[%s237 + $0x870] sm:$0xff]
        %v557 = vld [vmem:[%s237 + $0x878] sm:$0xff]
        %v558 = vld [vmem:[%s237 + $0x880] sm:$0xff]
        %v559 = vld [vmem:[%s237 + $0x888] sm:$0xff]
        %v560 = vld [vmem:[%s237 + $0x890] sm:$0xff]
        %v561 = vld [vmem:[%s237 + $0x898] sm:$0xff]
        %v562 = vld [vmem:[%s237 + $0x8a0] sm:$0xff]
        %v563 = vld [vmem:[%s237 + $0x8a8] sm:$0xff]
        %v564 = vld [vmem:[%s237 + $0x8b0] sm:$0xff]
        %v565 = vld [vmem:[%s237 + $0x8b8] sm:$0xff]
        %v566 = vld [vmem:[%s237 + $0x8c0] sm:$0xff]
        %v567 = vld [vmem:[%s237 + $0x8c8] sm:$0xff]
        %v568 = vld [vmem:[%s237 + $0x8d0] sm:$0xff]
        %v569 = vld [vmem:[%s237 + $0x8d8] sm:$0xff]
        %v570 = vld [vmem:[%s237 + $0x8e0] sm:$0xff]
        %v571 = vld [vmem:[%s237 + $0x8e8] sm:$0xff]
        %v572 = vld [vmem:[%s237 + $0x8f0] sm:$0xff]
        %v573 = vld [vmem:[%s237 + $0x8f8] sm:$0xff]
        %v574 = vld [vmem:[%s237 + $0x900] sm:$0xff]
        %v575 = vld [vmem:[%s237 + $0x908] sm:$0xff]
        %v576 = vld [vmem:[%s237 + $0x910] sm:$0xff]
        %v577 = vld [vmem:[%s237 + $0x918] sm:$0xff]
        %v578 = vld [vmem:[%s237 + $0x920] sm:$0xff]
        %v579 = vld [vmem:[%s237 + $0x928] sm:$0xff]
        %v580 = vld [vmem:[%s237 + $0x930] sm:$0xff]
        %v581 = vld [vmem:[%s237 + $0x938] sm:$0xff]
        %v582 = vld [vmem:[%s237 + $0x940] sm:$0xff]
        %v583 = vld [vmem:[%s237 + $0x948] sm:$0xff]
        %v584 = vld [vmem:[%s237 + $0x950] sm:$0xff]
        %v585 = vld [vmem:[%s237 + $0x958] sm:$0xff]
        %v586 = vld [vmem:[%s237 + $0x960] sm:$0xff]
        %v587 = vld [vmem:[%s237 + $0x968] sm:$0xff]
        %v588 = vld [vmem:[%s237 + $0x970] sm:$0xff]
        %v589 = vld [vmem:[%s237 + $0x978] sm:$0xff]
        %v590 = vld [vmem:[%s237 + $0x980] sm:$0xff]
        %v591 = vld [vmem:[%s237 + $0x988] sm:$0xff]
        %v592 = vld [vmem:[%s237 + $0x990] sm:$0xff]
        %v593 = vld [vmem:[%s237 + $0x998] sm:$0xff]
        %v594 = vld [vmem:[%s237 + $0x9a0] sm:$0xff]
        %v595 = vld [vmem:[%s237 + $0x9a8] sm:$0xff]
        %v596 = vld [vmem:[%s237 + $0x9b0] sm:$0xff]
        %v597 = vld [vmem:[%s237 + $0x9b8] sm:$0xff]
        %v598 = vld [vmem:[%s237 + $0x9c0] sm:$0xff]
        %v599 = vld [vmem:[%s237 + $0x9c8] sm:$0xff]
        %v600 = vld [vmem:[%s237 + $0x9d0] sm:$0xff]
        %v601 = vld [vmem:[%s237 + $0x9d8] sm:$0xff]
        %v602 = vld [vmem:[%s237 + $0x9e0] sm:$0xff]
        %v603 = vld [vmem:[%s237 + $0x9e8] sm:$0xff]
        %v604 = vld [vmem:[%s237 + $0x9f0] sm:$0xff]
        %v605 = vld [vmem:[%s237 + $0x9f8] sm:$0xff]
        %v606 = vld [vmem:[%s237 + $0xa00] sm:$0xff]
        %v607 = vld [vmem:[%s237 + $0xa08] sm:$0xff]
        %v608 = vld [vmem:[%s237 + $0xa10] sm:$0xff]
        %v609 = vld [vmem:[%s237 + $0xa18] sm:$0xff]
        %v610 = vld [vmem:[%s237 + $0xa20] sm:$0xff]
        %v611 = vld [vmem:[%s237 + $0xa28] sm:$0xff]
        %v612 = vld [vmem:[%s237 + $0xa30] sm:$0xff]
        %v613 = vld [vmem:[%s237 + $0xa38] sm:$0xff]
        %v614 = vld [vmem:[%s237 + $0xa40] sm:$0xff]
        %v615 = vld [vmem:[%s237 + $0xa48] sm:$0xff]
        %v616 = vld [vmem:[%s237 + $0xa50] sm:$0xff]
        %v617 = vld [vmem:[%s237 + $0xa58] sm:$0xff]
        %v618 = vld [vmem:[%s237 + $0xa60] sm:$0xff]
        %v619 = vld [vmem:[%s237 + $0xa68] sm:$0xff]
        %v620 = vld [vmem:[%s237 + $0xa70] sm:$0xff]
        %v621 = vld [vmem:[%s237 + $0xa78] sm:$0xff]
        %v622 = vld [vmem:[%s237 + $0xa80] sm:$0xff]
        %v623 = vld [vmem:[%s237 + $0xa88] sm:$0xff]
        %v624 = vld [vmem:[%s237 + $0xa90] sm:$0xff]
        %v625 = vld [vmem:[%s237 + $0xa98] sm:$0xff]
        %v626 = vld [vmem:[%s237 + $0xaa0] sm:$0xff]
        %v627 = vld [vmem:[%s237 + $0xaa8] sm:$0xff]
        %v628 = vld [vmem:[%s237 + $0xab0] sm:$0xff]
        %v629 = vld [vmem:[%s237 + $0xab8] sm:$0xff]
        %v630 = vld [vmem:[%s237 + $0xac0] sm:$0xff]
        %v631 = vld [vmem:[%s237 + $0xac8] sm:$0xff]
        %v632 = vld [vmem:[%s237 + $0xad0] sm:$0xff]
        %v633 = vld [vmem:[%s237 + $0xad8] sm:$0xff]
        %v634 = vld [vmem:[%s237 + $0xae0] sm:$0xff]
        %v635 = vld [vmem:[%s237 + $0xae8] sm:$0xff]
        %v636 = vld [vmem:[%s237 + $0xaf0] sm:$0xff]
        %v637 = vld [vmem:[%s237 + $0xaf8] sm:$0xff]
        %v638 = vld [vmem:[%s237 + $0xb00] sm:$0xff]
        %v639 = vld [vmem:[%s237 + $0xb08] sm:$0xff]
        %v640 = vld [vmem:[%s237 + $0xb10] sm:$0xff]
        %v641 = vld [vmem:[%s237 + $0xb18] sm:$0xff]
        %v642 = vld [vmem:[%s237 + $0xb20] sm:$0xff]
        %v643 = vld [vmem:[%s237 + $0xb28] sm:$0xff]
        %v644 = vld [vmem:[%s237 + $0xb30] sm:$0xff]
        %v645 = vld [vmem:[%s237 + $0xb38] sm:$0xff]
        %v646 = vld [vmem:[%s237 + $0xb40] sm:$0xff]
        %v647 = vld [vmem:[%s237 + $0xb48] sm:$0xff]
        %v648 = vld [vmem:[%s237 + $0xb50] sm:$0xff]
        %v649 = vld [vmem:[%s237 + $0xb58] sm:$0xff]
        %v650 = vld [vmem:[%s237 + $0xb60] sm:$0xff]
        %v651 = vld [vmem:[%s237 + $0xb68] sm:$0xff]
        %v652 = vld [vmem:[%s237 + $0xb70] sm:$0xff]
        %v653 = vld [vmem:[%s237 + $0xb78] sm:$0xff]
        %v654 = vld [vmem:[%s237 + $0xb80] sm:$0xff]
        %v655 = vld [vmem:[%s237 + $0xb88] sm:$0xff]
        %v656 = vld [vmem:[%s237 + $0xb90] sm:$0xff]
        %v657 = vld [vmem:[%s237 + $0xb98] sm:$0xff]
        %v658 = vld [vmem:[%s237 + $0xba0] sm:$0xff]
        %v659 = vld [vmem:[%s237 + $0xba8] sm:$0xff]
        %v660 = vld [vmem:[%s237 + $0xbb0] sm:$0xff]
        %v661 = vld [vmem:[%s237 + $0xbb8] sm:$0xff]
        %v662 = vld [vmem:[%s237 + $0xbc0] sm:$0xff]
        %v663 = vld [vmem:[%s237 + $0xbc8] sm:$0xff]
        %v664 = vld [vmem:[%s237 + $0xbd0] sm:$0xff]
        %v665 = vld [vmem:[%s237 + $0xbd8] sm:$0xff]
        %v666 = vld [vmem:[%s237 + $0xbe0] sm:$0xff]
        %v667 = vld [vmem:[%s237 + $0xbe8] sm:$0xff]
        %v668 = vld [vmem:[%s237 + $0xbf0] sm:$0xff]
        %v669 = vld [vmem:[%s237 + $0xbf8] sm:$0xff]
        %v671 = vcombine.high %v285, %v285
        %v673 = vunpack.c.l.s4 1966171168
        %v674 = vunpack.c.0.s8 %v673
        %v675 = vlaneseq
        %v676 = vshrl.u32 %v675, 7
        %v677 = vsub.s32 %v674, %v676
        %v678 = vrot.slane %v285, %v677
        %v680 = vunpack.c.l.s4 1966171168
        %v681 = vunpack.c.0.s8 %v680
        %v682 = vlaneseq
        %v683 = vshrl.u32 %v682, 7
        %v684 = vsub.s32 %v681, %v683
        %v685 = vrot.slane %v671, %v684
        %v686 = vcombine.high %v678, %v678
        %v687 = vcombine.high %v685, %v685
        %v689 = vunpack.c.l.s4 1966171168
        %v690 = vunpack.c.0.s8 %v689
        %v691 = vlaneseq
        %v692 = vshrl.u32 %v691, 7
        %v693 = vsub.s32 %v690, %v692
        %v694 = vrot.slane %v678, %v693
        %v696 = vunpack.c.l.s4 1966171168
        %v697 = vunpack.c.0.s8 %v696
        %v698 = vlaneseq
        %v699 = vshrl.u32 %v698, 7
        %v700 = vsub.s32 %v697, %v699
        %v701 = vrot.slane %v685, %v700
        %v703 = vunpack.c.l.s4 1966171168
        %v704 = vunpack.c.0.s8 %v703
        %v705 = vlaneseq
        %v706 = vshrl.u32 %v705, 7
        %v707 = vsub.s32 %v704, %v706
        %v708 = vrot.slane %v686, %v707
        %v710 = vunpack.c.l.s4 1966171168
        %v711 = vunpack.c.0.s8 %v710
        %v712 = vlaneseq
        %v713 = vshrl.u32 %v712, 7
        %v714 = vsub.s32 %v711, %v713
        %v715 = vrot.slane %v687, %v714
        %v716 = vcombine.high %v694, %v694
        %v717 = vcombine.high %v708, %v708
        %v1108 = vunpack.c.l.b16 %v286
        %v1109 = vunpack.c.h.b16 %v286
        %v1110 = vunpack.c.l.b16 %v287
        %v1111 = vunpack.c.h.b16 %v287
        %v1112 = vunpack.c.l.b16 %v288
        %v1113 = vunpack.c.h.b16 %v288
        %v1114 = vunpack.c.l.b16 %v289
        %v1115 = vunpack.c.h.b16 %v289
        %v1116 = vunpack.c.l.b16 %v290
        %v1117 = vunpack.c.h.b16 %v290
        %v1118 = vunpack.c.l.b16 %v291
        %v1119 = vunpack.c.h.b16 %v291
        %v1120 = vunpack.c.l.b16 %v292
        %v1121 = vunpack.c.h.b16 %v292
        %v1122 = vunpack.c.l.b16 %v293
        %v1123 = vunpack.c.h.b16 %v293
        %v1124 = vunpack.c.l.b16 %v294
        %v1125 = vunpack.c.h.b16 %v294
        %v1126 = vunpack.c.l.b16 %v295
        %v1127 = vunpack.c.h.b16 %v295
        %v1128 = vunpack.c.l.b16 %v296
        %v1129 = vunpack.c.h.b16 %v296
        %v1130 = vunpack.c.l.b16 %v297
        %v1131 = vunpack.c.h.b16 %v297
        %v1132 = vunpack.c.l.b16 %v298
        %v1133 = vunpack.c.h.b16 %v298
        %v1134 = vunpack.c.l.b16 %v299
        %v1135 = vunpack.c.h.b16 %v299
        %v1136 = vunpack.c.l.b16 %v300
        %v1137 = vunpack.c.h.b16 %v300
        %v1138 = vunpack.c.l.b16 %v301
        %v1139 = vunpack.c.h.b16 %v301
        %v1140 = vunpack.c.l.b16 %v302
        %v1141 = vunpack.c.h.b16 %v302
        %v1142 = vunpack.c.l.b16 %v303
        %v1143 = vunpack.c.h.b16 %v303
        %v1144 = vunpack.c.l.b16 %v304
        %v1145 = vunpack.c.h.b16 %v304
        %v1146 = vunpack.c.l.b16 %v305
        %v1147 = vunpack.c.h.b16 %v305
        %v1148 = vunpack.c.l.b16 %v306
        %v1149 = vunpack.c.h.b16 %v306
        %v1150 = vunpack.c.l.b16 %v307
        %v1151 = vunpack.c.h.b16 %v307
        %v1152 = vunpack.c.l.b16 %v308
        %v1153 = vunpack.c.h.b16 %v308
        %v1154 = vunpack.c.l.b16 %v309
        %v1155 = vunpack.c.h.b16 %v309
        %v1156 = vunpack.c.l.b16 %v310
        %v1157 = vunpack.c.h.b16 %v310
        %v1158 = vunpack.c.l.b16 %v311
        %v1159 = vunpack.c.h.b16 %v311
        %v1160 = vunpack.c.l.b16 %v312
        %v1161 = vunpack.c.h.b16 %v312
        %v1162 = vunpack.c.l.b16 %v313
        %v1163 = vunpack.c.h.b16 %v313
        %v1164 = vunpack.c.l.b16 %v314
        %v1165 = vunpack.c.h.b16 %v314
        %v1166 = vunpack.c.l.b16 %v315
        %v1167 = vunpack.c.h.b16 %v315
        %v1168 = vunpack.c.l.b16 %v316
        %v1169 = vunpack.c.h.b16 %v316
        %v1170 = vunpack.c.l.b16 %v317
        %v1171 = vunpack.c.h.b16 %v317
        %v1172 = vunpack.c.l.b16 %v318
        %v1173 = vunpack.c.h.b16 %v318
        %v1174 = vunpack.c.l.b16 %v319
        %v1175 = vunpack.c.h.b16 %v319
        %v1176 = vunpack.c.l.b16 %v320
        %v1177 = vunpack.c.h.b16 %v320
        %v1178 = vunpack.c.l.b16 %v321
        %v1179 = vunpack.c.h.b16 %v321
        %v1180 = vunpack.c.l.b16 %v322
        %v1181 = vunpack.c.h.b16 %v322
        %v1182 = vunpack.c.l.b16 %v323
        %v1183 = vunpack.c.h.b16 %v323
        %v1184 = vunpack.c.l.b16 %v324
        %v1185 = vunpack.c.h.b16 %v324
        %v1186 = vunpack.c.l.b16 %v325
        %v1187 = vunpack.c.h.b16 %v325
        %v1188 = vunpack.c.l.b16 %v326
        %v1189 = vunpack.c.h.b16 %v326
        %v1190 = vunpack.c.l.b16 %v327
        %v1191 = vunpack.c.h.b16 %v327
        %v1192 = vunpack.c.l.b16 %v328
        %v1193 = vunpack.c.h.b16 %v328
        %v1194 = vunpack.c.l.b16 %v329
        %v1195 = vunpack.c.h.b16 %v329
        %v1196 = vunpack.c.l.b16 %v330
        %v1197 = vunpack.c.h.b16 %v330
        %v1198 = vunpack.c.l.b16 %v331
        %v1199 = vunpack.c.h.b16 %v331
        %v1200 = vunpack.c.l.b16 %v332
        %v1201 = vunpack.c.h.b16 %v332
        %v1202 = vunpack.c.l.b16 %v333
        %v1203 = vunpack.c.h.b16 %v333
        %v1204 = vunpack.c.l.b16 %v334
        %v1205 = vunpack.c.h.b16 %v334
        %v1206 = vunpack.c.l.b16 %v335
        %v1207 = vunpack.c.h.b16 %v335
        %v1208 = vunpack.c.l.b16 %v336
        %v1209 = vunpack.c.h.b16 %v336
        %v1210 = vunpack.c.l.b16 %v337
        %v1211 = vunpack.c.h.b16 %v337
        %v1212 = vunpack.c.l.b16 %v338
        %v1213 = vunpack.c.h.b16 %v338
        %v1214 = vunpack.c.l.b16 %v339
        %v1215 = vunpack.c.h.b16 %v339
        %v1216 = vunpack.c.l.b16 %v340
        %v1217 = vunpack.c.h.b16 %v340
        %v1218 = vunpack.c.l.b16 %v341
        %v1219 = vunpack.c.h.b16 %v341
        %v1220 = vunpack.c.l.b16 %v342
        %v1221 = vunpack.c.h.b16 %v342
        %v1222 = vunpack.c.l.b16 %v343
        %v1223 = vunpack.c.h.b16 %v343
        %v1224 = vunpack.c.l.b16 %v344
        %v1225 = vunpack.c.h.b16 %v344
        %v1226 = vunpack.c.l.b16 %v345
        %v1227 = vunpack.c.h.b16 %v345
        %v1228 = vunpack.c.l.b16 %v346
        %v1229 = vunpack.c.h.b16 %v346
        %v1230 = vunpack.c.l.b16 %v347
        %v1231 = vunpack.c.h.b16 %v347
        %v1232 = vunpack.c.l.b16 %v348
        %v1233 = vunpack.c.h.b16 %v348
        %v1234 = vunpack.c.l.b16 %v349
        %v1235 = vunpack.c.h.b16 %v349
        %v1236 = vunpack.c.l.b16 %v350
        %v1237 = vunpack.c.h.b16 %v350
        %v1238 = vunpack.c.l.b16 %v351
        %v1239 = vunpack.c.h.b16 %v351
        %v1240 = vunpack.c.l.b16 %v352
        %v1241 = vunpack.c.h.b16 %v352
        %v1242 = vunpack.c.l.b16 %v353
        %v1243 = vunpack.c.h.b16 %v353
        %v1244 = vunpack.c.l.b16 %v354
        %v1245 = vunpack.c.h.b16 %v354
        %v1246 = vunpack.c.l.b16 %v355
        %v1247 = vunpack.c.h.b16 %v355
        %v1248 = vunpack.c.l.b16 %v356
        %v1249 = vunpack.c.h.b16 %v356
        %v1250 = vunpack.c.l.b16 %v357
        %v1251 = vunpack.c.h.b16 %v357
        %v1252 = vunpack.c.l.b16 %v358
        %v1253 = vunpack.c.h.b16 %v358
        %v1254 = vunpack.c.l.b16 %v359
        %v1255 = vunpack.c.h.b16 %v359
        %v1256 = vunpack.c.l.b16 %v360
        %v1257 = vunpack.c.h.b16 %v360
        %v1258 = vunpack.c.l.b16 %v361
        %v1259 = vunpack.c.h.b16 %v361
        %v1260 = vunpack.c.l.b16 %v362
        %v1261 = vunpack.c.h.b16 %v362
        %v1262 = vunpack.c.l.b16 %v363
        %v1263 = vunpack.c.h.b16 %v363
        %v1264 = vunpack.c.l.b16 %v364
        %v1265 = vunpack.c.h.b16 %v364
        %v1266 = vunpack.c.l.b16 %v365
        %v1267 = vunpack.c.h.b16 %v365
        %v1268 = vunpack.c.l.b16 %v366
        %v1269 = vunpack.c.h.b16 %v366
        %v1270 = vunpack.c.l.b16 %v367
        %v1271 = vunpack.c.h.b16 %v367
        %v1272 = vunpack.c.l.b16 %v368
        %v1273 = vunpack.c.h.b16 %v368
        %v1274 = vunpack.c.l.b16 %v369
        %v1275 = vunpack.c.h.b16 %v369
        %v1276 = vunpack.c.l.b16 %v370
        %v1277 = vunpack.c.h.b16 %v370
        %v1278 = vunpack.c.l.b16 %v371
        %v1279 = vunpack.c.h.b16 %v371
        %v1280 = vunpack.c.l.b16 %v372
        %v1281 = vunpack.c.h.b16 %v372
        %v1282 = vunpack.c.l.b16 %v373
        %v1283 = vunpack.c.h.b16 %v373
        %v1284 = vunpack.c.l.b16 %v374
        %v1285 = vunpack.c.h.b16 %v374
        %v1286 = vunpack.c.l.b16 %v375
        %v1287 = vunpack.c.h.b16 %v375
        %v1288 = vunpack.c.l.b16 %v376
        %v1289 = vunpack.c.h.b16 %v376
        %v1290 = vunpack.c.l.b16 %v377
        %v1291 = vunpack.c.h.b16 %v377
        %v1292 = vunpack.c.l.b16 %v378
        %v1293 = vunpack.c.h.b16 %v378
        %v1294 = vunpack.c.l.b16 %v379
        %v1295 = vunpack.c.h.b16 %v379
        %v1296 = vunpack.c.l.b16 %v380
        %v1297 = vunpack.c.h.b16 %v380
        %v1298 = vunpack.c.l.b16 %v381
        %v1299 = vunpack.c.h.b16 %v381
        %v1300 = vunpack.c.l.b16 %v382
        %v1301 = vunpack.c.h.b16 %v382
        %v1302 = vunpack.c.l.b16 %v383
        %v1303 = vunpack.c.h.b16 %v383
        %v1304 = vunpack.c.l.b16 %v384
        %v1305 = vunpack.c.h.b16 %v384
        %v1306 = vunpack.c.l.b16 %v385
        %v1307 = vunpack.c.h.b16 %v385
        %v1308 = vunpack.c.l.b16 %v386
        %v1309 = vunpack.c.h.b16 %v386
        %v1310 = vunpack.c.l.b16 %v387
        %v1311 = vunpack.c.h.b16 %v387
        %v1312 = vunpack.c.l.b16 %v388
        %v1313 = vunpack.c.h.b16 %v388
        %v1314 = vunpack.c.l.b16 %v389
        %v1315 = vunpack.c.h.b16 %v389
        %v1316 = vunpack.c.l.b16 %v390
        %v1317 = vunpack.c.h.b16 %v390
        %v1318 = vunpack.c.l.b16 %v391
        %v1319 = vunpack.c.h.b16 %v391
        %v1320 = vunpack.c.l.b16 %v392
        %v1321 = vunpack.c.h.b16 %v392
        %v1322 = vunpack.c.l.b16 %v393
        %v1323 = vunpack.c.h.b16 %v393
        %v1324 = vunpack.c.l.b16 %v394
        %v1325 = vunpack.c.h.b16 %v394
        %v1326 = vunpack.c.l.b16 %v395
        %v1327 = vunpack.c.h.b16 %v395
        %v1328 = vunpack.c.l.b16 %v396
        %v1329 = vunpack.c.h.b16 %v396
        %v1330 = vunpack.c.l.b16 %v397
        %v1331 = vunpack.c.h.b16 %v397
        %v1332 = vunpack.c.l.b16 %v398
        %v1333 = vunpack.c.h.b16 %v398
        %v1334 = vunpack.c.l.b16 %v399
        %v1335 = vunpack.c.h.b16 %v399
        %v1336 = vunpack.c.l.b16 %v400
        %v1337 = vunpack.c.h.b16 %v400
        %v1338 = vunpack.c.l.b16 %v401
        %v1339 = vunpack.c.h.b16 %v401
        %v1340 = vunpack.c.l.b16 %v402
        %v1341 = vunpack.c.h.b16 %v402
        %v1342 = vunpack.c.l.b16 %v403
        %v1343 = vunpack.c.h.b16 %v403
        %v1344 = vunpack.c.l.b16 %v404
        %v1345 = vunpack.c.h.b16 %v404
        %v1346 = vunpack.c.l.b16 %v405
        %v1347 = vunpack.c.h.b16 %v405
        %v1348 = vunpack.c.l.b16 %v406
        %v1349 = vunpack.c.h.b16 %v406
        %v1350 = vunpack.c.l.b16 %v407
        %v1351 = vunpack.c.h.b16 %v407
        %v1352 = vunpack.c.l.b16 %v408
        %v1353 = vunpack.c.h.b16 %v408
        %v1354 = vunpack.c.l.b16 %v409
        %v1355 = vunpack.c.h.b16 %v409
        %v1356 = vunpack.c.l.b16 %v410
        %v1357 = vunpack.c.h.b16 %v410
        %v1358 = vunpack.c.l.b16 %v411
        %v1359 = vunpack.c.h.b16 %v411
        %v1360 = vunpack.c.l.b16 %v412
        %v1361 = vunpack.c.h.b16 %v412
        %v1362 = vunpack.c.l.b16 %v413
        %v1363 = vunpack.c.h.b16 %v413
        %v1364 = vunpack.c.l.b16 %v414
        %v1365 = vunpack.c.h.b16 %v414
        %v1366 = vunpack.c.l.b16 %v415
        %v1367 = vunpack.c.h.b16 %v415
        %v1368 = vunpack.c.l.b16 %v416
        %v1369 = vunpack.c.h.b16 %v416
        %v1370 = vunpack.c.l.b16 %v417
        %v1371 = vunpack.c.h.b16 %v417
        %v1372 = vunpack.c.l.b16 %v418
        %v1373 = vunpack.c.h.b16 %v418
        %v1374 = vunpack.c.l.b16 %v419
        %v1375 = vunpack.c.h.b16 %v419
        %v1376 = vunpack.c.l.b16 %v420
        %v1377 = vunpack.c.h.b16 %v420
        %v1378 = vunpack.c.l.b16 %v421
        %v1379 = vunpack.c.h.b16 %v421
        %v1380 = vunpack.c.l.b16 %v422
        %v1381 = vunpack.c.h.b16 %v422
        %v1382 = vunpack.c.l.b16 %v423
        %v1383 = vunpack.c.h.b16 %v423
        %v1384 = vunpack.c.l.b16 %v424
        %v1385 = vunpack.c.h.b16 %v424
        %v1386 = vunpack.c.l.b16 %v425
        %v1387 = vunpack.c.h.b16 %v425
        %v1388 = vunpack.c.l.b16 %v426
        %v1389 = vunpack.c.h.b16 %v426
        %v1390 = vunpack.c.l.b16 %v427
        %v1391 = vunpack.c.h.b16 %v427
        %v1392 = vunpack.c.l.b16 %v428
        %v1393 = vunpack.c.h.b16 %v428
        %v1394 = vunpack.c.l.b16 %v429
        %v1395 = vunpack.c.h.b16 %v429
        %v1396 = vunpack.c.l.b16 %v430
        %v1397 = vunpack.c.h.b16 %v430
        %v1398 = vunpack.c.l.b16 %v431
        %v1399 = vunpack.c.h.b16 %v431
        %v1400 = vunpack.c.l.b16 %v432
        %v1401 = vunpack.c.h.b16 %v432
        %v1402 = vunpack.c.l.b16 %v433
        %v1403 = vunpack.c.h.b16 %v433
        %v1404 = vunpack.c.l.b16 %v434
        %v1405 = vunpack.c.h.b16 %v434
        %v1406 = vunpack.c.l.b16 %v435
        %v1407 = vunpack.c.h.b16 %v435
        %v1408 = vunpack.c.l.b16 %v436
        %v1409 = vunpack.c.h.b16 %v436
        %v1410 = vunpack.c.l.b16 %v437
        %v1411 = vunpack.c.h.b16 %v437
        %v1412 = vunpack.c.l.b16 %v438
        %v1413 = vunpack.c.h.b16 %v438
        %v1414 = vunpack.c.l.b16 %v439
        %v1415 = vunpack.c.h.b16 %v439
        %v1416 = vunpack.c.l.b16 %v440
        %v1417 = vunpack.c.h.b16 %v440
        %v1418 = vunpack.c.l.b16 %v441
        %v1419 = vunpack.c.h.b16 %v441
        %v1420 = vunpack.c.l.b16 %v442
        %v1421 = vunpack.c.h.b16 %v442
        %v1422 = vunpack.c.l.b16 %v443
        %v1423 = vunpack.c.h.b16 %v443
        %v1424 = vunpack.c.l.b16 %v444
        %v1425 = vunpack.c.h.b16 %v444
        %v1426 = vunpack.c.l.b16 %v445
        %v1427 = vunpack.c.h.b16 %v445
        %v1428 = vunpack.c.l.b16 %v446
        %v1429 = vunpack.c.h.b16 %v446
        %v1430 = vunpack.c.l.b16 %v447
        %v1431 = vunpack.c.h.b16 %v447
        %v1432 = vunpack.c.l.b16 %v448
        %v1433 = vunpack.c.h.b16 %v448
        %v1434 = vunpack.c.l.b16 %v449
        %v1435 = vunpack.c.h.b16 %v449
        %v1436 = vunpack.c.l.b16 %v450
        %v1437 = vunpack.c.h.b16 %v450
        %v1438 = vunpack.c.l.b16 %v451
        %v1439 = vunpack.c.h.b16 %v451
        %v1440 = vunpack.c.l.b16 %v452
        %v1441 = vunpack.c.h.b16 %v452
        %v1442 = vunpack.c.l.b16 %v453
        %v1443 = vunpack.c.h.b16 %v453
        %v1444 = vunpack.c.l.b16 %v454
        %v1445 = vunpack.c.h.b16 %v454
        %v1446 = vunpack.c.l.b16 %v455
        %v1447 = vunpack.c.h.b16 %v455
        %v1448 = vunpack.c.l.b16 %v456
        %v1449 = vunpack.c.h.b16 %v456
        %v1450 = vunpack.c.l.b16 %v457
        %v1451 = vunpack.c.h.b16 %v457
        %v1452 = vunpack.c.l.b16 %v458
        %v1453 = vunpack.c.h.b16 %v458
        %v1454 = vunpack.c.l.b16 %v459
        %v1455 = vunpack.c.h.b16 %v459
        %v1456 = vunpack.c.l.b16 %v460
        %v1457 = vunpack.c.h.b16 %v460
        %v1458 = vunpack.c.l.b16 %v461
        %v1459 = vunpack.c.h.b16 %v461
        %v1460 = vunpack.c.l.b16 %v462
        %v1461 = vunpack.c.h.b16 %v462
        %v1462 = vunpack.c.l.b16 %v463
        %v1463 = vunpack.c.h.b16 %v463
        %v1464 = vunpack.c.l.b16 %v464
        %v1465 = vunpack.c.h.b16 %v464
        %v1466 = vunpack.c.l.b16 %v465
        %v1467 = vunpack.c.h.b16 %v465
        %v1468 = vunpack.c.l.b16 %v466
        %v1469 = vunpack.c.h.b16 %v466
        %v1470 = vunpack.c.l.b16 %v467
        %v1471 = vunpack.c.h.b16 %v467
        %v1472 = vunpack.c.l.b16 %v468
        %v1473 = vunpack.c.h.b16 %v468
        %v1474 = vunpack.c.l.b16 %v469
        %v1475 = vunpack.c.h.b16 %v469
        %v1476 = vunpack.c.l.b16 %v470
        %v1477 = vunpack.c.h.b16 %v470
        %v1478 = vunpack.c.l.b16 %v471
        %v1479 = vunpack.c.h.b16 %v471
        %v1480 = vunpack.c.l.b16 %v472
        %v1481 = vunpack.c.h.b16 %v472
        %v1482 = vunpack.c.l.b16 %v473
        %v1483 = vunpack.c.h.b16 %v473
        %v1484 = vunpack.c.l.b16 %v474
        %v1485 = vunpack.c.h.b16 %v474
        %v1486 = vunpack.c.l.b16 %v475
        %v1487 = vunpack.c.h.b16 %v475
        %v1488 = vunpack.c.l.b16 %v476
        %v1489 = vunpack.c.h.b16 %v476
        %v1490 = vunpack.c.l.b16 %v477
        %v1491 = vunpack.c.h.b16 %v477
        %v1492 = vunpack.c.l.b16 %v478
        %v1493 = vunpack.c.h.b16 %v478
        %v1494 = vunpack.c.l.b16 %v479
        %v1495 = vunpack.c.h.b16 %v479
        %v1496 = vunpack.c.l.b16 %v480
        %v1497 = vunpack.c.h.b16 %v480
        %v1498 = vunpack.c.l.b16 %v481
        %v1499 = vunpack.c.h.b16 %v481
        %v1500 = vunpack.c.l.b16 %v482
        %v1501 = vunpack.c.h.b16 %v482
        %v1502 = vunpack.c.l.b16 %v483
        %v1503 = vunpack.c.h.b16 %v483
        %v1504 = vunpack.c.l.b16 %v484
        %v1505 = vunpack.c.h.b16 %v484
        %v1506 = vunpack.c.l.b16 %v485
        %v1507 = vunpack.c.h.b16 %v485
        %v1508 = vunpack.c.l.b16 %v486
        %v1509 = vunpack.c.h.b16 %v486
        %v1510 = vunpack.c.l.b16 %v487
        %v1511 = vunpack.c.h.b16 %v487
        %v1512 = vunpack.c.l.b16 %v488
        %v1513 = vunpack.c.h.b16 %v488
        %v1514 = vunpack.c.l.b16 %v489
        %v1515 = vunpack.c.h.b16 %v489
        %v1516 = vunpack.c.l.b16 %v490
        %v1517 = vunpack.c.h.b16 %v490
        %v1518 = vunpack.c.l.b16 %v491
        %v1519 = vunpack.c.h.b16 %v491
        %v1520 = vunpack.c.l.b16 %v492
        %v1521 = vunpack.c.h.b16 %v492
        %v1522 = vunpack.c.l.b16 %v493
        %v1523 = vunpack.c.h.b16 %v493
        %v1524 = vunpack.c.l.b16 %v494
        %v1525 = vunpack.c.h.b16 %v494
        %v1526 = vunpack.c.l.b16 %v495
        %v1527 = vunpack.c.h.b16 %v495
        %v1528 = vunpack.c.l.b16 %v496
        %v1529 = vunpack.c.h.b16 %v496
        %v1530 = vunpack.c.l.b16 %v497
        %v1531 = vunpack.c.h.b16 %v497
        %v1532 = vunpack.c.l.b16 %v498
        %v1533 = vunpack.c.h.b16 %v498
        %v1534 = vunpack.c.l.b16 %v499
        %v1535 = vunpack.c.h.b16 %v499
        %v1536 = vunpack.c.l.b16 %v500
        %v1537 = vunpack.c.h.b16 %v500
        %v1538 = vunpack.c.l.b16 %v501
        %v1539 = vunpack.c.h.b16 %v501
        %v1540 = vunpack.c.l.b16 %v502
        %v1541 = vunpack.c.h.b16 %v502
        %v1542 = vunpack.c.l.b16 %v503
        %v1543 = vunpack.c.h.b16 %v503
        %v1544 = vunpack.c.l.b16 %v504
        %v1545 = vunpack.c.h.b16 %v504
        %v1546 = vunpack.c.l.b16 %v505
        %v1547 = vunpack.c.h.b16 %v505
        %v1548 = vunpack.c.l.b16 %v506
        %v1549 = vunpack.c.h.b16 %v506
        %v1550 = vunpack.c.l.b16 %v507
        %v1551 = vunpack.c.h.b16 %v507
        %v1552 = vunpack.c.l.b16 %v508
        %v1553 = vunpack.c.h.b16 %v508
        %v1554 = vunpack.c.l.b16 %v509
        %v1555 = vunpack.c.h.b16 %v509
        %v1556 = vunpack.c.l.b16 %v510
        %v1557 = vunpack.c.h.b16 %v510
        %v1558 = vunpack.c.l.b16 %v511
        %v1559 = vunpack.c.h.b16 %v511
        %v1560 = vunpack.c.l.b16 %v512
        %v1561 = vunpack.c.h.b16 %v512
        %v1562 = vunpack.c.l.b16 %v513
        %v1563 = vunpack.c.h.b16 %v513
        %v1564 = vunpack.c.l.b16 %v514
        %v1565 = vunpack.c.h.b16 %v514
        %v1566 = vunpack.c.l.b16 %v515
        %v1567 = vunpack.c.h.b16 %v515
        %v1568 = vunpack.c.l.b16 %v516
        %v1569 = vunpack.c.h.b16 %v516
        %v1570 = vunpack.c.l.b16 %v517
        %v1571 = vunpack.c.h.b16 %v517
        %v1572 = vunpack.c.l.b16 %v518
        %v1573 = vunpack.c.h.b16 %v518
        %v1574 = vunpack.c.l.b16 %v519
        %v1575 = vunpack.c.h.b16 %v519
        %v1576 = vunpack.c.l.b16 %v520
        %v1577 = vunpack.c.h.b16 %v520
        %v1578 = vunpack.c.l.b16 %v521
        %v1579 = vunpack.c.h.b16 %v521
        %v1580 = vunpack.c.l.b16 %v522
        %v1581 = vunpack.c.h.b16 %v522
        %v1582 = vunpack.c.l.b16 %v523
        %v1583 = vunpack.c.h.b16 %v523
        %v1584 = vunpack.c.l.b16 %v524
        %v1585 = vunpack.c.h.b16 %v524
        %v1586 = vunpack.c.l.b16 %v525
        %v1587 = vunpack.c.h.b16 %v525
        %v1588 = vunpack.c.l.b16 %v526
        %v1589 = vunpack.c.h.b16 %v526
        %v1590 = vunpack.c.l.b16 %v527
        %v1591 = vunpack.c.h.b16 %v527
        %v1592 = vunpack.c.l.b16 %v528
        %v1593 = vunpack.c.h.b16 %v528
        %v1594 = vunpack.c.l.b16 %v529
        %v1595 = vunpack.c.h.b16 %v529
        %v1596 = vunpack.c.l.b16 %v530
        %v1597 = vunpack.c.h.b16 %v530
        %v1598 = vunpack.c.l.b16 %v531
        %v1599 = vunpack.c.h.b16 %v531
        %v1600 = vunpack.c.l.b16 %v532
        %v1601 = vunpack.c.h.b16 %v532
        %v1602 = vunpack.c.l.b16 %v533
        %v1603 = vunpack.c.h.b16 %v533
        %v1604 = vunpack.c.l.b16 %v534
        %v1605 = vunpack.c.h.b16 %v534
        %v1606 = vunpack.c.l.b16 %v535
        %v1607 = vunpack.c.h.b16 %v535
        %v1608 = vunpack.c.l.b16 %v536
        %v1609 = vunpack.c.h.b16 %v536
        %v1610 = vunpack.c.l.b16 %v537
        %v1611 = vunpack.c.h.b16 %v537
        %v1612 = vunpack.c.l.b16 %v538
        %v1613 = vunpack.c.h.b16 %v538
        %v1614 = vunpack.c.l.b16 %v539
        %v1615 = vunpack.c.h.b16 %v539
        %v1616 = vunpack.c.l.b16 %v540
        %v1617 = vunpack.c.h.b16 %v540
        %v1618 = vunpack.c.l.b16 %v541
        %v1619 = vunpack.c.h.b16 %v541
        %v1620 = vunpack.c.l.b16 %v542
        %v1621 = vunpack.c.h.b16 %v542
        %v1622 = vunpack.c.l.b16 %v543
        %v1623 = vunpack.c.h.b16 %v543
        %v1624 = vunpack.c.l.b16 %v544
        %v1625 = vunpack.c.h.b16 %v544
        %v1626 = vunpack.c.l.b16 %v545
        %v1627 = vunpack.c.h.b16 %v545
        %v1628 = vunpack.c.l.b16 %v546
        %v1629 = vunpack.c.h.b16 %v546
        %v1630 = vunpack.c.l.b16 %v547
        %v1631 = vunpack.c.h.b16 %v547
        %v1632 = vunpack.c.l.b16 %v548
        %v1633 = vunpack.c.h.b16 %v548
        %v1634 = vunpack.c.l.b16 %v549
        %v1635 = vunpack.c.h.b16 %v549
        %v1636 = vunpack.c.l.b16 %v550
        %v1637 = vunpack.c.h.b16 %v550
        %v1638 = vunpack.c.l.b16 %v551
        %v1639 = vunpack.c.h.b16 %v551
        %v1640 = vunpack.c.l.b16 %v552
        %v1641 = vunpack.c.h.b16 %v552
        %v1642 = vunpack.c.l.b16 %v553
        %v1643 = vunpack.c.h.b16 %v553
        %v1644 = vunpack.c.l.b16 %v554
        %v1645 = vunpack.c.h.b16 %v554
        %v1646 = vunpack.c.l.b16 %v555
        %v1647 = vunpack.c.h.b16 %v555
        %v1648 = vunpack.c.l.b16 %v556
        %v1649 = vunpack.c.h.b16 %v556
        %v1650 = vunpack.c.l.b16 %v557
        %v1651 = vunpack.c.h.b16 %v557
        %v1652 = vunpack.c.l.b16 %v558
        %v1653 = vunpack.c.h.b16 %v558
        %v1654 = vunpack.c.l.b16 %v559
        %v1655 = vunpack.c.h.b16 %v559
        %v1656 = vunpack.c.l.b16 %v560
        %v1657 = vunpack.c.h.b16 %v560
        %v1658 = vunpack.c.l.b16 %v561
        %v1659 = vunpack.c.h.b16 %v561
        %v1660 = vunpack.c.l.b16 %v562
        %v1661 = vunpack.c.h.b16 %v562
        %v1662 = vunpack.c.l.b16 %v563
        %v1663 = vunpack.c.h.b16 %v563
        %v1664 = vunpack.c.l.b16 %v564
        %v1665 = vunpack.c.h.b16 %v564
        %v1666 = vunpack.c.l.b16 %v565
        %v1667 = vunpack.c.h.b16 %v565
        %v1668 = vunpack.c.l.b16 %v566
        %v1669 = vunpack.c.h.b16 %v566
        %v1670 = vunpack.c.l.b16 %v567
        %v1671 = vunpack.c.h.b16 %v567
        %v1672 = vunpack.c.l.b16 %v568
        %v1673 = vunpack.c.h.b16 %v568
        %v1674 = vunpack.c.l.b16 %v569
        %v1675 = vunpack.c.h.b16 %v569
        %v1676 = vunpack.c.l.b16 %v570
        %v1677 = vunpack.c.h.b16 %v570
        %v1678 = vunpack.c.l.b16 %v571
        %v1679 = vunpack.c.h.b16 %v571
        %v1680 = vunpack.c.l.b16 %v572
        %v1681 = vunpack.c.h.b16 %v572
        %v1682 = vunpack.c.l.b16 %v573
        %v1683 = vunpack.c.h.b16 %v573
        %v1684 = vunpack.c.l.b16 %v574
        %v1685 = vunpack.c.h.b16 %v574
        %v1686 = vunpack.c.l.b16 %v575
        %v1687 = vunpack.c.h.b16 %v575
        %v1688 = vunpack.c.l.b16 %v576
        %v1689 = vunpack.c.h.b16 %v576
        %v1690 = vunpack.c.l.b16 %v577
        %v1691 = vunpack.c.h.b16 %v577
        %v1692 = vunpack.c.l.b16 %v578
        %v1693 = vunpack.c.h.b16 %v578
        %v1694 = vunpack.c.l.b16 %v579
        %v1695 = vunpack.c.h.b16 %v579
        %v1696 = vunpack.c.l.b16 %v580
        %v1697 = vunpack.c.h.b16 %v580
        %v1698 = vunpack.c.l.b16 %v581
        %v1699 = vunpack.c.h.b16 %v581
        %v1700 = vunpack.c.l.b16 %v582
        %v1701 = vunpack.c.h.b16 %v582
        %v1702 = vunpack.c.l.b16 %v583
        %v1703 = vunpack.c.h.b16 %v583
        %v1704 = vunpack.c.l.b16 %v584
        %v1705 = vunpack.c.h.b16 %v584
        %v1706 = vunpack.c.l.b16 %v585
        %v1707 = vunpack.c.h.b16 %v585
        %v1708 = vunpack.c.l.b16 %v586
        %v1709 = vunpack.c.h.b16 %v586
        %v1710 = vunpack.c.l.b16 %v587
        %v1711 = vunpack.c.h.b16 %v587
        %v1712 = vunpack.c.l.b16 %v588
        %v1713 = vunpack.c.h.b16 %v588
        %v1714 = vunpack.c.l.b16 %v589
        %v1715 = vunpack.c.h.b16 %v589
        %v1716 = vunpack.c.l.b16 %v590
        %v1717 = vunpack.c.h.b16 %v590
        %v1718 = vunpack.c.l.b16 %v591
        %v1719 = vunpack.c.h.b16 %v591
        %v1720 = vunpack.c.l.b16 %v592
        %v1721 = vunpack.c.h.b16 %v592
        %v1722 = vunpack.c.l.b16 %v593
        %v1723 = vunpack.c.h.b16 %v593
        %v1724 = vunpack.c.l.b16 %v594
        %v1725 = vunpack.c.h.b16 %v594
        %v1726 = vunpack.c.l.b16 %v595
        %v1727 = vunpack.c.h.b16 %v595
        %v1728 = vunpack.c.l.b16 %v596
        %v1729 = vunpack.c.h.b16 %v596
        %v1730 = vunpack.c.l.b16 %v597
        %v1731 = vunpack.c.h.b16 %v597
        %v1732 = vunpack.c.l.b16 %v598
        %v1733 = vunpack.c.h.b16 %v598
        %v1734 = vunpack.c.l.b16 %v599
        %v1735 = vunpack.c.h.b16 %v599
        %v1736 = vunpack.c.l.b16 %v600
        %v1737 = vunpack.c.h.b16 %v600
        %v1738 = vunpack.c.l.b16 %v601
        %v1739 = vunpack.c.h.b16 %v601
        %v1740 = vunpack.c.l.b16 %v602
        %v1741 = vunpack.c.h.b16 %v602
        %v1742 = vunpack.c.l.b16 %v603
        %v1743 = vunpack.c.h.b16 %v603
        %v1744 = vunpack.c.l.b16 %v604
        %v1745 = vunpack.c.h.b16 %v604
        %v1746 = vunpack.c.l.b16 %v605
        %v1747 = vunpack.c.h.b16 %v605
        %v1748 = vunpack.c.l.b16 %v606
        %v1749 = vunpack.c.h.b16 %v606
        %v1750 = vunpack.c.l.b16 %v607
        %v1751 = vunpack.c.h.b16 %v607
        %v1752 = vunpack.c.l.b16 %v608
        %v1753 = vunpack.c.h.b16 %v608
        %v1754 = vunpack.c.l.b16 %v609
        %v1755 = vunpack.c.h.b16 %v609
        %v1756 = vunpack.c.l.b16 %v610
        %v1757 = vunpack.c.h.b16 %v610
        %v1758 = vunpack.c.l.b16 %v611
        %v1759 = vunpack.c.h.b16 %v611
        %v1760 = vunpack.c.l.b16 %v612
        %v1761 = vunpack.c.h.b16 %v612
        %v1762 = vunpack.c.l.b16 %v613
        %v1763 = vunpack.c.h.b16 %v613
        %v1764 = vunpack.c.l.b16 %v614
        %v1765 = vunpack.c.h.b16 %v614
        %v1766 = vunpack.c.l.b16 %v615
        %v1767 = vunpack.c.h.b16 %v615
        %v1768 = vunpack.c.l.b16 %v616
        %v1769 = vunpack.c.h.b16 %v616
        %v1770 = vunpack.c.l.b16 %v617
        %v1771 = vunpack.c.h.b16 %v617
        %v1772 = vunpack.c.l.b16 %v618
        %v1773 = vunpack.c.h.b16 %v618
        %v1774 = vunpack.c.l.b16 %v619
        %v1775 = vunpack.c.h.b16 %v619
        %v1776 = vunpack.c.l.b16 %v620
        %v1777 = vunpack.c.h.b16 %v620
        %v1778 = vunpack.c.l.b16 %v621
        %v1779 = vunpack.c.h.b16 %v621
        %v1780 = vunpack.c.l.b16 %v622
        %v1781 = vunpack.c.h.b16 %v622
        %v1782 = vunpack.c.l.b16 %v623
        %v1783 = vunpack.c.h.b16 %v623
        %v1784 = vunpack.c.l.b16 %v624
        %v1785 = vunpack.c.h.b16 %v624
        %v1786 = vunpack.c.l.b16 %v625
        %v1787 = vunpack.c.h.b16 %v625
        %v1788 = vunpack.c.l.b16 %v626
        %v1789 = vunpack.c.h.b16 %v626
        %v1790 = vunpack.c.l.b16 %v627
        %v1791 = vunpack.c.h.b16 %v627
        %v1792 = vunpack.c.l.b16 %v628
        %v1793 = vunpack.c.h.b16 %v628
        %v1794 = vunpack.c.l.b16 %v629
        %v1795 = vunpack.c.h.b16 %v629
        %v1796 = vunpack.c.l.b16 %v630
        %v1797 = vunpack.c.h.b16 %v630
        %v1798 = vunpack.c.l.b16 %v631
        %v1799 = vunpack.c.h.b16 %v631
        %v1800 = vunpack.c.l.b16 %v632
        %v1801 = vunpack.c.h.b16 %v632
        %v1802 = vunpack.c.l.b16 %v633
        %v1803 = vunpack.c.h.b16 %v633
        %v1804 = vunpack.c.l.b16 %v634
        %v1805 = vunpack.c.h.b16 %v634
        %v1806 = vunpack.c.l.b16 %v635
        %v1807 = vunpack.c.h.b16 %v635
        %v1808 = vunpack.c.l.b16 %v636
        %v1809 = vunpack.c.h.b16 %v636
        %v1810 = vunpack.c.l.b16 %v637
        %v1811 = vunpack.c.h.b16 %v637
        %v1812 = vunpack.c.l.b16 %v638
        %v1813 = vunpack.c.h.b16 %v638
        %v1814 = vunpack.c.l.b16 %v639
        %v1815 = vunpack.c.h.b16 %v639
        %v1816 = vunpack.c.l.b16 %v640
        %v1817 = vunpack.c.h.b16 %v640
        %v1818 = vunpack.c.l.b16 %v641
        %v1819 = vunpack.c.h.b16 %v641
        %v1820 = vunpack.c.l.b16 %v642
        %v1821 = vunpack.c.h.b16 %v642
        %v1822 = vunpack.c.l.b16 %v643
        %v1823 = vunpack.c.h.b16 %v643
        %v1824 = vunpack.c.l.b16 %v644
        %v1825 = vunpack.c.h.b16 %v644
        %v1826 = vunpack.c.l.b16 %v645
        %v1827 = vunpack.c.h.b16 %v645
        %v1828 = vunpack.c.l.b16 %v646
        %v1829 = vunpack.c.h.b16 %v646
        %v1830 = vunpack.c.l.b16 %v647
        %v1831 = vunpack.c.h.b16 %v647
        %v1832 = vunpack.c.l.b16 %v648
        %v1833 = vunpack.c.h.b16 %v648
        %v1834 = vunpack.c.l.b16 %v649
        %v1835 = vunpack.c.h.b16 %v649
        %v1836 = vunpack.c.l.b16 %v650
        %v1837 = vunpack.c.h.b16 %v650
        %v1838 = vunpack.c.l.b16 %v651
        %v1839 = vunpack.c.h.b16 %v651
        %v1840 = vunpack.c.l.b16 %v652
        %v1841 = vunpack.c.h.b16 %v652
        %v1842 = vunpack.c.l.b16 %v653
        %v1843 = vunpack.c.h.b16 %v653
        %v1844 = vunpack.c.l.b16 %v654
        %v1845 = vunpack.c.h.b16 %v654
        %v1846 = vunpack.c.l.b16 %v655
        %v1847 = vunpack.c.h.b16 %v655
        %v1848 = vunpack.c.l.b16 %v656
        %v1849 = vunpack.c.h.b16 %v656
        %v1850 = vunpack.c.l.b16 %v657
        %v1851 = vunpack.c.h.b16 %v657
        %v1852 = vunpack.c.l.b16 %v658
        %v1853 = vunpack.c.h.b16 %v658
        %v1854 = vunpack.c.l.b16 %v659
        %v1855 = vunpack.c.h.b16 %v659
        %v1856 = vunpack.c.l.b16 %v660
        %v1857 = vunpack.c.h.b16 %v660
        %v1858 = vunpack.c.l.b16 %v661
        %v1859 = vunpack.c.h.b16 %v661
        %v1860 = vunpack.c.l.b16 %v662
        %v1861 = vunpack.c.h.b16 %v662
        %v1862 = vunpack.c.l.b16 %v663
        %v1863 = vunpack.c.h.b16 %v663
        %v1864 = vunpack.c.l.b16 %v664
        %v1865 = vunpack.c.h.b16 %v664
        %v1866 = vunpack.c.l.b16 %v665
        %v1867 = vunpack.c.h.b16 %v665
        %v1868 = vunpack.c.l.b16 %v666
        %v1869 = vunpack.c.h.b16 %v666
        %v1870 = vunpack.c.l.b16 %v667
        %v1871 = vunpack.c.h.b16 %v667
        %v1872 = vunpack.c.l.b16 %v668
        %v1873 = vunpack.c.h.b16 %v668
        %v1874 = vunpack.c.l.b16 %v669
        %v1875 = vunpack.c.h.b16 %v669
        %v1876 = vpack.c.b16 %v1116, %v1108
        %v1877 = vpack.c.b16 %v1117, %v1109
        %v1878 = vpack.c.b16 %v1118, %v1110
        %v1879 = vpack.c.b16 %v1119, %v1111
        %v1880 = vpack.c.b16 %v1120, %v1112
        %v1881 = vpack.c.b16 %v1121, %v1113
        %v1882 = vpack.c.b16 %v1122, %v1114
        %v1883 = vpack.c.b16 %v1123, %v1115
        %v1884 = vpack.c.b16 %v1132, %v1124
        %v1885 = vpack.c.b16 %v1133, %v1125
        %v1886 = vpack.c.b16 %v1134, %v1126
        %v1887 = vpack.c.b16 %v1135, %v1127
        %v1888 = vpack.c.b16 %v1136, %v1128
        %v1889 = vpack.c.b16 %v1137, %v1129
        %v1890 = vpack.c.b16 %v1138, %v1130
        %v1891 = vpack.c.b16 %v1139, %v1131
        %v1892 = vpack.c.b16 %v1148, %v1140
        %v1893 = vpack.c.b16 %v1149, %v1141
        %v1894 = vpack.c.b16 %v1150, %v1142
        %v1895 = vpack.c.b16 %v1151, %v1143
        %v1896 = vpack.c.b16 %v1152, %v1144
        %v1897 = vpack.c.b16 %v1153, %v1145
        %v1898 = vpack.c.b16 %v1154, %v1146
        %v1899 = vpack.c.b16 %v1155, %v1147
        %v1900 = vpack.c.b16 %v1164, %v1156
        %v1901 = vpack.c.b16 %v1165, %v1157
        %v1902 = vpack.c.b16 %v1166, %v1158
        %v1903 = vpack.c.b16 %v1167, %v1159
        %v1904 = vpack.c.b16 %v1168, %v1160
        %v1905 = vpack.c.b16 %v1169, %v1161
        %v1906 = vpack.c.b16 %v1170, %v1162
        %v1907 = vpack.c.b16 %v1171, %v1163
        %v1908 = vpack.c.b16 %v1180, %v1172
        %v1909 = vpack.c.b16 %v1181, %v1173
        %v1910 = vpack.c.b16 %v1182, %v1174
        %v1911 = vpack.c.b16 %v1183, %v1175
        %v1912 = vpack.c.b16 %v1184, %v1176
        %v1913 = vpack.c.b16 %v1185, %v1177
        %v1914 = vpack.c.b16 %v1186, %v1178
        %v1915 = vpack.c.b16 %v1187, %v1179
        %v1916 = vpack.c.b16 %v1196, %v1188
        %v1917 = vpack.c.b16 %v1197, %v1189
        %v1918 = vpack.c.b16 %v1198, %v1190
        %v1919 = vpack.c.b16 %v1199, %v1191
        %v1920 = vpack.c.b16 %v1200, %v1192
        %v1921 = vpack.c.b16 %v1201, %v1193
        %v1922 = vpack.c.b16 %v1202, %v1194
        %v1923 = vpack.c.b16 %v1203, %v1195
        %v1924 = vpack.c.b16 %v1212, %v1204
        %v1925 = vpack.c.b16 %v1213, %v1205
        %v1926 = vpack.c.b16 %v1214, %v1206
        %v1927 = vpack.c.b16 %v1215, %v1207
        %v1928 = vpack.c.b16 %v1216, %v1208
        %v1929 = vpack.c.b16 %v1217, %v1209
        %v1930 = vpack.c.b16 %v1218, %v1210
        %v1931 = vpack.c.b16 %v1219, %v1211
        %v1932 = vpack.c.b16 %v1228, %v1220
        %v1933 = vpack.c.b16 %v1229, %v1221
        %v1934 = vpack.c.b16 %v1230, %v1222
        %v1935 = vpack.c.b16 %v1231, %v1223
        %v1936 = vpack.c.b16 %v1232, %v1224
        %v1937 = vpack.c.b16 %v1233, %v1225
        %v1938 = vpack.c.b16 %v1234, %v1226
        %v1939 = vpack.c.b16 %v1235, %v1227
        %v1940 = vpack.c.b16 %v1244, %v1236
        %v1941 = vpack.c.b16 %v1245, %v1237
        %v1942 = vpack.c.b16 %v1246, %v1238
        %v1943 = vpack.c.b16 %v1247, %v1239
        %v1944 = vpack.c.b16 %v1248, %v1240
        %v1945 = vpack.c.b16 %v1249, %v1241
        %v1946 = vpack.c.b16 %v1250, %v1242
        %v1947 = vpack.c.b16 %v1251, %v1243
        %v1948 = vpack.c.b16 %v1260, %v1252
        %v1949 = vpack.c.b16 %v1261, %v1253
        %v1950 = vpack.c.b16 %v1262, %v1254
        %v1951 = vpack.c.b16 %v1263, %v1255
        %v1952 = vpack.c.b16 %v1264, %v1256
        %v1953 = vpack.c.b16 %v1265, %v1257
        %v1954 = vpack.c.b16 %v1266, %v1258
        %v1955 = vpack.c.b16 %v1267, %v1259
        %v1956 = vpack.c.b16 %v1276, %v1268
        %v1957 = vpack.c.b16 %v1277, %v1269
        %v1958 = vpack.c.b16 %v1278, %v1270
        %v1959 = vpack.c.b16 %v1279, %v1271
        %v1960 = vpack.c.b16 %v1280, %v1272
        %v1961 = vpack.c.b16 %v1281, %v1273
        %v1962 = vpack.c.b16 %v1282, %v1274
        %v1963 = vpack.c.b16 %v1283, %v1275
        %v1964 = vpack.c.b16 %v1292, %v1284
        %v1965 = vpack.c.b16 %v1293, %v1285
        %v1966 = vpack.c.b16 %v1294, %v1286
        %v1967 = vpack.c.b16 %v1295, %v1287
        %v1968 = vpack.c.b16 %v1296, %v1288
        %v1969 = vpack.c.b16 %v1297, %v1289
        %v1970 = vpack.c.b16 %v1298, %v1290
        %v1971 = vpack.c.b16 %v1299, %v1291
        %v1972 = vpack.c.b16 %v1308, %v1300
        %v1973 = vpack.c.b16 %v1309, %v1301
        %v1974 = vpack.c.b16 %v1310, %v1302
        %v1975 = vpack.c.b16 %v1311, %v1303
        %v1976 = vpack.c.b16 %v1312, %v1304
        %v1977 = vpack.c.b16 %v1313, %v1305
        %v1978 = vpack.c.b16 %v1314, %v1306
        %v1979 = vpack.c.b16 %v1315, %v1307
        %v1980 = vpack.c.b16 %v1324, %v1316
        %v1981 = vpack.c.b16 %v1325, %v1317
        %v1982 = vpack.c.b16 %v1326, %v1318
        %v1983 = vpack.c.b16 %v1327, %v1319
        %v1984 = vpack.c.b16 %v1328, %v1320
        %v1985 = vpack.c.b16 %v1329, %v1321
        %v1986 = vpack.c.b16 %v1330, %v1322
        %v1987 = vpack.c.b16 %v1331, %v1323
        %v1988 = vpack.c.b16 %v1340, %v1332
        %v1989 = vpack.c.b16 %v1341, %v1333
        %v1990 = vpack.c.b16 %v1342, %v1334
        %v1991 = vpack.c.b16 %v1343, %v1335
        %v1992 = vpack.c.b16 %v1344, %v1336
        %v1993 = vpack.c.b16 %v1345, %v1337
        %v1994 = vpack.c.b16 %v1346, %v1338
        %v1995 = vpack.c.b16 %v1347, %v1339
        %v1996 = vpack.c.b16 %v1356, %v1348
        %v1997 = vpack.c.b16 %v1357, %v1349
        %v1998 = vpack.c.b16 %v1358, %v1350
        %v1999 = vpack.c.b16 %v1359, %v1351
        %v2000 = vpack.c.b16 %v1360, %v1352
        %v2001 = vpack.c.b16 %v1361, %v1353
        %v2002 = vpack.c.b16 %v1362, %v1354
        %v2003 = vpack.c.b16 %v1363, %v1355
        %v2004 = vpack.c.b16 %v1372, %v1364
        %v2005 = vpack.c.b16 %v1373, %v1365
        %v2006 = vpack.c.b16 %v1374, %v1366
        %v2007 = vpack.c.b16 %v1375, %v1367
        %v2008 = vpack.c.b16 %v1376, %v1368
        %v2009 = vpack.c.b16 %v1377, %v1369
        %v2010 = vpack.c.b16 %v1378, %v1370
        %v2011 = vpack.c.b16 %v1379, %v1371
        %v2012 = vpack.c.b16 %v1388, %v1380
        %v2013 = vpack.c.b16 %v1389, %v1381
        %v2014 = vpack.c.b16 %v1390, %v1382
        %v2015 = vpack.c.b16 %v1391, %v1383
        %v2016 = vpack.c.b16 %v1392, %v1384
        %v2017 = vpack.c.b16 %v1393, %v1385
        %v2018 = vpack.c.b16 %v1394, %v1386
        %v2019 = vpack.c.b16 %v1395, %v1387
        %v2020 = vpack.c.b16 %v1404, %v1396
        %v2021 = vpack.c.b16 %v1405, %v1397
        %v2022 = vpack.c.b16 %v1406, %v1398
        %v2023 = vpack.c.b16 %v1407, %v1399
        %v2024 = vpack.c.b16 %v1408, %v1400
        %v2025 = vpack.c.b16 %v1409, %v1401
        %v2026 = vpack.c.b16 %v1410, %v1402
        %v2027 = vpack.c.b16 %v1411, %v1403
        %v2028 = vpack.c.b16 %v1420, %v1412
        %v2029 = vpack.c.b16 %v1421, %v1413
        %v2030 = vpack.c.b16 %v1422, %v1414
        %v2031 = vpack.c.b16 %v1423, %v1415
        %v2032 = vpack.c.b16 %v1424, %v1416
        %v2033 = vpack.c.b16 %v1425, %v1417
        %v2034 = vpack.c.b16 %v1426, %v1418
        %v2035 = vpack.c.b16 %v1427, %v1419
        %v2036 = vpack.c.b16 %v1436, %v1428
        %v2037 = vpack.c.b16 %v1437, %v1429
        %v2038 = vpack.c.b16 %v1438, %v1430
        %v2039 = vpack.c.b16 %v1439, %v1431
        %v2040 = vpack.c.b16 %v1440, %v1432
        %v2041 = vpack.c.b16 %v1441, %v1433
        %v2042 = vpack.c.b16 %v1442, %v1434
        %v2043 = vpack.c.b16 %v1443, %v1435
        %v2044 = vpack.c.b16 %v1452, %v1444
        %v2045 = vpack.c.b16 %v1453, %v1445
        %v2046 = vpack.c.b16 %v1454, %v1446
        %v2047 = vpack.c.b16 %v1455, %v1447
        %v2048 = vpack.c.b16 %v1456, %v1448
        %v2049 = vpack.c.b16 %v1457, %v1449
        %v2050 = vpack.c.b16 %v1458, %v1450
        %v2051 = vpack.c.b16 %v1459, %v1451
        %v2052 = vpack.c.b16 %v1468, %v1460
        %v2053 = vpack.c.b16 %v1469, %v1461
        %v2054 = vpack.c.b16 %v1470, %v1462
        %v2055 = vpack.c.b16 %v1471, %v1463
        %v2056 = vpack.c.b16 %v1472, %v1464
        %v2057 = vpack.c.b16 %v1473, %v1465
        %v2058 = vpack.c.b16 %v1474, %v1466
        %v2059 = vpack.c.b16 %v1475, %v1467
        %v2060 = vpack.c.b16 %v1484, %v1476
        %v2061 = vpack.c.b16 %v1485, %v1477
        %v2062 = vpack.c.b16 %v1486, %v1478
        %v2063 = vpack.c.b16 %v1487, %v1479
        %v2064 = vpack.c.b16 %v1488, %v1480
        %v2065 = vpack.c.b16 %v1489, %v1481
        %v2066 = vpack.c.b16 %v1490, %v1482
        %v2067 = vpack.c.b16 %v1491, %v1483
        %v2068 = vpack.c.b16 %v1500, %v1492
        %v2069 = vpack.c.b16 %v1501, %v1493
        %v2070 = vpack.c.b16 %v1502, %v1494
        %v2071 = vpack.c.b16 %v1503, %v1495
        %v2072 = vpack.c.b16 %v1504, %v1496
        %v2073 = vpack.c.b16 %v1505, %v1497
        %v2074 = vpack.c.b16 %v1506, %v1498
        %v2075 = vpack.c.b16 %v1507, %v1499
        %v2076 = vpack.c.b16 %v1516, %v1508
        %v2077 = vpack.c.b16 %v1517, %v1509
        %v2078 = vpack.c.b16 %v1518, %v1510
        %v2079 = vpack.c.b16 %v1519, %v1511
        %v2080 = vpack.c.b16 %v1520, %v1512
        %v2081 = vpack.c.b16 %v1521, %v1513
        %v2082 = vpack.c.b16 %v1522, %v1514
        %v2083 = vpack.c.b16 %v1523, %v1515
        %v2084 = vpack.c.b16 %v1532, %v1524
        %v2085 = vpack.c.b16 %v1533, %v1525
        %v2086 = vpack.c.b16 %v1534, %v1526
        %v2087 = vpack.c.b16 %v1535, %v1527
        %v2088 = vpack.c.b16 %v1536, %v1528
        %v2089 = vpack.c.b16 %v1537, %v1529
        %v2090 = vpack.c.b16 %v1538, %v1530
        %v2091 = vpack.c.b16 %v1539, %v1531
        %v2092 = vpack.c.b16 %v1548, %v1540
        %v2093 = vpack.c.b16 %v1549, %v1541
        %v2094 = vpack.c.b16 %v1550, %v1542
        %v2095 = vpack.c.b16 %v1551, %v1543
        %v2096 = vpack.c.b16 %v1552, %v1544
        %v2097 = vpack.c.b16 %v1553, %v1545
        %v2098 = vpack.c.b16 %v1554, %v1546
        %v2099 = vpack.c.b16 %v1555, %v1547
        %v2100 = vpack.c.b16 %v1564, %v1556
        %v2101 = vpack.c.b16 %v1565, %v1557
        %v2102 = vpack.c.b16 %v1566, %v1558
        %v2103 = vpack.c.b16 %v1567, %v1559
        %v2104 = vpack.c.b16 %v1568, %v1560
        %v2105 = vpack.c.b16 %v1569, %v1561
        %v2106 = vpack.c.b16 %v1570, %v1562
        %v2107 = vpack.c.b16 %v1571, %v1563
        %v2108 = vpack.c.b16 %v1580, %v1572
        %v2109 = vpack.c.b16 %v1581, %v1573
        %v2110 = vpack.c.b16 %v1582, %v1574
        %v2111 = vpack.c.b16 %v1583, %v1575
        %v2112 = vpack.c.b16 %v1584, %v1576
        %v2113 = vpack.c.b16 %v1585, %v1577
        %v2114 = vpack.c.b16 %v1586, %v1578
        %v2115 = vpack.c.b16 %v1587, %v1579
        %v2116 = vpack.c.b16 %v1596, %v1588
        %v2117 = vpack.c.b16 %v1597, %v1589
        %v2118 = vpack.c.b16 %v1598, %v1590
        %v2119 = vpack.c.b16 %v1599, %v1591
        %v2120 = vpack.c.b16 %v1600, %v1592
        %v2121 = vpack.c.b16 %v1601, %v1593
        %v2122 = vpack.c.b16 %v1602, %v1594
        %v2123 = vpack.c.b16 %v1603, %v1595
        %v2124 = vpack.c.b16 %v1612, %v1604
        %v2125 = vpack.c.b16 %v1613, %v1605
        %v2126 = vpack.c.b16 %v1614, %v1606
        %v2127 = vpack.c.b16 %v1615, %v1607
        %v2128 = vpack.c.b16 %v1616, %v1608
        %v2129 = vpack.c.b16 %v1617, %v1609
        %v2130 = vpack.c.b16 %v1618, %v1610
        %v2131 = vpack.c.b16 %v1619, %v1611
        %v2132 = vpack.c.b16 %v1628, %v1620
        %v2133 = vpack.c.b16 %v1629, %v1621
        %v2134 = vpack.c.b16 %v1630, %v1622
        %v2135 = vpack.c.b16 %v1631, %v1623
        %v2136 = vpack.c.b16 %v1632, %v1624
        %v2137 = vpack.c.b16 %v1633, %v1625
        %v2138 = vpack.c.b16 %v1634, %v1626
        %v2139 = vpack.c.b16 %v1635, %v1627
        %v2140 = vpack.c.b16 %v1644, %v1636
        %v2141 = vpack.c.b16 %v1645, %v1637
        %v2142 = vpack.c.b16 %v1646, %v1638
        %v2143 = vpack.c.b16 %v1647, %v1639
        %v2144 = vpack.c.b16 %v1648, %v1640
        %v2145 = vpack.c.b16 %v1649, %v1641
        %v2146 = vpack.c.b16 %v1650, %v1642
        %v2147 = vpack.c.b16 %v1651, %v1643
        %v2148 = vpack.c.b16 %v1660, %v1652
        %v2149 = vpack.c.b16 %v1661, %v1653
        %v2150 = vpack.c.b16 %v1662, %v1654
        %v2151 = vpack.c.b16 %v1663, %v1655
        %v2152 = vpack.c.b16 %v1664, %v1656
        %v2153 = vpack.c.b16 %v1665, %v1657
        %v2154 = vpack.c.b16 %v1666, %v1658
        %v2155 = vpack.c.b16 %v1667, %v1659
        %v2156 = vpack.c.b16 %v1676, %v1668
        %v2157 = vpack.c.b16 %v1677, %v1669
        %v2158 = vpack.c.b16 %v1678, %v1670
        %v2159 = vpack.c.b16 %v1679, %v1671
        %v2160 = vpack.c.b16 %v1680, %v1672
        %v2161 = vpack.c.b16 %v1681, %v1673
        %v2162 = vpack.c.b16 %v1682, %v1674
        %v2163 = vpack.c.b16 %v1683, %v1675
        %v2164 = vpack.c.b16 %v1692, %v1684
        %v2165 = vpack.c.b16 %v1693, %v1685
        %v2166 = vpack.c.b16 %v1694, %v1686
        %v2167 = vpack.c.b16 %v1695, %v1687
        %v2168 = vpack.c.b16 %v1696, %v1688
        %v2169 = vpack.c.b16 %v1697, %v1689
        %v2170 = vpack.c.b16 %v1698, %v1690
        %v2171 = vpack.c.b16 %v1699, %v1691
        %v2172 = vpack.c.b16 %v1708, %v1700
        %v2173 = vpack.c.b16 %v1709, %v1701
        %v2174 = vpack.c.b16 %v1710, %v1702
        %v2175 = vpack.c.b16 %v1711, %v1703
        %v2176 = vpack.c.b16 %v1712, %v1704
        %v2177 = vpack.c.b16 %v1713, %v1705
        %v2178 = vpack.c.b16 %v1714, %v1706
        %v2179 = vpack.c.b16 %v1715, %v1707
        %v2180 = vpack.c.b16 %v1724, %v1716
        %v2181 = vpack.c.b16 %v1725, %v1717
        %v2182 = vpack.c.b16 %v1726, %v1718
        %v2183 = vpack.c.b16 %v1727, %v1719
        %v2184 = vpack.c.b16 %v1728, %v1720
        %v2185 = vpack.c.b16 %v1729, %v1721
        %v2186 = vpack.c.b16 %v1730, %v1722
        %v2187 = vpack.c.b16 %v1731, %v1723
        %v2188 = vpack.c.b16 %v1740, %v1732
        %v2189 = vpack.c.b16 %v1741, %v1733
        %v2190 = vpack.c.b16 %v1742, %v1734
        %v2191 = vpack.c.b16 %v1743, %v1735
        %v2192 = vpack.c.b16 %v1744, %v1736
        %v2193 = vpack.c.b16 %v1745, %v1737
        %v2194 = vpack.c.b16 %v1746, %v1738
        %v2195 = vpack.c.b16 %v1747, %v1739
        %v2196 = vpack.c.b16 %v1756, %v1748
        %v2197 = vpack.c.b16 %v1757, %v1749
        %v2198 = vpack.c.b16 %v1758, %v1750
        %v2199 = vpack.c.b16 %v1759, %v1751
        %v2200 = vpack.c.b16 %v1760, %v1752
        %v2201 = vpack.c.b16 %v1761, %v1753
        %v2202 = vpack.c.b16 %v1762, %v1754
        %v2203 = vpack.c.b16 %v1763, %v1755
        %v2204 = vpack.c.b16 %v1772, %v1764
        %v2205 = vpack.c.b16 %v1773, %v1765
        %v2206 = vpack.c.b16 %v1774, %v1766
        %v2207 = vpack.c.b16 %v1775, %v1767
        %v2208 = vpack.c.b16 %v1776, %v1768
        %v2209 = vpack.c.b16 %v1777, %v1769
        %v2210 = vpack.c.b16 %v1778, %v1770
        %v2211 = vpack.c.b16 %v1779, %v1771
        %v2212 = vpack.c.b16 %v1788, %v1780
        %v2213 = vpack.c.b16 %v1789, %v1781
        %v2214 = vpack.c.b16 %v1790, %v1782
        %v2215 = vpack.c.b16 %v1791, %v1783
        %v2216 = vpack.c.b16 %v1792, %v1784
        %v2217 = vpack.c.b16 %v1793, %v1785
        %v2218 = vpack.c.b16 %v1794, %v1786
        %v2219 = vpack.c.b16 %v1795, %v1787
        %v2220 = vpack.c.b16 %v1804, %v1796
        %v2221 = vpack.c.b16 %v1805, %v1797
        %v2222 = vpack.c.b16 %v1806, %v1798
        %v2223 = vpack.c.b16 %v1807, %v1799
        %v2224 = vpack.c.b16 %v1808, %v1800
        %v2225 = vpack.c.b16 %v1809, %v1801
        %v2226 = vpack.c.b16 %v1810, %v1802
        %v2227 = vpack.c.b16 %v1811, %v1803
        %v2228 = vpack.c.b16 %v1820, %v1812
        %v2229 = vpack.c.b16 %v1821, %v1813
        %v2230 = vpack.c.b16 %v1822, %v1814
        %v2231 = vpack.c.b16 %v1823, %v1815
        %v2232 = vpack.c.b16 %v1824, %v1816
        %v2233 = vpack.c.b16 %v1825, %v1817
        %v2234 = vpack.c.b16 %v1826, %v1818
        %v2235 = vpack.c.b16 %v1827, %v1819
        %v2236 = vpack.c.b16 %v1836, %v1828
        %v2237 = vpack.c.b16 %v1837, %v1829
        %v2238 = vpack.c.b16 %v1838, %v1830
        %v2239 = vpack.c.b16 %v1839, %v1831
        %v2240 = vpack.c.b16 %v1840, %v1832
        %v2241 = vpack.c.b16 %v1841, %v1833
        %v2242 = vpack.c.b16 %v1842, %v1834
        %v2243 = vpack.c.b16 %v1843, %v1835
        %v2244 = vpack.c.b16 %v1852, %v1844
        %v2245 = vpack.c.b16 %v1853, %v1845
        %v2246 = vpack.c.b16 %v1854, %v1846
        %v2247 = vpack.c.b16 %v1855, %v1847
        %v2248 = vpack.c.b16 %v1856, %v1848
        %v2249 = vpack.c.b16 %v1857, %v1849
        %v2250 = vpack.c.b16 %v1858, %v1850
        %v2251 = vpack.c.b16 %v1859, %v1851
        %v2252 = vpack.c.b16 %v1868, %v1860
        %v2253 = vpack.c.b16 %v1869, %v1861
        %v2254 = vpack.c.b16 %v1870, %v1862
        %v2255 = vpack.c.b16 %v1871, %v1863
        %v2256 = vpack.c.b16 %v1872, %v1864
        %v2257 = vpack.c.b16 %v1873, %v1865
        %v2258 = vpack.c.b16 %v1874, %v1866
        %v2259 = vpack.c.b16 %v1875, %v1867
        %2644 = vmatprep.subr.bf16.mxu0 %v1877
        %2645 = vmatpush1.bf16.msra.mxu0 %v1876
        %2646 = vmatprep.subr.bf16.mxu0 %v1885
        %2647 = vmatpush1.bf16.msra.mxu0 %v1884
        %2648 = vmatprep.subr.bf16.mxu0 %v1893
        %2649 = vmatpush1.bf16.msra.mxu0 %v1892
        %2650 = vmatprep.subr.bf16.mxu0 %v1901
        %2651 = vmatpush1.bf16.msra.mxu0 %v1900
        %2652 = vmatprep.subr.bf16.mxu0 %v1909
        %2653 = vmatpush1.bf16.msra.mxu0 %v1908
        %2654 = vmatprep.subr.bf16.mxu0 %v1917
        %2655 = vmatpush1.bf16.msra.mxu0 %v1916
        %2656 = vmatprep.subr.bf16.mxu0 %v1925
        %2657 = vmatpush1.bf16.msra.mxu0 %v1924
        %2658 = vmatprep.subr.bf16.mxu0 %v1933
        %2659 = vmatpush1.bf16.msra.mxu0 %v1932
        %2660 = vmatprep.subr.bf16.mxu0 %v1941
        %2661 = vmatpush1.bf16.msra.mxu0 %v1940
        %2662 = vmatprep.subr.bf16.mxu0 %v1949
        %2663 = vmatpush1.bf16.msra.mxu0 %v1948
        %2664 = vmatprep.subr.bf16.mxu0 %v1957
        %2665 = vmatpush1.bf16.msra.mxu0 %v1956
        %2666 = vmatprep.subr.bf16.mxu0 %v1965
        %2667 = vmatpush1.bf16.msra.mxu0 %v1964
        %2668 = vmatprep.subr.bf16.mxu0 %v1973
        %2669 = vmatpush1.bf16.msra.mxu0 %v1972
        %2670 = vmatprep.subr.bf16.mxu0 %v1981
        %2671 = vmatpush1.bf16.msra.mxu0 %v1980
        %2672 = vmatprep.subr.bf16.mxu0 %v1989
        %2673 = vmatpush1.bf16.msra.mxu0 %v1988
        %2674 = vmatprep.subr.bf16.mxu0 %v1997
        %2675 = vmatpush1.bf16.msra.mxu0 %v1996
        %2676 = vmatprep.mubr.bf16.mxu0 %v708
        %2677 = vmatmul.mubr.bf16.gmra.mrb[0].mxu0 %v694
        %v2678 = vpop.f32.mrb[0].mxu0
        %v2679 = vadd.f32 0.0, %v2678
        %v2680 = vpop.f32.mrb[0].mxu0
        %v2681 = vadd.f32 0.0, %v2680
        %v2682 = vpop.f32.mrb[0].mxu0
        %v2683 = vpop.f32.mrb[0].mxu0
        %2684 = vdwg.mxu0
        %2685 = vmatprep.subr.bf16.mxu0 %v2005
        %2686 = vmatpush1.bf16.msra.mxu0 %v2004
        %2687 = vmatprep.subr.bf16.mxu0 %v2013
        %2688 = vmatpush1.bf16.msra.mxu0 %v2012
        %2689 = vmatprep.subr.bf16.mxu0 %v2021
        %2690 = vmatpush1.bf16.msra.mxu0 %v2020
        %2691 = vmatprep.subr.bf16.mxu0 %v2029
        %2692 = vmatpush1.bf16.msra.mxu0 %v2028
        %2693 = vmatprep.subr.bf16.mxu0 %v2037
        %2694 = vmatpush1.bf16.msra.mxu0 %v2036
        %2695 = vmatprep.subr.bf16.mxu0 %v2045
        %2696 = vmatpush1.bf16.msra.mxu0 %v2044
        %2697 = vmatprep.subr.bf16.mxu0 %v2053
        %2698 = vmatpush1.bf16.msra.mxu0 %v2052
        %2699 = vmatprep.subr.bf16.mxu0 %v2061
        %2700 = vmatpush1.bf16.msra.mxu0 %v2060
        %2701 = vmatprep.subr.bf16.mxu0 %v2069
        %2702 = vmatpush1.bf16.msra.mxu0 %v2068
        %2703 = vmatprep.subr.bf16.mxu0 %v2077
        %2704 = vmatpush1.bf16.msra.mxu0 %v2076
        %2705 = vmatprep.subr.bf16.mxu0 %v2085
        %2706 = vmatpush1.bf16.msra.mxu0 %v2084
        %2707 = vmatprep.subr.bf16.mxu0 %v2093
        %2708 = vmatpush1.bf16.msra.mxu0 %v2092
        %2709 = vmatprep.subr.bf16.mxu0 %v2101
        %2710 = vmatpush1.bf16.msra.mxu0 %v2100
        %2711 = vmatprep.subr.bf16.mxu0 %v2109
        %2712 = vmatpush1.bf16.msra.mxu0 %v2108
        %2713 = vmatprep.subr.bf16.mxu0 %v2117
        %2714 = vmatpush1.bf16.msra.mxu0 %v2116
        %2715 = vmatprep.subr.bf16.mxu0 %v2125
        %2716 = vmatpush1.bf16.msra.mxu0 %v2124
        %2717 = vmatprep.mubr.bf16.mxu0 %v717
        %2718 = vmatmul.mubr.bf16.gmra.mrb[0].mxu0 %v716
        %v2719 = vpop.f32.mrb[0].mxu0
        %v2720 = vadd.f32 %v2679, %v2719
        %v2721 = vpop.f32.mrb[0].mxu0
        %v2722 = vadd.f32 %v2681, %v2721
        %v2723 = vpop.f32.mrb[0].mxu0
        %v2724 = vpop.f32.mrb[0].mxu0
        %2725 = vdwg.mxu0
        %2726 = vmatprep.subr.bf16.mxu0 %v2133
        %2727 = vmatpush1.bf16.msra.mxu0 %v2132
        %2728 = vmatprep.subr.bf16.mxu0 %v2141
        %2729 = vmatpush1.bf16.msra.mxu0 %v2140
        %2730 = vmatprep.subr.bf16.mxu0 %v2149
        %2731 = vmatpush1.bf16.msra.mxu0 %v2148
        %2732 = vmatprep.subr.bf16.mxu0 %v2157
        %2733 = vmatpush1.bf16.msra.mxu0 %v2156
        %2734 = vmatprep.subr.bf16.mxu0 %v2165
        %2735 = vmatpush1.bf16.msra.mxu0 %v2164
        %2736 = vmatprep.subr.bf16.mxu0 %v2173
        %2737 = vmatpush1.bf16.msra.mxu0 %v2172
        %2738 = vmatprep.subr.bf16.mxu0 %v2181
        %2739 = vmatpush1.bf16.msra.mxu0 %v2180
        %2740 = vmatprep.subr.bf16.mxu0 %v2189
        %2741 = vmatpush1.bf16.msra.mxu0 %v2188
        %2742 = vmatprep.subr.bf16.mxu0 %v2197
        %2743 = vmatpush1.bf16.msra.mxu0 %v2196
        %2744 = vmatprep.subr.bf16.mxu0 %v2205
        %2745 = vmatpush1.bf16.msra.mxu0 %v2204
        %2746 = vmatprep.subr.bf16.mxu0 %v2213
        %2747 = vmatpush1.bf16.msra.mxu0 %v2212
        %2748 = vmatprep.subr.bf16.mxu0 %v2221
        %2749 = vmatpush1.bf16.msra.mxu0 %v2220
        %2750 = vmatprep.subr.bf16.mxu0 %v2229
        %2751 = vmatpush1.bf16.msra.mxu0 %v2228
        %2752 = vmatprep.subr.bf16.mxu0 %v2237
        %2753 = vmatpush1.bf16.msra.mxu0 %v2236
        %2754 = vmatprep.subr.bf16.mxu0 %v2245
        %2755 = vmatpush1.bf16.msra.mxu0 %v2244
        %2756 = vmatprep.subr.bf16.mxu0 %v2253
        %2757 = vmatpush1.bf16.msra.mxu0 %v2252
        %2758 = vmatprep.mubr.bf16.mxu0 %v715
        %2759 = vmatmul.mubr.bf16.gmra.mrb[0].mxu0 %v701
        %v2760 = vpop.f32.mrb[0].mxu0
        %v2761 = vadd.f32 %v2720, %v2760
        %v2762 = vpop.f32.mrb[0].mxu0
        %v2763 = vadd.f32 %v2722, %v2762
        %v2764 = vpop.f32.mrb[0].mxu0
        %v2765 = vpop.f32.mrb[0].mxu0
        %2766 = vdwg.mxu0
        %2767 = vmatprep.subr.bf16.mxu0 %v1879
        %2768 = vmatpush1.bf16.msra.mxu0 %v1878
        %2769 = vmatprep.subr.bf16.mxu0 %v1887
        %2770 = vmatpush1.bf16.msra.mxu0 %v1886
        %2771 = vmatprep.subr.bf16.mxu0 %v1895
        %2772 = vmatpush1.bf16.msra.mxu0 %v1894
        %2773 = vmatprep.subr.bf16.mxu0 %v1903
        %2774 = vmatpush1.bf16.msra.mxu0 %v1902
        %2775 = vmatprep.subr.bf16.mxu0 %v1911
        %2776 = vmatpush1.bf16.msra.mxu0 %v1910
        %2777 = vmatprep.subr.bf16.mxu0 %v1919
        %2778 = vmatpush1.bf16.msra.mxu0 %v1918
        %2779 = vmatprep.subr.bf16.mxu0 %v1927
        %2780 = vmatpush1.bf16.msra.mxu0 %v1926
        %2781 = vmatprep.subr.bf16.mxu0 %v1935
        %2782 = vmatpush1.bf16.msra.mxu0 %v1934
        %2783 = vmatprep.subr.bf16.mxu0 %v1943
        %2784 = vmatpush1.bf16.msra.mxu0 %v1942
        %2785 = vmatprep.subr.bf16.mxu0 %v1951
        %2786 = vmatpush1.bf16.msra.mxu0 %v1950
        %2787 = vmatprep.subr.bf16.mxu0 %v1959
        %2788 = vmatpush1.bf16.msra.mxu0 %v1958
        %2789 = vmatprep.subr.bf16.mxu0 %v1967
        %2790 = vmatpush1.bf16.msra.mxu0 %v1966
        %2791 = vmatprep.subr.bf16.mxu0 %v1975
        %2792 = vmatpush1.bf16.msra.mxu0 %v1974
        %2793 = vmatprep.subr.bf16.mxu0 %v1983
        %2794 = vmatpush1.bf16.msra.mxu0 %v1982
        %2795 = vmatprep.subr.bf16.mxu0 %v1991
        %2796 = vmatpush1.bf16.msra.mxu0 %v1990
        %2797 = vmatprep.subr.bf16.mxu0 %v1999
        %2798 = vmatpush1.bf16.msra.mxu0 %v1998
        %2799 = vmatprep.mubr.bf16.mxu0 %v708
        %2800 = vmatmul.mubr.bf16.gmra.mrb[0].mxu0 %v694
        %v2801 = vpop.f32.mrb[0].mxu0
        %v2802 = vadd.f32 0.0, %v2801
        %v2803 = vpop.f32.mrb[0].mxu0
        %v2804 = vadd.f32 0.0, %v2803
        %v2805 = vpop.f32.mrb[0].mxu0
        %v2806 = vpop.f32.mrb[0].mxu0
        %2807 = vdwg.mxu0
        %2808 = vmatprep.subr.bf16.mxu0 %v2007
        %2809 = vmatpush1.bf16.msra.mxu0 %v2006
        %2810 = vmatprep.subr.bf16.mxu0 %v2015
        %2811 = vmatpush1.bf16.msra.mxu0 %v2014
        %2812 = vmatprep.subr.bf16.mxu0 %v2023
        %2813 = vmatpush1.bf16.msra.mxu0 %v2022
        %2814 = vmatprep.subr.bf16.mxu0 %v2031
        %2815 = vmatpush1.bf16.msra.mxu0 %v2030
        %2816 = vmatprep.subr.bf16.mxu0 %v2039
        %2817 = vmatpush1.bf16.msra.mxu0 %v2038
        %2818 = vmatprep.subr.bf16.mxu0 %v2047
        %2819 = vmatpush1.bf16.msra.mxu0 %v2046
        %2820 = vmatprep.subr.bf16.mxu0 %v2055
        %2821 = vmatpush1.bf16.msra.mxu0 %v2054
        %2822 = vmatprep.subr.bf16.mxu0 %v2063
        %2823 = vmatpush1.bf16.msra.mxu0 %v2062
        %2824 = vmatprep.subr.bf16.mxu0 %v2071
        %2825 = vmatpush1.bf16.msra.mxu0 %v2070
        %2826 = vmatprep.subr.bf16.mxu0 %v2079
        %2827 = vmatpush1.bf16.msra.mxu0 %v2078
        %2828 = vmatprep.subr.bf16.mxu0 %v2087
        %2829 = vmatpush1.bf16.msra.mxu0 %v2086
        %2830 = vmatprep.subr.bf16.mxu0 %v2095
        %2831 = vmatpush1.bf16.msra.mxu0 %v2094
        %2832 = vmatprep.subr.bf16.mxu0 %v2103
        %2833 = vmatpush1.bf16.msra.mxu0 %v2102
        %2834 = vmatprep.subr.bf16.mxu0 %v2111
        %2835 = vmatpush1.bf16.msra.mxu0 %v2110
        %2836 = vmatprep.subr.bf16.mxu0 %v2119
        %2837 = vmatpush1.bf16.msra.mxu0 %v2118
        %2838 = vmatprep.subr.bf16.mxu0 %v2127
        %2839 = vmatpush1.bf16.msra.mxu0 %v2126
        %2840 = vmatprep.mubr.bf16.mxu0 %v717
        %2841 = vmatmul.mubr.bf16.gmra.mrb[0].mxu0 %v716
        %v2842 = vpop.f32.mrb[0].mxu0
        %v2843 = vadd.f32 %v2802, %v2842
        %v2844 = vpop.f32.mrb[0].mxu0
        %v2845 = vadd.f32 %v2804, %v2844
        %v2846 = vpop.f32.mrb[0].mxu0
        %v2847 = vpop.f32.mrb[0].mxu0
        %2848 = vdwg.mxu0
        %2849 = vmatprep.subr.bf16.mxu0 %v2135
        %2850 = vmatpush1.bf16.msra.mxu0 %v2134
        %2851 = vmatprep.subr.bf16.mxu0 %v2143
        %2852 = vmatpush1.bf16.msra.mxu0 %v2142
        %2853 = vmatprep.subr.bf16.mxu0 %v2151
        %2854 = vmatpush1.bf16.msra.mxu0 %v2150
        %2855 = vmatprep.subr.bf16.mxu0 %v2159
        %2856 = vmatpush1.bf16.msra.mxu0 %v2158
        %2857 = vmatprep.subr.bf16.mxu0 %v2167
        %2858 = vmatpush1.bf16.msra.mxu0 %v2166
        %2859 = vmatprep.subr.bf16.mxu0 %v2175
        %2860 = vmatpush1.bf16.msra.mxu0 %v2174
        %2861 = vmatprep.subr.bf16.mxu0 %v2183
        %2862 = vmatpush1.bf16.msra.mxu0 %v2182
        %2863 = vmatprep.subr.bf16.mxu0 %v2191
        %2864 = vmatpush1.bf16.msra.mxu0 %v2190
        %2865 = vmatprep.subr.bf16.mxu0 %v2199
        %2866 = vmatpush1.bf16.msra.mxu0 %v2198
        %2867 = vmatprep.subr.bf16.mxu0 %v2207
        %2868 = vmatpush1.bf16.msra.mxu0 %v2206
        %2869 = vmatprep.subr.bf16.mxu0 %v2215
        %2870 = vmatpush1.bf16.msra.mxu0 %v2214
        %2871 = vmatprep.subr.bf16.mxu0 %v2223
        %2872 = vmatpush1.bf16.msra.mxu0 %v2222
        %2873 = vmatprep.subr.bf16.mxu0 %v2231
        %2874 = vmatpush1.bf16.msra.mxu0 %v2230
        %2875 = vmatprep.subr.bf16.mxu0 %v2239
        %2876 = vmatpush1.bf16.msra.mxu0 %v2238
        %2877 = vmatprep.subr.bf16.mxu0 %v2247
        %2878 = vmatpush1.bf16.msra.mxu0 %v2246
        %2879 = vmatprep.subr.bf16.mxu0 %v2255
        %2880 = vmatpush1.bf16.msra.mxu0 %v2254
        %2881 = vmatprep.mubr.bf16.mxu0 %v715
        %2882 = vmatmul.mubr.bf16.gmra.mrb[0].mxu0 %v701
        %v2883 = vpop.f32.mrb[0].mxu0
        %v2884 = vadd.f32 %v2843, %v2883
        %v2885 = vpop.f32.mrb[0].mxu0
        %v2886 = vadd.f32 %v2845, %v2885
        %v2887 = vpop.f32.mrb[0].mxu0
        %v2888 = vpop.f32.mrb[0].mxu0
        %2889 = vdwg.mxu0
        %2890 = vmatprep.subr.bf16.mxu0 %v1881
        %2891 = vmatpush1.bf16.msra.mxu0 %v1880
        %2892 = vmatprep.subr.bf16.mxu0 %v1889
        %2893 = vmatpush1.bf16.msra.mxu0 %v1888
        %2894 = vmatprep.subr.bf16.mxu0 %v1897
        %2895 = vmatpush1.bf16.msra.mxu0 %v1896
        %2896 = vmatprep.subr.bf16.mxu0 %v1905
        %2897 = vmatpush1.bf16.msra.mxu0 %v1904
        %2898 = vmatprep.subr.bf16.mxu0 %v1913
        %2899 = vmatpush1.bf16.msra.mxu0 %v1912
        %2900 = vmatprep.subr.bf16.mxu0 %v1921
        %2901 = vmatpush1.bf16.msra.mxu0 %v1920
        %2902 = vmatprep.subr.bf16.mxu0 %v1929
        %2903 = vmatpush1.bf16.msra.mxu0 %v1928
        %2904 = vmatprep.subr.bf16.mxu0 %v1937
        %2905 = vmatpush1.bf16.msra.mxu0 %v1936
        %2906 = vmatprep.subr.bf16.mxu0 %v1945
        %2907 = vmatpush1.bf16.msra.mxu0 %v1944
        %2908 = vmatprep.subr.bf16.mxu0 %v1953
        %2909 = vmatpush1.bf16.msra.mxu0 %v1952
        %2910 = vmatprep.subr.bf16.mxu0 %v1961
        %2911 = vmatpush1.bf16.msra.mxu0 %v1960
        %2912 = vmatprep.subr.bf16.mxu0 %v1969
        %2913 = vmatpush1.bf16.msra.mxu0 %v1968
        %2914 = vmatprep.subr.bf16.mxu0 %v1977
        %2915 = vmatpush1.bf16.msra.mxu0 %v1976
        %2916 = vmatprep.subr.bf16.mxu0 %v1985
        %2917 = vmatpush1.bf16.msra.mxu0 %v1984
        %2918 = vmatprep.subr.bf16.mxu0 %v1993
        %2919 = vmatpush1.bf16.msra.mxu0 %v1992
        %2920 = vmatprep.subr.bf16.mxu0 %v2001
        %2921 = vmatpush1.bf16.msra.mxu0 %v2000
        %2922 = vmatprep.mubr.bf16.mxu0 %v708
        %2923 = vmatmul.mubr.bf16.gmra.mrb[0].mxu0 %v694
        %v2924 = vpop.f32.mrb[0].mxu0
        %v2925 = vadd.f32 0.0, %v2924
        %v2926 = vpop.f32.mrb[0].mxu0
        %v2927 = vadd.f32 0.0, %v2926
        %v2928 = vpop.f32.mrb[0].mxu0
        %v2929 = vpop.f32.mrb[0].mxu0
        %2930 = vdwg.mxu0
        %2931 = vmatprep.subr.bf16.mxu0 %v2009
        %2932 = vmatpush1.bf16.msra.mxu0 %v2008
        %2933 = vmatprep.subr.bf16.mxu0 %v2017
        %2934 = vmatpush1.bf16.msra.mxu0 %v2016
        %2935 = vmatprep.subr.bf16.mxu0 %v2025
        %2936 = vmatpush1.bf16.msra.mxu0 %v2024
        %2937 = vmatprep.subr.bf16.mxu0 %v2033
        %2938 = vmatpush1.bf16.msra.mxu0 %v2032
        %2939 = vmatprep.subr.bf16.mxu0 %v2041
        %2940 = vmatpush1.bf16.msra.mxu0 %v2040
        %2941 = vmatprep.subr.bf16.mxu0 %v2049
        %2942 = vmatpush1.bf16.msra.mxu0 %v2048
        %2943 = vmatprep.subr.bf16.mxu0 %v2057
        %2944 = vmatpush1.bf16.msra.mxu0 %v2056
        %2945 = vmatprep.subr.bf16.mxu0 %v2065
        %2946 = vmatpush1.bf16.msra.mxu0 %v2064
        %2947 = vmatprep.subr.bf16.mxu0 %v2073
        %2948 = vmatpush1.bf16.msra.mxu0 %v2072
        %2949 = vmatprep.subr.bf16.mxu0 %v2081
        %2950 = vmatpush1.bf16.msra.mxu0 %v2080
        %2951 = vmatprep.subr.bf16.mxu0 %v2089
        %2952 = vmatpush1.bf16.msra.mxu0 %v2088
        %2953 = vmatprep.subr.bf16.mxu0 %v2097
        %2954 = vmatpush1.bf16.msra.mxu0 %v2096
        %2955 = vmatprep.subr.bf16.mxu0 %v2105
        %2956 = vmatpush1.bf16.msra.mxu0 %v2104
        %2957 = vmatprep.subr.bf16.mxu0 %v2113
        %2958 = vmatpush1.bf16.msra.mxu0 %v2112
        %2959 = vmatprep.subr.bf16.mxu0 %v2121
        %2960 = vmatpush1.bf16.msra.mxu0 %v2120
        %2961 = vmatprep.subr.bf16.mxu0 %v2129
        %2962 = vmatpush1.bf16.msra.mxu0 %v2128
        %2963 = vmatprep.mubr.bf16.mxu0 %v717
        %2964 = vmatmul.mubr.bf16.gmra.mrb[0].mxu0 %v716
        %v2965 = vpop.f32.mrb[0].mxu0
        %v2966 = vadd.f32 %v2925, %v2965
        %v2967 = vpop.f32.mrb[0].mxu0
        %v2968 = vadd.f32 %v2927, %v2967
        %v2969 = vpop.f32.mrb[0].mxu0
        %v2970 = vpop.f32.mrb[0].mxu0
        %2971 = vdwg.mxu0
        %2972 = vmatprep.subr.bf16.mxu0 %v2137
        %2973 = vmatpush1.bf16.msra.mxu0 %v2136
        %2974 = vmatprep.subr.bf16.mxu0 %v2145
        %2975 = vmatpush1.bf16.msra.mxu0 %v2144
        %2976 = vmatprep.subr.bf16.mxu0 %v2153
        %2977 = vmatpush1.bf16.msra.mxu0 %v2152
        %2978 = vmatprep.subr.bf16.mxu0 %v2161
        %2979 = vmatpush1.bf16.msra.mxu0 %v2160
        %2980 = vmatprep.subr.bf16.mxu0 %v2169
        %2981 = vmatpush1.bf16.msra.mxu0 %v2168
        %2982 = vmatprep.subr.bf16.mxu0 %v2177
        %2983 = vmatpush1.bf16.msra.mxu0 %v2176
        %2984 = vmatprep.subr.bf16.mxu0 %v2185
        %2985 = vmatpush1.bf16.msra.mxu0 %v2184
        %2986 = vmatprep.subr.bf16.mxu0 %v2193
        %2987 = vmatpush1.bf16.msra.mxu0 %v2192
        %2988 = vmatprep.subr.bf16.mxu0 %v2201
        %2989 = vmatpush1.bf16.msra.mxu0 %v2200
        %2990 = vmatprep.subr.bf16.mxu0 %v2209
        %2991 = vmatpush1.bf16.msra.mxu0 %v2208
        %2992 = vmatprep.subr.bf16.mxu0 %v2217
        %2993 = vmatpush1.bf16.msra.mxu0 %v2216
        %2994 = vmatprep.subr.bf16.mxu0 %v2225
        %2995 = vmatpush1.bf16.msra.mxu0 %v2224
        %2996 = vmatprep.subr.bf16.mxu0 %v2233
        %2997 = vmatpush1.bf16.msra.mxu0 %v2232
        %2998 = vmatprep.subr.bf16.mxu0 %v2241
        %2999 = vmatpush1.bf16.msra.mxu0 %v2240
        %3000 = vmatprep.subr.bf16.mxu0 %v2249
        %3001 = vmatpush1.bf16.msra.mxu0 %v2248
        %3002 = vmatprep.subr.bf16.mxu0 %v2257
        %3003 = vmatpush1.bf16.msra.mxu0 %v2256
        %3004 = vmatprep.mubr.bf16.mxu0 %v715
        %3005 = vmatmul.mubr.bf16.gmra.mrb[0].mxu0 %v701
        %v3006 = vpop.f32.mrb[0].mxu0
        %v3007 = vadd.f32 %v2966, %v3006
        %v3008 = vpop.f32.mrb[0].mxu0
        %v3009 = vadd.f32 %v2968, %v3008
        %v3010 = vpop.f32.mrb[0].mxu0
        %v3011 = vpop.f32.mrb[0].mxu0
        %3012 = vdwg.mxu0
        %3013 = vmatprep.subr.bf16.mxu0 %v1883
        %3014 = vmatpush1.bf16.msra.mxu0 %v1882
        %3015 = vmatprep.subr.bf16.mxu0 %v1891
        %3016 = vmatpush1.bf16.msra.mxu0 %v1890
        %3017 = vmatprep.subr.bf16.mxu0 %v1899
        %3018 = vmatpush1.bf16.msra.mxu0 %v1898
        %3019 = vmatprep.subr.bf16.mxu0 %v1907
        %3020 = vmatpush1.bf16.msra.mxu0 %v1906
        %3021 = vmatprep.subr.bf16.mxu0 %v1915
        %3022 = vmatpush1.bf16.msra.mxu0 %v1914
        %3023 = vmatprep.subr.bf16.mxu0 %v1923
        %3024 = vmatpush1.bf16.msra.mxu0 %v1922
        %3025 = vmatprep.subr.bf16.mxu0 %v1931
        %3026 = vmatpush1.bf16.msra.mxu0 %v1930
        %3027 = vmatprep.subr.bf16.mxu0 %v1939
        %3028 = vmatpush1.bf16.msra.mxu0 %v1938
        %3029 = vmatprep.subr.bf16.mxu0 %v1947
        %3030 = vmatpush1.bf16.msra.mxu0 %v1946
        %3031 = vmatprep.subr.bf16.mxu0 %v1955
        %3032 = vmatpush1.bf16.msra.mxu0 %v1954
        %3033 = vmatprep.subr.bf16.mxu0 %v1963
        %3034 = vmatpush1.bf16.msra.mxu0 %v1962
        %3035 = vmatprep.subr.bf16.mxu0 %v1971
        %3036 = vmatpush1.bf16.msra.mxu0 %v1970
        %3037 = vmatprep.subr.bf16.mxu0 %v1979
        %3038 = vmatpush1.bf16.msra.mxu0 %v1978
        %3039 = vmatprep.subr.bf16.mxu0 %v1987
        %3040 = vmatpush1.bf16.msra.mxu0 %v1986
        %3041 = vmatprep.subr.bf16.mxu0 %v1995
        %3042 = vmatpush1.bf16.msra.mxu0 %v1994
        %3043 = vmatprep.subr.bf16.mxu0 %v2003
        %3044 = vmatpush1.bf16.msra.mxu0 %v2002
        %3045 = vmatprep.mubr.bf16.mxu0 %v708
        %3046 = vmatmul.mubr.bf16.gmra.mrb[0].mxu0 %v694
        %v3047 = vpop.f32.mrb[0].mxu0
        %v3048 = vadd.f32 0.0, %v3047
        %v3049 = vpop.f32.mrb[0].mxu0
        %v3050 = vadd.f32 0.0, %v3049
        %v3051 = vpop.f32.mrb[0].mxu0
        %v3052 = vpop.f32.mrb[0].mxu0
        %3053 = vdwg.mxu0
        %3054 = vmatprep.subr.bf16.mxu0 %v2011
        %3055 = vmatpush1.bf16.msra.mxu0 %v2010
        %3056 = vmatprep.subr.bf16.mxu0 %v2019
        %3057 = vmatpush1.bf16.msra.mxu0 %v2018
        %3058 = vmatprep.subr.bf16.mxu0 %v2027
        %3059 = vmatpush1.bf16.msra.mxu0 %v2026
        %3060 = vmatprep.subr.bf16.mxu0 %v2035
        %3061 = vmatpush1.bf16.msra.mxu0 %v2034
        %3062 = vmatprep.subr.bf16.mxu0 %v2043
        %3063 = vmatpush1.bf16.msra.mxu0 %v2042
        %3064 = vmatprep.subr.bf16.mxu0 %v2051
        %3065 = vmatpush1.bf16.msra.mxu0 %v2050
        %3066 = vmatprep.subr.bf16.mxu0 %v2059
        %3067 = vmatpush1.bf16.msra.mxu0 %v2058
        %3068 = vmatprep.subr.bf16.mxu0 %v2067
        %3069 = vmatpush1.bf16.msra.mxu0 %v2066
        %3070 = vmatprep.subr.bf16.mxu0 %v2075
        %3071 = vmatpush1.bf16.msra.mxu0 %v2074
        %3072 = vmatprep.subr.bf16.mxu0 %v2083
        %3073 = vmatpush1.bf16.msra.mxu0 %v2082
        %3074 = vmatprep.subr.bf16.mxu0 %v2091
        %3075 = vmatpush1.bf16.msra.mxu0 %v2090
        %3076 = vmatprep.subr.bf16.mxu0 %v2099
        %3077 = vmatpush1.bf16.msra.mxu0 %v2098
        %3078 = vmatprep.subr.bf16.mxu0 %v2107
        %3079 = vmatpush1.bf16.msra.mxu0 %v2106
        %3080 = vmatprep.subr.bf16.mxu0 %v2115
        %3081 = vmatpush1.bf16.msra.mxu0 %v2114
        %3082 = vmatprep.subr.bf16.mxu0 %v2123
        %3083 = vmatpush1.bf16.msra.mxu0 %v2122
        %3084 = vmatprep.subr.bf16.mxu0 %v2131
        %3085 = vmatpush1.bf16.msra.mxu0 %v2130
        %3086 = vmatprep.mubr.bf16.mxu0 %v717
        %3087 = vmatmul.mubr.bf16.gmra.mrb[0].mxu0 %v716
        %v3088 = vpop.f32.mrb[0].mxu0
        %v3089 = vadd.f32 %v3048, %v3088
        %v3090 = vpop.f32.mrb[0].mxu0
        %v3091 = vadd.f32 %v3050, %v3090
        %v3092 = vpop.f32.mrb[0].mxu0
        %v3093 = vpop.f32.mrb[0].mxu0
        %3094 = vdwg.mxu0
        %3095 = vmatprep.subr.bf16.mxu0 %v2139
        %3096 = vmatpush1.bf16.msra.mxu0 %v2138
        %3097 = vmatprep.subr.bf16.mxu0 %v2147
        %3098 = vmatpush1.bf16.msra.mxu0 %v2146
        %3099 = vmatprep.subr.bf16.mxu0 %v2155
        %3100 = vmatpush1.bf16.msra.mxu0 %v2154
        %3101 = vmatprep.subr.bf16.mxu0 %v2163
        %3102 = vmatpush1.bf16.msra.mxu0 %v2162
        %3103 = vmatprep.subr.bf16.mxu0 %v2171
        %3104 = vmatpush1.bf16.msra.mxu0 %v2170
        %3105 = vmatprep.subr.bf16.mxu0 %v2179
        %3106 = vmatpush1.bf16.msra.mxu0 %v2178
        %3107 = vmatprep.subr.bf16.mxu0 %v2187
        %3108 = vmatpush1.bf16.msra.mxu0 %v2186
        %3109 = vmatprep.subr.bf16.mxu0 %v2195
        %3110 = vmatpush1.bf16.msra.mxu0 %v2194
        %3111 = vmatprep.subr.bf16.mxu0 %v2203
        %3112 = vmatpush1.bf16.msra.mxu0 %v2202
        %3113 = vmatprep.subr.bf16.mxu0 %v2211
        %3114 = vmatpush1.bf16.msra.mxu0 %v2210
        %3115 = vmatprep.subr.bf16.mxu0 %v2219
        %3116 = vmatpush1.bf16.msra.mxu0 %v2218
        %3117 = vmatprep.subr.bf16.mxu0 %v2227
        %3118 = vmatpush1.bf16.msra.mxu0 %v2226
        %3119 = vmatprep.subr.bf16.mxu0 %v2235
        %3120 = vmatpush1.bf16.msra.mxu0 %v2234
        %3121 = vmatprep.subr.bf16.mxu0 %v2243
        %3122 = vmatpush1.bf16.msra.mxu0 %v2242
        %3123 = vmatprep.subr.bf16.mxu0 %v2251
        %3124 = vmatpush1.bf16.msra.mxu0 %v2250
        %3125 = vmatprep.subr.bf16.mxu0 %v2259
        %3126 = vmatpush1.bf16.msra.mxu0 %v2258
        %3127 = vmatprep.mubr.bf16.mxu0 %v715
        %3128 = vmatmul.mubr.bf16.gmra.mrb[0].mxu0 %v701
        %v3129 = vpop.f32.mrb[0].mxu0
        %v3130 = vadd.f32 %v3089, %v3129
        %v3131 = vpop.f32.mrb[0].mxu0
        %v3132 = vadd.f32 %v3091, %v3131
        %v3133 = vpop.f32.mrb[0].mxu0
        %v3134 = vpop.f32.mrb[0].mxu0
        %3135 = vdwg.mxu0
        %v3144 = vcombine.low %v2761, %v2763
        %v3145 = vcombine.low %v2884, %v2886
        %v3147 = vunpack.c.l.s4 1983009808
        %v3148 = vunpack.c.0.s8 %v3147
        %v3149 = vlaneseq
        %v3150 = vshrl.u32 %v3149, 7
        %v3151 = vsub.s32 %v3148, %v3150
        %v3152 = vrot.slane %v3144, %v3151
        %v3154 = vunpack.c.l.s4 1983009808
        %v3155 = vunpack.c.0.s8 %v3154
        %v3156 = vlaneseq
        %v3157 = vshrl.u32 %v3156, 7
        %v3158 = vsub.s32 %v3155, %v3157
        %v3159 = vrot.slane %v3145, %v3158
        %v3160 = vcombine.low %v3152, %v3159
        %v3161 = vcombine.low %v3007, %v3009
        %v3162 = vcombine.low %v3130, %v3132
        %v3164 = vunpack.c.l.s4 1983009808
        %v3165 = vunpack.c.0.s8 %v3164
        %v3166 = vlaneseq
        %v3167 = vshrl.u32 %v3166, 7
        %v3168 = vsub.s32 %v3165, %v3167
        %v3169 = vrot.slane %v3161, %v3168
        %v3171 = vunpack.c.l.s4 1983009808
        %v3172 = vunpack.c.0.s8 %v3171
        %v3173 = vlaneseq
        %v3174 = vshrl.u32 %v3173, 7
        %v3175 = vsub.s32 %v3172, %v3174
        %v3176 = vrot.slane %v3162, %v3175
        %v3177 = vcombine.low %v3169, %v3176
        %v3180 = vadd.f32 %v283, %v3160
        %v3181 = vadd.f32 %v284, %v3177
        %3182 = vst [vmem:[#allocation2] sm:$0xff] %v3180
        %3183 = vst [vmem:[#allocation2 + $0x8] sm:$0xff] %v3181
        %p3184 = scmp.eq.s32.totalorder %s21, 3
        // Predicated region
        $region57: #{mlfnet_forward.3} parent=39 // pred_check
          %p3185 = pneg %p3184
        $region58: #{mlfnet_forward.3} parent=39 // pred_check_branch
          %3187 = sbr.rel (%p3185) target = $region60
        $region59: #{mlfnet_forward.3} parent=39 // pred_region
          %v3188 = vld [vmem:[#allocation2] sm:$0xff]
          %v3189 = vld [vmem:[#allocation2 + $0x8] sm:$0xff]
          %v3190 = vld [vmem:[#allocation6] sm:$0xff]
          %v3192 = vlaneseq
          %v3193 = vshrl.u32 %v3192, 7
          %v3194 = vsub.s32 0, %v3193
          %v3195 = vrot.slane %v3190, %v3194
          %v3196 = vlaneseq
          %v3197 = vshrl.u32 %v3196, 7
          %v3198 = vsub.s32 1, %v3197
          %v3199 = vrot.slane %v3190, %v3198
          %v3200 = vlaneseq
          %v3201 = vshrl.u32 %v3200, 7
          %v3202 = vsub.s32 2, %v3201
          %v3203 = vrot.slane %v3190, %v3202
          %v3204 = vlaneseq
          %v3205 = vshrl.u32 %v3204, 7
          %v3206 = vsub.s32 3, %v3205
          %v3207 = vrot.slane %v3190, %v3206
          %v3208 = vlaneseq
          %v3209 = vshrl.u32 %v3208, 7
          %v3210 = vsub.s32 4, %v3209
          %v3211 = vrot.slane %v3190, %v3210
          %v3212 = vlaneseq
          %v3213 = vshrl.u32 %v3212, 7
          %v3214 = vsub.s32 5, %v3213
          %v3215 = vrot.slane %v3190, %v3214
          %v3216 = vlaneseq
          %v3217 = vshrl.u32 %v3216, 7
          %v3218 = vsub.s32 6, %v3217
          %v3219 = vrot.slane %v3190, %v3218
          %v3220 = vlaneseq
          %v3221 = vshrl.u32 %v3220, 7
          %v3222 = vsub.s32 7, %v3221
          %v3223 = vrot.slane %v3190, %v3222
          %v3224 = vcombine.low %v3195, %v3199
          %v3225 = vcombine.low %v3203, %v3207
          %v3227 = vunpack.c.l.s4 1983009808
          %v3228 = vunpack.c.0.s8 %v3227
          %v3229 = vlaneseq
          %v3230 = vshrl.u32 %v3229, 7
          %v3231 = vsub.s32 %v3228, %v3230
          %v3232 = vrot.slane %v3224, %v3231
          %v3234 = vunpack.c.l.s4 1983009808
          %v3235 = vunpack.c.0.s8 %v3234
          %v3236 = vlaneseq
          %v3237 = vshrl.u32 %v3236, 7
          %v3238 = vsub.s32 %v3235, %v3237
          %v3239 = vrot.slane %v3225, %v3238
          %v3240 = vcombine.low %v3232, %v3239
          %v3241 = vcombine.low %v3211, %v3215
          %v3242 = vcombine.low %v3219, %v3223
          %v3244 = vunpack.c.l.s4 1983009808
          %v3245 = vunpack.c.0.s8 %v3244
          %v3246 = vlaneseq
          %v3247 = vshrl.u32 %v3246, 7
          %v3248 = vsub.s32 %v3245, %v3247
          %v3249 = vrot.slane %v3241, %v3248
          %v3251 = vunpack.c.l.s4 1983009808
          %v3252 = vunpack.c.0.s8 %v3251
          %v3253 = vlaneseq
          %v3254 = vshrl.u32 %v3253, 7
          %v3255 = vsub.s32 %v3252, %v3254
          %v3256 = vrot.slane %v3242, %v3255
          %v3257 = vcombine.low %v3249, %v3256
          %v3260 = vadd.f32 %v3188, %v3240
          %v3261 = vadd.f32 %v3189, %v3257
          %v3262 = vmax.f32 %v3260, 0.0
          %v3263 = vmax.f32 %v3261, 0.0
          %v3264 = vld [vmem:[%s3] sm:$0xff]
          %v3265 = vld [vmem:[%s3 + $0x8] sm:$0xff]
          %v3266 = vld [vmem:[%s3 + $0x10] sm:$0xff]
          %v3267 = vld [vmem:[%s3 + $0x18] sm:$0xff]
          %v3268 = vld [vmem:[%s3 + $0x20] sm:$0xff]
          %v3269 = vld [vmem:[%s3 + $0x28] sm:$0xff]
          %v3270 = vld [vmem:[%s3 + $0x30] sm:$0xff]
          %v3271 = vld [vmem:[%s3 + $0x38] sm:$0xff]
          %v3272 = vld [vmem:[%s3 + $0x40] sm:$0xff]
          %v3273 = vld [vmem:[%s3 + $0x48] sm:$0xff]
          %v3274 = vld [vmem:[%s3 + $0x50] sm:$0xff]
          %v3275 = vld [vmem:[%s3 + $0x58] sm:$0xff]
          %v3276 = vld [vmem:[%s3 + $0x60] sm:$0xff]
          %v3277 = vld [vmem:[%s3 + $0x68] sm:$0xff]
          %v3278 = vld [vmem:[%s3 + $0x70] sm:$0xff]
          %v3279 = vld [vmem:[%s3 + $0x78] sm:$0xff]
          %v3280 = vld [vmem:[%s3 + $0x80] sm:$0xff]
          %v3281 = vld [vmem:[%s3 + $0x88] sm:$0xff]
          %v3282 = vld [vmem:[%s3 + $0x90] sm:$0xff]
          %v3283 = vld [vmem:[%s3 + $0x98] sm:$0xff]
          %v3284 = vld [vmem:[%s3 + $0xa0] sm:$0xff]
          %v3285 = vld [vmem:[%s3 + $0xa8] sm:$0xff]
          %v3286 = vld [vmem:[%s3 + $0xb0] sm:$0xff]
          %v3287 = vld [vmem:[%s3 + $0xb8] sm:$0xff]
          %v3288 = vld [vmem:[%s3 + $0xc0] sm:$0xff]
          %v3289 = vld [vmem:[%s3 + $0xc8] sm:$0xff]
          %v3290 = vld [vmem:[%s3 + $0xd0] sm:$0xff]
          %v3291 = vld [vmem:[%s3 + $0xd8] sm:$0xff]
          %v3292 = vld [vmem:[%s3 + $0xe0] sm:$0xff]
          %v3293 = vld [vmem:[%s3 + $0xe8] sm:$0xff]
          %v3294 = vld [vmem:[%s3 + $0xf0] sm:$0xff]
          %v3295 = vld [vmem:[%s3 + $0xf8] sm:$0xff]
          %v3296 = vld [vmem:[%s3 + $0x100] sm:$0xff]
          %v3297 = vld [vmem:[%s3 + $0x108] sm:$0xff]
          %v3298 = vld [vmem:[%s3 + $0x110] sm:$0xff]
          %v3299 = vld [vmem:[%s3 + $0x118] sm:$0xff]
          %v3300 = vld [vmem:[%s3 + $0x120] sm:$0xff]
          %v3301 = vld [vmem:[%s3 + $0x128] sm:$0xff]
          %v3302 = vld [vmem:[%s3 + $0x130] sm:$0xff]
          %v3303 = vld [vmem:[%s3 + $0x138] sm:$0xff]
          %v3304 = vld [vmem:[%s3 + $0x140] sm:$0xff]
          %v3305 = vld [vmem:[%s3 + $0x148] sm:$0xff]
          %v3306 = vld [vmem:[%s3 + $0x150] sm:$0xff]
          %v3307 = vld [vmem:[%s3 + $0x158] sm:$0xff]
          %v3308 = vld [vmem:[%s3 + $0x160] sm:$0xff]
          %v3309 = vld [vmem:[%s3 + $0x168] sm:$0xff]
          %v3310 = vld [vmem:[%s3 + $0x170] sm:$0xff]
          %v3311 = vld [vmem:[%s3 + $0x178] sm:$0xff]
          %v3312 = vld [vmem:[%s3 + $0x180] sm:$0xff]
          %v3313 = vld [vmem:[%s3 + $0x188] sm:$0xff]
          %v3314 = vld [vmem:[%s3 + $0x190] sm:$0xff]
          %v3315 = vld [vmem:[%s3 + $0x198] sm:$0xff]
          %v3316 = vld [vmem:[%s3 + $0x1a0] sm:$0xff]
          %v3317 = vld [vmem:[%s3 + $0x1a8] sm:$0xff]
          %v3318 = vld [vmem:[%s3 + $0x1b0] sm:$0xff]
          %v3319 = vld [vmem:[%s3 + $0x1b8] sm:$0xff]
          %v3320 = vld [vmem:[%s3 + $0x1c0] sm:$0xff]
          %v3321 = vld [vmem:[%s3 + $0x1c8] sm:$0xff]
          %v3322 = vld [vmem:[%s3 + $0x1d0] sm:$0xff]
          %v3323 = vld [vmem:[%s3 + $0x1d8] sm:$0xff]
          %v3324 = vld [vmem:[%s3 + $0x1e0] sm:$0xff]
          %v3325 = vld [vmem:[%s3 + $0x1e8] sm:$0xff]
          %v3326 = vld [vmem:[%s3 + $0x1f0] sm:$0xff]
          %v3327 = vld [vmem:[%s3 + $0x1f8] sm:$0xff]
          %v3328 = vld [vmem:[%s3 + $0x200] sm:$0xff]
          %v3329 = vld [vmem:[%s3 + $0x208] sm:$0xff]
          %v3330 = vld [vmem:[%s3 + $0x210] sm:$0xff]
          %v3331 = vld [vmem:[%s3 + $0x218] sm:$0xff]
          %v3332 = vld [vmem:[%s3 + $0x220] sm:$0xff]
          %v3333 = vld [vmem:[%s3 + $0x228] sm:$0xff]
          %v3334 = vld [vmem:[%s3 + $0x230] sm:$0xff]
          %v3335 = vld [vmem:[%s3 + $0x238] sm:$0xff]
          %v3336 = vld [vmem:[%s3 + $0x240] sm:$0xff]
          %v3337 = vld [vmem:[%s3 + $0x248] sm:$0xff]
          %v3338 = vld [vmem:[%s3 + $0x250] sm:$0xff]
          %v3339 = vld [vmem:[%s3 + $0x258] sm:$0xff]
          %v3340 = vld [vmem:[%s3 + $0x260] sm:$0xff]
          %v3341 = vld [vmem:[%s3 + $0x268] sm:$0xff]
          %v3342 = vld [vmem:[%s3 + $0x270] sm:$0xff]
          %v3343 = vld [vmem:[%s3 + $0x278] sm:$0xff]
          %v3344 = vld [vmem:[%s3 + $0x280] sm:$0xff]
          %v3345 = vld [vmem:[%s3 + $0x288] sm:$0xff]
          %v3346 = vld [vmem:[%s3 + $0x290] sm:$0xff]
          %v3347 = vld [vmem:[%s3 + $0x298] sm:$0xff]
          %v3348 = vld [vmem:[%s3 + $0x2a0] sm:$0xff]
          %v3349 = vld [vmem:[%s3 + $0x2a8] sm:$0xff]
          %v3350 = vld [vmem:[%s3 + $0x2b0] sm:$0xff]
          %v3351 = vld [vmem:[%s3 + $0x2b8] sm:$0xff]
          %v3352 = vld [vmem:[%s3 + $0x2c0] sm:$0xff]
          %v3353 = vld [vmem:[%s3 + $0x2c8] sm:$0xff]
          %v3354 = vld [vmem:[%s3 + $0x2d0] sm:$0xff]
          %v3355 = vld [vmem:[%s3 + $0x2d8] sm:$0xff]
          %v3356 = vld [vmem:[%s3 + $0x2e0] sm:$0xff]
          %v3357 = vld [vmem:[%s3 + $0x2e8] sm:$0xff]
          %v3358 = vld [vmem:[%s3 + $0x2f0] sm:$0xff]
          %v3359 = vld [vmem:[%s3 + $0x2f8] sm:$0xff]
          %v3360 = vld [vmem:[%s3 + $0x300] sm:$0xff]
          %v3361 = vld [vmem:[%s3 + $0x308] sm:$0xff]
          %v3362 = vld [vmem:[%s3 + $0x310] sm:$0xff]
          %v3363 = vld [vmem:[%s3 + $0x318] sm:$0xff]
          %v3364 = vld [vmem:[%s3 + $0x320] sm:$0xff]
          %v3365 = vld [vmem:[%s3 + $0x328] sm:$0xff]
          %v3366 = vld [vmem:[%s3 + $0x330] sm:$0xff]
          %v3367 = vld [vmem:[%s3 + $0x338] sm:$0xff]
          %v3368 = vld [vmem:[%s3 + $0x340] sm:$0xff]
          %v3369 = vld [vmem:[%s3 + $0x348] sm:$0xff]
          %v3370 = vld [vmem:[%s3 + $0x350] sm:$0xff]
          %v3371 = vld [vmem:[%s3 + $0x358] sm:$0xff]
          %v3372 = vld [vmem:[%s3 + $0x360] sm:$0xff]
          %v3373 = vld [vmem:[%s3 + $0x368] sm:$0xff]
          %v3374 = vld [vmem:[%s3 + $0x370] sm:$0xff]
          %v3375 = vld [vmem:[%s3 + $0x378] sm:$0xff]
          %v3376 = vld [vmem:[%s3 + $0x380] sm:$0xff]
          %v3377 = vld [vmem:[%s3 + $0x388] sm:$0xff]
          %v3378 = vld [vmem:[%s3 + $0x390] sm:$0xff]
          %v3379 = vld [vmem:[%s3 + $0x398] sm:$0xff]
          %v3380 = vld [vmem:[%s3 + $0x3a0] sm:$0xff]
          %v3381 = vld [vmem:[%s3 + $0x3a8] sm:$0xff]
          %v3382 = vld [vmem:[%s3 + $0x3b0] sm:$0xff]
          %v3383 = vld [vmem:[%s3 + $0x3b8] sm:$0xff]
          %v3384 = vld [vmem:[%s3 + $0x3c0] sm:$0xff]
          %v3385 = vld [vmem:[%s3 + $0x3c8] sm:$0xff]
          %v3386 = vld [vmem:[%s3 + $0x3d0] sm:$0xff]
          %v3387 = vld [vmem:[%s3 + $0x3d8] sm:$0xff]
          %v3388 = vld [vmem:[%s3 + $0x3e0] sm:$0xff]
          %v3389 = vld [vmem:[%s3 + $0x3e8] sm:$0xff]
          %v3390 = vld [vmem:[%s3 + $0x3f0] sm:$0xff]
          %v3391 = vld [vmem:[%s3 + $0x3f8] sm:$0xff]
          %v3392 = vld [vmem:[#allocation8] sm:$0x1]
          %v3394 = vlaneseq
          %v3395 = vshrl.u32 %v3394, 7
          %v3396 = vsub.s32 0, %v3395
          %v3397 = vrot.slane %v3392, %v3396
          %v3401 = vcombine.high %v3262, %v3262
          %v3403 = vunpack.c.l.s4 1983009808
          %v3404 = vunpack.c.0.s8 %v3403
          %v3405 = vlaneseq
          %v3406 = vshrl.u32 %v3405, 7
          %v3407 = vsub.s32 %v3404, %v3406
          %v3408 = vrot.slane %v3262, %v3407
          %v3410 = vunpack.c.l.s4 1983009808
          %v3411 = vunpack.c.0.s8 %v3410
          %v3412 = vlaneseq
          %v3413 = vshrl.u32 %v3412, 7
          %v3414 = vsub.s32 %v3411, %v3413
          %v3415 = vrot.slane %v3401, %v3414
          %v3416 = vcombine.high %v3408, %v3408
          %v3417 = vcombine.high %v3415, %v3415
          %v3418 = vcombine.high %v3263, %v3263
          %v3420 = vunpack.c.l.s4 1983009808
          %v3421 = vunpack.c.0.s8 %v3420
          %v3422 = vlaneseq
          %v3423 = vshrl.u32 %v3422, 7
          %v3424 = vsub.s32 %v3421, %v3423
          %v3425 = vrot.slane %v3263, %v3424
          %v3427 = vunpack.c.l.s4 1983009808
          %v3428 = vunpack.c.0.s8 %v3427
          %v3429 = vlaneseq
          %v3430 = vshrl.u32 %v3429, 7
          %v3431 = vsub.s32 %v3428, %v3430
          %v3432 = vrot.slane %v3418, %v3431
          %v3433 = vcombine.high %v3425, %v3425
          %v3434 = vcombine.high %v3432, %v3432
          %3443 = vmatprep.subr.mxu0 0.0
          %3444 = vmatpush1.msra.mxu0 %v3264
          %3445 = vmatprep.subr.mxu0 0.0
          %3446 = vmatpush1.msra.mxu0 %v3265
          %3447 = vmatprep.subr.mxu0 0.0
          %3448 = vmatpush1.msra.mxu0 %v3266
          %3449 = vmatprep.subr.mxu0 0.0
          %3450 = vmatpush1.msra.mxu0 %v3267
          %3451 = vmatprep.subr.mxu0 0.0
          %3452 = vmatpush1.msra.mxu0 %v3268
          %3453 = vmatprep.subr.mxu0 0.0
          %3454 = vmatpush1.msra.mxu0 %v3269
          %3455 = vmatprep.subr.mxu0 0.0
          %3456 = vmatpush1.msra.mxu0 %v3270
          %3457 = vmatprep.subr.mxu0 0.0
          %3458 = vmatpush1.msra.mxu0 %v3271
          %3459 = vmatprep.subr.mxu0 0.0
          %3460 = vmatpush1.msra.mxu0 %v3272
          %3461 = vmatprep.subr.mxu0 0.0
          %3462 = vmatpush1.msra.mxu0 %v3273
          %3463 = vmatprep.subr.mxu0 0.0
          %3464 = vmatpush1.msra.mxu0 %v3274
          %3465 = vmatprep.subr.mxu0 0.0
          %3466 = vmatpush1.msra.mxu0 %v3275
          %3467 = vmatprep.subr.mxu0 0.0
          %3468 = vmatpush1.msra.mxu0 %v3276
          %3469 = vmatprep.subr.mxu0 0.0
          %3470 = vmatpush1.msra.mxu0 %v3277
          %3471 = vmatprep.subr.mxu0 0.0
          %3472 = vmatpush1.msra.mxu0 %v3278
          %3473 = vmatprep.subr.mxu0 0.0
          %3474 = vmatpush1.msra.mxu0 %v3279
          %3475 = vmatprep.subr.mxu0 0.0
          %3476 = vmatpush1.msra.mxu0 %v3280
          %3477 = vmatprep.subr.mxu0 0.0
          %3478 = vmatpush1.msra.mxu0 %v3281
          %3479 = vmatprep.subr.mxu0 0.0
          %3480 = vmatpush1.msra.mxu0 %v3282
          %3481 = vmatprep.subr.mxu0 0.0
          %3482 = vmatpush1.msra.mxu0 %v3283
          %3483 = vmatprep.subr.mxu0 0.0
          %3484 = vmatpush1.msra.mxu0 %v3284
          %3485 = vmatprep.subr.mxu0 0.0
          %3486 = vmatpush1.msra.mxu0 %v3285
          %3487 = vmatprep.subr.mxu0 0.0
          %3488 = vmatpush1.msra.mxu0 %v3286
          %3489 = vmatprep.subr.mxu0 0.0
          %3490 = vmatpush1.msra.mxu0 %v3287
          %3491 = vmatprep.subr.mxu0 0.0
          %3492 = vmatpush1.msra.mxu0 %v3288
          %3493 = vmatprep.subr.mxu0 0.0
          %3494 = vmatpush1.msra.mxu0 %v3289
          %3495 = vmatprep.subr.mxu0 0.0
          %3496 = vmatpush1.msra.mxu0 %v3290
          %3497 = vmatprep.subr.mxu0 0.0
          %3498 = vmatpush1.msra.mxu0 %v3291
          %3499 = vmatprep.subr.mxu0 0.0
          %3500 = vmatpush1.msra.mxu0 %v3292
          %3501 = vmatprep.subr.mxu0 0.0
          %3502 = vmatpush1.msra.mxu0 %v3293
          %3503 = vmatprep.subr.mxu0 0.0
          %3504 = vmatpush1.msra.mxu0 %v3294
          %3505 = vmatprep.subr.mxu0 0.0
          %3506 = vmatpush1.msra.mxu0 %v3295
          %3507 = vmatprep.mubr.f32.mxu0 %v3416
          %3508 = vmatmul.mubr.f32.gmra.mrb[0].mxu0 %v3408
          %v3509 = vpop.f32.mrb[0].mxu0
          %v3510 = vadd.f32 %v3397, %v3509
          %v3511 = vpop.f32.mrb[0].mxu0
          %3512 = vdwg.mxu0
          %3513 = vmatprep.subr.mxu0 0.0
          %3514 = vmatpush1.msra.mxu0 %v3296
          %3515 = vmatprep.subr.mxu0 0.0
          %3516 = vmatpush1.msra.mxu0 %v3297
          %3517 = vmatprep.subr.mxu0 0.0
          %3518 = vmatpush1.msra.mxu0 %v3298
          %3519 = vmatprep.subr.mxu0 0.0
          %3520 = vmatpush1.msra.mxu0 %v3299
          %3521 = vmatprep.subr.mxu0 0.0
          %3522 = vmatpush1.msra.mxu0 %v3300
          %3523 = vmatprep.subr.mxu0 0.0
          %3524 = vmatpush1.msra.mxu0 %v3301
          %3525 = vmatprep.subr.mxu0 0.0
          %3526 = vmatpush1.msra.mxu0 %v3302
          %3527 = vmatprep.subr.mxu0 0.0
          %3528 = vmatpush1.msra.mxu0 %v3303
          %3529 = vmatprep.subr.mxu0 0.0
          %3530 = vmatpush1.msra.mxu0 %v3304
          %3531 = vmatprep.subr.mxu0 0.0
          %3532 = vmatpush1.msra.mxu0 %v3305
          %3533 = vmatprep.subr.mxu0 0.0
          %3534 = vmatpush1.msra.mxu0 %v3306
          %3535 = vmatprep.subr.mxu0 0.0
          %3536 = vmatpush1.msra.mxu0 %v3307
          %3537 = vmatprep.subr.mxu0 0.0
          %3538 = vmatpush1.msra.mxu0 %v3308
          %3539 = vmatprep.subr.mxu0 0.0
          %3540 = vmatpush1.msra.mxu0 %v3309
          %3541 = vmatprep.subr.mxu0 0.0
          %3542 = vmatpush1.msra.mxu0 %v3310
          %3543 = vmatprep.subr.mxu0 0.0
          %3544 = vmatpush1.msra.mxu0 %v3311
          %3545 = vmatprep.subr.mxu0 0.0
          %3546 = vmatpush1.msra.mxu0 %v3312
          %3547 = vmatprep.subr.mxu0 0.0
          %3548 = vmatpush1.msra.mxu0 %v3313
          %3549 = vmatprep.subr.mxu0 0.0
          %3550 = vmatpush1.msra.mxu0 %v3314
          %3551 = vmatprep.subr.mxu0 0.0
          %3552 = vmatpush1.msra.mxu0 %v3315
          %3553 = vmatprep.subr.mxu0 0.0
          %3554 = vmatpush1.msra.mxu0 %v3316
          %3555 = vmatprep.subr.mxu0 0.0
          %3556 = vmatpush1.msra.mxu0 %v3317
          %3557 = vmatprep.subr.mxu0 0.0
          %3558 = vmatpush1.msra.mxu0 %v3318
          %3559 = vmatprep.subr.mxu0 0.0
          %3560 = vmatpush1.msra.mxu0 %v3319
          %3561 = vmatprep.subr.mxu0 0.0
          %3562 = vmatpush1.msra.mxu0 %v3320
          %3563 = vmatprep.subr.mxu0 0.0
          %3564 = vmatpush1.msra.mxu0 %v3321
          %3565 = vmatprep.subr.mxu0 0.0
          %3566 = vmatpush1.msra.mxu0 %v3322
          %3567 = vmatprep.subr.mxu0 0.0
          %3568 = vmatpush1.msra.mxu0 %v3323
          %3569 = vmatprep.subr.mxu0 0.0
          %3570 = vmatpush1.msra.mxu0 %v3324
          %3571 = vmatprep.subr.mxu0 0.0
          %3572 = vmatpush1.msra.mxu0 %v3325
          %3573 = vmatprep.subr.mxu0 0.0
          %3574 = vmatpush1.msra.mxu0 %v3326
          %3575 = vmatprep.subr.mxu0 0.0
          %3576 = vmatpush1.msra.mxu0 %v3327
          %3577 = vmatprep.mubr.f32.mxu0 %v3417
          %3578 = vmatmul.mubr.f32.gmra.mrb[0].mxu0 %v3415
          %v3579 = vpop.f32.mrb[0].mxu0
          %v3580 = vadd.f32 %v3510, %v3579
          %v3581 = vpop.f32.mrb[0].mxu0
          %3582 = vdwg.mxu0
          %3583 = vmatprep.subr.mxu0 0.0
          %3584 = vmatpush1.msra.mxu0 %v3328
          %3585 = vmatprep.subr.mxu0 0.0
          %3586 = vmatpush1.msra.mxu0 %v3329
          %3587 = vmatprep.subr.mxu0 0.0
          %3588 = vmatpush1.msra.mxu0 %v3330
          %3589 = vmatprep.subr.mxu0 0.0
          %3590 = vmatpush1.msra.mxu0 %v3331
          %3591 = vmatprep.subr.mxu0 0.0
          %3592 = vmatpush1.msra.mxu0 %v3332
          %3593 = vmatprep.subr.mxu0 0.0
          %3594 = vmatpush1.msra.mxu0 %v3333
          %3595 = vmatprep.subr.mxu0 0.0
          %3596 = vmatpush1.msra.mxu0 %v3334
          %3597 = vmatprep.subr.mxu0 0.0
          %3598 = vmatpush1.msra.mxu0 %v3335
          %3599 = vmatprep.subr.mxu0 0.0
          %3600 = vmatpush1.msra.mxu0 %v3336
          %3601 = vmatprep.subr.mxu0 0.0
          %3602 = vmatpush1.msra.mxu0 %v3337
          %3603 = vmatprep.subr.mxu0 0.0
          %3604 = vmatpush1.msra.mxu0 %v3338
          %3605 = vmatprep.subr.mxu0 0.0
          %3606 = vmatpush1.msra.mxu0 %v3339
          %3607 = vmatprep.subr.mxu0 0.0
          %3608 = vmatpush1.msra.mxu0 %v3340
          %3609 = vmatprep.subr.mxu0 0.0
          %3610 = vmatpush1.msra.mxu0 %v3341
          %3611 = vmatprep.subr.mxu0 0.0
          %3612 = vmatpush1.msra.mxu0 %v3342
          %3613 = vmatprep.subr.mxu0 0.0
          %3614 = vmatpush1.msra.mxu0 %v3343
          %3615 = vmatprep.subr.mxu0 0.0
          %3616 = vmatpush1.msra.mxu0 %v3344
          %3617 = vmatprep.subr.mxu0 0.0
          %3618 = vmatpush1.msra.mxu0 %v3345
          %3619 = vmatprep.subr.mxu0 0.0
          %3620 = vmatpush1.msra.mxu0 %v3346
          %3621 = vmatprep.subr.mxu0 0.0
          %3622 = vmatpush1.msra.mxu0 %v3347
          %3623 = vmatprep.subr.mxu0 0.0
          %3624 = vmatpush1.msra.mxu0 %v3348
          %3625 = vmatprep.subr.mxu0 0.0
          %3626 = vmatpush1.msra.mxu0 %v3349
          %3627 = vmatprep.subr.mxu0 0.0
          %3628 = vmatpush1.msra.mxu0 %v3350
          %3629 = vmatprep.subr.mxu0 0.0
          %3630 = vmatpush1.msra.mxu0 %v3351
          %3631 = vmatprep.subr.mxu0 0.0
          %3632 = vmatpush1.msra.mxu0 %v3352
          %3633 = vmatprep.subr.mxu0 0.0
          %3634 = vmatpush1.msra.mxu0 %v3353
          %3635 = vmatprep.subr.mxu0 0.0
          %3636 = vmatpush1.msra.mxu0 %v3354
          %3637 = vmatprep.subr.mxu0 0.0
          %3638 = vmatpush1.msra.mxu0 %v3355
          %3639 = vmatprep.subr.mxu0 0.0
          %3640 = vmatpush1.msra.mxu0 %v3356
          %3641 = vmatprep.subr.mxu0 0.0
          %3642 = vmatpush1.msra.mxu0 %v3357
          %3643 = vmatprep.subr.mxu0 0.0
          %3644 = vmatpush1.msra.mxu0 %v3358
          %3645 = vmatprep.subr.mxu0 0.0
          %3646 = vmatpush1.msra.mxu0 %v3359
          %3647 = vmatprep.mubr.f32.mxu0 %v3433
          %3648 = vmatmul.mubr.f32.gmra.mrb[0].mxu0 %v3425
          %v3649 = vpop.f32.mrb[0].mxu0
          %v3650 = vadd.f32 %v3580, %v3649
          %v3651 = vpop.f32.mrb[0].mxu0
          %3652 = vdwg.mxu0
          %3653 = vmatprep.subr.mxu0 0.0
          %3654 = vmatpush1.msra.mxu0 %v3360
          %3655 = vmatprep.subr.mxu0 0.0
          %3656 = vmatpush1.msra.mxu0 %v3361
          %3657 = vmatprep.subr.mxu0 0.0
          %3658 = vmatpush1.msra.mxu0 %v3362
          %3659 = vmatprep.subr.mxu0 0.0
          %3660 = vmatpush1.msra.mxu0 %v3363
          %3661 = vmatprep.subr.mxu0 0.0
          %3662 = vmatpush1.msra.mxu0 %v3364
          %3663 = vmatprep.subr.mxu0 0.0
          %3664 = vmatpush1.msra.mxu0 %v3365
          %3665 = vmatprep.subr.mxu0 0.0
          %3666 = vmatpush1.msra.mxu0 %v3366
          %3667 = vmatprep.subr.mxu0 0.0
          %3668 = vmatpush1.msra.mxu0 %v3367
          %3669 = vmatprep.subr.mxu0 0.0
          %3670 = vmatpush1.msra.mxu0 %v3368
          %3671 = vmatprep.subr.mxu0 0.0
          %3672 = vmatpush1.msra.mxu0 %v3369
          %3673 = vmatprep.subr.mxu0 0.0
          %3674 = vmatpush1.msra.mxu0 %v3370
          %3675 = vmatprep.subr.mxu0 0.0
          %3676 = vmatpush1.msra.mxu0 %v3371
          %3677 = vmatprep.subr.mxu0 0.0
          %3678 = vmatpush1.msra.mxu0 %v3372
          %3679 = vmatprep.subr.mxu0 0.0
          %3680 = vmatpush1.msra.mxu0 %v3373
          %3681 = vmatprep.subr.mxu0 0.0
          %3682 = vmatpush1.msra.mxu0 %v3374
          %3683 = vmatprep.subr.mxu0 0.0
          %3684 = vmatpush1.msra.mxu0 %v3375
          %3685 = vmatprep.subr.mxu0 0.0
          %3686 = vmatpush1.msra.mxu0 %v3376
          %3687 = vmatprep.subr.mxu0 0.0
          %3688 = vmatpush1.msra.mxu0 %v3377
          %3689 = vmatprep.subr.mxu0 0.0
          %3690 = vmatpush1.msra.mxu0 %v3378
          %3691 = vmatprep.subr.mxu0 0.0
          %3692 = vmatpush1.msra.mxu0 %v3379
          %3693 = vmatprep.subr.mxu0 0.0
          %3694 = vmatpush1.msra.mxu0 %v3380
          %3695 = vmatprep.subr.mxu0 0.0
          %3696 = vmatpush1.msra.mxu0 %v3381
          %3697 = vmatprep.subr.mxu0 0.0
          %3698 = vmatpush1.msra.mxu0 %v3382
          %3699 = vmatprep.subr.mxu0 0.0
          %3700 = vmatpush1.msra.mxu0 %v3383
          %3701 = vmatprep.subr.mxu0 0.0
          %3702 = vmatpush1.msra.mxu0 %v3384
          %3703 = vmatprep.subr.mxu0 0.0
          %3704 = vmatpush1.msra.mxu0 %v3385
          %3705 = vmatprep.subr.mxu0 0.0
          %3706 = vmatpush1.msra.mxu0 %v3386
          %3707 = vmatprep.subr.mxu0 0.0
          %3708 = vmatpush1.msra.mxu0 %v3387
          %3709 = vmatprep.subr.mxu0 0.0
          %3710 = vmatpush1.msra.mxu0 %v3388
          %3711 = vmatprep.subr.mxu0 0.0
          %3712 = vmatpush1.msra.mxu0 %v3389
          %3713 = vmatprep.subr.mxu0 0.0
          %3714 = vmatpush1.msra.mxu0 %v3390
          %3715 = vmatprep.subr.mxu0 0.0
          %3716 = vmatpush1.msra.mxu0 %v3391
          %3717 = vmatprep.mubr.f32.mxu0 %v3434
          %3718 = vmatmul.mubr.f32.gmra.mrb[0].mxu0 %v3432
          %v3719 = vpop.f32.mrb[0].mxu0
          %v3720 = vadd.f32 %v3650, %v3719
          %v3721 = vpop.f32.mrb[0].mxu0
          %3722 = vdwg.mxu0
          %vm3723 = vcmask 33792
          %v3724 = vsel %vm3723, %v3720, -inf
          %3725 = vmax.xlane.f32.xlu0 %v3724
          %v3726 = vpop.xlane.xlu0 %3725
          %v3727 = vsub.f32 %v3720, %v3726
          %v3728 = vmul.f32 %v3727, 1.442695
          %v3729 = vpow.pop %v3728
          %v3730 = vsel %vm3723, %v3729, 0.0
          %3731 = vadd.xlane.f32.xlu0 %v3730
          %v3732 = vpop.xlane.xlu0 %3731
          %v3733 = vrcp.pop %v3732
          %v3734 = vmul.f32 %v3729, %v3733
          %3735 = vst.msk [vmem:[#allocation9] sm:$0x3] %vm3723, %v3734
        $region60: #{mlfnet_forward.3} parent=39 // pred_fallthru
          _
        // Predicated region
        $region61: #{mlfnet_forward.3} parent=39 // pred_check
          %p3736 = pneg %p149
        $region62: #{mlfnet_forward.3} parent=39 // pred_check_branch
          %3738 = sbr.rel (%p3736) target = $region64
        $region63: #{mlfnet_forward.3} parent=39 // pred_region
          %s3740 = ssub.s32 32, 32
          %3741 = vsyncadd [#allocation5], %s3740
          %s3743 = sshll.u32 [#allocation9], 4
          %s3744 = int_to_ptr.vmem [resolvable:$true] %s3743
          %3746 = dma.vmem_to_hbm [thread:$0]  %s3744, 32, %s5, [#allocation5]
        $region64: #{mlfnet_forward.3} parent=39 // pred_fallthru
          _
        // Predicated region
        $region65: #{mlfnet_forward.3} parent=39 // pred_check
          %p3747 = pneg %p149
        $region66: #{mlfnet_forward.3} parent=39 // pred_check_branch
          %3749 = sbr.rel (%p3747) target = $region68
        $region67: #{mlfnet_forward.3} parent=39 // pred_region
          %3750 = dma.done [#allocation5], 32
        $region68: #{mlfnet_forward.3} parent=39 // pred_fallthru
          _
      $region40: #{mlfnet_forward.3} parent=5 // pred_fallthru
        _
      %p3751 = scmp.le.s32.totalorder 2, %s16
      // Predicated region
      $region69: #{mlfnet_forward.3} parent=5 // pred_check
        %p3752 = pneg %p3751
      $region70: #{mlfnet_forward.3} parent=5 // pred_check_branch
        %3754 = sbr.rel (%p3752) target = $region72
      $region71: #{mlfnet_forward.3} parent=5 // pred_region
        %s3755 = ssub.s32 %s16, 2
      $region72: #{mlfnet_forward.3} parent=5 // pred_fallthru
        _
    $region6: #{mlfnet_forward.3} parent=1 // loop_footer
      %s20 = sadd.s32 1, %s16
    $region7: #{mlfnet_forward.3} parent=1 // loop_footer_branch
      %15 = sbr.rel target = $region3
    $region8: #{mlfnet_forward.3} parent=1 // loop_exit
      _
    %3756 = vsyncpa [#allocation4], 1
    %s3757 = scalar_lea.sflag [#allocation4], 1
    %3758 = vsyncpa %s3757, 1
    %3759 = vsyncpa [#allocation7], 1
    %3760 = vsyncpa [#allocation5], 1
    %s3761 = scalar_lea.sflag [#allocation5], 1
    %3762 = vsyncpa %s3761, 1

</llo_original>
